<compile_context>
chip_gen: v7x
topology: tpu7x:2x2x1
jax: 0.10.0
libtpu: 0.0.40
codegen_flags: <defaults>
</compile_context>

<pallas_src>
import functools

import jax
import jax.numpy as jnp
from jax import lax
from jax.experimental import pallas as pl
from jax.experimental.pallas import tpu as pltpu

F32 = jnp.float32
BF16 = jnp.bfloat16
ACT_DTYPE = BF16          # inter-kernel activation dtype (halves HBM traffic)


# ------------------------- generation-dependent tuning -------------------------

def _detect_vmem_capacity():
    try:
        return int(pltpu.get_tpu_info().vmem_capacity_bytes)
    except Exception:
        return 64 * 1024 * 1024          # conservative (v7x-class) fallback

_VMEM_CAP = _detect_vmem_capacity()
if _VMEM_CAP > 96 * 1024 * 1024:         # v5e / v6e: 128 MiB physical VMEM
    VMEM_LIMIT = 100 * 1024 * 1024
    LANE_TILE_TARGET = 2048
else:                                     # v7x-class: 64 MiB physical VMEM
    VMEM_LIMIT = 48 * 1024 * 1024
    LANE_TILE_TARGET = 1024


def _lane_tile(length, target=None):
    """Largest lane tile satisfying the (8,128) rule: a multiple of 128 that
    divides `length`, capped at `target`; otherwise the full length."""
    if target is None:
        target = LANE_TILE_TARGET
    if length <= target or length % 128 != 0:
        return length
    t = (target // 128) * 128
    while t >= 128:
        if length % t == 0:
            return t
        t -= 128
    return length


def _compiler_params(n_parallel):
    return pltpu.CompilerParams(
        dimension_semantics=("parallel",) * n_parallel,
        vmem_limit_bytes=VMEM_LIMIT)


# ---------------------------- fused conv kernel ----------------------------

def _conv_bn_kernel(x_ref, si_ref, bi_ref, w_ref, o_ref, *, k, pad_l, pad_r):
    """BatchNorm(scale/shift) + ReLU + k-tap Conv1d on one (C, L) slab.

    x_ref : (cin, L)       activation slab (bf16 or f32)
    si/bi : (cin, 1)       BatchNorm scale / shift (f32)
    w_ref : (k, cout, cin) bf16 tap-major weights
    o_ref : (cout, L)      (pad_l + pad_r == k - 1, so Lout == L)
    Conv zero-padding is applied IN VMEM to the post-BN/ReLU value (matches the
    reference, where the conv pads its already-normalized input).
    """
    x = x_ref[...].astype(F32)
    x = jnp.maximum(x * si_ref[...] + bi_ref[...], 0.0)
    xb = x.astype(BF16)
    cin = xb.shape[0]
    lout = o_ref.shape[1]
    if pad_l or pad_r:
        parts = []
        if pad_l:
            parts.append(jnp.zeros((cin, pad_l), BF16))
        parts.append(xb)
        if pad_r:
            parts.append(jnp.zeros((cin, pad_r), BF16))
        xb = jnp.concatenate(parts, axis=-1)
    acc = jnp.dot(w_ref[0], xb[:, 0:lout], preferred_element_type=F32)
    for t in range(1, k):
        acc = acc + jnp.dot(w_ref[t], xb[:, t:t + lout],
                            preferred_element_type=F32)
    o_ref[...] = acc.astype(o_ref.dtype)


def _conv_bn_alias_kernel(x_ref, si_ref, bi_ref, w_ref, buf_ref, o_ref, *,
                          k, pad_l, pad_r):
    # `buf_ref` is the aliased block buffer (channel slice); never read.
    del buf_ref
    _conv_bn_kernel(x_ref, si_ref, bi_ref, w_ref, o_ref,
                    k=k, pad_l=pad_l, pad_r=pad_r)


def fused_conv_bn(x, w, s_in, b_in, *, cin=None, pad=(0, 0),
                  out_buf=None, out_ch_start=0):
    """Fused BatchNorm + ReLU + Conv1d(bias=False).

    x        : (B, C_buf, L); only channels [0, cin) are read.
    w        : (k, cout, cin) bf16 tap-major weights.
    out_buf  : if given, a (B, C_total, L) buffer; the cout output channels are
               written in place at channel offset `out_ch_start` (the buffer is
               aliased to the output, no full-buffer copy) and the updated
               buffer is returned.  Otherwise a fresh (B, cout, L) is returned.
    """
    b, c_buf, length = x.shape
    k, cout, cin_w = w.shape
    if cin is None:
        cin = c_buf
    assert cin_w == cin
    pad_l, pad_r = pad
    assert pad_l + pad_r == k - 1
    if cin != c_buf and cin % 8 != 0:
        # Rare fallback: keep the BlockSpec sublane dim a multiple of 8.
        x = x[:, :cin, :]
        c_buf = cin
    kern = functools.partial(_conv_bn_kernel, k=k, pad_l=pad_l, pad_r=pad_r)

    if out_buf is not None and out_ch_start % cout != 0:
        # Fallback for channel offsets the out-spec can't express.
        new = fused_conv_bn(x, w, s_in, b_in, cin=cin, pad=pad)
        return lax.dynamic_update_slice(out_buf, new, (0, out_ch_start, 0))

    if k == 1 and out_buf is None:
        # Pointwise conv: tile the lane (L) axis, grid over (batch, lane-tile).
        lt = _lane_tile(length)
        return pl.pallas_call(
            kern,
            out_shape=jax.ShapeDtypeStruct((b, cout, length), ACT_DTYPE),
            grid=(b, length // lt),
            in_specs=[
                pl.BlockSpec((None, cin, lt), lambda i, j: (i, 0, j)),
                pl.BlockSpec((cin, 1), lambda i, j: (0, 0)),
                pl.BlockSpec((cin, 1), lambda i, j: (0, 0)),
                pl.BlockSpec((1, cout, cin), lambda i, j: (0, 0, 0)),
            ],
            out_specs=pl.BlockSpec((None, cout, lt), lambda i, j: (i, 0, j)),
            compiler_params=_compiler_params(2),
        )(x, s_in, b_in, w)

    # k > 1 and/or in-place write into the block buffer: full-L blocks.
    in_specs = [
        pl.BlockSpec((None, cin, length), lambda i: (i, 0, 0)),
        pl.BlockSpec((cin, 1), lambda i: (0, 0)),
        pl.BlockSpec((cin, 1), lambda i: (0, 0)),
        pl.BlockSpec((k, cout, cin), lambda i: (0, 0, 0)),
    ]
    if out_buf is None:
        return pl.pallas_call(
            kern,
            out_shape=jax.ShapeDtypeStruct((b, cout, length), ACT_DTYPE),
            grid=(b,),
            in_specs=in_specs,
            out_specs=pl.BlockSpec((None, cout, length), lambda i: (i, 0, 0)),
            compiler_params=_compiler_params(1),
        )(x, s_in, b_in, w)

    out_ch_blk = out_ch_start // cout
    alias_kern = functools.partial(_conv_bn_alias_kernel, k=k,
                                   pad_l=pad_l, pad_r=pad_r)
    in_specs.append(pl.BlockSpec((None, cout, length),
                                 lambda i: (i, out_ch_blk, 0)))
    return pl.pallas_call(
        alias_kern,
        out_shape=jax.ShapeDtypeStruct(out_buf.shape, out_buf.dtype),
        grid=(b,),
        in_specs=in_specs,
        out_specs=pl.BlockSpec((None, cout, length),
                               lambda i: (i, out_ch_blk, 0)),
        input_output_aliases={4: 0},        # out_buf <-> output buffer
        compiler_params=_compiler_params(1),
    )(x, s_in, b_in, w, out_buf)


# ----------------- conv0 + norm0 + relu0 + pool0 (single kernel) -----------------

def _conv0_pool_kernel(x_ref, we_ref, wo_ref, s_ref, b_ref, o_ref):
    """Stride-2 conv0 and stride-2 max-pool folded into channels.

    x_ref : (4*12, L/4)   4-phase fold of the raw input (phase q of lead c is
                          channel 4c+q)
    we    : (2, c0, 48)   folded weights producing the even conv0 columns
    wo    : (3, c0, 48)   folded weights producing the odd conv0 columns
    o_ref : (c0, L/4)     pool0 output written into the block-1 buffer
    """
    x = x_ref[...].astype(BF16)
    c, l4 = x.shape
    zc = jnp.zeros((c, 1), BF16)
    # even conv0 columns: 2-tap conv over the folded input, pad (1, 0)
    xe = jnp.concatenate([zc, x], axis=-1)
    ye = (jnp.dot(we_ref[0], xe[:, 0:l4], preferred_element_type=F32)
          + jnp.dot(we_ref[1], x, preferred_element_type=F32))
    # odd conv0 columns: 3-tap conv over the folded input, pad (1, 1)
    xo = jnp.concatenate([zc, x, zc], axis=-1)
    yo = (jnp.dot(wo_ref[0], xo[:, 0:l4], preferred_element_type=F32)
          + jnp.dot(wo_ref[1], x, preferred_element_type=F32)
          + jnp.dot(wo_ref[2], xo[:, 2:l4 + 2], preferred_element_type=F32))
    # norm0 + relu0
    ze = jnp.maximum(ye * s_ref[...] + b_ref[...], 0.0)
    zo = jnp.maximum(yo * s_ref[...] + b_ref[...], 0.0)
    # pool0 (k=3, s=2, p=1): out[r] = max(z[2r-1], z[2r], z[2r+1]); after ReLU a
    # zero fill for the r=0 left edge is exact (values are >= 0).
    c0 = ze.shape[0]
    zo_prev = jnp.concatenate(
        [jnp.zeros((c0, 1), F32), zo[:, :l4 - 1]], axis=-1)
    o_ref[...] = jnp.maximum(jnp.maximum(ze, zo), zo_prev).astype(o_ref.dtype)


def conv0_pool(xq, we, wo, bn0_scale, bn0_shift, block1_channels):
    """Runs the fused stem and writes channels [0, c0) of a fresh
    (B, block1_channels, L/4) block buffer (rest written later via aliasing)."""
    b, c48, l4 = xq.shape
    c0 = we.shape[1]
    return pl.pallas_call(
        _conv0_pool_kernel,
        out_shape=jax.ShapeDtypeStruct((b, block1_channels, l4), ACT_DTYPE),
        grid=(b,),
        in_specs=[
            pl.BlockSpec((None, c48, l4), lambda i: (i, 0, 0)),
            pl.BlockSpec((2, c0, c48), lambda i: (0, 0, 0)),
            pl.BlockSpec((3, c0, c48), lambda i: (0, 0, 0)),
            pl.BlockSpec((c0, 1), lambda i: (0, 0)),
            pl.BlockSpec((c0, 1), lambda i: (0, 0)),
        ],
        out_specs=pl.BlockSpec((None, c0, l4), lambda i: (i, 0, 0)),
        compiler_params=_compiler_params(1),
    )(xq, we, wo, bn0_scale, bn0_shift)


# ---------------------------- transition avg pool ----------------------------

def _avgpool_kernel(xe_ref, xo_ref, o_ref):
    o_ref[...] = (0.5 * (xe_ref[...].astype(F32) + xo_ref[...].astype(F32))
                  ).astype(o_ref.dtype)


def avg_pool1d_into(x, out_channels_total):
    """AvgPool1d(kernel_size=2, stride=2), writing channels [0, C) of a fresh
    (B, out_channels_total, L//2) block buffer (the next dense block fills the
    remaining channels in place)."""
    b, c, length = x.shape
    if length % 2:                       # PyTorch floor-drops the last column
        x = x[:, :, :length - 1]
        length -= 1
    xe = x[:, :, 0::2]
    xo = x[:, :, 1::2]
    lout = length // 2
    lt = _lane_tile(lout)
    return pl.pallas_call(
        _avgpool_kernel,
        out_shape=jax.ShapeDtypeStruct((b, out_channels_total, lout), ACT_DTYPE),
        grid=(b, lout // lt),
        in_specs=[pl.BlockSpec((None, c, lt), lambda i, j: (i, 0, j)),
                  pl.BlockSpec((None, c, lt), lambda i, j: (i, 0, j))],
        out_specs=pl.BlockSpec((None, c, lt), lambda i, j: (i, 0, j)),
        compiler_params=_compiler_params(2),
    )(xe, xo)


# ---------------------------- fused network tail ----------------------------

def _tail_kernel(x_ref, s_ref, sh_ref, d_ref, wd_ref, bd_ref,
                 wm_ref, wg_ref, bc_ref, o_ref):
    # norm5 + ReLU + global average pool + demographics Linear + classifier
    a = jnp.maximum(x_ref[...].astype(F32) * s_ref[...] + sh_ref[...], 0.0)
    pooled = jnp.mean(a, axis=1, keepdims=True)                       # (C5, 1)
    ag = jnp.dot(wd_ref[...], d_ref[...],
                 preferred_element_type=F32) + bd_ref[...]            # (nadd, 1)
    out = (jnp.dot(wm_ref[...], pooled, preferred_element_type=F32)
           + jnp.dot(wg_ref[...], ag, preferred_element_type=F32)
           + bc_ref[...])                                             # (ncls, 1)
    o_ref[...] = out


def tail_forward(x, params, demographics):
    b, c5, length = x.shape
    ncls = params["cls_w_main"].shape[0]
    nadd = params["demo_w"].shape[0]
    demo3 = demographics.reshape(b, nadd, 1)
    out = pl.pallas_call(
        _tail_kernel,
        out_shape=jax.ShapeDtypeStruct((b, ncls, 1), F32),
        grid=(b,),
        in_specs=[
            pl.BlockSpec((None, c5, length), lambda i: (i, 0, 0)),
            pl.BlockSpec((c5, 1), lambda i: (0, 0)),
            pl.BlockSpec((c5, 1), lambda i: (0, 0)),
            pl.BlockSpec((None, nadd, 1), lambda i: (i, 0, 0)),
            pl.BlockSpec((nadd, nadd), lambda i: (0, 0)),
            pl.BlockSpec((nadd, 1), lambda i: (0, 0)),
            pl.BlockSpec((ncls, c5), lambda i: (0, 0)),
            pl.BlockSpec((ncls, nadd), lambda i: (0, 0)),
            pl.BlockSpec((ncls, 1), lambda i: (0, 0)),
        ],
        out_specs=pl.BlockSpec((None, ncls, 1), lambda i: (i, 0, 0)),
        compiler_params=_compiler_params(1),
    )(x, params["bn5_scale"], params["bn5_shift"], demo3,
      params["demo_w"], params["demo_b"], params["cls_w_main"],
      params["cls_w_demo"], params["cls_b"])
    return out.reshape(b, ncls)


# ---------------------------- parameters ----------------------------

def _kaiming_conv(key, cout, cin, k):
    std = (2.0 / (cin * k)) ** 0.5          # nn.init.kaiming_normal_
    return jax.random.normal(key, (cout, cin, k), F32) * std


def _to_taps(w):
    """(cout, cin, k) -> (k, cout, cin) in bf16 for the MXU."""
    return jnp.transpose(w, (2, 0, 1)).astype(BF16)


def _bn_params(c, eps=1e-5):
    """Inference-mode scale/shift of a freshly-initialized BatchNorm1d
    (weight=1, bias=0, running_mean=0, running_var=1)."""
    gamma = jnp.ones((c,), F32)
    beta = jnp.zeros((c,), F32)
    mean = jnp.zeros((c,), F32)
    var = jnp.ones((c,), F32)
    scale = gamma / jnp.sqrt(var + eps)
    shift = beta - mean * scale
    return scale.reshape(c, 1), shift.reshape(c, 1)


def _fold_conv0_weights(w):
    """Fold the k=7/stride-2 conv0 AND the stride-2 output decimation of pool0
    into channels: a 4-phase fold of the input (channel 4*ci+q = phase q of
    lead ci) turns the even conv0 columns into a 2-tap stride-1 conv (pad 1,0)
    and the odd columns into a 3-tap stride-1 conv (pad 1,1)."""
    c0, cin, k = w.shape
    assert k == 7
    we = jnp.zeros((2, c0, 4 * cin), F32)
    wo = jnp.zeros((3, c0, 4 * cin), F32)
    for j in range(2):
        for q in range(4):
            t = 4 * j + q - 1
            if 0 <= t < k:
                we = we.at[j, :, q::4].set(w[:, :, t])
    for j in range(3):
        for q in range(4):
            t = 4 * j + q - 3
            if 0 <= t < k:
                wo = wo.at[j, :, q::4].set(w[:, :, t])
    return we.astype(BF16), wo.astype(BF16)


def build_params(key, growth_rate, block_config, num_init_features, bn_size,
                 num_classes, num_additional_features):
    keys = iter(jax.random.split(key, 512))
    p = {}
    w0 = _kaiming_conv(next(keys), num_init_features, 12, 7)
    p["conv0_we"], p["conv0_wo"] = _fold_conv0_weights(w0)
    p["bn0_scale"], p["bn0_shift"] = _bn_params(num_init_features)

    nf = num_init_features
    blocks = []
    for i, num_layers in enumerate(block_config):
        layers = []
        for j in range(num_layers):
            cin = nf + j * growth_rate
            s1, sh1 = _bn_params(cin)
            s2, sh2 = _bn_params(bn_size * growth_rate)
            layers.append({
                "bn1_scale": s1, "bn1_shift": sh1,
                "conv1_w": _to_taps(_kaiming_conv(next(keys),
                                                  bn_size * growth_rate, cin, 1)),
                "bn2_scale": s2, "bn2_shift": sh2,
                "conv2_w": _to_taps(_kaiming_conv(next(keys), growth_rate,
                                                  bn_size * growth_rate, 3)),
            })
        blk = {"layers": layers}
        nf = nf + num_layers * growth_rate
        if i != len(block_config) - 1:
            st, sht = _bn_params(nf)
            blk["trans_bn_scale"] = st
            blk["trans_bn_shift"] = sht
            blk["trans_conv_w"] = _to_taps(_kaiming_conv(next(keys),
                                                         nf // 2, nf, 1))
            nf //= 2
        blocks.append(blk)
    p["blocks"] = blocks

    p["bn5_scale"], p["bn5_shift"] = _bn_params(nf)
    fin = nf + num_additional_features
    wc = jax.random.normal(next(keys), (num_classes, fin), F32) * (1.0 / fin) ** 0.5
    p["cls_w_main"] = wc[:, :nf]
    p["cls_w_demo"] = wc[:, nf:]
    p["cls_b"] = jnp.zeros((num_classes, 1), F32)    # nn.init.constant_(bias, 0)
    nadd = num_additional_features
    p["demo_w"] = (jax.random.normal(next(keys), (nadd, nadd), F32)
                   * (1.0 / nadd) ** 0.5)
    p["demo_b"] = jnp.zeros((nadd, 1), F32)
    return p


# ---------------------------- forward pass ----------------------------

def _block_channels(blk, c0):
    g = blk["layers"][0]["conv2_w"].shape[1]
    return c0 + len(blk["layers"]) * g, g


def densenet_forward(params, x, demographics):
    b, c_in, length = x.shape
    assert length % 4 == 0, "conv0 stride-2 + pool0 stride-2 require L % 4 == 0"
    l4 = length // 4

    # 4-phase fold of the raw input (stride-2 conv0 and stride-2 pool0 folded
    # into channels).  This is the only XLA-side layout op left in the network.
    xq = jnp.transpose(x.reshape(b, c_in, l4, 4), (0, 1, 3, 2))
    xq = xq.reshape(b, 4 * c_in, l4)

    blocks = params["blocks"]
    c0 = params["conv0_we"].shape[1]
    c_end, _ = _block_channels(blocks[0], c0)

    # Stem (conv0+norm0+relu0+pool0) writes straight into block 1's buffer.
    buf = conv0_pool(xq, params["conv0_we"], params["conv0_wo"],
                     params["bn0_scale"], params["bn0_shift"], c_end)

    for bi, blk in enumerate(blocks):
        cin = c0                       # channels of `buf` that are valid so far
        for layer in blk["layers"]:
            g = layer["conv2_w"].shape[1]
            # norm1 + relu1 + conv1 (1x1 bottleneck), lane-tiled.
            y1 = fused_conv_bn(buf, layer["conv1_w"],
                               layer["bn1_scale"], layer["bn1_shift"], cin=cin)
            # norm2 + relu2 + conv2 (3-tap, in-VMEM padding); the growth_rate
            # new channels are written in place into `buf` (aliased output).
            buf = fused_conv_bn(y1, layer["conv2_w"],
                                layer["bn2_scale"], layer["bn2_shift"],
                                cin=y1.shape[1], pad=(1, 1),
                                out_buf=buf, out_ch_start=cin)
            # TODO(synk): F.dropout(p=drop_rate) is training-only; inference no-op.
            cin += g
        if "trans_conv_w" in blk:                         # _Transition
            y = fused_conv_bn(buf, blk["trans_conv_w"],
                              blk["trans_bn_scale"], blk["trans_bn_shift"],
                              cin=buf.shape[1])
            c0 = y.shape[1]
            c_end, _ = _block_channels(blocks[bi + 1], c0)
            # Avg-pool writes into the front channels of the next block buffer.
            buf = avg_pool1d_into(y, c_end)

    # norm5 + ReLU + adaptive_avg_pool1d(1) + demographics Linear + classifier
    return tail_forward(buf, params, demographics)


if __name__ == "__main__":
    key = jax.random.PRNGKey(0)
    kp, kx, kd = jax.random.split(key, 3)
    # Small but structurally faithful config (channel counts multiples of 16).
    params = build_params(kp, growth_rate=16, block_config=(2, 2),
                          num_init_features=32, bn_size=2,
                          num_classes=5, num_additional_features=3)
    x = jax.random.normal(kx, (2, 12, 256), F32)          # (B, 12 leads, L)
    demographics = jax.random.normal(kd, (2, 3), F32)     # (B, num_additional_features)

    out = jax.jit(densenet_forward)(params, x, demographics)
    jax.block_until_ready(out)
    assert out.shape == (2, 5), out.shape
    print("KERNEL_OK")
</pallas_src>

<mosaic_0001>
module attributes {stable_mosaic.version = 11 : i64} {
  func.func @_conv0_pool_kernel(%arg0: i32, %arg1: memref<1x48x64xf32, #tpu.memory_space<vmem>>, %arg2: memref<2x32x48xbf16, #tpu.memory_space<vmem>>, %arg3: memref<3x32x48xbf16, #tpu.memory_space<vmem>>, %arg4: memref<32x1xf32, #tpu.memory_space<vmem>>, %arg5: memref<32x1xf32, #tpu.memory_space<vmem>>, %arg6: memref<1x32x64xbf16, #tpu.memory_space<vmem>>) attributes {dimension_semantics = [#tpu.dimension_semantics<parallel>], iteration_bounds = array<i64: 2>, scalar_prefetch = 0 : i64, scratch_operands = 0 : i64, tpu.core_type = #tpu.core_type<tc>, window_params = [{transform_indices = @transform_0, window_bounds = array<i64: 1, 48, 64>}, {pipeline_mode = #tpu.pipeline_mode<synchronous>, transform_indices = @transform_1, window_bounds = array<i64: 2, 32, 48>}, {pipeline_mode = #tpu.pipeline_mode<synchronous>, transform_indices = @transform_2, window_bounds = array<i64: 3, 32, 48>}, {pipeline_mode = #tpu.pipeline_mode<synchronous>, transform_indices = @transform_3, window_bounds = array<i64: 32, 1>}, {pipeline_mode = #tpu.pipeline_mode<synchronous>, transform_indices = @transform_4, window_bounds = array<i64: 32, 1>}, {transform_indices = @transform_5, window_bounds = array<i64: 1, 32, 64>}]} {
    %c0 = arith.constant 0 : index
    %c0_0 = arith.constant 0 : index
    %c0_1 = arith.constant 0 : index
    %0 = vector.load %arg1[%c0, %c0_0, %c0_1] : memref<1x48x64xf32, #tpu.memory_space<vmem>>, vector<1x48x64xf32>
    %1 = vector.shape_cast %0 : vector<1x48x64xf32> to vector<48x64xf32>
    %2 = arith.truncf %1 : vector<48x64xf32> to vector<48x64xbf16>
    %cst = arith.constant 0.000000e+00 : bf16
    %3 = vector.broadcast %cst : bf16 to vector<48x1xbf16>
    %4 = tpu.concatenate %3, %2 in 1 : vector<48x1xbf16>, vector<48x64xbf16> -> vector<48x65xbf16>
    %c0_2 = arith.constant 0 : index
    %c0_3 = arith.constant 0 : index
    %c0_4 = arith.constant 0 : index
    %5 = vector.load %arg2[%c0_2, %c0_3, %c0_4] : memref<2x32x48xbf16, #tpu.memory_space<vmem>>, vector<1x32x48xbf16>
    %6 = vector.shape_cast %5 : vector<1x32x48xbf16> to vector<32x48xbf16>
    %7 = vector.extract_strided_slice %4 {offsets = [0, 0], sizes = [48, 64], strides = [1, 1]} : vector<48x65xbf16> to vector<48x64xbf16>
    %cst_5 = arith.constant dense<0.000000e+00> : vector<32x64xf32>
    %8 = tpu.matmul %6, %7, %cst_5 {dimension_numbers = #tpu.dot_dimension_numbers<[1], [0], [0], [1], [0, 0, 1, 1], [], []>} : vector<32x48xbf16>, vector<48x64xbf16>, vector<32x64xf32> -> vector<32x64xf32>
    %c1 = arith.constant 1 : index
    %c0_6 = arith.constant 0 : index
    %c0_7 = arith.constant 0 : index
    %9 = vector.load %arg2[%c1, %c0_6, %c0_7] : memref<2x32x48xbf16, #tpu.memory_space<vmem>>, vector<1x32x48xbf16>
    %10 = vector.shape_cast %9 : vector<1x32x48xbf16> to vector<32x48xbf16>
    %cst_8 = arith.constant dense<0.000000e+00> : vector<32x64xf32>
    %11 = tpu.matmul %10, %2, %cst_8 {dimension_numbers = #tpu.dot_dimension_numbers<[1], [0], [0], [1], [0, 0, 1, 1], [], []>} : vector<32x48xbf16>, vector<48x64xbf16>, vector<32x64xf32> -> vector<32x64xf32>
    %12 = arith.addf %8, %11 : vector<32x64xf32>
    %13 = tpu.concatenate %3, %2, %3 in 1 : vector<48x1xbf16>, vector<48x64xbf16>, vector<48x1xbf16> -> vector<48x66xbf16>
    %c0_9 = arith.constant 0 : index
    %c0_10 = arith.constant 0 : index
    %c0_11 = arith.constant 0 : index
    %14 = vector.load %arg3[%c0_9, %c0_10, %c0_11] : memref<3x32x48xbf16, #tpu.memory_space<vmem>>, vector<1x32x48xbf16>
    %15 = vector.shape_cast %14 : vector<1x32x48xbf16> to vector<32x48xbf16>
    %16 = vector.extract_strided_slice %13 {offsets = [0, 0], sizes = [48, 64], strides = [1, 1]} : vector<48x66xbf16> to vector<48x64xbf16>
    %cst_12 = arith.constant dense<0.000000e+00> : vector<32x64xf32>
    %17 = tpu.matmul %15, %16, %cst_12 {dimension_numbers = #tpu.dot_dimension_numbers<[1], [0], [0], [1], [0, 0, 1, 1], [], []>} : vector<32x48xbf16>, vector<48x64xbf16>, vector<32x64xf32> -> vector<32x64xf32>
    %c1_13 = arith.constant 1 : index
    %c0_14 = arith.constant 0 : index
    %c0_15 = arith.constant 0 : index
    %18 = vector.load %arg3[%c1_13, %c0_14, %c0_15] : memref<3x32x48xbf16, #tpu.memory_space<vmem>>, vector<1x32x48xbf16>
    %19 = vector.shape_cast %18 : vector<1x32x48xbf16> to vector<32x48xbf16>
    %cst_16 = arith.constant dense<0.000000e+00> : vector<32x64xf32>
    %20 = tpu.matmul %19, %2, %cst_16 {dimension_numbers = #tpu.dot_dimension_numbers<[1], [0], [0], [1], [0, 0, 1, 1], [], []>} : vector<32x48xbf16>, vector<48x64xbf16>, vector<32x64xf32> -> vector<32x64xf32>
    %21 = arith.addf %17, %20 : vector<32x64xf32>
    %c2 = arith.constant 2 : index
    %c0_17 = arith.constant 0 : index
    %c0_18 = arith.constant 0 : index
    %22 = vector.load %arg3[%c2, %c0_17, %c0_18] : memref<3x32x48xbf16, #tpu.memory_space<vmem>>, vector<1x32x48xbf16>
    %23 = vector.shape_cast %22 : vector<1x32x48xbf16> to vector<32x48xbf16>
    %24 = vector.extract_strided_slice %13 {offsets = [0, 2], sizes = [48, 64], strides = [1, 1]} : vector<48x66xbf16> to vector<48x64xbf16>
    %cst_19 = arith.constant dense<0.000000e+00> : vector<32x64xf32>
    %25 = tpu.matmul %23, %24, %cst_19 {dimension_numbers = #tpu.dot_dimension_numbers<[1], [0], [0], [1], [0, 0, 1, 1], [], []>} : vector<32x48xbf16>, vector<48x64xbf16>, vector<32x64xf32> -> vector<32x64xf32>
    %26 = arith.addf %21, %25 : vector<32x64xf32>
    %c0_20 = arith.constant 0 : index
    %c0_21 = arith.constant 0 : index
    %27 = vector.load %arg4[%c0_20, %c0_21] : memref<32x1xf32, #tpu.memory_space<vmem>>, vector<32x1xf32>
    %28 = vector.broadcast %27 : vector<32x1xf32> to vector<32x64xf32>
    %29 = arith.mulf %12, %28 : vector<32x64xf32>
    %c0_22 = arith.constant 0 : index
    %c0_23 = arith.constant 0 : index
    %30 = vector.load %arg5[%c0_22, %c0_23] : memref<32x1xf32, #tpu.memory_space<vmem>>, vector<32x1xf32>
    %31 = vector.broadcast %30 : vector<32x1xf32> to vector<32x64xf32>
    %32 = arith.addf %29, %31 : vector<32x64xf32>
    %cst_24 = arith.constant 0.000000e+00 : f32
    %33 = vector.broadcast %cst_24 : f32 to vector<32x64xf32>
    %34 = arith.maximumf %32, %33 : vector<32x64xf32>
    %c0_25 = arith.constant 0 : index
    %c0_26 = arith.constant 0 : index
    %35 = vector.load %arg4[%c0_25, %c0_26] : memref<32x1xf32, #tpu.memory_space<vmem>>, vector<32x1xf32>
    %36 = vector.broadcast %35 : vector<32x1xf32> to vector<32x64xf32>
    %37 = arith.mulf %26, %36 : vector<32x64xf32>
    %c0_27 = arith.constant 0 : index
    %c0_28 = arith.constant 0 : index
    %38 = vector.load %arg5[%c0_27, %c0_28] : memref<32x1xf32, #tpu.memory_space<vmem>>, vector<32x1xf32>
    %39 = vector.broadcast %38 : vector<32x1xf32> to vector<32x64xf32>
    %40 = arith.addf %37, %39 : vector<32x64xf32>
    %cst_29 = arith.constant 0.000000e+00 : f32
    %41 = vector.broadcast %cst_29 : f32 to vector<32x64xf32>
    %42 = arith.maximumf %40, %41 : vector<32x64xf32>
    %cst_30 = arith.constant 0.000000e+00 : f32
    %43 = vector.broadcast %cst_30 : f32 to vector<32x1xf32>
    %44 = vector.extract_strided_slice %42 {offsets = [0, 0], sizes = [32, 63], strides = [1, 1]} : vector<32x64xf32> to vector<32x63xf32>
    %45 = tpu.concatenate %43, %44 in 1 : vector<32x1xf32>, vector<32x63xf32> -> vector<32x64xf32>
    %46 = arith.maximumf %34, %42 : vector<32x64xf32>
    %47 = arith.maximumf %46, %45 : vector<32x64xf32>
    %48 = arith.truncf %47 : vector<32x64xf32> to vector<32x64xbf16>
    %c0_31 = arith.constant 0 : index
    %c0_32 = arith.constant 0 : index
    %c0_33 = arith.constant 0 : index
    %49 = vector.load %arg6[%c0_31, %c0_32, %c0_33] : memref<1x32x64xbf16, #tpu.memory_space<vmem>>, vector<1x32x64xbf16>
    %50 = vector.shape_cast %49 : vector<1x32x64xbf16> to vector<32x64xbf16>
    %51 = vector.shape_cast %48 : vector<32x64xbf16> to vector<1x32x64xbf16>
    tpu.vector_store %arg6[%c0_31, %c0_32, %c0_33], %51 {strides = array<i32>} : memref<1x32x64xbf16, #tpu.memory_space<vmem>>, vector<1x32x64xbf16>,
    return
  }
  func.func @transform_0(%arg0: i32) -> (i32, i32, i32) {
    %c0_i32 = arith.constant 0 : i32
    %c0_i32_0 = arith.constant 0 : i32
    %c0_i32_1 = arith.constant 0 : i32
    return %arg0, %c0_i32, %c0_i32_0 : i32, i32, i32
  }
  func.func @transform_1(%arg0: i32) -> (i32, i32, i32) {
    %c0_i32 = arith.constant 0 : i32
    %c0_i32_0 = arith.constant 0 : i32
    %c0_i32_1 = arith.constant 0 : i32
    %c0_i32_2 = arith.constant 0 : i32
    return %c0_i32, %c0_i32_0, %c0_i32_1 : i32, i32, i32
  }
  func.func @transform_2(%arg0: i32) -> (i32, i32, i32) {
    %c0_i32 = arith.constant 0 : i32
    %c0_i32_0 = arith.constant 0 : i32
    %c0_i32_1 = arith.constant 0 : i32
    %c0_i32_2 = arith.constant 0 : i32
    return %c0_i32, %c0_i32_0, %c0_i32_1 : i32, i32, i32
  }
  func.func @transform_3(%arg0: i32) -> (i32, i32) {
    %c0_i32 = arith.constant 0 : i32
    %c0_i32_0 = arith.constant 0 : i32
    %c0_i32_1 = arith.constant 0 : i32
    return %c0_i32, %c0_i32_0 : i32, i32
  }
  func.func @transform_4(%arg0: i32) -> (i32, i32) {
    %c0_i32 = arith.constant 0 : i32
    %c0_i32_0 = arith.constant 0 : i32
    %c0_i32_1 = arith.constant 0 : i32
    return %c0_i32, %c0_i32_0 : i32, i32
  }
  func.func @transform_5(%arg0: i32) -> (i32, i32, i32) {
    %c0_i32 = arith.constant 0 : i32
    %c0_i32_0 = arith.constant 0 : i32
    %c0_i32_1 = arith.constant 0 : i32
    return %arg0, %c0_i32, %c0_i32_0 : i32, i32, i32
  }
}

module attributes {stable_mosaic.version = 11 : i64} {
  func.func @_conv_bn_kernel(%arg0: i32, %arg1: i32, %arg2: memref<1x32x64xbf16, #tpu.memory_space<vmem>>, %arg3: memref<32x1xf32, #tpu.memory_space<vmem>>, %arg4: memref<32x1xf32, #tpu.memory_space<vmem>>, %arg5: memref<1x32x32xbf16, #tpu.memory_space<vmem>>, %arg6: memref<1x32x64xbf16, #tpu.memory_space<vmem>>) attributes {dimension_semantics = [#tpu.dimension_semantics<parallel>, #tpu.dimension_semantics<parallel>], iteration_bounds = array<i64: 2, 1>, scalar_prefetch = 0 : i64, scratch_operands = 0 : i64, tpu.core_type = #tpu.core_type<tc>, window_params = [{transform_indices = @transform_0, window_bounds = array<i64: 1, 32, 64>}, {pipeline_mode = #tpu.pipeline_mode<synchronous>, transform_indices = @transform_1, window_bounds = array<i64: 32, 1>}, {pipeline_mode = #tpu.pipeline_mode<synchronous>, transform_indices = @transform_2, window_bounds = array<i64: 32, 1>}, {pipeline_mode = #tpu.pipeline_mode<synchronous>, transform_indices = @transform_3, window_bounds = array<i64: 1, 32, 32>}, {transform_indices = @transform_4, window_bounds = array<i64: 1, 32, 64>}]} {
    %c0 = arith.constant 0 : index
    %c0_0 = arith.constant 0 : index
    %c0_1 = arith.constant 0 : index
    %0 = vector.load %arg2[%c0, %c0_0, %c0_1] : memref<1x32x64xbf16, #tpu.memory_space<vmem>>, vector<1x32x64xbf16>
    %1 = vector.shape_cast %0 : vector<1x32x64xbf16> to vector<32x64xbf16>
    %2 = arith.extf %1 : vector<32x64xbf16> to vector<32x64xf32>
    %c0_2 = arith.constant 0 : index
    %c0_3 = arith.constant 0 : index
    %3 = vector.load %arg3[%c0_2, %c0_3] : memref<32x1xf32, #tpu.memory_space<vmem>>, vector<32x1xf32>
    %4 = vector.broadcast %3 : vector<32x1xf32> to vector<32x64xf32>
    %5 = arith.mulf %2, %4 : vector<32x64xf32>
    %c0_4 = arith.constant 0 : index
    %c0_5 = arith.constant 0 : index
    %6 = vector.load %arg4[%c0_4, %c0_5] : memref<32x1xf32, #tpu.memory_space<vmem>>, vector<32x1xf32>
    %7 = vector.broadcast %6 : vector<32x1xf32> to vector<32x64xf32>
    %8 = arith.addf %5, %7 : vector<32x64xf32>
    %cst = arith.constant 0.000000e+00 : f32
    %9 = vector.broadcast %cst : f32 to vector<32x64xf32>
    %10 = arith.maximumf %8, %9 : vector<32x64xf32>
    %11 = arith.truncf %10 : vector<32x64xf32> to vector<32x64xbf16>
    %c0_6 = arith.constant 0 : index
    %c0_7 = arith.constant 0 : index
    %c0_8 = arith.constant 0 : index
    %12 = vector.load %arg5[%c0_6, %c0_7, %c0_8] : memref<1x32x32xbf16, #tpu.memory_space<vmem>>, vector<1x32x32xbf16>
    %13 = vector.shape_cast %12 : vector<1x32x32xbf16> to vector<32x32xbf16>
    %cst_9 = arith.constant dense<0.000000e+00> : vector<32x64xf32>
    %14 = tpu.matmul %13, %11, %cst_9 {dimension_numbers = #tpu.dot_dimension_numbers<[1], [0], [0], [1], [0, 0, 1, 1], [], []>} : vector<32x32xbf16>, vector<32x64xbf16>, vector<32x64xf32> -> vector<32x64xf32>
    %15 = arith.truncf %14 : vector<32x64xf32> to vector<32x64xbf16>
    %c0_10 = arith.constant 0 : index
    %c0_11 = arith.constant 0 : index
    %c0_12 = arith.constant 0 : index
    %16 = vector.load %arg6[%c0_10, %c0_11, %c0_12] : memref<1x32x64xbf16, #tpu.memory_space<vmem>>, vector<1x32x64xbf16>
    %17 = vector.shape_cast %16 : vector<1x32x64xbf16> to vector<32x64xbf16>
    %18 = vector.shape_cast %15 : vector<32x64xbf16> to vector<1x32x64xbf16>
    tpu.vector_store %arg6[%c0_10, %c0_11, %c0_12], %18 {strides = array<i32>} : memref<1x32x64xbf16, #tpu.memory_space<vmem>>, vector<1x32x64xbf16>,
    return
  }
  func.func @transform_0(%arg0: i32, %arg1: i32) -> (i32, i32, i32) {
    %c0_i32 = arith.constant 0 : i32
    %c0_i32_0 = arith.constant 0 : i32
    return %arg0, %c0_i32, %arg1 : i32, i32, i32
  }
  func.func @transform_1(%arg0: i32, %arg1: i32) -> (i32, i32) {
    %c0_i32 = arith.constant 0 : i32
    %c0_i32_0 = arith.constant 0 : i32
    %c0_i32_1 = arith.constant 0 : i32
    return %c0_i32, %c0_i32_0 : i32, i32
  }
  func.func @transform_2(%arg0: i32, %arg1: i32) -> (i32, i32) {
    %c0_i32 = arith.constant 0 : i32
    %c0_i32_0 = arith.constant 0 : i32
    %c0_i32_1 = arith.constant 0 : i32
    return %c0_i32, %c0_i32_0 : i32, i32
  }
  func.func @transform_3(%arg0: i32, %arg1: i32) -> (i32, i32, i32) {
    %c0_i32 = arith.constant 0 : i32
    %c0_i32_0 = arith.constant 0 : i32
    %c0_i32_1 = arith.constant 0 : i32
    %c0_i32_2 = arith.constant 0 : i32
    return %c0_i32, %c0_i32_0, %c0_i32_1 : i32, i32, i32
  }
  func.func @transform_4(%arg0: i32, %arg1: i32) -> (i32, i32, i32) {
    %c0_i32 = arith.constant 0 : i32
    %c0_i32_0 = arith.constant 0 : i32
    return %arg0, %c0_i32, %arg1 : i32, i32, i32
  }
}

module attributes {stable_mosaic.version = 11 : i64} {
  func.func @_conv_bn_alias_kernel(%arg0: i32, %arg1: memref<1x32x64xbf16, #tpu.memory_space<vmem>>, %arg2: memref<32x1xf32, #tpu.memory_space<vmem>>, %arg3: memref<32x1xf32, #tpu.memory_space<vmem>>, %arg4: memref<3x16x32xbf16, #tpu.memory_space<vmem>>, %arg5: memref<1x16x64xbf16, #tpu.memory_space<vmem>>, %arg6: memref<1x16x64xbf16, #tpu.memory_space<vmem>>) attributes {dimension_semantics = [#tpu.dimension_semantics<parallel>], iteration_bounds = array<i64: 2>, scalar_prefetch = 0 : i64, scratch_operands = 0 : i64, tpu.core_type = #tpu.core_type<tc>, window_params = [{transform_indices = @transform_0, window_bounds = array<i64: 1, 32, 64>}, {pipeline_mode = #tpu.pipeline_mode<synchronous>, transform_indices = @transform_1, window_bounds = array<i64: 32, 1>}, {pipeline_mode = #tpu.pipeline_mode<synchronous>, transform_indices = @transform_2, window_bounds = array<i64: 32, 1>}, {pipeline_mode = #tpu.pipeline_mode<synchronous>, transform_indices = @transform_3, window_bounds = array<i64: 3, 16, 32>}, {transform_indices = @transform_4, window_bounds = array<i64: 1, 16, 64>}, {transform_indices = @transform_5, window_bounds = array<i64: 1, 16, 64>}]} {
    %c0 = arith.constant 0 : index
    %c0_0 = arith.constant 0 : index
    %c0_1 = arith.constant 0 : index
    %0 = vector.load %arg1[%c0, %c0_0, %c0_1] : memref<1x32x64xbf16, #tpu.memory_space<vmem>>, vector<1x32x64xbf16>
    %1 = vector.shape_cast %0 : vector<1x32x64xbf16> to vector<32x64xbf16>
    %2 = arith.extf %1 : vector<32x64xbf16> to vector<32x64xf32>
    %c0_2 = arith.constant 0 : index
    %c0_3 = arith.constant 0 : index
    %3 = vector.load %arg2[%c0_2, %c0_3] : memref<32x1xf32, #tpu.memory_space<vmem>>, vector<32x1xf32>
    %4 = vector.broadcast %3 : vector<32x1xf32> to vector<32x64xf32>
    %5 = arith.mulf %2, %4 : vector<32x64xf32>
    %c0_4 = arith.constant 0 : index
    %c0_5 = arith.constant 0 : index
    %6 = vector.load %arg3[%c0_4, %c0_5] : memref<32x1xf32, #tpu.memory_space<vmem>>, vector<32x1xf32>
    %7 = vector.broadcast %6 : vector<32x1xf32> to vector<32x64xf32>
    %8 = arith.addf %5, %7 : vector<32x64xf32>
    %cst = arith.constant 0.000000e+00 : f32
    %9 = vector.broadcast %cst : f32 to vector<32x64xf32>
    %10 = arith.maximumf %8, %9 : vector<32x64xf32>
    %11 = arith.truncf %10 : vector<32x64xf32> to vector<32x64xbf16>
    %cst_6 = arith.constant 0.000000e+00 : bf16
    %12 = vector.broadcast %cst_6 : bf16 to vector<32x1xbf16>
    %cst_7 = arith.constant 0.000000e+00 : bf16
    %13 = vector.broadcast %cst_7 : bf16 to vector<32x1xbf16>
    %14 = tpu.concatenate %12, %11, %13 in 1 : vector<32x1xbf16>, vector<32x64xbf16>, vector<32x1xbf16> -> vector<32x66xbf16>
    %c0_8 = arith.constant 0 : index
    %c0_9 = arith.constant 0 : index
    %c0_10 = arith.constant 0 : index
    %15 = vector.load %arg4[%c0_8, %c0_9, %c0_10] : memref<3x16x32xbf16, #tpu.memory_space<vmem>>, vector<1x16x32xbf16>
    %16 = vector.shape_cast %15 : vector<1x16x32xbf16> to vector<16x32xbf16>
    %17 = vector.extract_strided_slice %14 {offsets = [0, 0], sizes = [32, 64], strides = [1, 1]} : vector<32x66xbf16> to vector<32x64xbf16>
    %cst_11 = arith.constant dense<0.000000e+00> : vector<16x64xf32>
    %18 = tpu.matmul %16, %17, %cst_11 {dimension_numbers = #tpu.dot_dimension_numbers<[1], [0], [0], [1], [0, 0, 1, 1], [], []>} : vector<16x32xbf16>, vector<32x64xbf16>, vector<16x64xf32> -> vector<16x64xf32>
    %c1 = arith.constant 1 : index
    %c0_12 = arith.constant 0 : index
    %c0_13 = arith.constant 0 : index
    %19 = vector.load %arg4[%c1, %c0_12, %c0_13] : memref<3x16x32xbf16, #tpu.memory_space<vmem>>, vector<1x16x32xbf16>
    %20 = vector.shape_cast %19 : vector<1x16x32xbf16> to vector<16x32xbf16>
    %21 = vector.extract_strided_slice %14 {offsets = [0, 1], sizes = [32, 64], strides = [1, 1]} : vector<32x66xbf16> to vector<32x64xbf16>
    %cst_14 = arith.constant dense<0.000000e+00> : vector<16x64xf32>
    %22 = tpu.matmul %20, %21, %cst_14 {dimension_numbers = #tpu.dot_dimension_numbers<[1], [0], [0], [1], [0, 0, 1, 1], [], []>} : vector<16x32xbf16>, vector<32x64xbf16>, vector<16x64xf32> -> vector<16x64xf32>
    %23 = arith.addf %18, %22 : vector<16x64xf32>
    %c2 = arith.constant 2 : index
    %c0_15 = arith.constant 0 : index
    %c0_16 = arith.constant 0 : index
    %24 = vector.load %arg4[%c2, %c0_15, %c0_16] : memref<3x16x32xbf16, #tpu.memory_space<vmem>>, vector<1x16x32xbf16>
    %25 = vector.shape_cast %24 : vector<1x16x32xbf16> to vector<16x32xbf16>
    %26 = vector.extract_strided_slice %14 {offsets = [0, 2], sizes = [32, 64], strides = [1, 1]} : vector<32x66xbf16> to vector<32x64xbf16>
    %cst_17 = arith.constant dense<0.000000e+00> : vector<16x64xf32>
    %27 = tpu.matmul %25, %26, %cst_17 {dimension_numbers = #tpu.dot_dimension_numbers<[1], [0], [0], [1], [0, 0, 1, 1], [], []>} : vector<16x32xbf16>, vector<32x64xbf16>, vector<16x64xf32> -> vector<16x64xf32>
    %28 = arith.addf %23, %27 : vector<16x64xf32>
    %29 = arith.truncf %28 : vector<16x64xf32> to vector<16x64xbf16>
    %c0_18 = arith.constant 0 : index
    %c0_19 = arith.constant 0 : index
    %c0_20 = arith.constant 0 : index
    %30 = vector.load %arg6[%c0_18, %c0_19, %c0_20] : memref<1x16x64xbf16, #tpu.memory_space<vmem>>, vector<1x16x64xbf16>
    %31 = vector.shape_cast %30 : vector<1x16x64xbf16> to vector<16x64xbf16>
    %32 = vector.shape_cast %29 : vector<16x64xbf16> to vector<1x16x64xbf16>
    tpu.vector_store %arg6[%c0_18, %c0_19, %c0_20], %32 {strides = array<i32>} : memref<1x16x64xbf16, #tpu.memory_space<vmem>>, vector<1x16x64xbf16>,
    return
  }
  func.func @transform_0(%arg0: i32) -> (i32, i32, i32) {
    %c0_i32 = arith.constant 0 : i32
    %c0_i32_0 = arith.constant 0 : i32
    %c0_i32_1 = arith.constant 0 : i32
    return %arg0, %c0_i32, %c0_i32_0 : i32, i32, i32
  }
  func.func @transform_1(%arg0: i32) -> (i32, i32) {
    %c0_i32 = arith.constant 0 : i32
    %c0_i32_0 = arith.constant 0 : i32
    %c0_i32_1 = arith.constant 0 : i32
    return %c0_i32, %c0_i32_0 : i32, i32
  }
  func.func @transform_2(%arg0: i32) -> (i32, i32) {
    %c0_i32 = arith.constant 0 : i32
    %c0_i32_0 = arith.constant 0 : i32
    %c0_i32_1 = arith.constant 0 : i32
    return %c0_i32, %c0_i32_0 : i32, i32
  }
  func.func @transform_3(%arg0: i32) -> (i32, i32, i32) {
    %c0_i32 = arith.constant 0 : i32
    %c0_i32_0 = arith.constant 0 : i32
    %c0_i32_1 = arith.constant 0 : i32
    %c0_i32_2 = arith.constant 0 : i32
    return %c0_i32, %c0_i32_0, %c0_i32_1 : i32, i32, i32
  }
  func.func @transform_4(%arg0: i32) -> (i32, i32, i32) {
    %c2_i32 = arith.constant 2 : i32
    %c0_i32 = arith.constant 0 : i32
    %c0_i32_0 = arith.constant 0 : i32
    return %arg0, %c2_i32, %c0_i32 : i32, i32, i32
  }
  func.func @transform_5(%arg0: i32) -> (i32, i32, i32) {
    %c2_i32 = arith.constant 2 : i32
    %c0_i32 = arith.constant 0 : i32
    %c0_i32_0 = arith.constant 0 : i32
    return %arg0, %c2_i32, %c0_i32 : i32, i32, i32
  }
}

module attributes {stable_mosaic.version = 11 : i64} {
  func.func @_conv_bn_kernel(%arg0: i32, %arg1: i32, %arg2: memref<1x48x64xbf16, #tpu.memory_space<vmem>>, %arg3: memref<48x1xf32, #tpu.memory_space<vmem>>, %arg4: memref<48x1xf32, #tpu.memory_space<vmem>>, %arg5: memref<1x32x48xbf16, #tpu.memory_space<vmem>>, %arg6: memref<1x32x64xbf16, #tpu.memory_space<vmem>>) attributes {dimension_semantics = [#tpu.dimension_semantics<parallel>, #tpu.dimension_semantics<parallel>], iteration_bounds = array<i64: 2, 1>, scalar_prefetch = 0 : i64, scratch_operands = 0 : i64, tpu.core_type = #tpu.core_type<tc>, window_params = [{transform_indices = @transform_0, window_bounds = array<i64: 1, 48, 64>}, {pipeline_mode = #tpu.pipeline_mode<synchronous>, transform_indices = @transform_1, window_bounds = array<i64: 48, 1>}, {pipeline_mode = #tpu.pipeline_mode<synchronous>, transform_indices = @transform_2, window_bounds = array<i64: 48, 1>}, {pipeline_mode = #tpu.pipeline_mode<synchronous>, transform_indices = @transform_3, window_bounds = array<i64: 1, 32, 48>}, {transform_indices = @transform_4, window_bounds = array<i64: 1, 32, 64>}]} {
    %c0 = arith.constant 0 : index
    %c0_0 = arith.constant 0 : index
    %c0_1 = arith.constant 0 : index
    %0 = vector.load %arg2[%c0, %c0_0, %c0_1] : memref<1x48x64xbf16, #tpu.memory_space<vmem>>, vector<1x48x64xbf16>
    %1 = vector.shape_cast %0 : vector<1x48x64xbf16> to vector<48x64xbf16>
    %2 = arith.extf %1 : vector<48x64xbf16> to vector<48x64xf32>
    %c0_2 = arith.constant 0 : index
    %c0_3 = arith.constant 0 : index
    %3 = vector.load %arg3[%c0_2, %c0_3] : memref<48x1xf32, #tpu.memory_space<vmem>>, vector<48x1xf32>
    %4 = vector.broadcast %3 : vector<48x1xf32> to vector<48x64xf32>
    %5 = arith.mulf %2, %4 : vector<48x64xf32>
    %c0_4 = arith.constant 0 : index
    %c0_5 = arith.constant 0 : index
    %6 = vector.load %arg4[%c0_4, %c0_5] : memref<48x1xf32, #tpu.memory_space<vmem>>, vector<48x1xf32>
    %7 = vector.broadcast %6 : vector<48x1xf32> to vector<48x64xf32>
    %8 = arith.addf %5, %7 : vector<48x64xf32>
    %cst = arith.constant 0.000000e+00 : f32
    %9 = vector.broadcast %cst : f32 to vector<48x64xf32>
    %10 = arith.maximumf %8, %9 : vector<48x64xf32>
    %11 = arith.truncf %10 : vector<48x64xf32> to vector<48x64xbf16>
    %c0_6 = arith.constant 0 : index
    %c0_7 = arith.constant 0 : index
    %c0_8 = arith.constant 0 : index
    %12 = vector.load %arg5[%c0_6, %c0_7, %c0_8] : memref<1x32x48xbf16, #tpu.memory_space<vmem>>, vector<1x32x48xbf16>
    %13 = vector.shape_cast %12 : vector<1x32x48xbf16> to vector<32x48xbf16>
    %cst_9 = arith.constant dense<0.000000e+00> : vector<32x64xf32>
    %14 = tpu.matmul %13, %11, %cst_9 {dimension_numbers = #tpu.dot_dimension_numbers<[1], [0], [0], [1], [0, 0, 1, 1], [], []>} : vector<32x48xbf16>, vector<48x64xbf16>, vector<32x64xf32> -> vector<32x64xf32>
    %15 = arith.truncf %14 : vector<32x64xf32> to vector<32x64xbf16>
    %c0_10 = arith.constant 0 : index
    %c0_11 = arith.constant 0 : index
    %c0_12 = arith.constant 0 : index
    %16 = vector.load %arg6[%c0_10, %c0_11, %c0_12] : memref<1x32x64xbf16, #tpu.memory_space<vmem>>, vector<1x32x64xbf16>
    %17 = vector.shape_cast %16 : vector<1x32x64xbf16> to vector<32x64xbf16>
    %18 = vector.shape_cast %15 : vector<32x64xbf16> to vector<1x32x64xbf16>
    tpu.vector_store %arg6[%c0_10, %c0_11, %c0_12], %18 {strides = array<i32>} : memref<1x32x64xbf16, #tpu.memory_space<vmem>>, vector<1x32x64xbf16>,
    return
  }
  func.func @transform_0(%arg0: i32, %arg1: i32) -> (i32, i32, i32) {
    %c0_i32 = arith.constant 0 : i32
    %c0_i32_0 = arith.constant 0 : i32
    return %arg0, %c0_i32, %arg1 : i32, i32, i32
  }
  func.func @transform_1(%arg0: i32, %arg1: i32) -> (i32, i32) {
    %c0_i32 = arith.constant 0 : i32
    %c0_i32_0 = arith.constant 0 : i32
    %c0_i32_1 = arith.constant 0 : i32
    return %c0_i32, %c0_i32_0 : i32, i32
  }
  func.func @transform_2(%arg0: i32, %arg1: i32) -> (i32, i32) {
    %c0_i32 = arith.constant 0 : i32
    %c0_i32_0 = arith.constant 0 : i32
    %c0_i32_1 = arith.constant 0 : i32
    return %c0_i32, %c0_i32_0 : i32, i32
  }
  func.func @transform_3(%arg0: i32, %arg1: i32) -> (i32, i32, i32) {
    %c0_i32 = arith.constant 0 : i32
    %c0_i32_0 = arith.constant 0 : i32
    %c0_i32_1 = arith.constant 0 : i32
    %c0_i32_2 = arith.constant 0 : i32
    return %c0_i32, %c0_i32_0, %c0_i32_1 : i32, i32, i32
  }
  func.func @transform_4(%arg0: i32, %arg1: i32) -> (i32, i32, i32) {
    %c0_i32 = arith.constant 0 : i32
    %c0_i32_0 = arith.constant 0 : i32
    return %arg0, %c0_i32, %arg1 : i32, i32, i32
  }
}

module attributes {stable_mosaic.version = 11 : i64} {
  func.func @_conv_bn_alias_kernel(%arg0: i32, %arg1: memref<1x32x64xbf16, #tpu.memory_space<vmem>>, %arg2: memref<32x1xf32, #tpu.memory_space<vmem>>, %arg3: memref<32x1xf32, #tpu.memory_space<vmem>>, %arg4: memref<3x16x32xbf16, #tpu.memory_space<vmem>>, %arg5: memref<1x16x64xbf16, #tpu.memory_space<vmem>>, %arg6: memref<1x16x64xbf16, #tpu.memory_space<vmem>>) attributes {dimension_semantics = [#tpu.dimension_semantics<parallel>], iteration_bounds = array<i64: 2>, scalar_prefetch = 0 : i64, scratch_operands = 0 : i64, tpu.core_type = #tpu.core_type<tc>, window_params = [{transform_indices = @transform_0, window_bounds = array<i64: 1, 32, 64>}, {pipeline_mode = #tpu.pipeline_mode<synchronous>, transform_indices = @transform_1, window_bounds = array<i64: 32, 1>}, {pipeline_mode = #tpu.pipeline_mode<synchronous>, transform_indices = @transform_2, window_bounds = array<i64: 32, 1>}, {pipeline_mode = #tpu.pipeline_mode<synchronous>, transform_indices = @transform_3, window_bounds = array<i64: 3, 16, 32>}, {transform_indices = @transform_4, window_bounds = array<i64: 1, 16, 64>}, {transform_indices = @transform_5, window_bounds = array<i64: 1, 16, 64>}]} {
    %c0 = arith.constant 0 : index
    %c0_0 = arith.constant 0 : index
    %c0_1 = arith.constant 0 : index
    %0 = vector.load %arg1[%c0, %c0_0, %c0_1] : memref<1x32x64xbf16, #tpu.memory_space<vmem>>, vector<1x32x64xbf16>
    %1 = vector.shape_cast %0 : vector<1x32x64xbf16> to vector<32x64xbf16>
    %2 = arith.extf %1 : vector<32x64xbf16> to vector<32x64xf32>
    %c0_2 = arith.constant 0 : index
    %c0_3 = arith.constant 0 : index
    %3 = vector.load %arg2[%c0_2, %c0_3] : memref<32x1xf32, #tpu.memory_space<vmem>>, vector<32x1xf32>
    %4 = vector.broadcast %3 : vector<32x1xf32> to vector<32x64xf32>
    %5 = arith.mulf %2, %4 : vector<32x64xf32>
    %c0_4 = arith.constant 0 : index
    %c0_5 = arith.constant 0 : index
    %6 = vector.load %arg3[%c0_4, %c0_5] : memref<32x1xf32, #tpu.memory_space<vmem>>, vector<32x1xf32>
    %7 = vector.broadcast %6 : vector<32x1xf32> to vector<32x64xf32>
    %8 = arith.addf %5, %7 : vector<32x64xf32>
    %cst = arith.constant 0.000000e+00 : f32
    %9 = vector.broadcast %cst : f32 to vector<32x64xf32>
    %10 = arith.maximumf %8, %9 : vector<32x64xf32>
    %11 = arith.truncf %10 : vector<32x64xf32> to vector<32x64xbf16>
    %cst_6 = arith.constant 0.000000e+00 : bf16
    %12 = vector.broadcast %cst_6 : bf16 to vector<32x1xbf16>
    %cst_7 = arith.constant 0.000000e+00 : bf16
    %13 = vector.broadcast %cst_7 : bf16 to vector<32x1xbf16>
    %14 = tpu.concatenate %12, %11, %13 in 1 : vector<32x1xbf16>, vector<32x64xbf16>, vector<32x1xbf16> -> vector<32x66xbf16>
    %c0_8 = arith.constant 0 : index
    %c0_9 = arith.constant 0 : index
    %c0_10 = arith.constant 0 : index
    %15 = vector.load %arg4[%c0_8, %c0_9, %c0_10] : memref<3x16x32xbf16, #tpu.memory_space<vmem>>, vector<1x16x32xbf16>
    %16 = vector.shape_cast %15 : vector<1x16x32xbf16> to vector<16x32xbf16>
    %17 = vector.extract_strided_slice %14 {offsets = [0, 0], sizes = [32, 64], strides = [1, 1]} : vector<32x66xbf16> to vector<32x64xbf16>
    %cst_11 = arith.constant dense<0.000000e+00> : vector<16x64xf32>
    %18 = tpu.matmul %16, %17, %cst_11 {dimension_numbers = #tpu.dot_dimension_numbers<[1], [0], [0], [1], [0, 0, 1, 1], [], []>} : vector<16x32xbf16>, vector<32x64xbf16>, vector<16x64xf32> -> vector<16x64xf32>
    %c1 = arith.constant 1 : index
    %c0_12 = arith.constant 0 : index
    %c0_13 = arith.constant 0 : index
    %19 = vector.load %arg4[%c1, %c0_12, %c0_13] : memref<3x16x32xbf16, #tpu.memory_space<vmem>>, vector<1x16x32xbf16>
    %20 = vector.shape_cast %19 : vector<1x16x32xbf16> to vector<16x32xbf16>
    %21 = vector.extract_strided_slice %14 {offsets = [0, 1], sizes = [32, 64], strides = [1, 1]} : vector<32x66xbf16> to vector<32x64xbf16>
    %cst_14 = arith.constant dense<0.000000e+00> : vector<16x64xf32>
    %22 = tpu.matmul %20, %21, %cst_14 {dimension_numbers = #tpu.dot_dimension_numbers<[1], [0], [0], [1], [0, 0, 1, 1], [], []>} : vector<16x32xbf16>, vector<32x64xbf16>, vector<16x64xf32> -> vector<16x64xf32>
    %23 = arith.addf %18, %22 : vector<16x64xf32>
    %c2 = arith.constant 2 : index
    %c0_15 = arith.constant 0 : index
    %c0_16 = arith.constant 0 : index
    %24 = vector.load %arg4[%c2, %c0_15, %c0_16] : memref<3x16x32xbf16, #tpu.memory_space<vmem>>, vector<1x16x32xbf16>
    %25 = vector.shape_cast %24 : vector<1x16x32xbf16> to vector<16x32xbf16>
    %26 = vector.extract_strided_slice %14 {offsets = [0, 2], sizes = [32, 64], strides = [1, 1]} : vector<32x66xbf16> to vector<32x64xbf16>
    %cst_17 = arith.constant dense<0.000000e+00> : vector<16x64xf32>
    %27 = tpu.matmul %25, %26, %cst_17 {dimension_numbers = #tpu.dot_dimension_numbers<[1], [0], [0], [1], [0, 0, 1, 1], [], []>} : vector<16x32xbf16>, vector<32x64xbf16>, vector<16x64xf32> -> vector<16x64xf32>
    %28 = arith.addf %23, %27 : vector<16x64xf32>
    %29 = arith.truncf %28 : vector<16x64xf32> to vector<16x64xbf16>
    %c0_18 = arith.constant 0 : index
    %c0_19 = arith.constant 0 : index
    %c0_20 = arith.constant 0 : index
    %30 = vector.load %arg6[%c0_18, %c0_19, %c0_20] : memref<1x16x64xbf16, #tpu.memory_space<vmem>>, vector<1x16x64xbf16>
    %31 = vector.shape_cast %30 : vector<1x16x64xbf16> to vector<16x64xbf16>
    %32 = vector.shape_cast %29 : vector<16x64xbf16> to vector<1x16x64xbf16>
    tpu.vector_store %arg6[%c0_18, %c0_19, %c0_20], %32 {strides = array<i32>} : memref<1x16x64xbf16, #tpu.memory_space<vmem>>, vector<1x16x64xbf16>,
    return
  }
  func.func @transform_0(%arg0: i32) -> (i32, i32, i32) {
    %c0_i32 = arith.constant 0 : i32
    %c0_i32_0 = arith.constant 0 : i32
    %c0_i32_1 = arith.constant 0 : i32
    return %arg0, %c0_i32, %c0_i32_0 : i32, i32, i32
  }
  func.func @transform_1(%arg0: i32) -> (i32, i32) {
    %c0_i32 = arith.constant 0 : i32
    %c0_i32_0 = arith.constant 0 : i32
    %c0_i32_1 = arith.constant 0 : i32
    return %c0_i32, %c0_i32_0 : i32, i32
  }
  func.func @transform_2(%arg0: i32) -> (i32, i32) {
    %c0_i32 = arith.constant 0 : i32
    %c0_i32_0 = arith.constant 0 : i32
    %c0_i32_1 = arith.constant 0 : i32
    return %c0_i32, %c0_i32_0 : i32, i32
  }
  func.func @transform_3(%arg0: i32) -> (i32, i32, i32) {
    %c0_i32 = arith.constant 0 : i32
    %c0_i32_0 = arith.constant 0 : i32
    %c0_i32_1 = arith.constant 0 : i32
    %c0_i32_2 = arith.constant 0 : i32
    return %c0_i32, %c0_i32_0, %c0_i32_1 : i32, i32, i32
  }
  func.func @transform_4(%arg0: i32) -> (i32, i32, i32) {
    %c3_i32 = arith.constant 3 : i32
    %c0_i32 = arith.constant 0 : i32
    %c0_i32_0 = arith.constant 0 : i32
    return %arg0, %c3_i32, %c0_i32 : i32, i32, i32
  }
  func.func @transform_5(%arg0: i32) -> (i32, i32, i32) {
    %c3_i32 = arith.constant 3 : i32
    %c0_i32 = arith.constant 0 : i32
    %c0_i32_0 = arith.constant 0 : i32
    return %arg0, %c3_i32, %c0_i32 : i32, i32, i32
  }
}

module attributes {stable_mosaic.version = 11 : i64} {
  func.func @_conv_bn_kernel(%arg0: i32, %arg1: i32, %arg2: memref<1x64x64xbf16, #tpu.memory_space<vmem>>, %arg3: memref<64x1xf32, #tpu.memory_space<vmem>>, %arg4: memref<64x1xf32, #tpu.memory_space<vmem>>, %arg5: memref<1x32x64xbf16, #tpu.memory_space<vmem>>, %arg6: memref<1x32x64xbf16, #tpu.memory_space<vmem>>) attributes {dimension_semantics = [#tpu.dimension_semantics<parallel>, #tpu.dimension_semantics<parallel>], iteration_bounds = array<i64: 2, 1>, scalar_prefetch = 0 : i64, scratch_operands = 0 : i64, tpu.core_type = #tpu.core_type<tc>, window_params = [{transform_indices = @transform_0, window_bounds = array<i64: 1, 64, 64>}, {pipeline_mode = #tpu.pipeline_mode<synchronous>, transform_indices = @transform_1, window_bounds = array<i64: 64, 1>}, {pipeline_mode = #tpu.pipeline_mode<synchronous>, transform_indices = @transform_2, window_bounds = array<i64: 64, 1>}, {pipeline_mode = #tpu.pipeline_mode<synchronous>, transform_indices = @transform_3, window_bounds = array<i64: 1, 32, 64>}, {transform_indices = @transform_4, window_bounds = array<i64: 1, 32, 64>}]} {
    %c0 = arith.constant 0 : index
    %c0_0 = arith.constant 0 : index
    %c0_1 = arith.constant 0 : index
    %0 = vector.load %arg2[%c0, %c0_0, %c0_1] : memref<1x64x64xbf16, #tpu.memory_space<vmem>>, vector<1x64x64xbf16>
    %1 = vector.shape_cast %0 : vector<1x64x64xbf16> to vector<64x64xbf16>
    %2 = arith.extf %1 : vector<64x64xbf16> to vector<64x64xf32>
    %c0_2 = arith.constant 0 : index
    %c0_3 = arith.constant 0 : index
    %3 = vector.load %arg3[%c0_2, %c0_3] : memref<64x1xf32, #tpu.memory_space<vmem>>, vector<64x1xf32>
    %4 = vector.broadcast %3 : vector<64x1xf32> to vector<64x64xf32>
    %5 = arith.mulf %2, %4 : vector<64x64xf32>
    %c0_4 = arith.constant 0 : index
    %c0_5 = arith.constant 0 : index
    %6 = vector.load %arg4[%c0_4, %c0_5] : memref<64x1xf32, #tpu.memory_space<vmem>>, vector<64x1xf32>
    %7 = vector.broadcast %6 : vector<64x1xf32> to vector<64x64xf32>
    %8 = arith.addf %5, %7 : vector<64x64xf32>
    %cst = arith.constant 0.000000e+00 : f32
    %9 = vector.broadcast %cst : f32 to vector<64x64xf32>
    %10 = arith.maximumf %8, %9 : vector<64x64xf32>
    %11 = arith.truncf %10 : vector<64x64xf32> to vector<64x64xbf16>
    %c0_6 = arith.constant 0 : index
    %c0_7 = arith.constant 0 : index
    %c0_8 = arith.constant 0 : index
    %12 = vector.load %arg5[%c0_6, %c0_7, %c0_8] : memref<1x32x64xbf16, #tpu.memory_space<vmem>>, vector<1x32x64xbf16>
    %13 = vector.shape_cast %12 : vector<1x32x64xbf16> to vector<32x64xbf16>
    %cst_9 = arith.constant dense<0.000000e+00> : vector<32x64xf32>
    %14 = tpu.matmul %13, %11, %cst_9 {dimension_numbers = #tpu.dot_dimension_numbers<[1], [0], [0], [1], [0, 0, 1, 1], [], []>} : vector<32x64xbf16>, vector<64x64xbf16>, vector<32x64xf32> -> vector<32x64xf32>
    %15 = arith.truncf %14 : vector<32x64xf32> to vector<32x64xbf16>
    %c0_10 = arith.constant 0 : index
    %c0_11 = arith.constant 0 : index
    %c0_12 = arith.constant 0 : index
    %16 = vector.load %arg6[%c0_10, %c0_11, %c0_12] : memref<1x32x64xbf16, #tpu.memory_space<vmem>>, vector<1x32x64xbf16>
    %17 = vector.shape_cast %16 : vector<1x32x64xbf16> to vector<32x64xbf16>
    %18 = vector.shape_cast %15 : vector<32x64xbf16> to vector<1x32x64xbf16>
    tpu.vector_store %arg6[%c0_10, %c0_11, %c0_12], %18 {strides = array<i32>} : memref<1x32x64xbf16, #tpu.memory_space<vmem>>, vector<1x32x64xbf16>,
    return
  }
  func.func @transform_0(%arg0: i32, %arg1: i32) -> (i32, i32, i32) {
    %c0_i32 = arith.constant 0 : i32
    %c0_i32_0 = arith.constant 0 : i32
    return %arg0, %c0_i32, %arg1 : i32, i32, i32
  }
  func.func @transform_1(%arg0: i32, %arg1: i32) -> (i32, i32) {
    %c0_i32 = arith.constant 0 : i32
    %c0_i32_0 = arith.constant 0 : i32
    %c0_i32_1 = arith.constant 0 : i32
    return %c0_i32, %c0_i32_0 : i32, i32
  }
  func.func @transform_2(%arg0: i32, %arg1: i32) -> (i32, i32) {
    %c0_i32 = arith.constant 0 : i32
    %c0_i32_0 = arith.constant 0 : i32
    %c0_i32_1 = arith.constant 0 : i32
    return %c0_i32, %c0_i32_0 : i32, i32
  }
  func.func @transform_3(%arg0: i32, %arg1: i32) -> (i32, i32, i32) {
    %c0_i32 = arith.constant 0 : i32
    %c0_i32_0 = arith.constant 0 : i32
    %c0_i32_1 = arith.constant 0 : i32
    %c0_i32_2 = arith.constant 0 : i32
    return %c0_i32, %c0_i32_0, %c0_i32_1 : i32, i32, i32
  }
  func.func @transform_4(%arg0: i32, %arg1: i32) -> (i32, i32, i32) {
    %c0_i32 = arith.constant 0 : i32
    %c0_i32_0 = arith.constant 0 : i32
    return %arg0, %c0_i32, %arg1 : i32, i32, i32
  }
}

module attributes {stable_mosaic.version = 11 : i64} {
  func.func @_conv_bn_alias_kernel(%arg0: i32, %arg1: memref<1x32x32xbf16, #tpu.memory_space<vmem>>, %arg2: memref<32x1xf32, #tpu.memory_space<vmem>>, %arg3: memref<32x1xf32, #tpu.memory_space<vmem>>, %arg4: memref<3x16x32xbf16, #tpu.memory_space<vmem>>, %arg5: memref<1x16x32xbf16, #tpu.memory_space<vmem>>, %arg6: memref<1x16x32xbf16, #tpu.memory_space<vmem>>) attributes {dimension_semantics = [#tpu.dimension_semantics<parallel>], iteration_bounds = array<i64: 2>, scalar_prefetch = 0 : i64, scratch_operands = 0 : i64, tpu.core_type = #tpu.core_type<tc>, window_params = [{transform_indices = @transform_0, window_bounds = array<i64: 1, 32, 32>}, {pipeline_mode = #tpu.pipeline_mode<synchronous>, transform_indices = @transform_1, window_bounds = array<i64: 32, 1>}, {pipeline_mode = #tpu.pipeline_mode<synchronous>, transform_indices = @transform_2, window_bounds = array<i64: 32, 1>}, {pipeline_mode = #tpu.pipeline_mode<synchronous>, transform_indices = @transform_3, window_bounds = array<i64: 3, 16, 32>}, {transform_indices = @transform_4, window_bounds = array<i64: 1, 16, 32>}, {transform_indices = @transform_5, window_bounds = array<i64: 1, 16, 32>}]} {
    %c0 = arith.constant 0 : index
    %c0_0 = arith.constant 0 : index
    %c0_1 = arith.constant 0 : index
    %0 = vector.load %arg1[%c0, %c0_0, %c0_1] : memref<1x32x32xbf16, #tpu.memory_space<vmem>>, vector<1x32x32xbf16>
    %1 = vector.shape_cast %0 : vector<1x32x32xbf16> to vector<32x32xbf16>
    %2 = arith.extf %1 : vector<32x32xbf16> to vector<32x32xf32>
    %c0_2 = arith.constant 0 : index
    %c0_3 = arith.constant 0 : index
    %3 = vector.load %arg2[%c0_2, %c0_3] : memref<32x1xf32, #tpu.memory_space<vmem>>, vector<32x1xf32>
    %4 = vector.broadcast %3 : vector<32x1xf32> to vector<32x32xf32>
    %5 = arith.mulf %2, %4 : vector<32x32xf32>
    %c0_4 = arith.constant 0 : index
    %c0_5 = arith.constant 0 : index
    %6 = vector.load %arg3[%c0_4, %c0_5] : memref<32x1xf32, #tpu.memory_space<vmem>>, vector<32x1xf32>
    %7 = vector.broadcast %6 : vector<32x1xf32> to vector<32x32xf32>
    %8 = arith.addf %5, %7 : vector<32x32xf32>
    %cst = arith.constant 0.000000e+00 : f32
    %9 = vector.broadcast %cst : f32 to vector<32x32xf32>
    %10 = arith.maximumf %8, %9 : vector<32x32xf32>
    %11 = arith.truncf %10 : vector<32x32xf32> to vector<32x32xbf16>
    %cst_6 = arith.constant 0.000000e+00 : bf16
    %12 = vector.broadcast %cst_6 : bf16 to vector<32x1xbf16>
    %cst_7 = arith.constant 0.000000e+00 : bf16
    %13 = vector.broadcast %cst_7 : bf16 to vector<32x1xbf16>
    %14 = tpu.concatenate %12, %11, %13 in 1 : vector<32x1xbf16>, vector<32x32xbf16>, vector<32x1xbf16> -> vector<32x34xbf16>
    %c0_8 = arith.constant 0 : index
    %c0_9 = arith.constant 0 : index
    %c0_10 = arith.constant 0 : index
    %15 = vector.load %arg4[%c0_8, %c0_9, %c0_10] : memref<3x16x32xbf16, #tpu.memory_space<vmem>>, vector<1x16x32xbf16>
    %16 = vector.shape_cast %15 : vector<1x16x32xbf16> to vector<16x32xbf16>
    %17 = vector.extract_strided_slice %14 {offsets = [0, 0], sizes = [32, 32], strides = [1, 1]} : vector<32x34xbf16> to vector<32x32xbf16>
    %cst_11 = arith.constant dense<0.000000e+00> : vector<16x32xf32>
    %18 = tpu.matmul %16, %17, %cst_11 {dimension_numbers = #tpu.dot_dimension_numbers<[1], [0], [0], [1], [0, 0, 1, 1], [], []>} : vector<16x32xbf16>, vector<32x32xbf16>, vector<16x32xf32> -> vector<16x32xf32>
    %c1 = arith.constant 1 : index
    %c0_12 = arith.constant 0 : index
    %c0_13 = arith.constant 0 : index
    %19 = vector.load %arg4[%c1, %c0_12, %c0_13] : memref<3x16x32xbf16, #tpu.memory_space<vmem>>, vector<1x16x32xbf16>
    %20 = vector.shape_cast %19 : vector<1x16x32xbf16> to vector<16x32xbf16>
    %21 = vector.extract_strided_slice %14 {offsets = [0, 1], sizes = [32, 32], strides = [1, 1]} : vector<32x34xbf16> to vector<32x32xbf16>
    %cst_14 = arith.constant dense<0.000000e+00> : vector<16x32xf32>
    %22 = tpu.matmul %20, %21, %cst_14 {dimension_numbers = #tpu.dot_dimension_numbers<[1], [0], [0], [1], [0, 0, 1, 1], [], []>} : vector<16x32xbf16>, vector<32x32xbf16>, vector<16x32xf32> -> vector<16x32xf32>
    %23 = arith.addf %18, %22 : vector<16x32xf32>
    %c2 = arith.constant 2 : index
    %c0_15 = arith.constant 0 : index
    %c0_16 = arith.constant 0 : index
    %24 = vector.load %arg4[%c2, %c0_15, %c0_16] : memref<3x16x32xbf16, #tpu.memory_space<vmem>>, vector<1x16x32xbf16>
    %25 = vector.shape_cast %24 : vector<1x16x32xbf16> to vector<16x32xbf16>
    %26 = vector.extract_strided_slice %14 {offsets = [0, 2], sizes = [32, 32], strides = [1, 1]} : vector<32x34xbf16> to vector<32x32xbf16>
    %cst_17 = arith.constant dense<0.000000e+00> : vector<16x32xf32>
    %27 = tpu.matmul %25, %26, %cst_17 {dimension_numbers = #tpu.dot_dimension_numbers<[1], [0], [0], [1], [0, 0, 1, 1], [], []>} : vector<16x32xbf16>, vector<32x32xbf16>, vector<16x32xf32> -> vector<16x32xf32>
    %28 = arith.addf %23, %27 : vector<16x32xf32>
    %29 = arith.truncf %28 : vector<16x32xf32> to vector<16x32xbf16>
    %c0_18 = arith.constant 0 : index
    %c0_19 = arith.constant 0 : index
    %c0_20 = arith.constant 0 : index
    %30 = vector.load %arg6[%c0_18, %c0_19, %c0_20] : memref<1x16x32xbf16, #tpu.memory_space<vmem>>, vector<1x16x32xbf16>
    %31 = vector.shape_cast %30 : vector<1x16x32xbf16> to vector<16x32xbf16>
    %32 = vector.shape_cast %29 : vector<16x32xbf16> to vector<1x16x32xbf16>
    tpu.vector_store %arg6[%c0_18, %c0_19, %c0_20], %32 {strides = array<i32>} : memref<1x16x32xbf16, #tpu.memory_space<vmem>>, vector<1x16x32xbf16>,
    return
  }
  func.func @transform_0(%arg0: i32) -> (i32, i32, i32) {
    %c0_i32 = arith.constant 0 : i32
    %c0_i32_0 = arith.constant 0 : i32
    %c0_i32_1 = arith.constant 0 : i32
    return %arg0, %c0_i32, %c0_i32_0 : i32, i32, i32
  }
  func.func @transform_1(%arg0: i32) -> (i32, i32) {
    %c0_i32 = arith.constant 0 : i32
    %c0_i32_0 = arith.constant 0 : i32
    %c0_i32_1 = arith.constant 0 : i32
    return %c0_i32, %c0_i32_0 : i32, i32
  }
  func.func @transform_2(%arg0: i32) -> (i32, i32) {
    %c0_i32 = arith.constant 0 : i32
    %c0_i32_0 = arith.constant 0 : i32
    %c0_i32_1 = arith.constant 0 : i32
    return %c0_i32, %c0_i32_0 : i32, i32
  }
  func.func @transform_3(%arg0: i32) -> (i32, i32, i32) {
    %c0_i32 = arith.constant 0 : i32
    %c0_i32_0 = arith.constant 0 : i32
    %c0_i32_1 = arith.constant 0 : i32
    %c0_i32_2 = arith.constant 0 : i32
    return %c0_i32, %c0_i32_0, %c0_i32_1 : i32, i32, i32
  }
  func.func @transform_4(%arg0: i32) -> (i32, i32, i32) {
    %c2_i32 = arith.constant 2 : i32
    %c0_i32 = arith.constant 0 : i32
    %c0_i32_0 = arith.constant 0 : i32
    return %arg0, %c2_i32, %c0_i32 : i32, i32, i32
  }
  func.func @transform_5(%arg0: i32) -> (i32, i32, i32) {
    %c2_i32 = arith.constant 2 : i32
    %c0_i32 = arith.constant 0 : i32
    %c0_i32_0 = arith.constant 0 : i32
    return %arg0, %c2_i32, %c0_i32 : i32, i32, i32
  }
}

module attributes {stable_mosaic.version = 11 : i64} {
  func.func @_conv_bn_kernel(%arg0: i32, %arg1: i32, %arg2: memref<1x32x32xbf16, #tpu.memory_space<vmem>>, %arg3: memref<32x1xf32, #tpu.memory_space<vmem>>, %arg4: memref<32x1xf32, #tpu.memory_space<vmem>>, %arg5: memref<1x32x32xbf16, #tpu.memory_space<vmem>>, %arg6: memref<1x32x32xbf16, #tpu.memory_space<vmem>>) attributes {dimension_semantics = [#tpu.dimension_semantics<parallel>, #tpu.dimension_semantics<parallel>], iteration_bounds = array<i64: 2, 1>, scalar_prefetch = 0 : i64, scratch_operands = 0 : i64, tpu.core_type = #tpu.core_type<tc>, window_params = [{transform_indices = @transform_0, window_bounds = array<i64: 1, 32, 32>}, {pipeline_mode = #tpu.pipeline_mode<synchronous>, transform_indices = @transform_1, window_bounds = array<i64: 32, 1>}, {pipeline_mode = #tpu.pipeline_mode<synchronous>, transform_indices = @transform_2, window_bounds = array<i64: 32, 1>}, {pipeline_mode = #tpu.pipeline_mode<synchronous>, transform_indices = @transform_3, window_bounds = array<i64: 1, 32, 32>}, {transform_indices = @transform_4, window_bounds = array<i64: 1, 32, 32>}]} {
    %c0 = arith.constant 0 : index
    %c0_0 = arith.constant 0 : index
    %c0_1 = arith.constant 0 : index
    %0 = vector.load %arg2[%c0, %c0_0, %c0_1] : memref<1x32x32xbf16, #tpu.memory_space<vmem>>, vector<1x32x32xbf16>
    %1 = vector.shape_cast %0 : vector<1x32x32xbf16> to vector<32x32xbf16>
    %2 = arith.extf %1 : vector<32x32xbf16> to vector<32x32xf32>
    %c0_2 = arith.constant 0 : index
    %c0_3 = arith.constant 0 : index
    %3 = vector.load %arg3[%c0_2, %c0_3] : memref<32x1xf32, #tpu.memory_space<vmem>>, vector<32x1xf32>
    %4 = vector.broadcast %3 : vector<32x1xf32> to vector<32x32xf32>
    %5 = arith.mulf %2, %4 : vector<32x32xf32>
    %c0_4 = arith.constant 0 : index
    %c0_5 = arith.constant 0 : index
    %6 = vector.load %arg4[%c0_4, %c0_5] : memref<32x1xf32, #tpu.memory_space<vmem>>, vector<32x1xf32>
    %7 = vector.broadcast %6 : vector<32x1xf32> to vector<32x32xf32>
    %8 = arith.addf %5, %7 : vector<32x32xf32>
    %cst = arith.constant 0.000000e+00 : f32
    %9 = vector.broadcast %cst : f32 to vector<32x32xf32>
    %10 = arith.maximumf %8, %9 : vector<32x32xf32>
    %11 = arith.truncf %10 : vector<32x32xf32> to vector<32x32xbf16>
    %c0_6 = arith.constant 0 : index
    %c0_7 = arith.constant 0 : index
    %c0_8 = arith.constant 0 : index
    %12 = vector.load %arg5[%c0_6, %c0_7, %c0_8] : memref<1x32x32xbf16, #tpu.memory_space<vmem>>, vector<1x32x32xbf16>
    %13 = vector.shape_cast %12 : vector<1x32x32xbf16> to vector<32x32xbf16>
    %cst_9 = arith.constant dense<0.000000e+00> : vector<32x32xf32>
    %14 = tpu.matmul %13, %11, %cst_9 {dimension_numbers = #tpu.dot_dimension_numbers<[1], [0], [0], [1], [0, 0, 1, 1], [], []>} : vector<32x32xbf16>, vector<32x32xbf16>, vector<32x32xf32> -> vector<32x32xf32>
    %15 = arith.truncf %14 : vector<32x32xf32> to vector<32x32xbf16>
    %c0_10 = arith.constant 0 : index
    %c0_11 = arith.constant 0 : index
    %c0_12 = arith.constant 0 : index
    %16 = vector.load %arg6[%c0_10, %c0_11, %c0_12] : memref<1x32x32xbf16, #tpu.memory_space<vmem>>, vector<1x32x32xbf16>
    %17 = vector.shape_cast %16 : vector<1x32x32xbf16> to vector<32x32xbf16>
    %18 = vector.shape_cast %15 : vector<32x32xbf16> to vector<1x32x32xbf16>
    tpu.vector_store %arg6[%c0_10, %c0_11, %c0_12], %18 {strides = array<i32>} : memref<1x32x32xbf16, #tpu.memory_space<vmem>>, vector<1x32x32xbf16>,
    return
  }
  func.func @transform_0(%arg0: i32, %arg1: i32) -> (i32, i32, i32) {
    %c0_i32 = arith.constant 0 : i32
    %c0_i32_0 = arith.constant 0 : i32
    return %arg0, %c0_i32, %arg1 : i32, i32, i32
  }
  func.func @transform_1(%arg0: i32, %arg1: i32) -> (i32, i32) {
    %c0_i32 = arith.constant 0 : i32
    %c0_i32_0 = arith.constant 0 : i32
    %c0_i32_1 = arith.constant 0 : i32
    return %c0_i32, %c0_i32_0 : i32, i32
  }
  func.func @transform_2(%arg0: i32, %arg1: i32) -> (i32, i32) {
    %c0_i32 = arith.constant 0 : i32
    %c0_i32_0 = arith.constant 0 : i32
    %c0_i32_1 = arith.constant 0 : i32
    return %c0_i32, %c0_i32_0 : i32, i32
  }
  func.func @transform_3(%arg0: i32, %arg1: i32) -> (i32, i32, i32) {
    %c0_i32 = arith.constant 0 : i32
    %c0_i32_0 = arith.constant 0 : i32
    %c0_i32_1 = arith.constant 0 : i32
    %c0_i32_2 = arith.constant 0 : i32
    return %c0_i32, %c0_i32_0, %c0_i32_1 : i32, i32, i32
  }
  func.func @transform_4(%arg0: i32, %arg1: i32) -> (i32, i32, i32) {
    %c0_i32 = arith.constant 0 : i32
    %c0_i32_0 = arith.constant 0 : i32
    return %arg0, %c0_i32, %arg1 : i32, i32, i32
  }
}

module attributes {stable_mosaic.version = 11 : i64} {
  func.func @_avgpool_kernel(%arg0: i32, %arg1: i32, %arg2: memref<1x32x32xbf16, #tpu.memory_space<vmem>>, %arg3: memref<1x32x32xbf16, #tpu.memory_space<vmem>>, %arg4: memref<1x32x32xbf16, #tpu.memory_space<vmem>>) attributes {dimension_semantics = [#tpu.dimension_semantics<parallel>, #tpu.dimension_semantics<parallel>], iteration_bounds = array<i64: 2, 1>, scalar_prefetch = 0 : i64, scratch_operands = 0 : i64, tpu.core_type = #tpu.core_type<tc>, window_params = [{transform_indices = @transform_0, window_bounds = array<i64: 1, 32, 32>}, {transform_indices = @transform_1, window_bounds = array<i64: 1, 32, 32>}, {transform_indices = @transform_2, window_bounds = array<i64: 1, 32, 32>}]} {
    %c0 = arith.constant 0 : index
    %c0_0 = arith.constant 0 : index
    %c0_1 = arith.constant 0 : index
    %0 = vector.load %arg2[%c0, %c0_0, %c0_1] : memref<1x32x32xbf16, #tpu.memory_space<vmem>>, vector<1x32x32xbf16>
    %1 = vector.shape_cast %0 : vector<1x32x32xbf16> to vector<32x32xbf16>
    %2 = arith.extf %1 : vector<32x32xbf16> to vector<32x32xf32>
    %c0_2 = arith.constant 0 : index
    %c0_3 = arith.constant 0 : index
    %c0_4 = arith.constant 0 : index
    %3 = vector.load %arg3[%c0_2, %c0_3, %c0_4] : memref<1x32x32xbf16, #tpu.memory_space<vmem>>, vector<1x32x32xbf16>
    %4 = vector.shape_cast %3 : vector<1x32x32xbf16> to vector<32x32xbf16>
    %5 = arith.extf %4 : vector<32x32xbf16> to vector<32x32xf32>
    %6 = arith.addf %2, %5 : vector<32x32xf32>
    %cst = arith.constant 5.000000e-01 : f32
    %7 = vector.broadcast %cst : f32 to vector<32x32xf32>
    %8 = arith.mulf %7, %6 : vector<32x32xf32>
    %9 = arith.truncf %8 : vector<32x32xf32> to vector<32x32xbf16>
    %c0_5 = arith.constant 0 : index
    %c0_6 = arith.constant 0 : index
    %c0_7 = arith.constant 0 : index
    %10 = vector.load %arg4[%c0_5, %c0_6, %c0_7] : memref<1x32x32xbf16, #tpu.memory_space<vmem>>, vector<1x32x32xbf16>
    %11 = vector.shape_cast %10 : vector<1x32x32xbf16> to vector<32x32xbf16>
    %12 = vector.shape_cast %9 : vector<32x32xbf16> to vector<1x32x32xbf16>
    tpu.vector_store %arg4[%c0_5, %c0_6, %c0_7], %12 {strides = array<i32>} : memref<1x32x32xbf16, #tpu.memory_space<vmem>>, vector<1x32x32xbf16>,
    return
  }
  func.func @transform_0(%arg0: i32, %arg1: i32) -> (i32, i32, i32) {
    %c0_i32 = arith.constant 0 : i32
    %c0_i32_0 = arith.constant 0 : i32
    return %arg0, %c0_i32, %arg1 : i32, i32, i32
  }
  func.func @transform_1(%arg0: i32, %arg1: i32) -> (i32, i32, i32) {
    %c0_i32 = arith.constant 0 : i32
    %c0_i32_0 = arith.constant 0 : i32
    return %arg0, %c0_i32, %arg1 : i32, i32, i32
  }
  func.func @transform_2(%arg0: i32, %arg1: i32) -> (i32, i32, i32) {
    %c0_i32 = arith.constant 0 : i32
    %c0_i32_0 = arith.constant 0 : i32
    return %arg0, %c0_i32, %arg1 : i32, i32, i32
  }
}

module attributes {stable_mosaic.version = 11 : i64} {
  func.func @_conv_bn_kernel(%arg0: i32, %arg1: i32, %arg2: memref<1x48x32xbf16, #tpu.memory_space<vmem>>, %arg3: memref<48x1xf32, #tpu.memory_space<vmem>>, %arg4: memref<48x1xf32, #tpu.memory_space<vmem>>, %arg5: memref<1x32x48xbf16, #tpu.memory_space<vmem>>, %arg6: memref<1x32x32xbf16, #tpu.memory_space<vmem>>) attributes {dimension_semantics = [#tpu.dimension_semantics<parallel>, #tpu.dimension_semantics<parallel>], iteration_bounds = array<i64: 2, 1>, scalar_prefetch = 0 : i64, scratch_operands = 0 : i64, tpu.core_type = #tpu.core_type<tc>, window_params = [{transform_indices = @transform_0, window_bounds = array<i64: 1, 48, 32>}, {pipeline_mode = #tpu.pipeline_mode<synchronous>, transform_indices = @transform_1, window_bounds = array<i64: 48, 1>}, {pipeline_mode = #tpu.pipeline_mode<synchronous>, transform_indices = @transform_2, window_bounds = array<i64: 48, 1>}, {pipeline_mode = #tpu.pipeline_mode<synchronous>, transform_indices = @transform_3, window_bounds = array<i64: 1, 32, 48>}, {transform_indices = @transform_4, window_bounds = array<i64: 1, 32, 32>}]} {
    %c0 = arith.constant 0 : index
    %c0_0 = arith.constant 0 : index
    %c0_1 = arith.constant 0 : index
    %0 = vector.load %arg2[%c0, %c0_0, %c0_1] : memref<1x48x32xbf16, #tpu.memory_space<vmem>>, vector<1x48x32xbf16>
    %1 = vector.shape_cast %0 : vector<1x48x32xbf16> to vector<48x32xbf16>
    %2 = arith.extf %1 : vector<48x32xbf16> to vector<48x32xf32>
    %c0_2 = arith.constant 0 : index
    %c0_3 = arith.constant 0 : index
    %3 = vector.load %arg3[%c0_2, %c0_3] : memref<48x1xf32, #tpu.memory_space<vmem>>, vector<48x1xf32>
    %4 = vector.broadcast %3 : vector<48x1xf32> to vector<48x32xf32>
    %5 = arith.mulf %2, %4 : vector<48x32xf32>
    %c0_4 = arith.constant 0 : index
    %c0_5 = arith.constant 0 : index
    %6 = vector.load %arg4[%c0_4, %c0_5] : memref<48x1xf32, #tpu.memory_space<vmem>>, vector<48x1xf32>
    %7 = vector.broadcast %6 : vector<48x1xf32> to vector<48x32xf32>
    %8 = arith.addf %5, %7 : vector<48x32xf32>
    %cst = arith.constant 0.000000e+00 : f32
    %9 = vector.broadcast %cst : f32 to vector<48x32xf32>
    %10 = arith.maximumf %8, %9 : vector<48x32xf32>
    %11 = arith.truncf %10 : vector<48x32xf32> to vector<48x32xbf16>
    %c0_6 = arith.constant 0 : index
    %c0_7 = arith.constant 0 : index
    %c0_8 = arith.constant 0 : index
    %12 = vector.load %arg5[%c0_6, %c0_7, %c0_8] : memref<1x32x48xbf16, #tpu.memory_space<vmem>>, vector<1x32x48xbf16>
    %13 = vector.shape_cast %12 : vector<1x32x48xbf16> to vector<32x48xbf16>
    %cst_9 = arith.constant dense<0.000000e+00> : vector<32x32xf32>
    %14 = tpu.matmul %13, %11, %cst_9 {dimension_numbers = #tpu.dot_dimension_numbers<[1], [0], [0], [1], [0, 0, 1, 1], [], []>} : vector<32x48xbf16>, vector<48x32xbf16>, vector<32x32xf32> -> vector<32x32xf32>
    %15 = arith.truncf %14 : vector<32x32xf32> to vector<32x32xbf16>
    %c0_10 = arith.constant 0 : index
    %c0_11 = arith.constant 0 : index
    %c0_12 = arith.constant 0 : index
    %16 = vector.load %arg6[%c0_10, %c0_11, %c0_12] : memref<1x32x32xbf16, #tpu.memory_space<vmem>>, vector<1x32x32xbf16>
    %17 = vector.shape_cast %16 : vector<1x32x32xbf16> to vector<32x32xbf16>
    %18 = vector.shape_cast %15 : vector<32x32xbf16> to vector<1x32x32xbf16>
    tpu.vector_store %arg6[%c0_10, %c0_11, %c0_12], %18 {strides = array<i32>} : memref<1x32x32xbf16, #tpu.memory_space<vmem>>, vector<1x32x32xbf16>,
    return
  }
  func.func @transform_0(%arg0: i32, %arg1: i32) -> (i32, i32, i32) {
    %c0_i32 = arith.constant 0 : i32
    %c0_i32_0 = arith.constant 0 : i32
    return %arg0, %c0_i32, %arg1 : i32, i32, i32
  }
  func.func @transform_1(%arg0: i32, %arg1: i32) -> (i32, i32) {
    %c0_i32 = arith.constant 0 : i32
    %c0_i32_0 = arith.constant 0 : i32
    %c0_i32_1 = arith.constant 0 : i32
    return %c0_i32, %c0_i32_0 : i32, i32
  }
  func.func @transform_2(%arg0: i32, %arg1: i32) -> (i32, i32) {
    %c0_i32 = arith.constant 0 : i32
    %c0_i32_0 = arith.constant 0 : i32
    %c0_i32_1 = arith.constant 0 : i32
    return %c0_i32, %c0_i32_0 : i32, i32
  }
  func.func @transform_3(%arg0: i32, %arg1: i32) -> (i32, i32, i32) {
    %c0_i32 = arith.constant 0 : i32
    %c0_i32_0 = arith.constant 0 : i32
    %c0_i32_1 = arith.constant 0 : i32
    %c0_i32_2 = arith.constant 0 : i32
    return %c0_i32, %c0_i32_0, %c0_i32_1 : i32, i32, i32
  }
  func.func @transform_4(%arg0: i32, %arg1: i32) -> (i32, i32, i32) {
    %c0_i32 = arith.constant 0 : i32
    %c0_i32_0 = arith.constant 0 : i32
    return %arg0, %c0_i32, %arg1 : i32, i32, i32
  }
}

module attributes {stable_mosaic.version = 11 : i64} {
  func.func @_conv_bn_alias_kernel(%arg0: i32, %arg1: memref<1x32x32xbf16, #tpu.memory_space<vmem>>, %arg2: memref<32x1xf32, #tpu.memory_space<vmem>>, %arg3: memref<32x1xf32, #tpu.memory_space<vmem>>, %arg4: memref<3x16x32xbf16, #tpu.memory_space<vmem>>, %arg5: memref<1x16x32xbf16, #tpu.memory_space<vmem>>, %arg6: memref<1x16x32xbf16, #tpu.memory_space<vmem>>) attributes {dimension_semantics = [#tpu.dimension_semantics<parallel>], iteration_bounds = array<i64: 2>, scalar_prefetch = 0 : i64, scratch_operands = 0 : i64, tpu.core_type = #tpu.core_type<tc>, window_params = [{transform_indices = @transform_0, window_bounds = array<i64: 1, 32, 32>}, {pipeline_mode = #tpu.pipeline_mode<synchronous>, transform_indices = @transform_1, window_bounds = array<i64: 32, 1>}, {pipeline_mode = #tpu.pipeline_mode<synchronous>, transform_indices = @transform_2, window_bounds = array<i64: 32, 1>}, {pipeline_mode = #tpu.pipeline_mode<synchronous>, transform_indices = @transform_3, window_bounds = array<i64: 3, 16, 32>}, {transform_indices = @transform_4, window_bounds = array<i64: 1, 16, 32>}, {transform_indices = @transform_5, window_bounds = array<i64: 1, 16, 32>}]} {
    %c0 = arith.constant 0 : index
    %c0_0 = arith.constant 0 : index
    %c0_1 = arith.constant 0 : index
    %0 = vector.load %arg1[%c0, %c0_0, %c0_1] : memref<1x32x32xbf16, #tpu.memory_space<vmem>>, vector<1x32x32xbf16>
    %1 = vector.shape_cast %0 : vector<1x32x32xbf16> to vector<32x32xbf16>
    %2 = arith.extf %1 : vector<32x32xbf16> to vector<32x32xf32>
    %c0_2 = arith.constant 0 : index
    %c0_3 = arith.constant 0 : index
    %3 = vector.load %arg2[%c0_2, %c0_3] : memref<32x1xf32, #tpu.memory_space<vmem>>, vector<32x1xf32>
    %4 = vector.broadcast %3 : vector<32x1xf32> to vector<32x32xf32>
    %5 = arith.mulf %2, %4 : vector<32x32xf32>
    %c0_4 = arith.constant 0 : index
    %c0_5 = arith.constant 0 : index
    %6 = vector.load %arg3[%c0_4, %c0_5] : memref<32x1xf32, #tpu.memory_space<vmem>>, vector<32x1xf32>
    %7 = vector.broadcast %6 : vector<32x1xf32> to vector<32x32xf32>
    %8 = arith.addf %5, %7 : vector<32x32xf32>
    %cst = arith.constant 0.000000e+00 : f32
    %9 = vector.broadcast %cst : f32 to vector<32x32xf32>
    %10 = arith.maximumf %8, %9 : vector<32x32xf32>
    %11 = arith.truncf %10 : vector<32x32xf32> to vector<32x32xbf16>
    %cst_6 = arith.constant 0.000000e+00 : bf16
    %12 = vector.broadcast %cst_6 : bf16 to vector<32x1xbf16>
    %cst_7 = arith.constant 0.000000e+00 : bf16
    %13 = vector.broadcast %cst_7 : bf16 to vector<32x1xbf16>
    %14 = tpu.concatenate %12, %11, %13 in 1 : vector<32x1xbf16>, vector<32x32xbf16>, vector<32x1xbf16> -> vector<32x34xbf16>
    %c0_8 = arith.constant 0 : index
    %c0_9 = arith.constant 0 : index
    %c0_10 = arith.constant 0 : index
    %15 = vector.load %arg4[%c0_8, %c0_9, %c0_10] : memref<3x16x32xbf16, #tpu.memory_space<vmem>>, vector<1x16x32xbf16>
    %16 = vector.shape_cast %15 : vector<1x16x32xbf16> to vector<16x32xbf16>
    %17 = vector.extract_strided_slice %14 {offsets = [0, 0], sizes = [32, 32], strides = [1, 1]} : vector<32x34xbf16> to vector<32x32xbf16>
    %cst_11 = arith.constant dense<0.000000e+00> : vector<16x32xf32>
    %18 = tpu.matmul %16, %17, %cst_11 {dimension_numbers = #tpu.dot_dimension_numbers<[1], [0], [0], [1], [0, 0, 1, 1], [], []>} : vector<16x32xbf16>, vector<32x32xbf16>, vector<16x32xf32> -> vector<16x32xf32>
    %c1 = arith.constant 1 : index
    %c0_12 = arith.constant 0 : index
    %c0_13 = arith.constant 0 : index
    %19 = vector.load %arg4[%c1, %c0_12, %c0_13] : memref<3x16x32xbf16, #tpu.memory_space<vmem>>, vector<1x16x32xbf16>
    %20 = vector.shape_cast %19 : vector<1x16x32xbf16> to vector<16x32xbf16>
    %21 = vector.extract_strided_slice %14 {offsets = [0, 1], sizes = [32, 32], strides = [1, 1]} : vector<32x34xbf16> to vector<32x32xbf16>
    %cst_14 = arith.constant dense<0.000000e+00> : vector<16x32xf32>
    %22 = tpu.matmul %20, %21, %cst_14 {dimension_numbers = #tpu.dot_dimension_numbers<[1], [0], [0], [1], [0, 0, 1, 1], [], []>} : vector<16x32xbf16>, vector<32x32xbf16>, vector<16x32xf32> -> vector<16x32xf32>
    %23 = arith.addf %18, %22 : vector<16x32xf32>
    %c2 = arith.constant 2 : index
    %c0_15 = arith.constant 0 : index
    %c0_16 = arith.constant 0 : index
    %24 = vector.load %arg4[%c2, %c0_15, %c0_16] : memref<3x16x32xbf16, #tpu.memory_space<vmem>>, vector<1x16x32xbf16>
    %25 = vector.shape_cast %24 : vector<1x16x32xbf16> to vector<16x32xbf16>
    %26 = vector.extract_strided_slice %14 {offsets = [0, 2], sizes = [32, 32], strides = [1, 1]} : vector<32x34xbf16> to vector<32x32xbf16>
    %cst_17 = arith.constant dense<0.000000e+00> : vector<16x32xf32>
    %27 = tpu.matmul %25, %26, %cst_17 {dimension_numbers = #tpu.dot_dimension_numbers<[1], [0], [0], [1], [0, 0, 1, 1], [], []>} : vector<16x32xbf16>, vector<32x32xbf16>, vector<16x32xf32> -> vector<16x32xf32>
    %28 = arith.addf %23, %27 : vector<16x32xf32>
    %29 = arith.truncf %28 : vector<16x32xf32> to vector<16x32xbf16>
    %c0_18 = arith.constant 0 : index
    %c0_19 = arith.constant 0 : index
    %c0_20 = arith.constant 0 : index
    %30 = vector.load %arg6[%c0_18, %c0_19, %c0_20] : memref<1x16x32xbf16, #tpu.memory_space<vmem>>, vector<1x16x32xbf16>
    %31 = vector.shape_cast %30 : vector<1x16x32xbf16> to vector<16x32xbf16>
    %32 = vector.shape_cast %29 : vector<16x32xbf16> to vector<1x16x32xbf16>
    tpu.vector_store %arg6[%c0_18, %c0_19, %c0_20], %32 {strides = array<i32>} : memref<1x16x32xbf16, #tpu.memory_space<vmem>>, vector<1x16x32xbf16>,
    return
  }
  func.func @transform_0(%arg0: i32) -> (i32, i32, i32) {
    %c0_i32 = arith.constant 0 : i32
    %c0_i32_0 = arith.constant 0 : i32
    %c0_i32_1 = arith.constant 0 : i32
    return %arg0, %c0_i32, %c0_i32_0 : i32, i32, i32
  }
  func.func @transform_1(%arg0: i32) -> (i32, i32) {
    %c0_i32 = arith.constant 0 : i32
    %c0_i32_0 = arith.constant 0 : i32
    %c0_i32_1 = arith.constant 0 : i32
    return %c0_i32, %c0_i32_0 : i32, i32
  }
  func.func @transform_2(%arg0: i32) -> (i32, i32) {
    %c0_i32 = arith.constant 0 : i32
    %c0_i32_0 = arith.constant 0 : i32
    %c0_i32_1 = arith.constant 0 : i32
    return %c0_i32, %c0_i32_0 : i32, i32
  }
  func.func @transform_3(%arg0: i32) -> (i32, i32, i32) {
    %c0_i32 = arith.constant 0 : i32
    %c0_i32_0 = arith.constant 0 : i32
    %c0_i32_1 = arith.constant 0 : i32
    %c0_i32_2 = arith.constant 0 : i32
    return %c0_i32, %c0_i32_0, %c0_i32_1 : i32, i32, i32
  }
  func.func @transform_4(%arg0: i32) -> (i32, i32, i32) {
    %c3_i32 = arith.constant 3 : i32
    %c0_i32 = arith.constant 0 : i32
    %c0_i32_0 = arith.constant 0 : i32
    return %arg0, %c3_i32, %c0_i32 : i32, i32, i32
  }
  func.func @transform_5(%arg0: i32) -> (i32, i32, i32) {
    %c3_i32 = arith.constant 3 : i32
    %c0_i32 = arith.constant 0 : i32
    %c0_i32_0 = arith.constant 0 : i32
    return %arg0, %c3_i32, %c0_i32 : i32, i32, i32
  }
}

module attributes {stable_mosaic.version = 11 : i64} {
  func.func @_tail_kernel(%arg0: i32, %arg1: memref<1x64x32xbf16, #tpu.memory_space<vmem>>, %arg2: memref<64x1xf32, #tpu.memory_space<vmem>>, %arg3: memref<64x1xf32, #tpu.memory_space<vmem>>, %arg4: memref<1x3x1xf32, #tpu.memory_space<vmem>>, %arg5: memref<3x3xf32, #tpu.memory_space<vmem>>, %arg6: memref<3x1xf32, #tpu.memory_space<vmem>>, %arg7: memref<5x64xf32, #tpu.memory_space<vmem>>, %arg8: memref<5x3xf32, #tpu.memory_space<vmem>>, %arg9: memref<5x1xf32, #tpu.memory_space<vmem>>, %arg10: memref<1x5x1xf32, #tpu.memory_space<vmem>>) attributes {dimension_semantics = [#tpu.dimension_semantics<parallel>], iteration_bounds = array<i64: 2>, scalar_prefetch = 0 : i64, scratch_operands = 0 : i64, tpu.core_type = #tpu.core_type<tc>, window_params = [{transform_indices = @transform_0, window_bounds = array<i64: 1, 64, 32>}, {pipeline_mode = #tpu.pipeline_mode<synchronous>, transform_indices = @transform_1, window_bounds = array<i64: 64, 1>}, {pipeline_mode = #tpu.pipeline_mode<synchronous>, transform_indices = @transform_2, window_bounds = array<i64: 64, 1>}, {transform_indices = @transform_3, window_bounds = array<i64: 1, 3, 1>}, {pipeline_mode = #tpu.pipeline_mode<synchronous>, transform_indices = @transform_4, window_bounds = array<i64: 3, 3>}, {pipeline_mode = #tpu.pipeline_mode<synchronous>, transform_indices = @transform_5, window_bounds = array<i64: 3, 1>}, {pipeline_mode = #tpu.pipeline_mode<synchronous>, transform_indices = @transform_6, window_bounds = array<i64: 5, 64>}, {pipeline_mode = #tpu.pipeline_mode<synchronous>, transform_indices = @transform_7, window_bounds = array<i64: 5, 3>}, {pipeline_mode = #tpu.pipeline_mode<synchronous>, transform_indices = @transform_8, window_bounds = array<i64: 5, 1>}, {transform_indices = @transform_9, window_bounds = array<i64: 1, 5, 1>}]} {
    %c0 = arith.constant 0 : index
    %c0_0 = arith.constant 0 : index
    %c0_1 = arith.constant 0 : index
    %0 = vector.load %arg1[%c0, %c0_0, %c0_1] : memref<1x64x32xbf16, #tpu.memory_space<vmem>>, vector<1x64x32xbf16>
    %1 = vector.shape_cast %0 : vector<1x64x32xbf16> to vector<64x32xbf16>
    %2 = arith.extf %1 : vector<64x32xbf16> to vector<64x32xf32>
    %c0_2 = arith.constant 0 : index
    %c0_3 = arith.constant 0 : index
    %3 = vector.load %arg2[%c0_2, %c0_3] : memref<64x1xf32, #tpu.memory_space<vmem>>, vector<64x1xf32>
    %4 = vector.broadcast %3 : vector<64x1xf32> to vector<64x32xf32>
    %5 = arith.mulf %2, %4 : vector<64x32xf32>
    %c0_4 = arith.constant 0 : index
    %c0_5 = arith.constant 0 : index
    %6 = vector.load %arg3[%c0_4, %c0_5] : memref<64x1xf32, #tpu.memory_space<vmem>>, vector<64x1xf32>
    %7 = vector.broadcast %6 : vector<64x1xf32> to vector<64x32xf32>
    %8 = arith.addf %5, %7 : vector<64x32xf32>
    %cst = arith.constant 0.000000e+00 : f32
    %9 = vector.broadcast %cst : f32 to vector<64x32xf32>
    %10 = arith.maximumf %8, %9 : vector<64x32xf32>
    %cst_6 = arith.constant dense<0.000000e+00> : vector<64xf32>
    %11 = vector.multi_reduction <add>, %10, %cst_6 [1] : vector<64x32xf32> to vector<64xf32>
    %12 = vector.shape_cast %11 : vector<64xf32> to vector<64x1xf32>
    %cst_7 = arith.constant 3.200000e+01 : f32
    %13 = vector.broadcast %cst_7 : f32 to vector<64x1xf32>
    %14 = arith.divf %12, %13 : vector<64x1xf32>
    %c0_8 = arith.constant 0 : index
    %c0_9 = arith.constant 0 : index
    %15 = vector.load %arg5[%c0_8, %c0_9] : memref<3x3xf32, #tpu.memory_space<vmem>>, vector<3x3xf32>
    %c0_10 = arith.constant 0 : index
    %c0_11 = arith.constant 0 : index
    %c0_12 = arith.constant 0 : index
    %16 = vector.load %arg4[%c0_10, %c0_11, %c0_12] : memref<1x3x1xf32, #tpu.memory_space<vmem>>, vector<1x3x1xf32>
    %17 = vector.shape_cast %16 : vector<1x3x1xf32> to vector<3x1xf32>
    %cst_13 = arith.constant dense<0.000000e+00> : vector<3x1xf32>
    %18 = tpu.matmul %15, %17, %cst_13 {dimension_numbers = #tpu.dot_dimension_numbers<[1], [0], [0], [1], [0, 0, 1, 1], [], []>} : vector<3x3xf32>, vector<3x1xf32>, vector<3x1xf32> -> vector<3x1xf32>
    %c0_14 = arith.constant 0 : index
    %c0_15 = arith.constant 0 : index
    %19 = vector.load %arg6[%c0_14, %c0_15] : memref<3x1xf32, #tpu.memory_space<vmem>>, vector<3x1xf32>
    %20 = arith.addf %18, %19 : vector<3x1xf32>
    %c0_16 = arith.constant 0 : index
    %c0_17 = arith.constant 0 : index
    %21 = vector.load %arg7[%c0_16, %c0_17] : memref<5x64xf32, #tpu.memory_space<vmem>>, vector<5x64xf32>
    %cst_18 = arith.constant dense<0.000000e+00> : vector<5x1xf32>
    %22 = tpu.matmul %21, %14, %cst_18 {dimension_numbers = #tpu.dot_dimension_numbers<[1], [0], [0], [1], [0, 0, 1, 1], [], []>} : vector<5x64xf32>, vector<64x1xf32>, vector<5x1xf32> -> vector<5x1xf32>
    %c0_19 = arith.constant 0 : index
    %c0_20 = arith.constant 0 : index
    %23 = vector.load %arg8[%c0_19, %c0_20] : memref<5x3xf32, #tpu.memory_space<vmem>>, vector<5x3xf32>
    %cst_21 = arith.constant dense<0.000000e+00> : vector<5x1xf32>
    %24 = tpu.matmul %23, %20, %cst_21 {dimension_numbers = #tpu.dot_dimension_numbers<[1], [0], [0], [1], [0, 0, 1, 1], [], []>} : vector<5x3xf32>, vector<3x1xf32>, vector<5x1xf32> -> vector<5x1xf32>
    %25 = arith.addf %22, %24 : vector<5x1xf32>
    %c0_22 = arith.constant 0 : index
    %c0_23 = arith.constant 0 : index
    %26 = vector.load %arg9[%c0_22, %c0_23] : memref<5x1xf32, #tpu.memory_space<vmem>>, vector<5x1xf32>
    %27 = arith.addf %25, %26 : vector<5x1xf32>
    %c0_24 = arith.constant 0 : index
    %c0_25 = arith.constant 0 : index
    %c0_26 = arith.constant 0 : index
    %28 = vector.load %arg10[%c0_24, %c0_25, %c0_26] : memref<1x5x1xf32, #tpu.memory_space<vmem>>, vector<1x5x1xf32>
    %29 = vector.shape_cast %28 : vector<1x5x1xf32> to vector<5x1xf32>
    %30 = vector.shape_cast %27 : vector<5x1xf32> to vector<1x5x1xf32>
    tpu.vector_store %arg10[%c0_24, %c0_25, %c0_26], %30 {strides = array<i32>} : memref<1x5x1xf32, #tpu.memory_space<vmem>>, vector<1x5x1xf32>,
    return
  }
  func.func @transform_0(%arg0: i32) -> (i32, i32, i32) {
    %c0_i32 = arith.constant 0 : i32
    %c0_i32_0 = arith.constant 0 : i32
    %c0_i32_1 = arith.constant 0 : i32
    return %arg0, %c0_i32, %c0_i32_0 : i32, i32, i32
  }
  func.func @transform_1(%arg0: i32) -> (i32, i32) {
    %c0_i32 = arith.constant 0 : i32
    %c0_i32_0 = arith.constant 0 : i32
    %c0_i32_1 = arith.constant 0 : i32
    return %c0_i32, %c0_i32_0 : i32, i32
  }
  func.func @transform_2(%arg0: i32) -> (i32, i32) {
    %c0_i32 = arith.constant 0 : i32
    %c0_i32_0 = arith.constant 0 : i32
    %c0_i32_1 = arith.constant 0 : i32
    return %c0_i32, %c0_i32_0 : i32, i32
  }
  func.func @transform_3(%arg0: i32) -> (i32, i32, i32) {
    %c0_i32 = arith.constant 0 : i32
    %c0_i32_0 = arith.constant 0 : i32
    %c0_i32_1 = arith.constant 0 : i32
    return %arg0, %c0_i32, %c0_i32_0 : i32, i32, i32
  }
  func.func @transform_4(%arg0: i32) -> (i32, i32) {
    %c0_i32 = arith.constant 0 : i32
    %c0_i32_0 = arith.constant 0 : i32
    %c0_i32_1 = arith.constant 0 : i32
    return %c0_i32, %c0_i32_0 : i32, i32
  }
  func.func @transform_5(%arg0: i32) -> (i32, i32) {
    %c0_i32 = arith.constant 0 : i32
    %c0_i32_0 = arith.constant 0 : i32
    %c0_i32_1 = arith.constant 0 : i32
    return %c0_i32, %c0_i32_0 : i32, i32
  }
  func.func @transform_6(%arg0: i32) -> (i32, i32) {
    %c0_i32 = arith.constant 0 : i32
    %c0_i32_0 = arith.constant 0 : i32
    %c0_i32_1 = arith.constant 0 : i32
    return %c0_i32, %c0_i32_0 : i32, i32
  }
  func.func @transform_7(%arg0: i32) -> (i32, i32) {
    %c0_i32 = arith.constant 0 : i32
    %c0_i32_0 = arith.constant 0 : i32
    %c0_i32_1 = arith.constant 0 : i32
    return %c0_i32, %c0_i32_0 : i32, i32
  }
  func.func @transform_8(%arg0: i32) -> (i32, i32) {
    %c0_i32 = arith.constant 0 : i32
    %c0_i32_0 = arith.constant 0 : i32
    %c0_i32_1 = arith.constant 0 : i32
    return %c0_i32, %c0_i32_0 : i32, i32
  }
  func.func @transform_9(%arg0: i32) -> (i32, i32, i32) {
    %c0_i32 = arith.constant 0 : i32
    %c0_i32_0 = arith.constant 0 : i32
    %c0_i32_1 = arith.constant 0 : i32
    return %arg0, %c0_i32, %c0_i32_0 : i32, i32, i32
  }
}

</mosaic_0001>

<llo_original>
// kernel: densenet_forward.13
$region0: #{densenet_forward.13}
  #allocation0 [shape = 'u32[]', space=smem, size = 0x4, offset = 0x4, fixed_abs, tag = 'smem constant byte address 0x4 - core index']
  #allocation1 [shape = 'u32[144,128]{1,0:T(1,128)}', space=vmem, size = 0x12000, scoped, tag = 'internal scratch']
  %s0 = inlined_call_operand.vmem [shape: bf16[2,64,64], index: 0, kind: input, shape index: {}]
  %s1 = inlined_call_operand.vmem [shape: f32[32,1], index: 1, kind: input, shape index: {}]
  %s2 = inlined_call_operand.vmem [shape: f32[32,1], index: 2, kind: input, shape index: {}]
  %s3 = inlined_call_operand.vmem [shape: bf16[1,32,32], index: 3, kind: input, shape index: {}]
  %s4 = inlined_call_operand.vmem [shape: bf16[2,32,64], index: 4, kind: output, shape index: {}]
  %s5 = sld [smem:[#allocation0]]
  $region49: #{densenet_forward.13} parent=0
    _
  %s7 = ssub.s32 1, %s5
  %s8 = scalar_select 0, %s7, %s5
  loop: start=0, step=1, limit=4
  $region2: #{densenet_forward.13} parent=0 // loop_pre_header
    _
  $region3: #{densenet_forward.13} parent=0 // loop_header
    %s10 = sphi 0, %s14
    %p11 = scmp.ge.s32.totalorder %s10, 4
    %s17 = sphi 0, %s29
    %s18 = sphi 0, %s25
    %s19 = sphi 0, %s17
    %s20 = sphi 0, %s18
    %s21 = sphi 0, %s19
    %s22 = sphi 0, %s20
    %s34 = sphi 0, %s36
    %s37 = sphi 0, %s34
    %s38 = sphi 0, %s37
    %s54 = sphi 0, %s38
    %s58 = sphi 0, %s58
    %s60 = sphi 0, %s58
    %s61 = sphi 0, %s60
    %s75 = sphi 0, %s61
    %s79 = sphi 0, %s79
    %s81 = sphi 0, %s79
    %s82 = sphi 0, %s81
    %s96 = sphi 0, %s82
    %s100 = sphi 0, %s100
    %s102 = sphi 0, %s100
    %s103 = sphi 0, %s102
    %s117 = sphi 0, %s103
    %s125 = sphi 0, %s127
    %s128 = sphi 0, %s125
    %s129 = sphi 0, %s128
    %s145 = sphi 0, %s129
  $region4: #{densenet_forward.13} parent=0 // loop_header_branch
    %13 = sbr.rel (%p11) target = $region8
  $region5: #{densenet_forward.13} parent=0 // loop_body
    %s15 = ssub.s32 %s10, 1
    %s16 = ssub.s32 %s10, 2
    %s23 = sadd.s32 1, %s18
    %p24 = scmp.ge.s32.totalorder %s23, 1
    %s25 = scalar_select %p24, 0, %s23
    %s26 = sadd.s32 1, %s17
    %s27 = scalar_select %p24, %s26, %s17
    %p28 = scmp.ge.s32.totalorder %s27, 2
    %s29 = scalar_select %p28, 0, %s27
    %s30 = ssub.s32 %s17, %s29
    %s31 = ssub.s32 %s18, %s25
    %s32 = sor.u32 %s30, %s31
    %p33 = scmp.eq.s32.totalorder %s32, 0
    %s35 = sadd.s32 %s34, 1
    %s36 = scalar_select %p33, %s34, %s35
    %p39 = pneg %p33
    %p40 = scmp.eq.s32.totalorder %s10, 1
    %p41 = por %p39, %p40
    %p42 = scmp.ne.s32.totalorder %s34, %s37
    %p43 = scmp.eq.s32.totalorder %s10, 0
    %p44 = por %p42, %p43
    %p45 = scmp.ne.s32.totalorder %s34, %s37
    %p46 = scmp.eq.s32.totalorder %s15, 1
    %p47 = por %p45, %p46
    %p48 = scmp.ne.s32.totalorder %s37, %s38
    %p49 = scmp.eq.s32.totalorder %s15, 0
    %p50 = por %p48, %p49
    %p51 = scmp.ne.s32.totalorder %s37, %s38
    %p52 = scmp.eq.s32.totalorder %s16, 1
    %p53 = por %p51, %p52
    %p55 = scmp.ne.s32.totalorder %s38, %s54
    %p56 = scmp.eq.s32.totalorder %s16, 0
    %p57 = por %p55, %p56
    %s59 = sadd.s32 %s58, 1
    %p62 = scmp.eq.s32.totalorder %s10, 1
    %p63 = scmp.ne.s32.totalorder %s58, %s60
    %p64 = scmp.eq.s32.totalorder %s10, 0
    %p65 = por %p63, %p64
    %p66 = scmp.ne.s32.totalorder %s58, %s60
    %p67 = scmp.eq.s32.totalorder %s15, 1
    %p68 = por %p66, %p67
    %p69 = scmp.ne.s32.totalorder %s60, %s61
    %p70 = scmp.eq.s32.totalorder %s15, 0
    %p71 = por %p69, %p70
    %p72 = scmp.ne.s32.totalorder %s60, %s61
    %p73 = scmp.eq.s32.totalorder %s16, 1
    %p74 = por %p72, %p73
    %p76 = scmp.ne.s32.totalorder %s61, %s75
    %p77 = scmp.eq.s32.totalorder %s16, 0
    %p78 = por %p76, %p77
    %s80 = sadd.s32 %s79, 1
    %p83 = scmp.eq.s32.totalorder %s10, 1
    %p84 = scmp.ne.s32.totalorder %s79, %s81
    %p85 = scmp.eq.s32.totalorder %s10, 0
    %p86 = por %p84, %p85
    %p87 = scmp.ne.s32.totalorder %s79, %s81
    %p88 = scmp.eq.s32.totalorder %s15, 1
    %p89 = por %p87, %p88
    %p90 = scmp.ne.s32.totalorder %s81, %s82
    %p91 = scmp.eq.s32.totalorder %s15, 0
    %p92 = por %p90, %p91
    %p93 = scmp.ne.s32.totalorder %s81, %s82
    %p94 = scmp.eq.s32.totalorder %s16, 1
    %p95 = por %p93, %p94
    %p97 = scmp.ne.s32.totalorder %s82, %s96
    %p98 = scmp.eq.s32.totalorder %s16, 0
    %p99 = por %p97, %p98
    %s101 = sadd.s32 %s100, 1
    %p104 = scmp.eq.s32.totalorder %s10, 1
    %p105 = scmp.ne.s32.totalorder %s100, %s102
    %p106 = scmp.eq.s32.totalorder %s10, 0
    %p107 = por %p105, %p106
    %p108 = scmp.ne.s32.totalorder %s100, %s102
    %p109 = scmp.eq.s32.totalorder %s15, 1
    %p110 = por %p108, %p109
    %p111 = scmp.ne.s32.totalorder %s102, %s103
    %p112 = scmp.eq.s32.totalorder %s15, 0
    %p113 = por %p111, %p112
    %p114 = scmp.ne.s32.totalorder %s102, %s103
    %p115 = scmp.eq.s32.totalorder %s16, 1
    %p116 = por %p114, %p115
    %p118 = scmp.ne.s32.totalorder %s103, %s117
    %p119 = scmp.eq.s32.totalorder %s16, 0
    %p120 = por %p118, %p119
    %s121 = ssub.s32 %s17, %s29
    %s122 = ssub.s32 %s18, %s25
    %s123 = sor.u32 %s121, %s122
    %p124 = scmp.eq.s32.totalorder %s123, 0
    %s126 = sadd.s32 %s125, 1
    %s127 = scalar_select %p124, %s125, %s126
    %p130 = pneg %p124
    %p131 = scmp.eq.s32.totalorder %s10, 1
    %p132 = por %p130, %p131
    %p133 = scmp.ne.s32.totalorder %s125, %s128
    %p134 = scmp.eq.s32.totalorder %s10, 0
    %p135 = por %p133, %p134
    %p136 = scmp.ne.s32.totalorder %s125, %s128
    %p137 = scmp.eq.s32.totalorder %s15, 1
    %p138 = por %p136, %p137
    %p139 = scmp.ne.s32.totalorder %s128, %s129
    %p140 = scmp.eq.s32.totalorder %s15, 0
    %p141 = por %p139, %p140
    %p142 = scmp.ne.s32.totalorder %s128, %s129
    %p143 = scmp.eq.s32.totalorder %s16, 1
    %p144 = por %p142, %p143
    %p146 = scmp.ne.s32.totalorder %s129, %s145
    %p147 = scmp.eq.s32.totalorder %s16, 0
    %p148 = por %p146, %p147
    %p149 = scmp.le.s32.totalorder 1, %s10
    %p150 = scmp.lt.s32.totalorder %s10, 3
    %p151 = pnand %p149, %p150
    %p152 = pneg %p151
    // Predicated region
    $region9: #{densenet_forward.13} parent=5 // pred_check
      _
    $region10: #{densenet_forward.13} parent=5 // pred_check_branch
      %154 = sbr.rel (%p151) target = $region12
    $region11: #{densenet_forward.13} parent=5 // pred_region
      %s155 = ssub.s32 %s10, 1
      // Predicated region
      $region13: #{densenet_forward.13} parent=11 // pred_check
        %p156 = pneg %p71
      $region14: #{densenet_forward.13} parent=11 // pred_check_branch
        %158 = sbr.rel (%p156) target = $region16
      $region15: #{densenet_forward.13} parent=11 // pred_region
        _
      $region16: #{densenet_forward.13} parent=11 // pred_fallthru
        _
      // Predicated region
      $region17: #{densenet_forward.13} parent=11 // pred_check
        %p159 = pneg %p92
      $region18: #{densenet_forward.13} parent=11 // pred_check_branch
        %161 = sbr.rel (%p159) target = $region20
      $region19: #{densenet_forward.13} parent=11 // pred_region
        _
      $region20: #{densenet_forward.13} parent=11 // pred_fallthru
        _
      // Predicated region
      $region21: #{densenet_forward.13} parent=11 // pred_check
        %p162 = pneg %p113
      $region22: #{densenet_forward.13} parent=11 // pred_check_branch
        %164 = sbr.rel (%p162) target = $region24
      $region23: #{densenet_forward.13} parent=11 // pred_region
        _
      $region24: #{densenet_forward.13} parent=11 // pred_fallthru
        _
    $region12: #{densenet_forward.13} parent=5 // pred_fallthru
      _
    %p165 = scmp.lt.s32.totalorder %s10, 2
    // Predicated region
    $region25: #{densenet_forward.13} parent=5 // pred_check
      %p166 = pneg %p165
    $region26: #{densenet_forward.13} parent=5 // pred_check_branch
      %168 = sbr.rel (%p166) target = $region28
    $region27: #{densenet_forward.13} parent=5 // pred_region
      // Predicated region
      $region29: #{densenet_forward.13} parent=27 // pred_check
        %p169 = pneg %p44
      $region30: #{densenet_forward.13} parent=27 // pred_check_branch
        %171 = sbr.rel (%p169) target = $region32
      $region31: #{densenet_forward.13} parent=27 // pred_region
        %p172 = scmp.lt.s32.totalorder %s17, 1
        %s173 = scalar_select %p172, %s17, 1
        %p174 = scmp.lt.s32.totalorder %s18, 0
        %s175 = scalar_select %p174, %s18, 0
        %s176 = smul.addr %s173, 8
        %s177 = sadd.s32 %s175, %s176
        %s178 = smul.addr %s177, 4
        %s179 = scalar_lea.vmem %s0, %s178
      $region32: #{densenet_forward.13} parent=27 // pred_fallthru
        _
    $region28: #{densenet_forward.13} parent=5 // pred_fallthru
      _
    %p180 = scmp.le.s32.totalorder 1, %s10
    %p181 = scmp.lt.s32.totalorder %s10, 3
    %p182 = pnand %p180, %p181
    %p183 = pneg %p182
    // Predicated region
    $region33: #{densenet_forward.13} parent=5 // pred_check
      _
    $region34: #{densenet_forward.13} parent=5 // pred_check_branch
      %185 = sbr.rel (%p182) target = $region36
    $region35: #{densenet_forward.13} parent=5 // pred_region
      %s186 = ssub.s32 %s10, 1
      %p187 = scmp.lt.s32.totalorder %s19, 1
      %s188 = scalar_select %p187, %s19, 1
      %p189 = scmp.lt.s32.totalorder %s20, 0
      %s190 = scalar_select %p189, %s20, 0
      %s191 = smul.addr %s188, 8
      %s192 = sadd.s32 %s190, %s191
      %s193 = smul.addr %s192, 4
      %s194 = scalar_lea.vmem %s0, %s193
      %p195 = pneg %p50
      %p196 = pneg %p47
      %p197 = pneg %p71
      %p198 = pneg %p68
      %p199 = pneg %p92
      %p200 = pneg %p89
      %p201 = pneg %p113
      %p202 = pneg %p110
      %p203 = pneg %p141
      %p204 = pneg %p138
      %p205 = scmp.lt.s32.totalorder %s19, 1
      %s206 = scalar_select %p205, %s19, 1
      %p207 = scmp.lt.s32.totalorder %s20, 0
      %s208 = scalar_select %p207, %s20, 0
      %s209 = smul.addr %s206, 4
      %s210 = sadd.s32 %s208, %s209
      %s211 = smul.addr %s210, 4
      %s212 = scalar_lea.vmem %s4, %s211
      %p213 = scmp.lt.s32.totalorder %s19, 1
      %s214 = scalar_select %p213, %s19, 1
      %p215 = scmp.lt.s32.totalorder %s20, 0
      %s216 = scalar_select %p215, %s20, 0
      %s217 = smul.addr %s214, 8
      %s218 = sadd.s32 %s216, %s217
      %s219 = smul.addr %s218, 4
      %s220 = scalar_lea.vmem %s0, %s219
      %p221 = scmp.lt.s32.totalorder %s19, 1
      %s222 = scalar_select %p221, %s19, 1
      %p223 = scmp.lt.s32.totalorder %s20, 0
      %s224 = scalar_select %p223, %s20, 0
      %s225 = smul.addr %s222, 4
      %s226 = sadd.s32 %s224, %s225
      %s227 = smul.addr %s226, 4
      %s228 = scalar_lea.vmem %s4, %s227
      %v230 = vld [vmem:[%s220] sm:$0xf]
      %v231 = vld [vmem:[%s220 + $0x4] sm:$0xf]
      %v232 = vld [vmem:[%s220 + $0x8] sm:$0xf]
      %v233 = vld [vmem:[%s220 + $0xc] sm:$0xf]
      %v234 = vunpack.c.l.bf16 %v230
      %v235 = vunpack.c.l.bf16 %v231
      %v236 = vunpack.c.l.bf16 %v232
      %v237 = vunpack.c.l.bf16 %v233
      %v238 = vld [vmem:[%s1] sm:$0xff]
      %v239 = vld [vmem:[%s1 + $0x8] sm:$0xff]
      %v240 = vld [vmem:[%s1 + $0x10] sm:$0xff]
      %v241 = vld [vmem:[%s1 + $0x18] sm:$0xff]
      %243 = vset.pattern.permute.xlu0 0
      %244 = vperm.xlu0 %243, %v238
      %v245 = vpop.permute.xlu0 %244
      %248 = vset.pattern.permute.xlu0 0
      %249 = vperm.xlu0 %248, %v239
      %v250 = vpop.permute.xlu0 %249
      %253 = vset.pattern.permute.xlu0 0
      %254 = vperm.xlu0 %253, %v240
      %v255 = vpop.permute.xlu0 %254
      %258 = vset.pattern.permute.xlu0 0
      %259 = vperm.xlu0 %258, %v241
      %v260 = vpop.permute.xlu0 %259
      %v262 = vmul.f32 %v234, %v245
      %v263 = vmul.f32 %v235, %v250
      %v264 = vmul.f32 %v236, %v255
      %v265 = vmul.f32 %v237, %v260
      %v266 = vld [vmem:[%s2] sm:$0xff]
      %v267 = vld [vmem:[%s2 + $0x8] sm:$0xff]
      %v268 = vld [vmem:[%s2 + $0x10] sm:$0xff]
      %v269 = vld [vmem:[%s2 + $0x18] sm:$0xff]
      %271 = vset.pattern.permute.xlu0 0
      %272 = vperm.xlu0 %271, %v266
      %v273 = vpop.permute.xlu0 %272
      %276 = vset.pattern.permute.xlu0 0
      %277 = vperm.xlu0 %276, %v267
      %v278 = vpop.permute.xlu0 %277
      %281 = vset.pattern.permute.xlu0 0
      %282 = vperm.xlu0 %281, %v268
      %v283 = vpop.permute.xlu0 %282
      %286 = vset.pattern.permute.xlu0 0
      %287 = vperm.xlu0 %286, %v269
      %v288 = vpop.permute.xlu0 %287
      %v290 = vadd.f32 %v262, %v273
      %v291 = vadd.f32 %v263, %v278
      %v292 = vadd.f32 %v264, %v283
      %v293 = vadd.f32 %v265, %v288
      %v294 = vmax.f32 %v290, 0.0
      %v295 = vmax.f32 %v291, 0.0
      %v296 = vmax.f32 %v292, 0.0
      %v297 = vmax.f32 %v293, 0.0
      %v298 = vpack.c.bf16 %v295, %v294
      %v299 = vpack.c.bf16 %v297, %v296
      %v300 = vld [vmem:[%s3] sm:$0xf]
      %v301 = vld [vmem:[%s3 + $0x4] sm:$0xf]
      %v302 = vld [vmem:[%s3 + $0x8] sm:$0xf]
      %v303 = vld [vmem:[%s3 + $0xc] sm:$0xf]
      %v308 = vunpack.c.l.b16 %v300
      %v309 = vunpack.c.l.b16 %v301
      %v310 = vunpack.c.l.b16 %v302
      %v311 = vunpack.c.l.b16 %v303
      %v312 = vpack.c.b16 %v309, %v308
      %v313 = vpack.c.b16 %v311, %v310
      %vm314 = vcmask 261120
      %v316 = vsel %vm314, %v312, 0
      %v319 = vsel %vm314, %v313, 0
      %321 = vmatprep.subr.bf16.mxu0 0
      %322 = vmatpush1.bf16.msra.mxu0 %v298
      %323 = vmatprep.subr.bf16.mxu0 0
      %324 = vmatpush1.bf16.msra.mxu0 %v299
      %325 = vmatprep.subr.bf16.mxu0 0
      %326 = vmatpush1.bf16.msra.mxu0 0
      %327 = vmatprep.subr.bf16.mxu0 0
      %328 = vmatpush1.bf16.msra.mxu0 0
      %329 = vmatprep.subr.bf16.mxu0 0
      %330 = vmatpush1.bf16.msra.mxu0 0
      %331 = vmatprep.subr.bf16.mxu0 0
      %332 = vmatpush1.bf16.msra.mxu0 0
      %333 = vmatprep.subr.bf16.mxu0 0
      %334 = vmatpush1.bf16.msra.mxu0 0
      %335 = vmatprep.subr.bf16.mxu0 0
      %336 = vmatpush1.bf16.msra.mxu0 0
      %337 = vmatprep.subr.bf16.mxu0 0
      %338 = vmatpush1.bf16.msra.mxu0 0
      %339 = vmatprep.subr.bf16.mxu0 0
      %340 = vmatpush1.bf16.msra.mxu0 0
      %341 = vmatprep.subr.bf16.mxu0 0
      %342 = vmatpush1.bf16.msra.mxu0 0
      %343 = vmatprep.subr.bf16.mxu0 0
      %344 = vmatpush1.bf16.msra.mxu0 0
      %345 = vmatprep.subr.bf16.mxu0 0
      %346 = vmatpush1.bf16.msra.mxu0 0
      %347 = vmatprep.subr.bf16.mxu0 0
      %348 = vmatpush1.bf16.msra.mxu0 0
      %349 = vmatprep.subr.bf16.mxu0 0
      %350 = vmatpush1.bf16.msra.mxu0 0
      %351 = vmatprep.subr.bf16.mxu0 0
      %352 = vmatpush1.bf16.msra.mxu0 0
      %353 = vmatprep.mubr.bf16.mxu0 0
      %354 = vmatmul.mubr.bf16.gmra.mrb[0].mxu0 %v316
      %v355 = vpop.f32.mrb[0].mxu0
      %v356 = vadd.f32 0.0, %v355
      %v357 = vpop.f32.mrb[0].mxu0
      %v358 = vpop.f32.mrb[0].mxu0
      %v359 = vadd.f32 0.0, %v358
      %v360 = vpop.f32.mrb[0].mxu0
      %361 = vmatprep.mubr.bf16.mxu0 0
      %362 = vmatmul.mubr.bf16.gmra.mrb[0].mxu0 %v319
      %v363 = vpop.f32.mrb[0].mxu0
      %v364 = vadd.f32 0.0, %v363
      %v365 = vpop.f32.mrb[0].mxu0
      %v366 = vpop.f32.mrb[0].mxu0
      %v367 = vadd.f32 0.0, %v366
      %v368 = vpop.f32.mrb[0].mxu0
      %369 = vdwg.mxu0
      %v370 = vpack.c.bf16 %v359, %v356
      %v371 = vpack.c.bf16 %v367, %v364
      %v374 = vunpack.c.l.b16 %v370
      %v375 = vunpack.c.h.b16 %v370
      %v376 = vunpack.c.l.b16 %v371
      %v377 = vunpack.c.h.b16 %v371
      %v378 = vpack.c.b16 %v374, %v374
      %v379 = vpack.c.b16 %v375, %v375
      %v380 = vpack.c.b16 %v376, %v376
      %v381 = vpack.c.b16 %v377, %v377
      %vm386 = vcmask 519168
      %387 = vst.msk [vmem:[%s228] sm:$0xf] %vm386, %v378
      %388 = vst.msk [vmem:[%s228 + $0x4] sm:$0xf] %vm386, %v379
      %389 = vst.msk [vmem:[%s228 + $0x8] sm:$0xf] %vm386, %v380
      %390 = vst.msk [vmem:[%s228 + $0xc] sm:$0xf] %vm386, %v381
      %p391 = scmp.lt.s32.totalorder %s19, 1
      %s392 = scalar_select %p391, %s19, 1
      %p393 = scmp.lt.s32.totalorder %s20, 0
      %s394 = scalar_select %p393, %s20, 0
      %s395 = smul.addr %s392, 4
      %s396 = sadd.s32 %s394, %s395
      %s397 = smul.addr %s396, 4
      %s398 = scalar_lea.vmem %s4, %s397
      // Predicated region
      $region37: #{densenet_forward.13} parent=35 // pred_check
        %p399 = pneg %p138
      $region38: #{densenet_forward.13} parent=35 // pred_check_branch
        %401 = sbr.rel (%p399) target = $region40
      $region39: #{densenet_forward.13} parent=35 // pred_region
        _
      $region40: #{densenet_forward.13} parent=35 // pred_fallthru
        _
    $region36: #{densenet_forward.13} parent=5 // pred_fallthru
      _
    %p402 = scmp.le.s32.totalorder 2, %s10
    // Predicated region
    $region41: #{densenet_forward.13} parent=5 // pred_check
      %p403 = pneg %p402
    $region42: #{densenet_forward.13} parent=5 // pred_check_branch
      %405 = sbr.rel (%p403) target = $region44
    $region43: #{densenet_forward.13} parent=5 // pred_region
      %s406 = ssub.s32 %s10, 2
      // Predicated region
      $region45: #{densenet_forward.13} parent=43 // pred_check
        %p407 = pneg %p144
      $region46: #{densenet_forward.13} parent=43 // pred_check_branch
        %409 = sbr.rel (%p407) target = $region48
      $region47: #{densenet_forward.13} parent=43 // pred_region
        %p410 = scmp.lt.s32.totalorder %s21, 1
        %s411 = scalar_select %p410, %s21, 1
        %p412 = scmp.lt.s32.totalorder %s22, 0
        %s413 = scalar_select %p412, %s22, 0
        %s414 = smul.addr %s411, 4
        %s415 = sadd.s32 %s413, %s414
        %s416 = smul.addr %s415, 4
        %s417 = scalar_lea.vmem %s4, %s416
      $region48: #{densenet_forward.13} parent=43 // pred_fallthru
        _
    $region44: #{densenet_forward.13} parent=5 // pred_fallthru
      _
  $region6: #{densenet_forward.13} parent=0 // loop_footer
    %s14 = sadd.s32 1, %s10
  $region7: #{densenet_forward.13} parent=0 // loop_footer_branch
    %9 = sbr.rel target = $region3
  $region8: #{densenet_forward.13} parent=0 // loop_exit
    _

// kernel: densenet_forward.14
$region0: #{densenet_forward.14}
  #allocation0 [shape = 'u32[]', space=smem, size = 0x4, offset = 0x4, fixed_abs, tag = 'smem constant byte address 0x4 - core index']
  #allocation1 [shape = 'u32[144,128]{1,0:T(1,128)}', space=vmem, size = 0x12000, scoped, tag = 'internal scratch']
  %s0 = inlined_call_operand.vmem [shape: bf16[2,32,64], index: 0, kind: input, shape index: {}]
  %s1 = inlined_call_operand.vmem [shape: f32[32,1], index: 1, kind: input, shape index: {}]
  %s2 = inlined_call_operand.vmem [shape: f32[32,1], index: 2, kind: input, shape index: {}]
  %s3 = inlined_call_operand.vmem [shape: bf16[3,16,32], index: 3, kind: input, shape index: {}]
  %s4 = inlined_call_operand.vmem [shape: bf16[2,64,64], index: 4, kind: input, shape index: {}, may-alias: {4,5}]
  %s5 = inlined_call_operand.vmem [shape: bf16[2,64,64], index: 5, kind: output, shape index: {}, may-alias: {4,5}]
  %s6 = sld [smem:[#allocation0]]
  $region53: #{densenet_forward.14} parent=0
    _
  %s8 = ssub.s32 1, %s6
  %s9 = scalar_select 0, %s8, %s6
  loop: start=0, step=1, limit=4
  $region2: #{densenet_forward.14} parent=0 // loop_pre_header
    _
  $region3: #{densenet_forward.14} parent=0 // loop_header
    %s11 = sphi 0, %s15
    %p12 = scmp.ge.s32.totalorder %s11, 4
    %s21 = sphi 0, %s23
    %s24 = sphi 0, %s21
    %s25 = sphi 0, %s24
    %s41 = sphi 0, %s25
    %s45 = sphi 0, %s45
    %s47 = sphi 0, %s45
    %s48 = sphi 0, %s47
    %s62 = sphi 0, %s48
    %s66 = sphi 0, %s66
    %s68 = sphi 0, %s66
    %s69 = sphi 0, %s68
    %s83 = sphi 0, %s69
    %s87 = sphi 0, %s87
    %s89 = sphi 0, %s87
    %s90 = sphi 0, %s89
    %s104 = sphi 0, %s90
    %s110 = sphi 0, %s112
    %s113 = sphi 0, %s110
    %s114 = sphi 0, %s113
    %s130 = sphi 0, %s114
    %s136 = sphi 0, %s138
    %s139 = sphi 0, %s136
    %s140 = sphi 0, %s139
    %s156 = sphi 0, %s140
  $region4: #{densenet_forward.14} parent=0 // loop_header_branch
    %14 = sbr.rel (%p12) target = $region8
  $region5: #{densenet_forward.14} parent=0 // loop_body
    %s16 = ssub.s32 %s11, 1
    %s17 = ssub.s32 %s11, 2
    %s18 = sadd.s32 %s11, 1
    %s19 = ssub.s32 %s11, %s18
    %p20 = scmp.eq.s32.totalorder %s19, 0
    %s22 = sadd.s32 %s21, 1
    %s23 = scalar_select %p20, %s21, %s22
    %p26 = pneg %p20
    %p27 = scmp.eq.s32.totalorder %s11, 1
    %p28 = por %p26, %p27
    %p29 = scmp.ne.s32.totalorder %s21, %s24
    %p30 = scmp.eq.s32.totalorder %s11, 0
    %p31 = por %p29, %p30
    %p32 = scmp.ne.s32.totalorder %s21, %s24
    %p33 = scmp.eq.s32.totalorder %s16, 1
    %p34 = por %p32, %p33
    %p35 = scmp.ne.s32.totalorder %s24, %s25
    %p36 = scmp.eq.s32.totalorder %s16, 0
    %p37 = por %p35, %p36
    %p38 = scmp.ne.s32.totalorder %s24, %s25
    %p39 = scmp.eq.s32.totalorder %s17, 1
    %p40 = por %p38, %p39
    %p42 = scmp.ne.s32.totalorder %s25, %s41
    %p43 = scmp.eq.s32.totalorder %s17, 0
    %p44 = por %p42, %p43
    %s46 = sadd.s32 %s45, 1
    %p49 = scmp.eq.s32.totalorder %s11, 1
    %p50 = scmp.ne.s32.totalorder %s45, %s47
    %p51 = scmp.eq.s32.totalorder %s11, 0
    %p52 = por %p50, %p51
    %p53 = scmp.ne.s32.totalorder %s45, %s47
    %p54 = scmp.eq.s32.totalorder %s16, 1
    %p55 = por %p53, %p54
    %p56 = scmp.ne.s32.totalorder %s47, %s48
    %p57 = scmp.eq.s32.totalorder %s16, 0
    %p58 = por %p56, %p57
    %p59 = scmp.ne.s32.totalorder %s47, %s48
    %p60 = scmp.eq.s32.totalorder %s17, 1
    %p61 = por %p59, %p60
    %p63 = scmp.ne.s32.totalorder %s48, %s62
    %p64 = scmp.eq.s32.totalorder %s17, 0
    %p65 = por %p63, %p64
    %s67 = sadd.s32 %s66, 1
    %p70 = scmp.eq.s32.totalorder %s11, 1
    %p71 = scmp.ne.s32.totalorder %s66, %s68
    %p72 = scmp.eq.s32.totalorder %s11, 0
    %p73 = por %p71, %p72
    %p74 = scmp.ne.s32.totalorder %s66, %s68
    %p75 = scmp.eq.s32.totalorder %s16, 1
    %p76 = por %p74, %p75
    %p77 = scmp.ne.s32.totalorder %s68, %s69
    %p78 = scmp.eq.s32.totalorder %s16, 0
    %p79 = por %p77, %p78
    %p80 = scmp.ne.s32.totalorder %s68, %s69
    %p81 = scmp.eq.s32.totalorder %s17, 1
    %p82 = por %p80, %p81
    %p84 = scmp.ne.s32.totalorder %s69, %s83
    %p85 = scmp.eq.s32.totalorder %s17, 0
    %p86 = por %p84, %p85
    %s88 = sadd.s32 %s87, 1
    %p91 = scmp.eq.s32.totalorder %s11, 1
    %p92 = scmp.ne.s32.totalorder %s87, %s89
    %p93 = scmp.eq.s32.totalorder %s11, 0
    %p94 = por %p92, %p93
    %p95 = scmp.ne.s32.totalorder %s87, %s89
    %p96 = scmp.eq.s32.totalorder %s16, 1
    %p97 = por %p95, %p96
    %p98 = scmp.ne.s32.totalorder %s89, %s90
    %p99 = scmp.eq.s32.totalorder %s16, 0
    %p100 = por %p98, %p99
    %p101 = scmp.ne.s32.totalorder %s89, %s90
    %p102 = scmp.eq.s32.totalorder %s17, 1
    %p103 = por %p101, %p102
    %p105 = scmp.ne.s32.totalorder %s90, %s104
    %p106 = scmp.eq.s32.totalorder %s17, 0
    %p107 = por %p105, %p106
    %s108 = ssub.s32 %s11, %s18
    %p109 = scmp.eq.s32.totalorder %s108, 0
    %s111 = sadd.s32 %s110, 1
    %s112 = scalar_select %p109, %s110, %s111
    %p115 = pneg %p109
    %p116 = scmp.eq.s32.totalorder %s11, 1
    %p117 = por %p115, %p116
    %p118 = scmp.ne.s32.totalorder %s110, %s113
    %p119 = scmp.eq.s32.totalorder %s11, 0
    %p120 = por %p118, %p119
    %p121 = scmp.ne.s32.totalorder %s110, %s113
    %p122 = scmp.eq.s32.totalorder %s16, 1
    %p123 = por %p121, %p122
    %p124 = scmp.ne.s32.totalorder %s113, %s114
    %p125 = scmp.eq.s32.totalorder %s16, 0
    %p126 = por %p124, %p125
    %p127 = scmp.ne.s32.totalorder %s113, %s114
    %p128 = scmp.eq.s32.totalorder %s17, 1
    %p129 = por %p127, %p128
    %p131 = scmp.ne.s32.totalorder %s114, %s130
    %p132 = scmp.eq.s32.totalorder %s17, 0
    %p133 = por %p131, %p132
    %s134 = ssub.s32 %s11, %s18
    %p135 = scmp.eq.s32.totalorder %s134, 0
    %s137 = sadd.s32 %s136, 1
    %s138 = scalar_select %p135, %s136, %s137
    %p141 = pneg %p135
    %p142 = scmp.eq.s32.totalorder %s11, 1
    %p143 = por %p141, %p142
    %p144 = scmp.ne.s32.totalorder %s136, %s139
    %p145 = scmp.eq.s32.totalorder %s11, 0
    %p146 = por %p144, %p145
    %p147 = scmp.ne.s32.totalorder %s136, %s139
    %p148 = scmp.eq.s32.totalorder %s16, 1
    %p149 = por %p147, %p148
    %p150 = scmp.ne.s32.totalorder %s139, %s140
    %p151 = scmp.eq.s32.totalorder %s16, 0
    %p152 = por %p150, %p151
    %p153 = scmp.ne.s32.totalorder %s139, %s140
    %p154 = scmp.eq.s32.totalorder %s17, 1
    %p155 = por %p153, %p154
    %p157 = scmp.ne.s32.totalorder %s140, %s156
    %p158 = scmp.eq.s32.totalorder %s17, 0
    %p159 = por %p157, %p158
    %p160 = scmp.le.s32.totalorder 1, %s11
    %p161 = scmp.lt.s32.totalorder %s11, 3
    %p162 = pnand %p160, %p161
    %p163 = pneg %p162
    // Predicated region
    $region9: #{densenet_forward.14} parent=5 // pred_check
      _
    $region10: #{densenet_forward.14} parent=5 // pred_check_branch
      %165 = sbr.rel (%p162) target = $region12
    $region11: #{densenet_forward.14} parent=5 // pred_region
      %s166 = ssub.s32 %s11, 1
      // Predicated region
      $region13: #{densenet_forward.14} parent=11 // pred_check
        %p167 = pneg %p58
      $region14: #{densenet_forward.14} parent=11 // pred_check_branch
        %169 = sbr.rel (%p167) target = $region16
      $region15: #{densenet_forward.14} parent=11 // pred_region
        _
      $region16: #{densenet_forward.14} parent=11 // pred_fallthru
        _
      // Predicated region
      $region17: #{densenet_forward.14} parent=11 // pred_check
        %p170 = pneg %p79
      $region18: #{densenet_forward.14} parent=11 // pred_check_branch
        %172 = sbr.rel (%p170) target = $region20
      $region19: #{densenet_forward.14} parent=11 // pred_region
        _
      $region20: #{densenet_forward.14} parent=11 // pred_fallthru
        _
      // Predicated region
      $region21: #{densenet_forward.14} parent=11 // pred_check
        %p173 = pneg %p100
      $region22: #{densenet_forward.14} parent=11 // pred_check_branch
        %175 = sbr.rel (%p173) target = $region24
      $region23: #{densenet_forward.14} parent=11 // pred_region
        _
      $region24: #{densenet_forward.14} parent=11 // pred_fallthru
        _
    $region12: #{densenet_forward.14} parent=5 // pred_fallthru
      _
    %p176 = scmp.lt.s32.totalorder %s11, 2
    // Predicated region
    $region25: #{densenet_forward.14} parent=5 // pred_check
      %p177 = pneg %p176
    $region26: #{densenet_forward.14} parent=5 // pred_check_branch
      %179 = sbr.rel (%p177) target = $region28
    $region27: #{densenet_forward.14} parent=5 // pred_region
      // Predicated region
      $region29: #{densenet_forward.14} parent=27 // pred_check
        %p180 = pneg %p31
      $region30: #{densenet_forward.14} parent=27 // pred_check_branch
        %182 = sbr.rel (%p180) target = $region32
      $region31: #{densenet_forward.14} parent=27 // pred_region
        %p183 = scmp.lt.s32.totalorder %s11, 1
        %s184 = scalar_select %p183, %s11, 1
        %s185 = smul.addr %s184, 4
        %s186 = smul.addr %s185, 4
        %s187 = scalar_lea.vmem %s0, %s186
      $region32: #{densenet_forward.14} parent=27 // pred_fallthru
        _
      // Predicated region
      $region33: #{densenet_forward.14} parent=27 // pred_check
        %p188 = pneg %p120
      $region34: #{densenet_forward.14} parent=27 // pred_check_branch
        %190 = sbr.rel (%p188) target = $region36
      $region35: #{densenet_forward.14} parent=27 // pred_region
        %p191 = scmp.lt.s32.totalorder %s11, 1
        %s192 = scalar_select %p191, %s11, 1
        %s193 = smul.addr %s192, 8
        %s194 = sadd.s32 4, %s193
        %s195 = smul.addr %s194, 4
        %s196 = scalar_lea.vmem %s4, %s195
      $region36: #{densenet_forward.14} parent=27 // pred_fallthru
        _
    $region28: #{densenet_forward.14} parent=5 // pred_fallthru
      _
    %p197 = scmp.le.s32.totalorder 1, %s11
    %p198 = scmp.lt.s32.totalorder %s11, 3
    %p199 = pnand %p197, %p198
    %p200 = pneg %p199
    // Predicated region
    $region37: #{densenet_forward.14} parent=5 // pred_check
      _
    $region38: #{densenet_forward.14} parent=5 // pred_check_branch
      %202 = sbr.rel (%p199) target = $region40
    $region39: #{densenet_forward.14} parent=5 // pred_region
      %s203 = ssub.s32 %s11, 1
      %p204 = scmp.lt.s32.totalorder %s16, 1
      %s205 = scalar_select %p204, %s16, 1
      %s206 = smul.addr %s205, 4
      %s207 = smul.addr %s206, 4
      %s208 = scalar_lea.vmem %s0, %s207
      %p209 = pneg %p37
      %p210 = pneg %p34
      %p211 = pneg %p58
      %p212 = pneg %p55
      %p213 = pneg %p79
      %p214 = pneg %p76
      %p215 = pneg %p100
      %p216 = pneg %p97
      %p217 = scmp.lt.s32.totalorder %s16, 1
      %s218 = scalar_select %p217, %s16, 1
      %s219 = smul.addr %s218, 8
      %s220 = sadd.s32 4, %s219
      %s221 = smul.addr %s220, 4
      %s222 = scalar_lea.vmem %s4, %s221
      %p223 = pneg %p126
      %p224 = pneg %p123
      %p225 = pneg %p152
      %p226 = pneg %p149
      %p227 = scmp.lt.s32.totalorder %s16, 1
      %s228 = scalar_select %p227, %s16, 1
      %s229 = smul.addr %s228, 8
      %s230 = sadd.s32 4, %s229
      %s231 = smul.addr %s230, 4
      %s232 = scalar_lea.vmem %s5, %s231
      %p233 = scmp.lt.s32.totalorder %s16, 1
      %s234 = scalar_select %p233, %s16, 1
      %s235 = smul.addr %s234, 4
      %s236 = smul.addr %s235, 4
      %s237 = scalar_lea.vmem %s0, %s236
      %p238 = scmp.lt.s32.totalorder %s16, 1
      %s239 = scalar_select %p238, %s16, 1
      %s240 = smul.addr %s239, 8
      %s241 = sadd.s32 4, %s240
      %s242 = smul.addr %s241, 4
      %s243 = scalar_lea.vmem %s4, %s242
      %p244 = scmp.lt.s32.totalorder %s16, 1
      %s245 = scalar_select %p244, %s16, 1
      %s246 = smul.addr %s245, 8
      %s247 = sadd.s32 4, %s246
      %s248 = smul.addr %s247, 4
      %s249 = scalar_lea.vmem %s5, %s248
      %v251 = vld [vmem:[%s237] sm:$0xf]
      %v252 = vld [vmem:[%s237 + $0x4] sm:$0xf]
      %v253 = vld [vmem:[%s237 + $0x8] sm:$0xf]
      %v254 = vld [vmem:[%s237 + $0xc] sm:$0xf]
      %v255 = vunpack.c.l.bf16 %v251
      %v256 = vunpack.c.l.bf16 %v252
      %v257 = vunpack.c.l.bf16 %v253
      %v258 = vunpack.c.l.bf16 %v254
      %v259 = vld [vmem:[%s1] sm:$0xff]
      %v260 = vld [vmem:[%s1 + $0x8] sm:$0xff]
      %v261 = vld [vmem:[%s1 + $0x10] sm:$0xff]
      %v262 = vld [vmem:[%s1 + $0x18] sm:$0xff]
      %264 = vset.pattern.permute.xlu0 0
      %265 = vperm.xlu0 %264, %v259
      %v266 = vpop.permute.xlu0 %265
      %269 = vset.pattern.permute.xlu0 0
      %270 = vperm.xlu0 %269, %v260
      %v271 = vpop.permute.xlu0 %270
      %274 = vset.pattern.permute.xlu0 0
      %275 = vperm.xlu0 %274, %v261
      %v276 = vpop.permute.xlu0 %275
      %279 = vset.pattern.permute.xlu0 0
      %280 = vperm.xlu0 %279, %v262
      %v281 = vpop.permute.xlu0 %280
      %v283 = vmul.f32 %v255, %v266
      %v284 = vmul.f32 %v256, %v271
      %v285 = vmul.f32 %v257, %v276
      %v286 = vmul.f32 %v258, %v281
      %v287 = vld [vmem:[%s2] sm:$0xff]
      %v288 = vld [vmem:[%s2 + $0x8] sm:$0xff]
      %v289 = vld [vmem:[%s2 + $0x10] sm:$0xff]
      %v290 = vld [vmem:[%s2 + $0x18] sm:$0xff]
      %292 = vset.pattern.permute.xlu0 0
      %293 = vperm.xlu0 %292, %v287
      %v294 = vpop.permute.xlu0 %293
      %297 = vset.pattern.permute.xlu0 0
      %298 = vperm.xlu0 %297, %v288
      %v299 = vpop.permute.xlu0 %298
      %302 = vset.pattern.permute.xlu0 0
      %303 = vperm.xlu0 %302, %v289
      %v304 = vpop.permute.xlu0 %303
      %307 = vset.pattern.permute.xlu0 0
      %308 = vperm.xlu0 %307, %v290
      %v309 = vpop.permute.xlu0 %308
      %v311 = vadd.f32 %v283, %v294
      %v312 = vadd.f32 %v284, %v299
      %v313 = vadd.f32 %v285, %v304
      %v314 = vadd.f32 %v286, %v309
      %v315 = vmax.f32 %v311, 0.0
      %v316 = vmax.f32 %v312, 0.0
      %v317 = vmax.f32 %v313, 0.0
      %v318 = vmax.f32 %v314, 0.0
      %v319 = vpack.c.bf16 %v316, %v315
      %v320 = vpack.c.bf16 %v318, %v317
      %323 = vrot.lane.b32.xlu0 %v319, 1
      %v324 = vpop.permute.xlu0 %323
      %325 = vrot.lane.b32.xlu0 %v320, 1
      %v326 = vpop.permute.xlu0 %325
      %vm327 = vcmask 7168
      %v330 = vsel %vm327, 0, %v324
      %v332 = vsel %vm327, 0, %v326
      %vm333 = vcmask 531456
      %v334 = vsel %vm333, %v330, 0
      %v336 = vsel %vm333, %v332, 0
      %v338 = vld [vmem:[%s3] sm:$0xf]
      %v339 = vld [vmem:[%s3 + $0x4] sm:$0xf]
      %s340 = scalar_lea.vmem %s3, 8
      %v341 = vld [vmem:[%s340] sm:$0xf]
      %v342 = vld [vmem:[%s340 + $0x4] sm:$0xf]
      %v345 = vunpack.c.l.b16 %v341
      %v346 = vunpack.c.l.b16 %v342
      %v347 = vpack.c.b16 %v346, %v345
      %350 = vrot.lane.b32.xlu0 %v334, 127
      %v351 = vpop.permute.xlu0 %350
      %352 = vrot.lane.b32.xlu0 %v336, 127
      %v353 = vpop.permute.xlu0 %352
      %vm356 = vcmask 261120
      %v358 = vsel %vm356, %v347, 0
      %360 = vmatprep.subr.bf16.mxu0 0
      %361 = vmatpush1.bf16.msra.mxu0 %v351
      %362 = vmatprep.subr.bf16.mxu0 0
      %363 = vmatpush1.bf16.msra.mxu0 %v353
      %364 = vmatprep.subr.bf16.mxu0 0
      %365 = vmatpush1.bf16.msra.mxu0 0
      %366 = vmatprep.subr.bf16.mxu0 0
      %367 = vmatpush1.bf16.msra.mxu0 0
      %368 = vmatprep.subr.bf16.mxu0 0
      %369 = vmatpush1.bf16.msra.mxu0 0
      %370 = vmatprep.subr.bf16.mxu0 0
      %371 = vmatpush1.bf16.msra.mxu0 0
      %372 = vmatprep.subr.bf16.mxu0 0
      %373 = vmatpush1.bf16.msra.mxu0 0
      %374 = vmatprep.subr.bf16.mxu0 0
      %375 = vmatpush1.bf16.msra.mxu0 0
      %376 = vmatprep.subr.bf16.mxu0 0
      %377 = vmatpush1.bf16.msra.mxu0 0
      %378 = vmatprep.subr.bf16.mxu0 0
      %379 = vmatpush1.bf16.msra.mxu0 0
      %380 = vmatprep.subr.bf16.mxu0 0
      %381 = vmatpush1.bf16.msra.mxu0 0
      %382 = vmatprep.subr.bf16.mxu0 0
      %383 = vmatpush1.bf16.msra.mxu0 0
      %384 = vmatprep.subr.bf16.mxu0 0
      %385 = vmatpush1.bf16.msra.mxu0 0
      %386 = vmatprep.subr.bf16.mxu0 0
      %387 = vmatpush1.bf16.msra.mxu0 0
      %388 = vmatprep.subr.bf16.mxu0 0
      %389 = vmatpush1.bf16.msra.mxu0 0
      %390 = vmatprep.subr.bf16.mxu0 0
      %391 = vmatpush1.bf16.msra.mxu0 0
      %392 = vmatprep.mubr.bf16.mxu0 0
      %393 = vmatmul.mubr.bf16.gmra.mrb[0].mxu0 %v358
      %v394 = vpop.f32.mrb[0].mxu0
      %v395 = vadd.f32 0.0, %v394
      %v396 = vpop.f32.mrb[0].mxu0
      %v397 = vpop.f32.mrb[0].mxu0
      %v398 = vadd.f32 0.0, %v397
      %v399 = vpop.f32.mrb[0].mxu0
      %400 = vdwg.mxu0
      %v403 = vunpack.c.l.b16 %v338
      %v404 = vunpack.c.l.b16 %v339
      %v405 = vpack.c.b16 %v404, %v403
      %v407 = vsel %vm356, %v405, 0
      %409 = vmatprep.subr.bf16.mxu0 0
      %410 = vmatpush1.bf16.msra.mxu0 %v334
      %411 = vmatprep.subr.bf16.mxu0 0
      %412 = vmatpush1.bf16.msra.mxu0 %v336
      %413 = vmatprep.subr.bf16.mxu0 0
      %414 = vmatpush1.bf16.msra.mxu0 0
      %415 = vmatprep.subr.bf16.mxu0 0
      %416 = vmatpush1.bf16.msra.mxu0 0
      %417 = vmatprep.subr.bf16.mxu0 0
      %418 = vmatpush1.bf16.msra.mxu0 0
      %419 = vmatprep.subr.bf16.mxu0 0
      %420 = vmatpush1.bf16.msra.mxu0 0
      %421 = vmatprep.subr.bf16.mxu0 0
      %422 = vmatpush1.bf16.msra.mxu0 0
      %423 = vmatprep.subr.bf16.mxu0 0
      %424 = vmatpush1.bf16.msra.mxu0 0
      %425 = vmatprep.subr.bf16.mxu0 0
      %426 = vmatpush1.bf16.msra.mxu0 0
      %427 = vmatprep.subr.bf16.mxu0 0
      %428 = vmatpush1.bf16.msra.mxu0 0
      %429 = vmatprep.subr.bf16.mxu0 0
      %430 = vmatpush1.bf16.msra.mxu0 0
      %431 = vmatprep.subr.bf16.mxu0 0
      %432 = vmatpush1.bf16.msra.mxu0 0
      %433 = vmatprep.subr.bf16.mxu0 0
      %434 = vmatpush1.bf16.msra.mxu0 0
      %435 = vmatprep.subr.bf16.mxu0 0
      %436 = vmatpush1.bf16.msra.mxu0 0
      %437 = vmatprep.subr.bf16.mxu0 0
      %438 = vmatpush1.bf16.msra.mxu0 0
      %439 = vmatprep.subr.bf16.mxu0 0
      %440 = vmatpush1.bf16.msra.mxu0 0
      %441 = vmatprep.mubr.bf16.mxu0 0
      %442 = vmatmul.mubr.bf16.gmra.mrb[0].mxu0 %v407
      %v443 = vpop.f32.mrb[0].mxu0
      %v444 = vadd.f32 %v395, %v443
      %v445 = vpop.f32.mrb[0].mxu0
      %v446 = vpop.f32.mrb[0].mxu0
      %v447 = vadd.f32 %v398, %v446
      %v448 = vpop.f32.mrb[0].mxu0
      %449 = vdwg.mxu0
      %s450 = scalar_lea.vmem %s3, 16
      %v451 = vld [vmem:[%s450] sm:$0xf]
      %v452 = vld [vmem:[%s450 + $0x4] sm:$0xf]
      %v455 = vunpack.c.l.b16 %v451
      %v456 = vunpack.c.l.b16 %v452
      %v457 = vpack.c.b16 %v456, %v455
      %458 = vrot.lane.b32.xlu0 %v334, 126
      %v459 = vpop.permute.xlu0 %458
      %460 = vrot.lane.b32.xlu0 %v336, 126
      %v461 = vpop.permute.xlu0 %460
      %v465 = vsel %vm356, %v457, 0
      %467 = vmatprep.subr.bf16.mxu0 0
      %468 = vmatpush1.bf16.msra.mxu0 %v459
      %469 = vmatprep.subr.bf16.mxu0 0
      %470 = vmatpush1.bf16.msra.mxu0 %v461
      %471 = vmatprep.subr.bf16.mxu0 0
      %472 = vmatpush1.bf16.msra.mxu0 0
      %473 = vmatprep.subr.bf16.mxu0 0
      %474 = vmatpush1.bf16.msra.mxu0 0
      %475 = vmatprep.subr.bf16.mxu0 0
      %476 = vmatpush1.bf16.msra.mxu0 0
      %477 = vmatprep.subr.bf16.mxu0 0
      %478 = vmatpush1.bf16.msra.mxu0 0
      %479 = vmatprep.subr.bf16.mxu0 0
      %480 = vmatpush1.bf16.msra.mxu0 0
      %481 = vmatprep.subr.bf16.mxu0 0
      %482 = vmatpush1.bf16.msra.mxu0 0
      %483 = vmatprep.subr.bf16.mxu0 0
      %484 = vmatpush1.bf16.msra.mxu0 0
      %485 = vmatprep.subr.bf16.mxu0 0
      %486 = vmatpush1.bf16.msra.mxu0 0
      %487 = vmatprep.subr.bf16.mxu0 0
      %488 = vmatpush1.bf16.msra.mxu0 0
      %489 = vmatprep.subr.bf16.mxu0 0
      %490 = vmatpush1.bf16.msra.mxu0 0
      %491 = vmatprep.subr.bf16.mxu0 0
      %492 = vmatpush1.bf16.msra.mxu0 0
      %493 = vmatprep.subr.bf16.mxu0 0
      %494 = vmatpush1.bf16.msra.mxu0 0
      %495 = vmatprep.subr.bf16.mxu0 0
      %496 = vmatpush1.bf16.msra.mxu0 0
      %497 = vmatprep.subr.bf16.mxu0 0
      %498 = vmatpush1.bf16.msra.mxu0 0
      %499 = vmatprep.mubr.bf16.mxu0 0
      %500 = vmatmul.mubr.bf16.gmra.mrb[0].mxu0 %v465
      %v501 = vpop.f32.mrb[0].mxu0
      %v502 = vadd.f32 0.0, %v501
      %v503 = vpop.f32.mrb[0].mxu0
      %v504 = vpop.f32.mrb[0].mxu0
      %v505 = vadd.f32 0.0, %v504
      %v506 = vpop.f32.mrb[0].mxu0
      %507 = vdwg.mxu0
      %v508 = vadd.f32 %v444, %v502
      %v509 = vadd.f32 %v447, %v505
      %v510 = vpack.c.bf16 %v509, %v508
      %v512 = vunpack.c.l.b16 %v510
      %v513 = vunpack.c.h.b16 %v510
      %v514 = vpack.c.b16 %v512, %v512
      %v515 = vpack.c.b16 %v513, %v513
      %vm518 = vcmask 519168
      %519 = vst.msk [vmem:[%s249] sm:$0xf] %vm518, %v514
      %520 = vst.msk [vmem:[%s249 + $0x4] sm:$0xf] %vm518, %v515
      %p521 = scmp.lt.s32.totalorder %s16, 1
      %s522 = scalar_select %p521, %s16, 1
      %s523 = smul.addr %s522, 8
      %s524 = sadd.s32 4, %s523
      %s525 = smul.addr %s524, 4
      %s526 = scalar_lea.vmem %s5, %s525
      // Predicated region
      $region41: #{densenet_forward.14} parent=39 // pred_check
        %p527 = pneg %p149
      $region42: #{densenet_forward.14} parent=39 // pred_check_branch
        %529 = sbr.rel (%p527) target = $region44
      $region43: #{densenet_forward.14} parent=39 // pred_region
        _
      $region44: #{densenet_forward.14} parent=39 // pred_fallthru
        _
    $region40: #{densenet_forward.14} parent=5 // pred_fallthru
      _
    %p530 = scmp.le.s32.totalorder 2, %s11
    // Predicated region
    $region45: #{densenet_forward.14} parent=5 // pred_check
      %p531 = pneg %p530
    $region46: #{densenet_forward.14} parent=5 // pred_check_branch
      %533 = sbr.rel (%p531) target = $region48
    $region47: #{densenet_forward.14} parent=5 // pred_region
      %s534 = ssub.s32 %s11, 2
      // Predicated region
      $region49: #{densenet_forward.14} parent=47 // pred_check
        %p535 = pneg %p155
      $region50: #{densenet_forward.14} parent=47 // pred_check_branch
        %537 = sbr.rel (%p535) target = $region52
      $region51: #{densenet_forward.14} parent=47 // pred_region
        %p538 = scmp.lt.s32.totalorder %s17, 1
        %s539 = scalar_select %p538, %s17, 1
        %s540 = smul.addr %s539, 8
        %s541 = sadd.s32 4, %s540
        %s542 = smul.addr %s541, 4
        %s543 = scalar_lea.vmem %s5, %s542
      $region52: #{densenet_forward.14} parent=47 // pred_fallthru
        _
    $region48: #{densenet_forward.14} parent=5 // pred_fallthru
      _
  $region6: #{densenet_forward.14} parent=0 // loop_footer
    %s15 = sadd.s32 1, %s11
  $region7: #{densenet_forward.14} parent=0 // loop_footer_branch
    %10 = sbr.rel target = $region3
  $region8: #{densenet_forward.14} parent=0 // loop_exit
    _

// kernel: densenet_forward.12
$region0: #{densenet_forward.12}
  #allocation0 [shape = 'u32[]', space=smem, size = 0x4, offset = 0x4, fixed_abs, tag = 'smem constant byte address 0x4 - core index']
  #allocation1 [shape = 'u32[144,128]{1,0:T(1,128)}', space=vmem, size = 0x12000, scoped, tag = 'internal scratch']
  %s0 = inlined_call_operand.vmem [shape: f32[2,48,64], index: 0, kind: input, shape index: {}]
  %s1 = inlined_call_operand.vmem [shape: bf16[2,32,48], index: 1, kind: input, shape index: {}]
  %s2 = inlined_call_operand.vmem [shape: bf16[3,32,48], index: 2, kind: input, shape index: {}]
  %s3 = inlined_call_operand.vmem [shape: f32[32,1], index: 3, kind: input, shape index: {}]
  %s4 = inlined_call_operand.vmem [shape: f32[32,1], index: 4, kind: input, shape index: {}]
  %s5 = inlined_call_operand.vmem [shape: bf16[2,64,64], index: 5, kind: output, shape index: {}]
  %s6 = sld [smem:[#allocation0]]
  $region53: #{densenet_forward.12} parent=0
    _
  %s8 = ssub.s32 1, %s6
  %s9 = scalar_select 0, %s8, %s6
  loop: start=0, step=1, limit=4
  $region2: #{densenet_forward.12} parent=0 // loop_pre_header
    _
  $region3: #{densenet_forward.12} parent=0 // loop_header
    %s11 = sphi 0, %s15
    %p12 = scmp.ge.s32.totalorder %s11, 4
    %s21 = sphi 0, %s23
    %s24 = sphi 0, %s21
    %s25 = sphi 0, %s24
    %s41 = sphi 0, %s25
    %s45 = sphi 0, %s45
    %s47 = sphi 0, %s45
    %s48 = sphi 0, %s47
    %s62 = sphi 0, %s48
    %s66 = sphi 0, %s66
    %s68 = sphi 0, %s66
    %s69 = sphi 0, %s68
    %s83 = sphi 0, %s69
    %s87 = sphi 0, %s87
    %s89 = sphi 0, %s87
    %s90 = sphi 0, %s89
    %s104 = sphi 0, %s90
    %s108 = sphi 0, %s108
    %s110 = sphi 0, %s108
    %s111 = sphi 0, %s110
    %s125 = sphi 0, %s111
    %s131 = sphi 0, %s133
    %s134 = sphi 0, %s131
    %s135 = sphi 0, %s134
    %s151 = sphi 0, %s135
  $region4: #{densenet_forward.12} parent=0 // loop_header_branch
    %14 = sbr.rel (%p12) target = $region8
  $region5: #{densenet_forward.12} parent=0 // loop_body
    %s16 = ssub.s32 %s11, 1
    %s17 = ssub.s32 %s11, 2
    %s18 = sadd.s32 %s11, 1
    %s19 = ssub.s32 %s11, %s18
    %p20 = scmp.eq.s32.totalorder %s19, 0
    %s22 = sadd.s32 %s21, 1
    %s23 = scalar_select %p20, %s21, %s22
    %p26 = pneg %p20
    %p27 = scmp.eq.s32.totalorder %s11, 1
    %p28 = por %p26, %p27
    %p29 = scmp.ne.s32.totalorder %s21, %s24
    %p30 = scmp.eq.s32.totalorder %s11, 0
    %p31 = por %p29, %p30
    %p32 = scmp.ne.s32.totalorder %s21, %s24
    %p33 = scmp.eq.s32.totalorder %s16, 1
    %p34 = por %p32, %p33
    %p35 = scmp.ne.s32.totalorder %s24, %s25
    %p36 = scmp.eq.s32.totalorder %s16, 0
    %p37 = por %p35, %p36
    %p38 = scmp.ne.s32.totalorder %s24, %s25
    %p39 = scmp.eq.s32.totalorder %s17, 1
    %p40 = por %p38, %p39
    %p42 = scmp.ne.s32.totalorder %s25, %s41
    %p43 = scmp.eq.s32.totalorder %s17, 0
    %p44 = por %p42, %p43
    %s46 = sadd.s32 %s45, 1
    %p49 = scmp.eq.s32.totalorder %s11, 1
    %p50 = scmp.ne.s32.totalorder %s45, %s47
    %p51 = scmp.eq.s32.totalorder %s11, 0
    %p52 = por %p50, %p51
    %p53 = scmp.ne.s32.totalorder %s45, %s47
    %p54 = scmp.eq.s32.totalorder %s16, 1
    %p55 = por %p53, %p54
    %p56 = scmp.ne.s32.totalorder %s47, %s48
    %p57 = scmp.eq.s32.totalorder %s16, 0
    %p58 = por %p56, %p57
    %p59 = scmp.ne.s32.totalorder %s47, %s48
    %p60 = scmp.eq.s32.totalorder %s17, 1
    %p61 = por %p59, %p60
    %p63 = scmp.ne.s32.totalorder %s48, %s62
    %p64 = scmp.eq.s32.totalorder %s17, 0
    %p65 = por %p63, %p64
    %s67 = sadd.s32 %s66, 1
    %p70 = scmp.eq.s32.totalorder %s11, 1
    %p71 = scmp.ne.s32.totalorder %s66, %s68
    %p72 = scmp.eq.s32.totalorder %s11, 0
    %p73 = por %p71, %p72
    %p74 = scmp.ne.s32.totalorder %s66, %s68
    %p75 = scmp.eq.s32.totalorder %s16, 1
    %p76 = por %p74, %p75
    %p77 = scmp.ne.s32.totalorder %s68, %s69
    %p78 = scmp.eq.s32.totalorder %s16, 0
    %p79 = por %p77, %p78
    %p80 = scmp.ne.s32.totalorder %s68, %s69
    %p81 = scmp.eq.s32.totalorder %s17, 1
    %p82 = por %p80, %p81
    %p84 = scmp.ne.s32.totalorder %s69, %s83
    %p85 = scmp.eq.s32.totalorder %s17, 0
    %p86 = por %p84, %p85
    %s88 = sadd.s32 %s87, 1
    %p91 = scmp.eq.s32.totalorder %s11, 1
    %p92 = scmp.ne.s32.totalorder %s87, %s89
    %p93 = scmp.eq.s32.totalorder %s11, 0
    %p94 = por %p92, %p93
    %p95 = scmp.ne.s32.totalorder %s87, %s89
    %p96 = scmp.eq.s32.totalorder %s16, 1
    %p97 = por %p95, %p96
    %p98 = scmp.ne.s32.totalorder %s89, %s90
    %p99 = scmp.eq.s32.totalorder %s16, 0
    %p100 = por %p98, %p99
    %p101 = scmp.ne.s32.totalorder %s89, %s90
    %p102 = scmp.eq.s32.totalorder %s17, 1
    %p103 = por %p101, %p102
    %p105 = scmp.ne.s32.totalorder %s90, %s104
    %p106 = scmp.eq.s32.totalorder %s17, 0
    %p107 = por %p105, %p106
    %s109 = sadd.s32 %s108, 1
    %p112 = scmp.eq.s32.totalorder %s11, 1
    %p113 = scmp.ne.s32.totalorder %s108, %s110
    %p114 = scmp.eq.s32.totalorder %s11, 0
    %p115 = por %p113, %p114
    %p116 = scmp.ne.s32.totalorder %s108, %s110
    %p117 = scmp.eq.s32.totalorder %s16, 1
    %p118 = por %p116, %p117
    %p119 = scmp.ne.s32.totalorder %s110, %s111
    %p120 = scmp.eq.s32.totalorder %s16, 0
    %p121 = por %p119, %p120
    %p122 = scmp.ne.s32.totalorder %s110, %s111
    %p123 = scmp.eq.s32.totalorder %s17, 1
    %p124 = por %p122, %p123
    %p126 = scmp.ne.s32.totalorder %s111, %s125
    %p127 = scmp.eq.s32.totalorder %s17, 0
    %p128 = por %p126, %p127
    %s129 = ssub.s32 %s11, %s18
    %p130 = scmp.eq.s32.totalorder %s129, 0
    %s132 = sadd.s32 %s131, 1
    %s133 = scalar_select %p130, %s131, %s132
    %p136 = pneg %p130
    %p137 = scmp.eq.s32.totalorder %s11, 1
    %p138 = por %p136, %p137
    %p139 = scmp.ne.s32.totalorder %s131, %s134
    %p140 = scmp.eq.s32.totalorder %s11, 0
    %p141 = por %p139, %p140
    %p142 = scmp.ne.s32.totalorder %s131, %s134
    %p143 = scmp.eq.s32.totalorder %s16, 1
    %p144 = por %p142, %p143
    %p145 = scmp.ne.s32.totalorder %s134, %s135
    %p146 = scmp.eq.s32.totalorder %s16, 0
    %p147 = por %p145, %p146
    %p148 = scmp.ne.s32.totalorder %s134, %s135
    %p149 = scmp.eq.s32.totalorder %s17, 1
    %p150 = por %p148, %p149
    %p152 = scmp.ne.s32.totalorder %s135, %s151
    %p153 = scmp.eq.s32.totalorder %s17, 0
    %p154 = por %p152, %p153
    %p155 = scmp.le.s32.totalorder 1, %s11
    %p156 = scmp.lt.s32.totalorder %s11, 3
    %p157 = pnand %p155, %p156
    %p158 = pneg %p157
    // Predicated region
    $region9: #{densenet_forward.12} parent=5 // pred_check
      _
    $region10: #{densenet_forward.12} parent=5 // pred_check_branch
      %160 = sbr.rel (%p157) target = $region12
    $region11: #{densenet_forward.12} parent=5 // pred_region
      %s161 = ssub.s32 %s11, 1
      // Predicated region
      $region13: #{densenet_forward.12} parent=11 // pred_check
        %p162 = pneg %p58
      $region14: #{densenet_forward.12} parent=11 // pred_check_branch
        %164 = sbr.rel (%p162) target = $region16
      $region15: #{densenet_forward.12} parent=11 // pred_region
        _
      $region16: #{densenet_forward.12} parent=11 // pred_fallthru
        _
      // Predicated region
      $region17: #{densenet_forward.12} parent=11 // pred_check
        %p165 = pneg %p79
      $region18: #{densenet_forward.12} parent=11 // pred_check_branch
        %167 = sbr.rel (%p165) target = $region20
      $region19: #{densenet_forward.12} parent=11 // pred_region
        _
      $region20: #{densenet_forward.12} parent=11 // pred_fallthru
        _
      // Predicated region
      $region21: #{densenet_forward.12} parent=11 // pred_check
        %p168 = pneg %p100
      $region22: #{densenet_forward.12} parent=11 // pred_check_branch
        %170 = sbr.rel (%p168) target = $region24
      $region23: #{densenet_forward.12} parent=11 // pred_region
        _
      $region24: #{densenet_forward.12} parent=11 // pred_fallthru
        _
      // Predicated region
      $region25: #{densenet_forward.12} parent=11 // pred_check
        %p171 = pneg %p121
      $region26: #{densenet_forward.12} parent=11 // pred_check_branch
        %173 = sbr.rel (%p171) target = $region28
      $region27: #{densenet_forward.12} parent=11 // pred_region
        _
      $region28: #{densenet_forward.12} parent=11 // pred_fallthru
        _
    $region12: #{densenet_forward.12} parent=5 // pred_fallthru
      _
    %p174 = scmp.lt.s32.totalorder %s11, 2
    // Predicated region
    $region29: #{densenet_forward.12} parent=5 // pred_check
      %p175 = pneg %p174
    $region30: #{densenet_forward.12} parent=5 // pred_check_branch
      %177 = sbr.rel (%p175) target = $region32
    $region31: #{densenet_forward.12} parent=5 // pred_region
      // Predicated region
      $region33: #{densenet_forward.12} parent=31 // pred_check
        %p178 = pneg %p31
      $region34: #{densenet_forward.12} parent=31 // pred_check_branch
        %180 = sbr.rel (%p178) target = $region36
      $region35: #{densenet_forward.12} parent=31 // pred_region
        %p181 = scmp.lt.s32.totalorder %s11, 1
        %s182 = scalar_select %p181, %s11, 1
        %s183 = smul.addr %s182, 6
        %s184 = smul.addr %s183, 8
        %s185 = scalar_lea.vmem %s0, %s184
      $region36: #{densenet_forward.12} parent=31 // pred_fallthru
        _
    $region32: #{densenet_forward.12} parent=5 // pred_fallthru
      _
    %p186 = scmp.le.s32.totalorder 1, %s11
    %p187 = scmp.lt.s32.totalorder %s11, 3
    %p188 = pnand %p186, %p187
    %p189 = pneg %p188
    // Predicated region
    $region37: #{densenet_forward.12} parent=5 // pred_check
      _
    $region38: #{densenet_forward.12} parent=5 // pred_check_branch
      %191 = sbr.rel (%p188) target = $region40
    $region39: #{densenet_forward.12} parent=5 // pred_region
      %s192 = ssub.s32 %s11, 1
      %p193 = scmp.lt.s32.totalorder %s16, 1
      %s194 = scalar_select %p193, %s16, 1
      %s195 = smul.addr %s194, 6
      %s196 = smul.addr %s195, 8
      %s197 = scalar_lea.vmem %s0, %s196
      %p198 = pneg %p37
      %p199 = pneg %p34
      %p200 = pneg %p58
      %p201 = pneg %p55
      %p202 = pneg %p79
      %p203 = pneg %p76
      %p204 = pneg %p100
      %p205 = pneg %p97
      %p206 = pneg %p121
      %p207 = pneg %p118
      %p208 = pneg %p147
      %p209 = pneg %p144
      %p210 = scmp.lt.s32.totalorder %s16, 1
      %s211 = scalar_select %p210, %s16, 1
      %s212 = smul.addr %s211, 8
      %s213 = smul.addr %s212, 4
      %s214 = scalar_lea.vmem %s5, %s213
      %p215 = scmp.lt.s32.totalorder %s16, 1
      %s216 = scalar_select %p215, %s16, 1
      %s217 = smul.addr %s216, 6
      %s218 = smul.addr %s217, 8
      %s219 = scalar_lea.vmem %s0, %s218
      %p220 = scmp.lt.s32.totalorder %s16, 1
      %s221 = scalar_select %p220, %s16, 1
      %s222 = smul.addr %s221, 8
      %s223 = smul.addr %s222, 4
      %s224 = scalar_lea.vmem %s5, %s223
      %v226 = vld [vmem:[%s219] sm:$0xff]
      %v227 = vld [vmem:[%s219 + $0x8] sm:$0xff]
      %v228 = vld [vmem:[%s219 + $0x10] sm:$0xff]
      %v229 = vld [vmem:[%s219 + $0x18] sm:$0xff]
      %v230 = vld [vmem:[%s219 + $0x20] sm:$0xff]
      %v231 = vld [vmem:[%s219 + $0x28] sm:$0xff]
      %v232 = vpack.c.bf16 %v227, %v226
      %v233 = vpack.c.bf16 %v229, %v228
      %v234 = vpack.c.bf16 %v231, %v230
      %238 = vrot.lane.b32.xlu0 %v232, 1
      %v239 = vpop.permute.xlu0 %238
      %240 = vrot.lane.b32.xlu0 %v233, 1
      %v241 = vpop.permute.xlu0 %240
      %242 = vrot.lane.b32.xlu0 %v234, 1
      %v243 = vpop.permute.xlu0 %242
      %vm244 = vcmask 7168
      %v247 = vsel %vm244, 0, %v239
      %v250 = vsel %vm244, 0, %v241
      %v253 = vsel %vm244, 0, %v243
      %v255 = vld [vmem:[%s1] sm:$0xf]
      %v256 = vld [vmem:[%s1 + $0x4] sm:$0xf]
      %v257 = vld [vmem:[%s1 + $0x8] sm:$0xf]
      %v258 = vld [vmem:[%s1 + $0xc] sm:$0xf]
      %s259 = scalar_lea.vmem %s1, 16
      %v260 = vld [vmem:[%s259] sm:$0xf]
      %v261 = vld [vmem:[%s259 + $0x4] sm:$0xf]
      %v262 = vld [vmem:[%s259 + $0x8] sm:$0xf]
      %v263 = vld [vmem:[%s259 + $0xc] sm:$0xf]
      %v268 = vunpack.c.l.b16 %v260
      %v269 = vunpack.c.l.b16 %v261
      %v270 = vunpack.c.l.b16 %v262
      %v271 = vunpack.c.l.b16 %v263
      %v272 = vpack.c.b16 %v269, %v268
      %v273 = vpack.c.b16 %v271, %v270
      %vm274 = vcmask 392192
      %v276 = vsel %vm274, %v272, 0
      %v279 = vsel %vm274, %v273, 0
      %281 = vmatprep.subr.bf16.mxu0 0
      %282 = vmatpush1.bf16.msra.mxu0 %v232
      %283 = vmatprep.subr.bf16.mxu0 0
      %284 = vmatpush1.bf16.msra.mxu0 %v233
      %285 = vmatprep.subr.bf16.mxu0 0
      %286 = vmatpush1.bf16.msra.mxu0 %v234
      %287 = vmatprep.subr.bf16.mxu0 0
      %288 = vmatpush1.bf16.msra.mxu0 0
      %289 = vmatprep.subr.bf16.mxu0 0
      %290 = vmatpush1.bf16.msra.mxu0 0
      %291 = vmatprep.subr.bf16.mxu0 0
      %292 = vmatpush1.bf16.msra.mxu0 0
      %293 = vmatprep.subr.bf16.mxu0 0
      %294 = vmatpush1.bf16.msra.mxu0 0
      %295 = vmatprep.subr.bf16.mxu0 0
      %296 = vmatpush1.bf16.msra.mxu0 0
      %297 = vmatprep.subr.bf16.mxu0 0
      %298 = vmatpush1.bf16.msra.mxu0 0
      %299 = vmatprep.subr.bf16.mxu0 0
      %300 = vmatpush1.bf16.msra.mxu0 0
      %301 = vmatprep.subr.bf16.mxu0 0
      %302 = vmatpush1.bf16.msra.mxu0 0
      %303 = vmatprep.subr.bf16.mxu0 0
      %304 = vmatpush1.bf16.msra.mxu0 0
      %305 = vmatprep.subr.bf16.mxu0 0
      %306 = vmatpush1.bf16.msra.mxu0 0
      %307 = vmatprep.subr.bf16.mxu0 0
      %308 = vmatpush1.bf16.msra.mxu0 0
      %309 = vmatprep.subr.bf16.mxu0 0
      %310 = vmatpush1.bf16.msra.mxu0 0
      %311 = vmatprep.subr.bf16.mxu0 0
      %312 = vmatpush1.bf16.msra.mxu0 0
      %313 = vmatprep.mubr.bf16.mxu0 0
      %314 = vmatmul.mubr.bf16.gmra.mrb[0].mxu0 %v276
      %v315 = vpop.f32.mrb[0].mxu0
      %v316 = vadd.f32 0.0, %v315
      %v317 = vpop.f32.mrb[0].mxu0
      %v318 = vpop.f32.mrb[0].mxu0
      %v319 = vadd.f32 0.0, %v318
      %v320 = vpop.f32.mrb[0].mxu0
      %321 = vmatprep.mubr.bf16.mxu0 0
      %322 = vmatmul.mubr.bf16.gmra.mrb[0].mxu0 %v279
      %v323 = vpop.f32.mrb[0].mxu0
      %v324 = vadd.f32 0.0, %v323
      %v325 = vpop.f32.mrb[0].mxu0
      %v326 = vpop.f32.mrb[0].mxu0
      %v327 = vadd.f32 0.0, %v326
      %v328 = vpop.f32.mrb[0].mxu0
      %329 = vdwg.mxu0
      %v334 = vunpack.c.l.b16 %v255
      %v335 = vunpack.c.l.b16 %v256
      %v336 = vunpack.c.l.b16 %v257
      %v337 = vunpack.c.l.b16 %v258
      %v338 = vpack.c.b16 %v335, %v334
      %v339 = vpack.c.b16 %v337, %v336
      %v341 = vsel %vm274, %v338, 0
      %v344 = vsel %vm274, %v339, 0
      %346 = vmatprep.subr.bf16.mxu0 0
      %347 = vmatpush1.bf16.msra.mxu0 %v247
      %348 = vmatprep.subr.bf16.mxu0 0
      %349 = vmatpush1.bf16.msra.mxu0 %v250
      %350 = vmatprep.subr.bf16.mxu0 0
      %351 = vmatpush1.bf16.msra.mxu0 %v253
      %352 = vmatprep.subr.bf16.mxu0 0
      %353 = vmatpush1.bf16.msra.mxu0 0
      %354 = vmatprep.subr.bf16.mxu0 0
      %355 = vmatpush1.bf16.msra.mxu0 0
      %356 = vmatprep.subr.bf16.mxu0 0
      %357 = vmatpush1.bf16.msra.mxu0 0
      %358 = vmatprep.subr.bf16.mxu0 0
      %359 = vmatpush1.bf16.msra.mxu0 0
      %360 = vmatprep.subr.bf16.mxu0 0
      %361 = vmatpush1.bf16.msra.mxu0 0
      %362 = vmatprep.subr.bf16.mxu0 0
      %363 = vmatpush1.bf16.msra.mxu0 0
      %364 = vmatprep.subr.bf16.mxu0 0
      %365 = vmatpush1.bf16.msra.mxu0 0
      %366 = vmatprep.subr.bf16.mxu0 0
      %367 = vmatpush1.bf16.msra.mxu0 0
      %368 = vmatprep.subr.bf16.mxu0 0
      %369 = vmatpush1.bf16.msra.mxu0 0
      %370 = vmatprep.subr.bf16.mxu0 0
      %371 = vmatpush1.bf16.msra.mxu0 0
      %372 = vmatprep.subr.bf16.mxu0 0
      %373 = vmatpush1.bf16.msra.mxu0 0
      %374 = vmatprep.subr.bf16.mxu0 0
      %375 = vmatpush1.bf16.msra.mxu0 0
      %376 = vmatprep.subr.bf16.mxu0 0
      %377 = vmatpush1.bf16.msra.mxu0 0
      %378 = vmatprep.mubr.bf16.mxu0 0
      %379 = vmatmul.mubr.bf16.gmra.mrb[0].mxu0 %v341
      %v380 = vpop.f32.mrb[0].mxu0
      %v381 = vadd.f32 %v316, %v380
      %v382 = vpop.f32.mrb[0].mxu0
      %v383 = vpop.f32.mrb[0].mxu0
      %v384 = vadd.f32 %v319, %v383
      %v385 = vpop.f32.mrb[0].mxu0
      %386 = vmatprep.mubr.bf16.mxu0 0
      %387 = vmatmul.mubr.bf16.gmra.mrb[0].mxu0 %v344
      %v388 = vpop.f32.mrb[0].mxu0
      %v389 = vadd.f32 %v324, %v388
      %v390 = vpop.f32.mrb[0].mxu0
      %v391 = vpop.f32.mrb[0].mxu0
      %v392 = vadd.f32 %v327, %v391
      %v393 = vpop.f32.mrb[0].mxu0
      %394 = vdwg.mxu0
      %vm395 = vcmask 531456
      %v396 = vsel %vm395, %v247, 0
      %v398 = vsel %vm395, %v250, 0
      %v400 = vsel %vm395, %v253, 0
      %v402 = vld [vmem:[%s2] sm:$0xf]
      %v403 = vld [vmem:[%s2 + $0x4] sm:$0xf]
      %v404 = vld [vmem:[%s2 + $0x8] sm:$0xf]
      %v405 = vld [vmem:[%s2 + $0xc] sm:$0xf]
      %s406 = scalar_lea.vmem %s2, 16
      %v407 = vld [vmem:[%s406] sm:$0xf]
      %v408 = vld [vmem:[%s406 + $0x4] sm:$0xf]
      %v409 = vld [vmem:[%s406 + $0x8] sm:$0xf]
      %v410 = vld [vmem:[%s406 + $0xc] sm:$0xf]
      %v415 = vunpack.c.l.b16 %v407
      %v416 = vunpack.c.l.b16 %v408
      %v417 = vunpack.c.l.b16 %v409
      %v418 = vunpack.c.l.b16 %v410
      %v419 = vpack.c.b16 %v416, %v415
      %v420 = vpack.c.b16 %v418, %v417
      %v422 = vsel %vm274, %v419, 0
      %v425 = vsel %vm274, %v420, 0
      %427 = vmatprep.subr.bf16.mxu0 0
      %428 = vmatpush1.bf16.msra.mxu0 %v232
      %429 = vmatprep.subr.bf16.mxu0 0
      %430 = vmatpush1.bf16.msra.mxu0 %v233
      %431 = vmatprep.subr.bf16.mxu0 0
      %432 = vmatpush1.bf16.msra.mxu0 %v234
      %433 = vmatprep.subr.bf16.mxu0 0
      %434 = vmatpush1.bf16.msra.mxu0 0
      %435 = vmatprep.subr.bf16.mxu0 0
      %436 = vmatpush1.bf16.msra.mxu0 0
      %437 = vmatprep.subr.bf16.mxu0 0
      %438 = vmatpush1.bf16.msra.mxu0 0
      %439 = vmatprep.subr.bf16.mxu0 0
      %440 = vmatpush1.bf16.msra.mxu0 0
      %441 = vmatprep.subr.bf16.mxu0 0
      %442 = vmatpush1.bf16.msra.mxu0 0
      %443 = vmatprep.subr.bf16.mxu0 0
      %444 = vmatpush1.bf16.msra.mxu0 0
      %445 = vmatprep.subr.bf16.mxu0 0
      %446 = vmatpush1.bf16.msra.mxu0 0
      %447 = vmatprep.subr.bf16.mxu0 0
      %448 = vmatpush1.bf16.msra.mxu0 0
      %449 = vmatprep.subr.bf16.mxu0 0
      %450 = vmatpush1.bf16.msra.mxu0 0
      %451 = vmatprep.subr.bf16.mxu0 0
      %452 = vmatpush1.bf16.msra.mxu0 0
      %453 = vmatprep.subr.bf16.mxu0 0
      %454 = vmatpush1.bf16.msra.mxu0 0
      %455 = vmatprep.subr.bf16.mxu0 0
      %456 = vmatpush1.bf16.msra.mxu0 0
      %457 = vmatprep.subr.bf16.mxu0 0
      %458 = vmatpush1.bf16.msra.mxu0 0
      %459 = vmatprep.mubr.bf16.mxu0 0
      %460 = vmatmul.mubr.bf16.gmra.mrb[0].mxu0 %v422
      %v461 = vpop.f32.mrb[0].mxu0
      %v462 = vadd.f32 0.0, %v461
      %v463 = vpop.f32.mrb[0].mxu0
      %v464 = vpop.f32.mrb[0].mxu0
      %v465 = vadd.f32 0.0, %v464
      %v466 = vpop.f32.mrb[0].mxu0
      %467 = vmatprep.mubr.bf16.mxu0 0
      %468 = vmatmul.mubr.bf16.gmra.mrb[0].mxu0 %v425
      %v469 = vpop.f32.mrb[0].mxu0
      %v470 = vadd.f32 0.0, %v469
      %v471 = vpop.f32.mrb[0].mxu0
      %v472 = vpop.f32.mrb[0].mxu0
      %v473 = vadd.f32 0.0, %v472
      %v474 = vpop.f32.mrb[0].mxu0
      %475 = vdwg.mxu0
      %v480 = vunpack.c.l.b16 %v402
      %v481 = vunpack.c.l.b16 %v403
      %v482 = vunpack.c.l.b16 %v404
      %v483 = vunpack.c.l.b16 %v405
      %v484 = vpack.c.b16 %v481, %v480
      %v485 = vpack.c.b16 %v483, %v482
      %v487 = vsel %vm274, %v484, 0
      %v490 = vsel %vm274, %v485, 0
      %492 = vmatprep.subr.bf16.mxu0 0
      %493 = vmatpush1.bf16.msra.mxu0 %v396
      %494 = vmatprep.subr.bf16.mxu0 0
      %495 = vmatpush1.bf16.msra.mxu0 %v398
      %496 = vmatprep.subr.bf16.mxu0 0
      %497 = vmatpush1.bf16.msra.mxu0 %v400
      %498 = vmatprep.subr.bf16.mxu0 0
      %499 = vmatpush1.bf16.msra.mxu0 0
      %500 = vmatprep.subr.bf16.mxu0 0
      %501 = vmatpush1.bf16.msra.mxu0 0
      %502 = vmatprep.subr.bf16.mxu0 0
      %503 = vmatpush1.bf16.msra.mxu0 0
      %504 = vmatprep.subr.bf16.mxu0 0
      %505 = vmatpush1.bf16.msra.mxu0 0
      %506 = vmatprep.subr.bf16.mxu0 0
      %507 = vmatpush1.bf16.msra.mxu0 0
      %508 = vmatprep.subr.bf16.mxu0 0
      %509 = vmatpush1.bf16.msra.mxu0 0
      %510 = vmatprep.subr.bf16.mxu0 0
      %511 = vmatpush1.bf16.msra.mxu0 0
      %512 = vmatprep.subr.bf16.mxu0 0
      %513 = vmatpush1.bf16.msra.mxu0 0
      %514 = vmatprep.subr.bf16.mxu0 0
      %515 = vmatpush1.bf16.msra.mxu0 0
      %516 = vmatprep.subr.bf16.mxu0 0
      %517 = vmatpush1.bf16.msra.mxu0 0
      %518 = vmatprep.subr.bf16.mxu0 0
      %519 = vmatpush1.bf16.msra.mxu0 0
      %520 = vmatprep.subr.bf16.mxu0 0
      %521 = vmatpush1.bf16.msra.mxu0 0
      %522 = vmatprep.subr.bf16.mxu0 0
      %523 = vmatpush1.bf16.msra.mxu0 0
      %524 = vmatprep.mubr.bf16.mxu0 0
      %525 = vmatmul.mubr.bf16.gmra.mrb[0].mxu0 %v487
      %v526 = vpop.f32.mrb[0].mxu0
      %v527 = vadd.f32 %v462, %v526
      %v528 = vpop.f32.mrb[0].mxu0
      %v529 = vpop.f32.mrb[0].mxu0
      %v530 = vadd.f32 %v465, %v529
      %v531 = vpop.f32.mrb[0].mxu0
      %532 = vmatprep.mubr.bf16.mxu0 0
      %533 = vmatmul.mubr.bf16.gmra.mrb[0].mxu0 %v490
      %v534 = vpop.f32.mrb[0].mxu0
      %v535 = vadd.f32 %v470, %v534
      %v536 = vpop.f32.mrb[0].mxu0
      %v537 = vpop.f32.mrb[0].mxu0
      %v538 = vadd.f32 %v473, %v537
      %v539 = vpop.f32.mrb[0].mxu0
      %540 = vdwg.mxu0
      %s541 = scalar_lea.vmem %s2, 32
      %v542 = vld [vmem:[%s541] sm:$0xf]
      %v543 = vld [vmem:[%s541 + $0x4] sm:$0xf]
      %v544 = vld [vmem:[%s541 + $0x8] sm:$0xf]
      %v545 = vld [vmem:[%s541 + $0xc] sm:$0xf]
      %v550 = vunpack.c.l.b16 %v542
      %v551 = vunpack.c.l.b16 %v543
      %v552 = vunpack.c.l.b16 %v544
      %v553 = vunpack.c.l.b16 %v545
      %v554 = vpack.c.b16 %v551, %v550
      %v555 = vpack.c.b16 %v553, %v552
      %559 = vrot.lane.b32.xlu0 %v396, 126
      %v560 = vpop.permute.xlu0 %559
      %561 = vrot.lane.b32.xlu0 %v398, 126
      %v562 = vpop.permute.xlu0 %561
      %563 = vrot.lane.b32.xlu0 %v400, 126
      %v564 = vpop.permute.xlu0 %563
      %v569 = vsel %vm274, %v554, 0
      %v572 = vsel %vm274, %v555, 0
      %574 = vmatprep.subr.bf16.mxu0 0
      %575 = vmatpush1.bf16.msra.mxu0 %v560
      %576 = vmatprep.subr.bf16.mxu0 0
      %577 = vmatpush1.bf16.msra.mxu0 %v562
      %578 = vmatprep.subr.bf16.mxu0 0
      %579 = vmatpush1.bf16.msra.mxu0 %v564
      %580 = vmatprep.subr.bf16.mxu0 0
      %581 = vmatpush1.bf16.msra.mxu0 0
      %582 = vmatprep.subr.bf16.mxu0 0
      %583 = vmatpush1.bf16.msra.mxu0 0
      %584 = vmatprep.subr.bf16.mxu0 0
      %585 = vmatpush1.bf16.msra.mxu0 0
      %586 = vmatprep.subr.bf16.mxu0 0
      %587 = vmatpush1.bf16.msra.mxu0 0
      %588 = vmatprep.subr.bf16.mxu0 0
      %589 = vmatpush1.bf16.msra.mxu0 0
      %590 = vmatprep.subr.bf16.mxu0 0
      %591 = vmatpush1.bf16.msra.mxu0 0
      %592 = vmatprep.subr.bf16.mxu0 0
      %593 = vmatpush1.bf16.msra.mxu0 0
      %594 = vmatprep.subr.bf16.mxu0 0
      %595 = vmatpush1.bf16.msra.mxu0 0
      %596 = vmatprep.subr.bf16.mxu0 0
      %597 = vmatpush1.bf16.msra.mxu0 0
      %598 = vmatprep.subr.bf16.mxu0 0
      %599 = vmatpush1.bf16.msra.mxu0 0
      %600 = vmatprep.subr.bf16.mxu0 0
      %601 = vmatpush1.bf16.msra.mxu0 0
      %602 = vmatprep.subr.bf16.mxu0 0
      %603 = vmatpush1.bf16.msra.mxu0 0
      %604 = vmatprep.subr.bf16.mxu0 0
      %605 = vmatpush1.bf16.msra.mxu0 0
      %606 = vmatprep.mubr.bf16.mxu0 0
      %607 = vmatmul.mubr.bf16.gmra.mrb[0].mxu0 %v569
      %v608 = vpop.f32.mrb[0].mxu0
      %v609 = vadd.f32 0.0, %v608
      %v610 = vpop.f32.mrb[0].mxu0
      %v611 = vpop.f32.mrb[0].mxu0
      %v612 = vadd.f32 0.0, %v611
      %v613 = vpop.f32.mrb[0].mxu0
      %614 = vmatprep.mubr.bf16.mxu0 0
      %615 = vmatmul.mubr.bf16.gmra.mrb[0].mxu0 %v572
      %v616 = vpop.f32.mrb[0].mxu0
      %v617 = vadd.f32 0.0, %v616
      %v618 = vpop.f32.mrb[0].mxu0
      %v619 = vpop.f32.mrb[0].mxu0
      %v620 = vadd.f32 0.0, %v619
      %v621 = vpop.f32.mrb[0].mxu0
      %622 = vdwg.mxu0
      %v623 = vadd.f32 %v527, %v609
      %v624 = vadd.f32 %v530, %v612
      %v625 = vadd.f32 %v535, %v617
      %v626 = vadd.f32 %v538, %v620
      %v627 = vld [vmem:[%s3] sm:$0xff]
      %v628 = vld [vmem:[%s3 + $0x8] sm:$0xff]
      %v629 = vld [vmem:[%s3 + $0x10] sm:$0xff]
      %v630 = vld [vmem:[%s3 + $0x18] sm:$0xff]
      %632 = vset.pattern.permute.xlu0 0
      %633 = vperm.xlu0 %632, %v627
      %v634 = vpop.permute.xlu0 %633
      %637 = vset.pattern.permute.xlu0 0
      %638 = vperm.xlu0 %637, %v628
      %v639 = vpop.permute.xlu0 %638
      %642 = vset.pattern.permute.xlu0 0
      %643 = vperm.xlu0 %642, %v629
      %v644 = vpop.permute.xlu0 %643
      %647 = vset.pattern.permute.xlu0 0
      %648 = vperm.xlu0 %647, %v630
      %v649 = vpop.permute.xlu0 %648
      %v651 = vmul.f32 %v381, %v634
      %v652 = vmul.f32 %v384, %v639
      %v653 = vmul.f32 %v389, %v644
      %v654 = vmul.f32 %v392, %v649
      %v655 = vld [vmem:[%s4] sm:$0xff]
      %v656 = vld [vmem:[%s4 + $0x8] sm:$0xff]
      %v657 = vld [vmem:[%s4 + $0x10] sm:$0xff]
      %v658 = vld [vmem:[%s4 + $0x18] sm:$0xff]
      %660 = vset.pattern.permute.xlu0 0
      %661 = vperm.xlu0 %660, %v655
      %v662 = vpop.permute.xlu0 %661
      %665 = vset.pattern.permute.xlu0 0
      %666 = vperm.xlu0 %665, %v656
      %v667 = vpop.permute.xlu0 %666
      %670 = vset.pattern.permute.xlu0 0
      %671 = vperm.xlu0 %670, %v657
      %v672 = vpop.permute.xlu0 %671
      %675 = vset.pattern.permute.xlu0 0
      %676 = vperm.xlu0 %675, %v658
      %v677 = vpop.permute.xlu0 %676
      %v679 = vadd.f32 %v651, %v662
      %v680 = vadd.f32 %v652, %v667
      %v681 = vadd.f32 %v653, %v672
      %v682 = vadd.f32 %v654, %v677
      %v683 = vmax.f32 %v679, 0.0
      %v684 = vmax.f32 %v680, 0.0
      %v685 = vmax.f32 %v681, 0.0
      %v686 = vmax.f32 %v682, 0.0
      %v687 = vmul.f32 %v623, %v634
      %v688 = vmul.f32 %v624, %v639
      %v689 = vmul.f32 %v625, %v644
      %v690 = vmul.f32 %v626, %v649
      %v691 = vadd.f32 %v687, %v662
      %v692 = vadd.f32 %v688, %v667
      %v693 = vadd.f32 %v689, %v672
      %v694 = vadd.f32 %v690, %v677
      %v695 = vmax.f32 %v691, 0.0
      %v696 = vmax.f32 %v692, 0.0
      %v697 = vmax.f32 %v693, 0.0
      %v698 = vmax.f32 %v694, 0.0
      %703 = vrot.lane.b32.xlu0 %v695, 1
      %v704 = vpop.permute.xlu0 %703
      %705 = vrot.lane.b32.xlu0 %v696, 1
      %v706 = vpop.permute.xlu0 %705
      %707 = vrot.lane.b32.xlu0 %v697, 1
      %v708 = vpop.permute.xlu0 %707
      %709 = vrot.lane.b32.xlu0 %v698, 1
      %v710 = vpop.permute.xlu0 %709
      %v715 = vsel %vm244, 0.0, %v704
      %v716 = vsel %vm244, 0.0, %v706
      %v717 = vsel %vm244, 0.0, %v708
      %v718 = vsel %vm244, 0.0, %v710
      %v719 = vmax.f32 %v683, %v695
      %v720 = vmax.f32 %v684, %v696
      %v721 = vmax.f32 %v685, %v697
      %v722 = vmax.f32 %v686, %v698
      %v723 = vmax.f32 %v719, %v715
      %v724 = vmax.f32 %v720, %v716
      %v725 = vmax.f32 %v721, %v717
      %v726 = vmax.f32 %v722, %v718
      %v727 = vpack.c.bf16 %v724, %v723
      %v728 = vpack.c.bf16 %v726, %v725
      %v731 = vunpack.c.l.b16 %v727
      %v732 = vunpack.c.h.b16 %v727
      %v733 = vunpack.c.l.b16 %v728
      %v734 = vunpack.c.h.b16 %v728
      %v735 = vpack.c.b16 %v731, %v731
      %v736 = vpack.c.b16 %v732, %v732
      %v737 = vpack.c.b16 %v733, %v733
      %v738 = vpack.c.b16 %v734, %v734
      %vm743 = vcmask 519168
      %744 = vst.msk [vmem:[%s224] sm:$0xf] %vm743, %v735
      %745 = vst.msk [vmem:[%s224 + $0x4] sm:$0xf] %vm743, %v736
      %746 = vst.msk [vmem:[%s224 + $0x8] sm:$0xf] %vm743, %v737
      %747 = vst.msk [vmem:[%s224 + $0xc] sm:$0xf] %vm743, %v738
      %p748 = scmp.lt.s32.totalorder %s16, 1
      %s749 = scalar_select %p748, %s16, 1
      %s750 = smul.addr %s749, 8
      %s751 = smul.addr %s750, 4
      %s752 = scalar_lea.vmem %s5, %s751
      // Predicated region
      $region41: #{densenet_forward.12} parent=39 // pred_check
        %p753 = pneg %p144
      $region42: #{densenet_forward.12} parent=39 // pred_check_branch
        %755 = sbr.rel (%p753) target = $region44
      $region43: #{densenet_forward.12} parent=39 // pred_region
        _
      $region44: #{densenet_forward.12} parent=39 // pred_fallthru
        _
    $region40: #{densenet_forward.12} parent=5 // pred_fallthru
      _
    %p756 = scmp.le.s32.totalorder 2, %s11
    // Predicated region
    $region45: #{densenet_forward.12} parent=5 // pred_check
      %p757 = pneg %p756
    $region46: #{densenet_forward.12} parent=5 // pred_check_branch
      %759 = sbr.rel (%p757) target = $region48
    $region47: #{densenet_forward.12} parent=5 // pred_region
      %s760 = ssub.s32 %s11, 2
      // Predicated region
      $region49: #{densenet_forward.12} parent=47 // pred_check
        %p761 = pneg %p150
      $region50: #{densenet_forward.12} parent=47 // pred_check_branch
        %763 = sbr.rel (%p761) target = $region52
      $region51: #{densenet_forward.12} parent=47 // pred_region
        %p764 = scmp.lt.s32.totalorder %s17, 1
        %s765 = scalar_select %p764, %s17, 1
        %s766 = smul.addr %s765, 8
        %s767 = smul.addr %s766, 4
        %s768 = scalar_lea.vmem %s5, %s767
      $region52: #{densenet_forward.12} parent=47 // pred_fallthru
        _
    $region48: #{densenet_forward.12} parent=5 // pred_fallthru
      _
  $region6: #{densenet_forward.12} parent=0 // loop_footer
    %s15 = sadd.s32 1, %s11
  $region7: #{densenet_forward.12} parent=0 // loop_footer_branch
    %10 = sbr.rel target = $region3
  $region8: #{densenet_forward.12} parent=0 // loop_exit
    _

// kernel: densenet_forward.15
$region0: #{densenet_forward.15}
  #allocation0 [shape = 'u32[]', space=smem, size = 0x4, offset = 0x4, fixed_abs, tag = 'smem constant byte address 0x4 - core index']
  #allocation1 [shape = 'u32[144,128]{1,0:T(1,128)}', space=vmem, size = 0x12000, scoped, tag = 'internal scratch']
  %s0 = inlined_call_operand.vmem [shape: bf16[2,64,64], index: 0, kind: input, shape index: {}]
  %s1 = inlined_call_operand.vmem [shape: f32[48,1], index: 1, kind: input, shape index: {}]
  %s2 = inlined_call_operand.vmem [shape: f32[48,1], index: 2, kind: input, shape index: {}]
  %s3 = inlined_call_operand.vmem [shape: bf16[1,32,48], index: 3, kind: input, shape index: {}]
  %s4 = inlined_call_operand.vmem [shape: bf16[2,32,64], index: 4, kind: output, shape index: {}]
  %s5 = sld [smem:[#allocation0]]
  $region49: #{densenet_forward.15} parent=0
    _
  %s7 = ssub.s32 1, %s5
  %s8 = scalar_select 0, %s7, %s5
  loop: start=0, step=1, limit=4
  $region2: #{densenet_forward.15} parent=0 // loop_pre_header
    _
  $region3: #{densenet_forward.15} parent=0 // loop_header
    %s10 = sphi 0, %s14
    %p11 = scmp.ge.s32.totalorder %s10, 4
    %s17 = sphi 0, %s29
    %s18 = sphi 0, %s25
    %s19 = sphi 0, %s17
    %s20 = sphi 0, %s18
    %s21 = sphi 0, %s19
    %s22 = sphi 0, %s20
    %s34 = sphi 0, %s36
    %s37 = sphi 0, %s34
    %s38 = sphi 0, %s37
    %s54 = sphi 0, %s38
    %s58 = sphi 0, %s58
    %s60 = sphi 0, %s58
    %s61 = sphi 0, %s60
    %s75 = sphi 0, %s61
    %s79 = sphi 0, %s79
    %s81 = sphi 0, %s79
    %s82 = sphi 0, %s81
    %s96 = sphi 0, %s82
    %s100 = sphi 0, %s100
    %s102 = sphi 0, %s100
    %s103 = sphi 0, %s102
    %s117 = sphi 0, %s103
    %s125 = sphi 0, %s127
    %s128 = sphi 0, %s125
    %s129 = sphi 0, %s128
    %s145 = sphi 0, %s129
  $region4: #{densenet_forward.15} parent=0 // loop_header_branch
    %13 = sbr.rel (%p11) target = $region8
  $region5: #{densenet_forward.15} parent=0 // loop_body
    %s15 = ssub.s32 %s10, 1
    %s16 = ssub.s32 %s10, 2
    %s23 = sadd.s32 1, %s18
    %p24 = scmp.ge.s32.totalorder %s23, 1
    %s25 = scalar_select %p24, 0, %s23
    %s26 = sadd.s32 1, %s17
    %s27 = scalar_select %p24, %s26, %s17
    %p28 = scmp.ge.s32.totalorder %s27, 2
    %s29 = scalar_select %p28, 0, %s27
    %s30 = ssub.s32 %s17, %s29
    %s31 = ssub.s32 %s18, %s25
    %s32 = sor.u32 %s30, %s31
    %p33 = scmp.eq.s32.totalorder %s32, 0
    %s35 = sadd.s32 %s34, 1
    %s36 = scalar_select %p33, %s34, %s35
    %p39 = pneg %p33
    %p40 = scmp.eq.s32.totalorder %s10, 1
    %p41 = por %p39, %p40
    %p42 = scmp.ne.s32.totalorder %s34, %s37
    %p43 = scmp.eq.s32.totalorder %s10, 0
    %p44 = por %p42, %p43
    %p45 = scmp.ne.s32.totalorder %s34, %s37
    %p46 = scmp.eq.s32.totalorder %s15, 1
    %p47 = por %p45, %p46
    %p48 = scmp.ne.s32.totalorder %s37, %s38
    %p49 = scmp.eq.s32.totalorder %s15, 0
    %p50 = por %p48, %p49
    %p51 = scmp.ne.s32.totalorder %s37, %s38
    %p52 = scmp.eq.s32.totalorder %s16, 1
    %p53 = por %p51, %p52
    %p55 = scmp.ne.s32.totalorder %s38, %s54
    %p56 = scmp.eq.s32.totalorder %s16, 0
    %p57 = por %p55, %p56
    %s59 = sadd.s32 %s58, 1
    %p62 = scmp.eq.s32.totalorder %s10, 1
    %p63 = scmp.ne.s32.totalorder %s58, %s60
    %p64 = scmp.eq.s32.totalorder %s10, 0
    %p65 = por %p63, %p64
    %p66 = scmp.ne.s32.totalorder %s58, %s60
    %p67 = scmp.eq.s32.totalorder %s15, 1
    %p68 = por %p66, %p67
    %p69 = scmp.ne.s32.totalorder %s60, %s61
    %p70 = scmp.eq.s32.totalorder %s15, 0
    %p71 = por %p69, %p70
    %p72 = scmp.ne.s32.totalorder %s60, %s61
    %p73 = scmp.eq.s32.totalorder %s16, 1
    %p74 = por %p72, %p73
    %p76 = scmp.ne.s32.totalorder %s61, %s75
    %p77 = scmp.eq.s32.totalorder %s16, 0
    %p78 = por %p76, %p77
    %s80 = sadd.s32 %s79, 1
    %p83 = scmp.eq.s32.totalorder %s10, 1
    %p84 = scmp.ne.s32.totalorder %s79, %s81
    %p85 = scmp.eq.s32.totalorder %s10, 0
    %p86 = por %p84, %p85
    %p87 = scmp.ne.s32.totalorder %s79, %s81
    %p88 = scmp.eq.s32.totalorder %s15, 1
    %p89 = por %p87, %p88
    %p90 = scmp.ne.s32.totalorder %s81, %s82
    %p91 = scmp.eq.s32.totalorder %s15, 0
    %p92 = por %p90, %p91
    %p93 = scmp.ne.s32.totalorder %s81, %s82
    %p94 = scmp.eq.s32.totalorder %s16, 1
    %p95 = por %p93, %p94
    %p97 = scmp.ne.s32.totalorder %s82, %s96
    %p98 = scmp.eq.s32.totalorder %s16, 0
    %p99 = por %p97, %p98
    %s101 = sadd.s32 %s100, 1
    %p104 = scmp.eq.s32.totalorder %s10, 1
    %p105 = scmp.ne.s32.totalorder %s100, %s102
    %p106 = scmp.eq.s32.totalorder %s10, 0
    %p107 = por %p105, %p106
    %p108 = scmp.ne.s32.totalorder %s100, %s102
    %p109 = scmp.eq.s32.totalorder %s15, 1
    %p110 = por %p108, %p109
    %p111 = scmp.ne.s32.totalorder %s102, %s103
    %p112 = scmp.eq.s32.totalorder %s15, 0
    %p113 = por %p111, %p112
    %p114 = scmp.ne.s32.totalorder %s102, %s103
    %p115 = scmp.eq.s32.totalorder %s16, 1
    %p116 = por %p114, %p115
    %p118 = scmp.ne.s32.totalorder %s103, %s117
    %p119 = scmp.eq.s32.totalorder %s16, 0
    %p120 = por %p118, %p119
    %s121 = ssub.s32 %s17, %s29
    %s122 = ssub.s32 %s18, %s25
    %s123 = sor.u32 %s121, %s122
    %p124 = scmp.eq.s32.totalorder %s123, 0
    %s126 = sadd.s32 %s125, 1
    %s127 = scalar_select %p124, %s125, %s126
    %p130 = pneg %p124
    %p131 = scmp.eq.s32.totalorder %s10, 1
    %p132 = por %p130, %p131
    %p133 = scmp.ne.s32.totalorder %s125, %s128
    %p134 = scmp.eq.s32.totalorder %s10, 0
    %p135 = por %p133, %p134
    %p136 = scmp.ne.s32.totalorder %s125, %s128
    %p137 = scmp.eq.s32.totalorder %s15, 1
    %p138 = por %p136, %p137
    %p139 = scmp.ne.s32.totalorder %s128, %s129
    %p140 = scmp.eq.s32.totalorder %s15, 0
    %p141 = por %p139, %p140
    %p142 = scmp.ne.s32.totalorder %s128, %s129
    %p143 = scmp.eq.s32.totalorder %s16, 1
    %p144 = por %p142, %p143
    %p146 = scmp.ne.s32.totalorder %s129, %s145
    %p147 = scmp.eq.s32.totalorder %s16, 0
    %p148 = por %p146, %p147
    %p149 = scmp.le.s32.totalorder 1, %s10
    %p150 = scmp.lt.s32.totalorder %s10, 3
    %p151 = pnand %p149, %p150
    %p152 = pneg %p151
    // Predicated region
    $region9: #{densenet_forward.15} parent=5 // pred_check
      _
    $region10: #{densenet_forward.15} parent=5 // pred_check_branch
      %154 = sbr.rel (%p151) target = $region12
    $region11: #{densenet_forward.15} parent=5 // pred_region
      %s155 = ssub.s32 %s10, 1
      // Predicated region
      $region13: #{densenet_forward.15} parent=11 // pred_check
        %p156 = pneg %p71
      $region14: #{densenet_forward.15} parent=11 // pred_check_branch
        %158 = sbr.rel (%p156) target = $region16
      $region15: #{densenet_forward.15} parent=11 // pred_region
        _
      $region16: #{densenet_forward.15} parent=11 // pred_fallthru
        _
      // Predicated region
      $region17: #{densenet_forward.15} parent=11 // pred_check
        %p159 = pneg %p92
      $region18: #{densenet_forward.15} parent=11 // pred_check_branch
        %161 = sbr.rel (%p159) target = $region20
      $region19: #{densenet_forward.15} parent=11 // pred_region
        _
      $region20: #{densenet_forward.15} parent=11 // pred_fallthru
        _
      // Predicated region
      $region21: #{densenet_forward.15} parent=11 // pred_check
        %p162 = pneg %p113
      $region22: #{densenet_forward.15} parent=11 // pred_check_branch
        %164 = sbr.rel (%p162) target = $region24
      $region23: #{densenet_forward.15} parent=11 // pred_region
        _
      $region24: #{densenet_forward.15} parent=11 // pred_fallthru
        _
    $region12: #{densenet_forward.15} parent=5 // pred_fallthru
      _
    %p165 = scmp.lt.s32.totalorder %s10, 2
    // Predicated region
    $region25: #{densenet_forward.15} parent=5 // pred_check
      %p166 = pneg %p165
    $region26: #{densenet_forward.15} parent=5 // pred_check_branch
      %168 = sbr.rel (%p166) target = $region28
    $region27: #{densenet_forward.15} parent=5 // pred_region
      // Predicated region
      $region29: #{densenet_forward.15} parent=27 // pred_check
        %p169 = pneg %p44
      $region30: #{densenet_forward.15} parent=27 // pred_check_branch
        %171 = sbr.rel (%p169) target = $region32
      $region31: #{densenet_forward.15} parent=27 // pred_region
        %p172 = scmp.lt.s32.totalorder %s17, 1
        %s173 = scalar_select %p172, %s17, 1
        %p174 = scmp.lt.s32.totalorder %s18, 0
        %s175 = scalar_select %p174, %s18, 0
        %s176 = smul.addr %s173, 8
        %s177 = sadd.s32 %s175, %s176
        %s178 = smul.addr %s177, 4
        %s179 = scalar_lea.vmem %s0, %s178
      $region32: #{densenet_forward.15} parent=27 // pred_fallthru
        _
    $region28: #{densenet_forward.15} parent=5 // pred_fallthru
      _
    %p180 = scmp.le.s32.totalorder 1, %s10
    %p181 = scmp.lt.s32.totalorder %s10, 3
    %p182 = pnand %p180, %p181
    %p183 = pneg %p182
    // Predicated region
    $region33: #{densenet_forward.15} parent=5 // pred_check
      _
    $region34: #{densenet_forward.15} parent=5 // pred_check_branch
      %185 = sbr.rel (%p182) target = $region36
    $region35: #{densenet_forward.15} parent=5 // pred_region
      %s186 = ssub.s32 %s10, 1
      %p187 = scmp.lt.s32.totalorder %s19, 1
      %s188 = scalar_select %p187, %s19, 1
      %p189 = scmp.lt.s32.totalorder %s20, 0
      %s190 = scalar_select %p189, %s20, 0
      %s191 = smul.addr %s188, 8
      %s192 = sadd.s32 %s190, %s191
      %s193 = smul.addr %s192, 4
      %s194 = scalar_lea.vmem %s0, %s193
      %p195 = pneg %p50
      %p196 = pneg %p47
      %p197 = pneg %p71
      %p198 = pneg %p68
      %p199 = pneg %p92
      %p200 = pneg %p89
      %p201 = pneg %p113
      %p202 = pneg %p110
      %p203 = pneg %p141
      %p204 = pneg %p138
      %p205 = scmp.lt.s32.totalorder %s19, 1
      %s206 = scalar_select %p205, %s19, 1
      %p207 = scmp.lt.s32.totalorder %s20, 0
      %s208 = scalar_select %p207, %s20, 0
      %s209 = smul.addr %s206, 4
      %s210 = sadd.s32 %s208, %s209
      %s211 = smul.addr %s210, 4
      %s212 = scalar_lea.vmem %s4, %s211
      %p213 = scmp.lt.s32.totalorder %s19, 1
      %s214 = scalar_select %p213, %s19, 1
      %p215 = scmp.lt.s32.totalorder %s20, 0
      %s216 = scalar_select %p215, %s20, 0
      %s217 = smul.addr %s214, 8
      %s218 = sadd.s32 %s216, %s217
      %s219 = smul.addr %s218, 4
      %s220 = scalar_lea.vmem %s0, %s219
      %p221 = scmp.lt.s32.totalorder %s19, 1
      %s222 = scalar_select %p221, %s19, 1
      %p223 = scmp.lt.s32.totalorder %s20, 0
      %s224 = scalar_select %p223, %s20, 0
      %s225 = smul.addr %s222, 4
      %s226 = sadd.s32 %s224, %s225
      %s227 = smul.addr %s226, 4
      %s228 = scalar_lea.vmem %s4, %s227
      %v230 = vld [vmem:[%s220] sm:$0xf]
      %v231 = vld [vmem:[%s220 + $0x4] sm:$0xf]
      %v232 = vld [vmem:[%s220 + $0x8] sm:$0xf]
      %v233 = vld [vmem:[%s220 + $0xc] sm:$0xf]
      %v234 = vld [vmem:[%s220 + $0x10] sm:$0xf]
      %v235 = vld [vmem:[%s220 + $0x14] sm:$0xf]
      %v236 = vunpack.c.l.bf16 %v230
      %v237 = vunpack.c.l.bf16 %v231
      %v238 = vunpack.c.l.bf16 %v232
      %v239 = vunpack.c.l.bf16 %v233
      %v240 = vunpack.c.l.bf16 %v234
      %v241 = vunpack.c.l.bf16 %v235
      %v242 = vld [vmem:[%s1] sm:$0xff]
      %v243 = vld [vmem:[%s1 + $0x8] sm:$0xff]
      %v244 = vld [vmem:[%s1 + $0x10] sm:$0xff]
      %v245 = vld [vmem:[%s1 + $0x18] sm:$0xff]
      %v246 = vld [vmem:[%s1 + $0x20] sm:$0xff]
      %v247 = vld [vmem:[%s1 + $0x28] sm:$0xff]
      %249 = vset.pattern.permute.xlu0 0
      %250 = vperm.xlu0 %249, %v242
      %v251 = vpop.permute.xlu0 %250
      %254 = vset.pattern.permute.xlu0 0
      %255 = vperm.xlu0 %254, %v243
      %v256 = vpop.permute.xlu0 %255
      %259 = vset.pattern.permute.xlu0 0
      %260 = vperm.xlu0 %259, %v244
      %v261 = vpop.permute.xlu0 %260
      %264 = vset.pattern.permute.xlu0 0
      %265 = vperm.xlu0 %264, %v245
      %v266 = vpop.permute.xlu0 %265
      %269 = vset.pattern.permute.xlu0 0
      %270 = vperm.xlu0 %269, %v246
      %v271 = vpop.permute.xlu0 %270
      %274 = vset.pattern.permute.xlu0 0
      %275 = vperm.xlu0 %274, %v247
      %v276 = vpop.permute.xlu0 %275
      %v278 = vmul.f32 %v236, %v251
      %v279 = vmul.f32 %v237, %v256
      %v280 = vmul.f32 %v238, %v261
      %v281 = vmul.f32 %v239, %v266
      %v282 = vmul.f32 %v240, %v271
      %v283 = vmul.f32 %v241, %v276
      %v284 = vld [vmem:[%s2] sm:$0xff]
      %v285 = vld [vmem:[%s2 + $0x8] sm:$0xff]
      %v286 = vld [vmem:[%s2 + $0x10] sm:$0xff]
      %v287 = vld [vmem:[%s2 + $0x18] sm:$0xff]
      %v288 = vld [vmem:[%s2 + $0x20] sm:$0xff]
      %v289 = vld [vmem:[%s2 + $0x28] sm:$0xff]
      %291 = vset.pattern.permute.xlu0 0
      %292 = vperm.xlu0 %291, %v284
      %v293 = vpop.permute.xlu0 %292
      %296 = vset.pattern.permute.xlu0 0
      %297 = vperm.xlu0 %296, %v285
      %v298 = vpop.permute.xlu0 %297
      %301 = vset.pattern.permute.xlu0 0
      %302 = vperm.xlu0 %301, %v286
      %v303 = vpop.permute.xlu0 %302
      %306 = vset.pattern.permute.xlu0 0
      %307 = vperm.xlu0 %306, %v287
      %v308 = vpop.permute.xlu0 %307
      %311 = vset.pattern.permute.xlu0 0
      %312 = vperm.xlu0 %311, %v288
      %v313 = vpop.permute.xlu0 %312
      %316 = vset.pattern.permute.xlu0 0
      %317 = vperm.xlu0 %316, %v289
      %v318 = vpop.permute.xlu0 %317
      %v320 = vadd.f32 %v278, %v293
      %v321 = vadd.f32 %v279, %v298
      %v322 = vadd.f32 %v280, %v303
      %v323 = vadd.f32 %v281, %v308
      %v324 = vadd.f32 %v282, %v313
      %v325 = vadd.f32 %v283, %v318
      %v326 = vmax.f32 %v320, 0.0
      %v327 = vmax.f32 %v321, 0.0
      %v328 = vmax.f32 %v322, 0.0
      %v329 = vmax.f32 %v323, 0.0
      %v330 = vmax.f32 %v324, 0.0
      %v331 = vmax.f32 %v325, 0.0
      %v332 = vpack.c.bf16 %v327, %v326
      %v333 = vpack.c.bf16 %v329, %v328
      %v334 = vpack.c.bf16 %v331, %v330
      %v335 = vld [vmem:[%s3] sm:$0xf]
      %v336 = vld [vmem:[%s3 + $0x4] sm:$0xf]
      %v337 = vld [vmem:[%s3 + $0x8] sm:$0xf]
      %v338 = vld [vmem:[%s3 + $0xc] sm:$0xf]
      %v343 = vunpack.c.l.b16 %v335
      %v344 = vunpack.c.l.b16 %v336
      %v345 = vunpack.c.l.b16 %v337
      %v346 = vunpack.c.l.b16 %v338
      %v347 = vpack.c.b16 %v344, %v343
      %v348 = vpack.c.b16 %v346, %v345
      %vm349 = vcmask 392192
      %v351 = vsel %vm349, %v347, 0
      %v354 = vsel %vm349, %v348, 0
      %356 = vmatprep.subr.bf16.mxu0 0
      %357 = vmatpush1.bf16.msra.mxu0 %v332
      %358 = vmatprep.subr.bf16.mxu0 0
      %359 = vmatpush1.bf16.msra.mxu0 %v333
      %360 = vmatprep.subr.bf16.mxu0 0
      %361 = vmatpush1.bf16.msra.mxu0 %v334
      %362 = vmatprep.subr.bf16.mxu0 0
      %363 = vmatpush1.bf16.msra.mxu0 0
      %364 = vmatprep.subr.bf16.mxu0 0
      %365 = vmatpush1.bf16.msra.mxu0 0
      %366 = vmatprep.subr.bf16.mxu0 0
      %367 = vmatpush1.bf16.msra.mxu0 0
      %368 = vmatprep.subr.bf16.mxu0 0
      %369 = vmatpush1.bf16.msra.mxu0 0
      %370 = vmatprep.subr.bf16.mxu0 0
      %371 = vmatpush1.bf16.msra.mxu0 0
      %372 = vmatprep.subr.bf16.mxu0 0
      %373 = vmatpush1.bf16.msra.mxu0 0
      %374 = vmatprep.subr.bf16.mxu0 0
      %375 = vmatpush1.bf16.msra.mxu0 0
      %376 = vmatprep.subr.bf16.mxu0 0
      %377 = vmatpush1.bf16.msra.mxu0 0
      %378 = vmatprep.subr.bf16.mxu0 0
      %379 = vmatpush1.bf16.msra.mxu0 0
      %380 = vmatprep.subr.bf16.mxu0 0
      %381 = vmatpush1.bf16.msra.mxu0 0
      %382 = vmatprep.subr.bf16.mxu0 0
      %383 = vmatpush1.bf16.msra.mxu0 0
      %384 = vmatprep.subr.bf16.mxu0 0
      %385 = vmatpush1.bf16.msra.mxu0 0
      %386 = vmatprep.subr.bf16.mxu0 0
      %387 = vmatpush1.bf16.msra.mxu0 0
      %388 = vmatprep.mubr.bf16.mxu0 0
      %389 = vmatmul.mubr.bf16.gmra.mrb[0].mxu0 %v351
      %v390 = vpop.f32.mrb[0].mxu0
      %v391 = vadd.f32 0.0, %v390
      %v392 = vpop.f32.mrb[0].mxu0
      %v393 = vpop.f32.mrb[0].mxu0
      %v394 = vadd.f32 0.0, %v393
      %v395 = vpop.f32.mrb[0].mxu0
      %396 = vmatprep.mubr.bf16.mxu0 0
      %397 = vmatmul.mubr.bf16.gmra.mrb[0].mxu0 %v354
      %v398 = vpop.f32.mrb[0].mxu0
      %v399 = vadd.f32 0.0, %v398
      %v400 = vpop.f32.mrb[0].mxu0
      %v401 = vpop.f32.mrb[0].mxu0
      %v402 = vadd.f32 0.0, %v401
      %v403 = vpop.f32.mrb[0].mxu0
      %404 = vdwg.mxu0
      %v405 = vpack.c.bf16 %v394, %v391
      %v406 = vpack.c.bf16 %v402, %v399
      %v409 = vunpack.c.l.b16 %v405
      %v410 = vunpack.c.h.b16 %v405
      %v411 = vunpack.c.l.b16 %v406
      %v412 = vunpack.c.h.b16 %v406
      %v413 = vpack.c.b16 %v409, %v409
      %v414 = vpack.c.b16 %v410, %v410
      %v415 = vpack.c.b16 %v411, %v411
      %v416 = vpack.c.b16 %v412, %v412
      %vm421 = vcmask 519168
      %422 = vst.msk [vmem:[%s228] sm:$0xf] %vm421, %v413
      %423 = vst.msk [vmem:[%s228 + $0x4] sm:$0xf] %vm421, %v414
      %424 = vst.msk [vmem:[%s228 + $0x8] sm:$0xf] %vm421, %v415
      %425 = vst.msk [vmem:[%s228 + $0xc] sm:$0xf] %vm421, %v416
      %p426 = scmp.lt.s32.totalorder %s19, 1
      %s427 = scalar_select %p426, %s19, 1
      %p428 = scmp.lt.s32.totalorder %s20, 0
      %s429 = scalar_select %p428, %s20, 0
      %s430 = smul.addr %s427, 4
      %s431 = sadd.s32 %s429, %s430
      %s432 = smul.addr %s431, 4
      %s433 = scalar_lea.vmem %s4, %s432
      // Predicated region
      $region37: #{densenet_forward.15} parent=35 // pred_check
        %p434 = pneg %p138
      $region38: #{densenet_forward.15} parent=35 // pred_check_branch
        %436 = sbr.rel (%p434) target = $region40
      $region39: #{densenet_forward.15} parent=35 // pred_region
        _
      $region40: #{densenet_forward.15} parent=35 // pred_fallthru
        _
    $region36: #{densenet_forward.15} parent=5 // pred_fallthru
      _
    %p437 = scmp.le.s32.totalorder 2, %s10
    // Predicated region
    $region41: #{densenet_forward.15} parent=5 // pred_check
      %p438 = pneg %p437
    $region42: #{densenet_forward.15} parent=5 // pred_check_branch
      %440 = sbr.rel (%p438) target = $region44
    $region43: #{densenet_forward.15} parent=5 // pred_region
      %s441 = ssub.s32 %s10, 2
      // Predicated region
      $region45: #{densenet_forward.15} parent=43 // pred_check
        %p442 = pneg %p144
      $region46: #{densenet_forward.15} parent=43 // pred_check_branch
        %444 = sbr.rel (%p442) target = $region48
      $region47: #{densenet_forward.15} parent=43 // pred_region
        %p445 = scmp.lt.s32.totalorder %s21, 1
        %s446 = scalar_select %p445, %s21, 1
        %p447 = scmp.lt.s32.totalorder %s22, 0
        %s448 = scalar_select %p447, %s22, 0
        %s449 = smul.addr %s446, 4
        %s450 = sadd.s32 %s448, %s449
        %s451 = smul.addr %s450, 4
        %s452 = scalar_lea.vmem %s4, %s451
      $region48: #{densenet_forward.15} parent=43 // pred_fallthru
        _
    $region44: #{densenet_forward.15} parent=5 // pred_fallthru
      _
  $region6: #{densenet_forward.15} parent=0 // loop_footer
    %s14 = sadd.s32 1, %s10
  $region7: #{densenet_forward.15} parent=0 // loop_footer_branch
    %9 = sbr.rel target = $region3
  $region8: #{densenet_forward.15} parent=0 // loop_exit
    _

// kernel: densenet_forward.16
$region0: #{densenet_forward.16}
  #allocation0 [shape = 'u32[]', space=smem, size = 0x4, offset = 0x4, fixed_abs, tag = 'smem constant byte address 0x4 - core index']
  #allocation1 [shape = 'u32[144,128]{1,0:T(1,128)}', space=vmem, size = 0x12000, scoped, tag = 'internal scratch']
  %s0 = inlined_call_operand.vmem [shape: bf16[2,32,64], index: 0, kind: input, shape index: {}]
  %s1 = inlined_call_operand.vmem [shape: f32[32,1], index: 1, kind: input, shape index: {}]
  %s2 = inlined_call_operand.vmem [shape: f32[32,1], index: 2, kind: input, shape index: {}]
  %s3 = inlined_call_operand.vmem [shape: bf16[3,16,32], index: 3, kind: input, shape index: {}]
  %s4 = inlined_call_operand.vmem [shape: bf16[2,64,64], index: 4, kind: input, shape index: {}, may-alias: {4,5}]
  %s5 = inlined_call_operand.vmem [shape: bf16[2,64,64], index: 5, kind: output, shape index: {}, may-alias: {4,5}]
  %s6 = sld [smem:[#allocation0]]
  $region53: #{densenet_forward.16} parent=0
    _
  %s8 = ssub.s32 1, %s6
  %s9 = scalar_select 0, %s8, %s6
  loop: start=0, step=1, limit=4
  $region2: #{densenet_forward.16} parent=0 // loop_pre_header
    _
  $region3: #{densenet_forward.16} parent=0 // loop_header
    %s11 = sphi 0, %s15
    %p12 = scmp.ge.s32.totalorder %s11, 4
    %s21 = sphi 0, %s23
    %s24 = sphi 0, %s21
    %s25 = sphi 0, %s24
    %s41 = sphi 0, %s25
    %s45 = sphi 0, %s45
    %s47 = sphi 0, %s45
    %s48 = sphi 0, %s47
    %s62 = sphi 0, %s48
    %s66 = sphi 0, %s66
    %s68 = sphi 0, %s66
    %s69 = sphi 0, %s68
    %s83 = sphi 0, %s69
    %s87 = sphi 0, %s87
    %s89 = sphi 0, %s87
    %s90 = sphi 0, %s89
    %s104 = sphi 0, %s90
    %s110 = sphi 0, %s112
    %s113 = sphi 0, %s110
    %s114 = sphi 0, %s113
    %s130 = sphi 0, %s114
    %s136 = sphi 0, %s138
    %s139 = sphi 0, %s136
    %s140 = sphi 0, %s139
    %s156 = sphi 0, %s140
  $region4: #{densenet_forward.16} parent=0 // loop_header_branch
    %14 = sbr.rel (%p12) target = $region8
  $region5: #{densenet_forward.16} parent=0 // loop_body
    %s16 = ssub.s32 %s11, 1
    %s17 = ssub.s32 %s11, 2
    %s18 = sadd.s32 %s11, 1
    %s19 = ssub.s32 %s11, %s18
    %p20 = scmp.eq.s32.totalorder %s19, 0
    %s22 = sadd.s32 %s21, 1
    %s23 = scalar_select %p20, %s21, %s22
    %p26 = pneg %p20
    %p27 = scmp.eq.s32.totalorder %s11, 1
    %p28 = por %p26, %p27
    %p29 = scmp.ne.s32.totalorder %s21, %s24
    %p30 = scmp.eq.s32.totalorder %s11, 0
    %p31 = por %p29, %p30
    %p32 = scmp.ne.s32.totalorder %s21, %s24
    %p33 = scmp.eq.s32.totalorder %s16, 1
    %p34 = por %p32, %p33
    %p35 = scmp.ne.s32.totalorder %s24, %s25
    %p36 = scmp.eq.s32.totalorder %s16, 0
    %p37 = por %p35, %p36
    %p38 = scmp.ne.s32.totalorder %s24, %s25
    %p39 = scmp.eq.s32.totalorder %s17, 1
    %p40 = por %p38, %p39
    %p42 = scmp.ne.s32.totalorder %s25, %s41
    %p43 = scmp.eq.s32.totalorder %s17, 0
    %p44 = por %p42, %p43
    %s46 = sadd.s32 %s45, 1
    %p49 = scmp.eq.s32.totalorder %s11, 1
    %p50 = scmp.ne.s32.totalorder %s45, %s47
    %p51 = scmp.eq.s32.totalorder %s11, 0
    %p52 = por %p50, %p51
    %p53 = scmp.ne.s32.totalorder %s45, %s47
    %p54 = scmp.eq.s32.totalorder %s16, 1
    %p55 = por %p53, %p54
    %p56 = scmp.ne.s32.totalorder %s47, %s48
    %p57 = scmp.eq.s32.totalorder %s16, 0
    %p58 = por %p56, %p57
    %p59 = scmp.ne.s32.totalorder %s47, %s48
    %p60 = scmp.eq.s32.totalorder %s17, 1
    %p61 = por %p59, %p60
    %p63 = scmp.ne.s32.totalorder %s48, %s62
    %p64 = scmp.eq.s32.totalorder %s17, 0
    %p65 = por %p63, %p64
    %s67 = sadd.s32 %s66, 1
    %p70 = scmp.eq.s32.totalorder %s11, 1
    %p71 = scmp.ne.s32.totalorder %s66, %s68
    %p72 = scmp.eq.s32.totalorder %s11, 0
    %p73 = por %p71, %p72
    %p74 = scmp.ne.s32.totalorder %s66, %s68
    %p75 = scmp.eq.s32.totalorder %s16, 1
    %p76 = por %p74, %p75
    %p77 = scmp.ne.s32.totalorder %s68, %s69
    %p78 = scmp.eq.s32.totalorder %s16, 0
    %p79 = por %p77, %p78
    %p80 = scmp.ne.s32.totalorder %s68, %s69
    %p81 = scmp.eq.s32.totalorder %s17, 1
    %p82 = por %p80, %p81
    %p84 = scmp.ne.s32.totalorder %s69, %s83
    %p85 = scmp.eq.s32.totalorder %s17, 0
    %p86 = por %p84, %p85
    %s88 = sadd.s32 %s87, 1
    %p91 = scmp.eq.s32.totalorder %s11, 1
    %p92 = scmp.ne.s32.totalorder %s87, %s89
    %p93 = scmp.eq.s32.totalorder %s11, 0
    %p94 = por %p92, %p93
    %p95 = scmp.ne.s32.totalorder %s87, %s89
    %p96 = scmp.eq.s32.totalorder %s16, 1
    %p97 = por %p95, %p96
    %p98 = scmp.ne.s32.totalorder %s89, %s90
    %p99 = scmp.eq.s32.totalorder %s16, 0
    %p100 = por %p98, %p99
    %p101 = scmp.ne.s32.totalorder %s89, %s90
    %p102 = scmp.eq.s32.totalorder %s17, 1
    %p103 = por %p101, %p102
    %p105 = scmp.ne.s32.totalorder %s90, %s104
    %p106 = scmp.eq.s32.totalorder %s17, 0
    %p107 = por %p105, %p106
    %s108 = ssub.s32 %s11, %s18
    %p109 = scmp.eq.s32.totalorder %s108, 0
    %s111 = sadd.s32 %s110, 1
    %s112 = scalar_select %p109, %s110, %s111
    %p115 = pneg %p109
    %p116 = scmp.eq.s32.totalorder %s11, 1
    %p117 = por %p115, %p116
    %p118 = scmp.ne.s32.totalorder %s110, %s113
    %p119 = scmp.eq.s32.totalorder %s11, 0
    %p120 = por %p118, %p119
    %p121 = scmp.ne.s32.totalorder %s110, %s113
    %p122 = scmp.eq.s32.totalorder %s16, 1
    %p123 = por %p121, %p122
    %p124 = scmp.ne.s32.totalorder %s113, %s114
    %p125 = scmp.eq.s32.totalorder %s16, 0
    %p126 = por %p124, %p125
    %p127 = scmp.ne.s32.totalorder %s113, %s114
    %p128 = scmp.eq.s32.totalorder %s17, 1
    %p129 = por %p127, %p128
    %p131 = scmp.ne.s32.totalorder %s114, %s130
    %p132 = scmp.eq.s32.totalorder %s17, 0
    %p133 = por %p131, %p132
    %s134 = ssub.s32 %s11, %s18
    %p135 = scmp.eq.s32.totalorder %s134, 0
    %s137 = sadd.s32 %s136, 1
    %s138 = scalar_select %p135, %s136, %s137
    %p141 = pneg %p135
    %p142 = scmp.eq.s32.totalorder %s11, 1
    %p143 = por %p141, %p142
    %p144 = scmp.ne.s32.totalorder %s136, %s139
    %p145 = scmp.eq.s32.totalorder %s11, 0
    %p146 = por %p144, %p145
    %p147 = scmp.ne.s32.totalorder %s136, %s139
    %p148 = scmp.eq.s32.totalorder %s16, 1
    %p149 = por %p147, %p148
    %p150 = scmp.ne.s32.totalorder %s139, %s140
    %p151 = scmp.eq.s32.totalorder %s16, 0
    %p152 = por %p150, %p151
    %p153 = scmp.ne.s32.totalorder %s139, %s140
    %p154 = scmp.eq.s32.totalorder %s17, 1
    %p155 = por %p153, %p154
    %p157 = scmp.ne.s32.totalorder %s140, %s156
    %p158 = scmp.eq.s32.totalorder %s17, 0
    %p159 = por %p157, %p158
    %p160 = scmp.le.s32.totalorder 1, %s11
    %p161 = scmp.lt.s32.totalorder %s11, 3
    %p162 = pnand %p160, %p161
    %p163 = pneg %p162
    // Predicated region
    $region9: #{densenet_forward.16} parent=5 // pred_check
      _
    $region10: #{densenet_forward.16} parent=5 // pred_check_branch
      %165 = sbr.rel (%p162) target = $region12
    $region11: #{densenet_forward.16} parent=5 // pred_region
      %s166 = ssub.s32 %s11, 1
      // Predicated region
      $region13: #{densenet_forward.16} parent=11 // pred_check
        %p167 = pneg %p58
      $region14: #{densenet_forward.16} parent=11 // pred_check_branch
        %169 = sbr.rel (%p167) target = $region16
      $region15: #{densenet_forward.16} parent=11 // pred_region
        _
      $region16: #{densenet_forward.16} parent=11 // pred_fallthru
        _
      // Predicated region
      $region17: #{densenet_forward.16} parent=11 // pred_check
        %p170 = pneg %p79
      $region18: #{densenet_forward.16} parent=11 // pred_check_branch
        %172 = sbr.rel (%p170) target = $region20
      $region19: #{densenet_forward.16} parent=11 // pred_region
        _
      $region20: #{densenet_forward.16} parent=11 // pred_fallthru
        _
      // Predicated region
      $region21: #{densenet_forward.16} parent=11 // pred_check
        %p173 = pneg %p100
      $region22: #{densenet_forward.16} parent=11 // pred_check_branch
        %175 = sbr.rel (%p173) target = $region24
      $region23: #{densenet_forward.16} parent=11 // pred_region
        _
      $region24: #{densenet_forward.16} parent=11 // pred_fallthru
        _
    $region12: #{densenet_forward.16} parent=5 // pred_fallthru
      _
    %p176 = scmp.lt.s32.totalorder %s11, 2
    // Predicated region
    $region25: #{densenet_forward.16} parent=5 // pred_check
      %p177 = pneg %p176
    $region26: #{densenet_forward.16} parent=5 // pred_check_branch
      %179 = sbr.rel (%p177) target = $region28
    $region27: #{densenet_forward.16} parent=5 // pred_region
      // Predicated region
      $region29: #{densenet_forward.16} parent=27 // pred_check
        %p180 = pneg %p31
      $region30: #{densenet_forward.16} parent=27 // pred_check_branch
        %182 = sbr.rel (%p180) target = $region32
      $region31: #{densenet_forward.16} parent=27 // pred_region
        %p183 = scmp.lt.s32.totalorder %s11, 1
        %s184 = scalar_select %p183, %s11, 1
        %s185 = smul.addr %s184, 4
        %s186 = smul.addr %s185, 4
        %s187 = scalar_lea.vmem %s0, %s186
      $region32: #{densenet_forward.16} parent=27 // pred_fallthru
        _
      // Predicated region
      $region33: #{densenet_forward.16} parent=27 // pred_check
        %p188 = pneg %p120
      $region34: #{densenet_forward.16} parent=27 // pred_check_branch
        %190 = sbr.rel (%p188) target = $region36
      $region35: #{densenet_forward.16} parent=27 // pred_region
        %p191 = scmp.lt.s32.totalorder %s11, 1
        %s192 = scalar_select %p191, %s11, 1
        %s193 = smul.addr %s192, 8
        %s194 = sadd.s32 6, %s193
        %s195 = smul.addr %s194, 4
        %s196 = scalar_lea.vmem %s4, %s195
      $region36: #{densenet_forward.16} parent=27 // pred_fallthru
        _
    $region28: #{densenet_forward.16} parent=5 // pred_fallthru
      _
    %p197 = scmp.le.s32.totalorder 1, %s11
    %p198 = scmp.lt.s32.totalorder %s11, 3
    %p199 = pnand %p197, %p198
    %p200 = pneg %p199
    // Predicated region
    $region37: #{densenet_forward.16} parent=5 // pred_check
      _
    $region38: #{densenet_forward.16} parent=5 // pred_check_branch
      %202 = sbr.rel (%p199) target = $region40
    $region39: #{densenet_forward.16} parent=5 // pred_region
      %s203 = ssub.s32 %s11, 1
      %p204 = scmp.lt.s32.totalorder %s16, 1
      %s205 = scalar_select %p204, %s16, 1
      %s206 = smul.addr %s205, 4
      %s207 = smul.addr %s206, 4
      %s208 = scalar_lea.vmem %s0, %s207
      %p209 = pneg %p37
      %p210 = pneg %p34
      %p211 = pneg %p58
      %p212 = pneg %p55
      %p213 = pneg %p79
      %p214 = pneg %p76
      %p215 = pneg %p100
      %p216 = pneg %p97
      %p217 = scmp.lt.s32.totalorder %s16, 1
      %s218 = scalar_select %p217, %s16, 1
      %s219 = smul.addr %s218, 8
      %s220 = sadd.s32 6, %s219
      %s221 = smul.addr %s220, 4
      %s222 = scalar_lea.vmem %s4, %s221
      %p223 = pneg %p126
      %p224 = pneg %p123
      %p225 = pneg %p152
      %p226 = pneg %p149
      %p227 = scmp.lt.s32.totalorder %s16, 1
      %s228 = scalar_select %p227, %s16, 1
      %s229 = smul.addr %s228, 8
      %s230 = sadd.s32 6, %s229
      %s231 = smul.addr %s230, 4
      %s232 = scalar_lea.vmem %s5, %s231
      %p233 = scmp.lt.s32.totalorder %s16, 1
      %s234 = scalar_select %p233, %s16, 1
      %s235 = smul.addr %s234, 4
      %s236 = smul.addr %s235, 4
      %s237 = scalar_lea.vmem %s0, %s236
      %p238 = scmp.lt.s32.totalorder %s16, 1
      %s239 = scalar_select %p238, %s16, 1
      %s240 = smul.addr %s239, 8
      %s241 = sadd.s32 6, %s240
      %s242 = smul.addr %s241, 4
      %s243 = scalar_lea.vmem %s4, %s242
      %p244 = scmp.lt.s32.totalorder %s16, 1
      %s245 = scalar_select %p244, %s16, 1
      %s246 = smul.addr %s245, 8
      %s247 = sadd.s32 6, %s246
      %s248 = smul.addr %s247, 4
      %s249 = scalar_lea.vmem %s5, %s248
      %v251 = vld [vmem:[%s237] sm:$0xf]
      %v252 = vld [vmem:[%s237 + $0x4] sm:$0xf]
      %v253 = vld [vmem:[%s237 + $0x8] sm:$0xf]
      %v254 = vld [vmem:[%s237 + $0xc] sm:$0xf]
      %v255 = vunpack.c.l.bf16 %v251
      %v256 = vunpack.c.l.bf16 %v252
      %v257 = vunpack.c.l.bf16 %v253
      %v258 = vunpack.c.l.bf16 %v254
      %v259 = vld [vmem:[%s1] sm:$0xff]
      %v260 = vld [vmem:[%s1 + $0x8] sm:$0xff]
      %v261 = vld [vmem:[%s1 + $0x10] sm:$0xff]
      %v262 = vld [vmem:[%s1 + $0x18] sm:$0xff]
      %264 = vset.pattern.permute.xlu0 0
      %265 = vperm.xlu0 %264, %v259
      %v266 = vpop.permute.xlu0 %265
      %269 = vset.pattern.permute.xlu0 0
      %270 = vperm.xlu0 %269, %v260
      %v271 = vpop.permute.xlu0 %270
      %274 = vset.pattern.permute.xlu0 0
      %275 = vperm.xlu0 %274, %v261
      %v276 = vpop.permute.xlu0 %275
      %279 = vset.pattern.permute.xlu0 0
      %280 = vperm.xlu0 %279, %v262
      %v281 = vpop.permute.xlu0 %280
      %v283 = vmul.f32 %v255, %v266
      %v284 = vmul.f32 %v256, %v271
      %v285 = vmul.f32 %v257, %v276
      %v286 = vmul.f32 %v258, %v281
      %v287 = vld [vmem:[%s2] sm:$0xff]
      %v288 = vld [vmem:[%s2 + $0x8] sm:$0xff]
      %v289 = vld [vmem:[%s2 + $0x10] sm:$0xff]
      %v290 = vld [vmem:[%s2 + $0x18] sm:$0xff]
      %292 = vset.pattern.permute.xlu0 0
      %293 = vperm.xlu0 %292, %v287
      %v294 = vpop.permute.xlu0 %293
      %297 = vset.pattern.permute.xlu0 0
      %298 = vperm.xlu0 %297, %v288
      %v299 = vpop.permute.xlu0 %298
      %302 = vset.pattern.permute.xlu0 0
      %303 = vperm.xlu0 %302, %v289
      %v304 = vpop.permute.xlu0 %303
      %307 = vset.pattern.permute.xlu0 0
      %308 = vperm.xlu0 %307, %v290
      %v309 = vpop.permute.xlu0 %308
      %v311 = vadd.f32 %v283, %v294
      %v312 = vadd.f32 %v284, %v299
      %v313 = vadd.f32 %v285, %v304
      %v314 = vadd.f32 %v286, %v309
      %v315 = vmax.f32 %v311, 0.0
      %v316 = vmax.f32 %v312, 0.0
      %v317 = vmax.f32 %v313, 0.0
      %v318 = vmax.f32 %v314, 0.0
      %v319 = vpack.c.bf16 %v316, %v315
      %v320 = vpack.c.bf16 %v318, %v317
      %323 = vrot.lane.b32.xlu0 %v319, 1
      %v324 = vpop.permute.xlu0 %323
      %325 = vrot.lane.b32.xlu0 %v320, 1
      %v326 = vpop.permute.xlu0 %325
      %vm327 = vcmask 7168
      %v330 = vsel %vm327, 0, %v324
      %v332 = vsel %vm327, 0, %v326
      %vm333 = vcmask 531456
      %v334 = vsel %vm333, %v330, 0
      %v336 = vsel %vm333, %v332, 0
      %v338 = vld [vmem:[%s3] sm:$0xf]
      %v339 = vld [vmem:[%s3 + $0x4] sm:$0xf]
      %s340 = scalar_lea.vmem %s3, 8
      %v341 = vld [vmem:[%s340] sm:$0xf]
      %v342 = vld [vmem:[%s340 + $0x4] sm:$0xf]
      %v345 = vunpack.c.l.b16 %v341
      %v346 = vunpack.c.l.b16 %v342
      %v347 = vpack.c.b16 %v346, %v345
      %350 = vrot.lane.b32.xlu0 %v334, 127
      %v351 = vpop.permute.xlu0 %350
      %352 = vrot.lane.b32.xlu0 %v336, 127
      %v353 = vpop.permute.xlu0 %352
      %vm356 = vcmask 261120
      %v358 = vsel %vm356, %v347, 0
      %360 = vmatprep.subr.bf16.mxu0 0
      %361 = vmatpush1.bf16.msra.mxu0 %v351
      %362 = vmatprep.subr.bf16.mxu0 0
      %363 = vmatpush1.bf16.msra.mxu0 %v353
      %364 = vmatprep.subr.bf16.mxu0 0
      %365 = vmatpush1.bf16.msra.mxu0 0
      %366 = vmatprep.subr.bf16.mxu0 0
      %367 = vmatpush1.bf16.msra.mxu0 0
      %368 = vmatprep.subr.bf16.mxu0 0
      %369 = vmatpush1.bf16.msra.mxu0 0
      %370 = vmatprep.subr.bf16.mxu0 0
      %371 = vmatpush1.bf16.msra.mxu0 0
      %372 = vmatprep.subr.bf16.mxu0 0
      %373 = vmatpush1.bf16.msra.mxu0 0
      %374 = vmatprep.subr.bf16.mxu0 0
      %375 = vmatpush1.bf16.msra.mxu0 0
      %376 = vmatprep.subr.bf16.mxu0 0
      %377 = vmatpush1.bf16.msra.mxu0 0
      %378 = vmatprep.subr.bf16.mxu0 0
      %379 = vmatpush1.bf16.msra.mxu0 0
      %380 = vmatprep.subr.bf16.mxu0 0
      %381 = vmatpush1.bf16.msra.mxu0 0
      %382 = vmatprep.subr.bf16.mxu0 0
      %383 = vmatpush1.bf16.msra.mxu0 0
      %384 = vmatprep.subr.bf16.mxu0 0
      %385 = vmatpush1.bf16.msra.mxu0 0
      %386 = vmatprep.subr.bf16.mxu0 0
      %387 = vmatpush1.bf16.msra.mxu0 0
      %388 = vmatprep.subr.bf16.mxu0 0
      %389 = vmatpush1.bf16.msra.mxu0 0
      %390 = vmatprep.subr.bf16.mxu0 0
      %391 = vmatpush1.bf16.msra.mxu0 0
      %392 = vmatprep.mubr.bf16.mxu0 0
      %393 = vmatmul.mubr.bf16.gmra.mrb[0].mxu0 %v358
      %v394 = vpop.f32.mrb[0].mxu0
      %v395 = vadd.f32 0.0, %v394
      %v396 = vpop.f32.mrb[0].mxu0
      %v397 = vpop.f32.mrb[0].mxu0
      %v398 = vadd.f32 0.0, %v397
      %v399 = vpop.f32.mrb[0].mxu0
      %400 = vdwg.mxu0
      %v403 = vunpack.c.l.b16 %v338
      %v404 = vunpack.c.l.b16 %v339
      %v405 = vpack.c.b16 %v404, %v403
      %v407 = vsel %vm356, %v405, 0
      %409 = vmatprep.subr.bf16.mxu0 0
      %410 = vmatpush1.bf16.msra.mxu0 %v334
      %411 = vmatprep.subr.bf16.mxu0 0
      %412 = vmatpush1.bf16.msra.mxu0 %v336
      %413 = vmatprep.subr.bf16.mxu0 0
      %414 = vmatpush1.bf16.msra.mxu0 0
      %415 = vmatprep.subr.bf16.mxu0 0
      %416 = vmatpush1.bf16.msra.mxu0 0
      %417 = vmatprep.subr.bf16.mxu0 0
      %418 = vmatpush1.bf16.msra.mxu0 0
      %419 = vmatprep.subr.bf16.mxu0 0
      %420 = vmatpush1.bf16.msra.mxu0 0
      %421 = vmatprep.subr.bf16.mxu0 0
      %422 = vmatpush1.bf16.msra.mxu0 0
      %423 = vmatprep.subr.bf16.mxu0 0
      %424 = vmatpush1.bf16.msra.mxu0 0
      %425 = vmatprep.subr.bf16.mxu0 0
      %426 = vmatpush1.bf16.msra.mxu0 0
      %427 = vmatprep.subr.bf16.mxu0 0
      %428 = vmatpush1.bf16.msra.mxu0 0
      %429 = vmatprep.subr.bf16.mxu0 0
      %430 = vmatpush1.bf16.msra.mxu0 0
      %431 = vmatprep.subr.bf16.mxu0 0
      %432 = vmatpush1.bf16.msra.mxu0 0
      %433 = vmatprep.subr.bf16.mxu0 0
      %434 = vmatpush1.bf16.msra.mxu0 0
      %435 = vmatprep.subr.bf16.mxu0 0
      %436 = vmatpush1.bf16.msra.mxu0 0
      %437 = vmatprep.subr.bf16.mxu0 0
      %438 = vmatpush1.bf16.msra.mxu0 0
      %439 = vmatprep.subr.bf16.mxu0 0
      %440 = vmatpush1.bf16.msra.mxu0 0
      %441 = vmatprep.mubr.bf16.mxu0 0
      %442 = vmatmul.mubr.bf16.gmra.mrb[0].mxu0 %v407
      %v443 = vpop.f32.mrb[0].mxu0
      %v444 = vadd.f32 %v395, %v443
      %v445 = vpop.f32.mrb[0].mxu0
      %v446 = vpop.f32.mrb[0].mxu0
      %v447 = vadd.f32 %v398, %v446
      %v448 = vpop.f32.mrb[0].mxu0
      %449 = vdwg.mxu0
      %s450 = scalar_lea.vmem %s3, 16
      %v451 = vld [vmem:[%s450] sm:$0xf]
      %v452 = vld [vmem:[%s450 + $0x4] sm:$0xf]
      %v455 = vunpack.c.l.b16 %v451
      %v456 = vunpack.c.l.b16 %v452
      %v457 = vpack.c.b16 %v456, %v455
      %458 = vrot.lane.b32.xlu0 %v334, 126
      %v459 = vpop.permute.xlu0 %458
      %460 = vrot.lane.b32.xlu0 %v336, 126
      %v461 = vpop.permute.xlu0 %460
      %v465 = vsel %vm356, %v457, 0
      %467 = vmatprep.subr.bf16.mxu0 0
      %468 = vmatpush1.bf16.msra.mxu0 %v459
      %469 = vmatprep.subr.bf16.mxu0 0
      %470 = vmatpush1.bf16.msra.mxu0 %v461
      %471 = vmatprep.subr.bf16.mxu0 0
      %472 = vmatpush1.bf16.msra.mxu0 0
      %473 = vmatprep.subr.bf16.mxu0 0
      %474 = vmatpush1.bf16.msra.mxu0 0
      %475 = vmatprep.subr.bf16.mxu0 0
      %476 = vmatpush1.bf16.msra.mxu0 0
      %477 = vmatprep.subr.bf16.mxu0 0
      %478 = vmatpush1.bf16.msra.mxu0 0
      %479 = vmatprep.subr.bf16.mxu0 0
      %480 = vmatpush1.bf16.msra.mxu0 0
      %481 = vmatprep.subr.bf16.mxu0 0
      %482 = vmatpush1.bf16.msra.mxu0 0
      %483 = vmatprep.subr.bf16.mxu0 0
      %484 = vmatpush1.bf16.msra.mxu0 0
      %485 = vmatprep.subr.bf16.mxu0 0
      %486 = vmatpush1.bf16.msra.mxu0 0
      %487 = vmatprep.subr.bf16.mxu0 0
      %488 = vmatpush1.bf16.msra.mxu0 0
      %489 = vmatprep.subr.bf16.mxu0 0
      %490 = vmatpush1.bf16.msra.mxu0 0
      %491 = vmatprep.subr.bf16.mxu0 0
      %492 = vmatpush1.bf16.msra.mxu0 0
      %493 = vmatprep.subr.bf16.mxu0 0
      %494 = vmatpush1.bf16.msra.mxu0 0
      %495 = vmatprep.subr.bf16.mxu0 0
      %496 = vmatpush1.bf16.msra.mxu0 0
      %497 = vmatprep.subr.bf16.mxu0 0
      %498 = vmatpush1.bf16.msra.mxu0 0
      %499 = vmatprep.mubr.bf16.mxu0 0
      %500 = vmatmul.mubr.bf16.gmra.mrb[0].mxu0 %v465
      %v501 = vpop.f32.mrb[0].mxu0
      %v502 = vadd.f32 0.0, %v501
      %v503 = vpop.f32.mrb[0].mxu0
      %v504 = vpop.f32.mrb[0].mxu0
      %v505 = vadd.f32 0.0, %v504
      %v506 = vpop.f32.mrb[0].mxu0
      %507 = vdwg.mxu0
      %v508 = vadd.f32 %v444, %v502
      %v509 = vadd.f32 %v447, %v505
      %v510 = vpack.c.bf16 %v509, %v508
      %v512 = vunpack.c.l.b16 %v510
      %v513 = vunpack.c.h.b16 %v510
      %v514 = vpack.c.b16 %v512, %v512
      %v515 = vpack.c.b16 %v513, %v513
      %vm518 = vcmask 519168
      %519 = vst.msk [vmem:[%s249] sm:$0xf] %vm518, %v514
      %520 = vst.msk [vmem:[%s249 + $0x4] sm:$0xf] %vm518, %v515
      %p521 = scmp.lt.s32.totalorder %s16, 1
      %s522 = scalar_select %p521, %s16, 1
      %s523 = smul.addr %s522, 8
      %s524 = sadd.s32 6, %s523
      %s525 = smul.addr %s524, 4
      %s526 = scalar_lea.vmem %s5, %s525
      // Predicated region
      $region41: #{densenet_forward.16} parent=39 // pred_check
        %p527 = pneg %p149
      $region42: #{densenet_forward.16} parent=39 // pred_check_branch
        %529 = sbr.rel (%p527) target = $region44
      $region43: #{densenet_forward.16} parent=39 // pred_region
        _
      $region44: #{densenet_forward.16} parent=39 // pred_fallthru
        _
    $region40: #{densenet_forward.16} parent=5 // pred_fallthru
      _
    %p530 = scmp.le.s32.totalorder 2, %s11
    // Predicated region
    $region45: #{densenet_forward.16} parent=5 // pred_check
      %p531 = pneg %p530
    $region46: #{densenet_forward.16} parent=5 // pred_check_branch
      %533 = sbr.rel (%p531) target = $region48
    $region47: #{densenet_forward.16} parent=5 // pred_region
      %s534 = ssub.s32 %s11, 2
      // Predicated region
      $region49: #{densenet_forward.16} parent=47 // pred_check
        %p535 = pneg %p155
      $region50: #{densenet_forward.16} parent=47 // pred_check_branch
        %537 = sbr.rel (%p535) target = $region52
      $region51: #{densenet_forward.16} parent=47 // pred_region
        %p538 = scmp.lt.s32.totalorder %s17, 1
        %s539 = scalar_select %p538, %s17, 1
        %s540 = smul.addr %s539, 8
        %s541 = sadd.s32 6, %s540
        %s542 = smul.addr %s541, 4
        %s543 = scalar_lea.vmem %s5, %s542
      $region52: #{densenet_forward.16} parent=47 // pred_fallthru
        _
    $region48: #{densenet_forward.16} parent=5 // pred_fallthru
      _
  $region6: #{densenet_forward.16} parent=0 // loop_footer
    %s15 = sadd.s32 1, %s11
  $region7: #{densenet_forward.16} parent=0 // loop_footer_branch
    %10 = sbr.rel target = $region3
  $region8: #{densenet_forward.16} parent=0 // loop_exit
    _

// kernel: densenet_forward.17
$region0: #{densenet_forward.17}
  #allocation0 [shape = 'u32[]', space=smem, size = 0x4, offset = 0x4, fixed_abs, tag = 'smem constant byte address 0x4 - core index']
  #allocation1 [shape = 'u32[144,128]{1,0:T(1,128)}', space=vmem, size = 0x12000, scoped, tag = 'internal scratch']
  %s0 = inlined_call_operand.vmem [shape: bf16[2,64,64], index: 0, kind: input, shape index: {}]
  %s1 = inlined_call_operand.vmem [shape: f32[64,1], index: 1, kind: input, shape index: {}]
  %s2 = inlined_call_operand.vmem [shape: f32[64,1], index: 2, kind: input, shape index: {}]
  %s3 = inlined_call_operand.vmem [shape: bf16[1,32,64], index: 3, kind: input, shape index: {}]
  %s4 = inlined_call_operand.vmem [shape: bf16[2,32,64], index: 4, kind: output, shape index: {}]
  %s5 = sld [smem:[#allocation0]]
  $region49: #{densenet_forward.17} parent=0
    _
  %s7 = ssub.s32 1, %s5
  %s8 = scalar_select 0, %s7, %s5
  loop: start=0, step=1, limit=4
  $region2: #{densenet_forward.17} parent=0 // loop_pre_header
    _
  $region3: #{densenet_forward.17} parent=0 // loop_header
    %s10 = sphi 0, %s14
    %p11 = scmp.ge.s32.totalorder %s10, 4
    %s17 = sphi 0, %s29
    %s18 = sphi 0, %s25
    %s19 = sphi 0, %s17
    %s20 = sphi 0, %s18
    %s21 = sphi 0, %s19
    %s22 = sphi 0, %s20
    %s34 = sphi 0, %s36
    %s37 = sphi 0, %s34
    %s38 = sphi 0, %s37
    %s54 = sphi 0, %s38
    %s58 = sphi 0, %s58
    %s60 = sphi 0, %s58
    %s61 = sphi 0, %s60
    %s75 = sphi 0, %s61
    %s79 = sphi 0, %s79
    %s81 = sphi 0, %s79
    %s82 = sphi 0, %s81
    %s96 = sphi 0, %s82
    %s100 = sphi 0, %s100
    %s102 = sphi 0, %s100
    %s103 = sphi 0, %s102
    %s117 = sphi 0, %s103
    %s125 = sphi 0, %s127
    %s128 = sphi 0, %s125
    %s129 = sphi 0, %s128
    %s145 = sphi 0, %s129
  $region4: #{densenet_forward.17} parent=0 // loop_header_branch
    %13 = sbr.rel (%p11) target = $region8
  $region5: #{densenet_forward.17} parent=0 // loop_body
    %s15 = ssub.s32 %s10, 1
    %s16 = ssub.s32 %s10, 2
    %s23 = sadd.s32 1, %s18
    %p24 = scmp.ge.s32.totalorder %s23, 1
    %s25 = scalar_select %p24, 0, %s23
    %s26 = sadd.s32 1, %s17
    %s27 = scalar_select %p24, %s26, %s17
    %p28 = scmp.ge.s32.totalorder %s27, 2
    %s29 = scalar_select %p28, 0, %s27
    %s30 = ssub.s32 %s17, %s29
    %s31 = ssub.s32 %s18, %s25
    %s32 = sor.u32 %s30, %s31
    %p33 = scmp.eq.s32.totalorder %s32, 0
    %s35 = sadd.s32 %s34, 1
    %s36 = scalar_select %p33, %s34, %s35
    %p39 = pneg %p33
    %p40 = scmp.eq.s32.totalorder %s10, 1
    %p41 = por %p39, %p40
    %p42 = scmp.ne.s32.totalorder %s34, %s37
    %p43 = scmp.eq.s32.totalorder %s10, 0
    %p44 = por %p42, %p43
    %p45 = scmp.ne.s32.totalorder %s34, %s37
    %p46 = scmp.eq.s32.totalorder %s15, 1
    %p47 = por %p45, %p46
    %p48 = scmp.ne.s32.totalorder %s37, %s38
    %p49 = scmp.eq.s32.totalorder %s15, 0
    %p50 = por %p48, %p49
    %p51 = scmp.ne.s32.totalorder %s37, %s38
    %p52 = scmp.eq.s32.totalorder %s16, 1
    %p53 = por %p51, %p52
    %p55 = scmp.ne.s32.totalorder %s38, %s54
    %p56 = scmp.eq.s32.totalorder %s16, 0
    %p57 = por %p55, %p56
    %s59 = sadd.s32 %s58, 1
    %p62 = scmp.eq.s32.totalorder %s10, 1
    %p63 = scmp.ne.s32.totalorder %s58, %s60
    %p64 = scmp.eq.s32.totalorder %s10, 0
    %p65 = por %p63, %p64
    %p66 = scmp.ne.s32.totalorder %s58, %s60
    %p67 = scmp.eq.s32.totalorder %s15, 1
    %p68 = por %p66, %p67
    %p69 = scmp.ne.s32.totalorder %s60, %s61
    %p70 = scmp.eq.s32.totalorder %s15, 0
    %p71 = por %p69, %p70
    %p72 = scmp.ne.s32.totalorder %s60, %s61
    %p73 = scmp.eq.s32.totalorder %s16, 1
    %p74 = por %p72, %p73
    %p76 = scmp.ne.s32.totalorder %s61, %s75
    %p77 = scmp.eq.s32.totalorder %s16, 0
    %p78 = por %p76, %p77
    %s80 = sadd.s32 %s79, 1
    %p83 = scmp.eq.s32.totalorder %s10, 1
    %p84 = scmp.ne.s32.totalorder %s79, %s81
    %p85 = scmp.eq.s32.totalorder %s10, 0
    %p86 = por %p84, %p85
    %p87 = scmp.ne.s32.totalorder %s79, %s81
    %p88 = scmp.eq.s32.totalorder %s15, 1
    %p89 = por %p87, %p88
    %p90 = scmp.ne.s32.totalorder %s81, %s82
    %p91 = scmp.eq.s32.totalorder %s15, 0
    %p92 = por %p90, %p91
    %p93 = scmp.ne.s32.totalorder %s81, %s82
    %p94 = scmp.eq.s32.totalorder %s16, 1
    %p95 = por %p93, %p94
    %p97 = scmp.ne.s32.totalorder %s82, %s96
    %p98 = scmp.eq.s32.totalorder %s16, 0
    %p99 = por %p97, %p98
    %s101 = sadd.s32 %s100, 1
    %p104 = scmp.eq.s32.totalorder %s10, 1
    %p105 = scmp.ne.s32.totalorder %s100, %s102
    %p106 = scmp.eq.s32.totalorder %s10, 0
    %p107 = por %p105, %p106
    %p108 = scmp.ne.s32.totalorder %s100, %s102
    %p109 = scmp.eq.s32.totalorder %s15, 1
    %p110 = por %p108, %p109
    %p111 = scmp.ne.s32.totalorder %s102, %s103
    %p112 = scmp.eq.s32.totalorder %s15, 0
    %p113 = por %p111, %p112
    %p114 = scmp.ne.s32.totalorder %s102, %s103
    %p115 = scmp.eq.s32.totalorder %s16, 1
    %p116 = por %p114, %p115
    %p118 = scmp.ne.s32.totalorder %s103, %s117
    %p119 = scmp.eq.s32.totalorder %s16, 0
    %p120 = por %p118, %p119
    %s121 = ssub.s32 %s17, %s29
    %s122 = ssub.s32 %s18, %s25
    %s123 = sor.u32 %s121, %s122
    %p124 = scmp.eq.s32.totalorder %s123, 0
    %s126 = sadd.s32 %s125, 1
    %s127 = scalar_select %p124, %s125, %s126
    %p130 = pneg %p124
    %p131 = scmp.eq.s32.totalorder %s10, 1
    %p132 = por %p130, %p131
    %p133 = scmp.ne.s32.totalorder %s125, %s128
    %p134 = scmp.eq.s32.totalorder %s10, 0
    %p135 = por %p133, %p134
    %p136 = scmp.ne.s32.totalorder %s125, %s128
    %p137 = scmp.eq.s32.totalorder %s15, 1
    %p138 = por %p136, %p137
    %p139 = scmp.ne.s32.totalorder %s128, %s129
    %p140 = scmp.eq.s32.totalorder %s15, 0
    %p141 = por %p139, %p140
    %p142 = scmp.ne.s32.totalorder %s128, %s129
    %p143 = scmp.eq.s32.totalorder %s16, 1
    %p144 = por %p142, %p143
    %p146 = scmp.ne.s32.totalorder %s129, %s145
    %p147 = scmp.eq.s32.totalorder %s16, 0
    %p148 = por %p146, %p147
    %p149 = scmp.le.s32.totalorder 1, %s10
    %p150 = scmp.lt.s32.totalorder %s10, 3
    %p151 = pnand %p149, %p150
    %p152 = pneg %p151
    // Predicated region
    $region9: #{densenet_forward.17} parent=5 // pred_check
      _
    $region10: #{densenet_forward.17} parent=5 // pred_check_branch
      %154 = sbr.rel (%p151) target = $region12
    $region11: #{densenet_forward.17} parent=5 // pred_region
      %s155 = ssub.s32 %s10, 1
      // Predicated region
      $region13: #{densenet_forward.17} parent=11 // pred_check
        %p156 = pneg %p71
      $region14: #{densenet_forward.17} parent=11 // pred_check_branch
        %158 = sbr.rel (%p156) target = $region16
      $region15: #{densenet_forward.17} parent=11 // pred_region
        _
      $region16: #{densenet_forward.17} parent=11 // pred_fallthru
        _
      // Predicated region
      $region17: #{densenet_forward.17} parent=11 // pred_check
        %p159 = pneg %p92
      $region18: #{densenet_forward.17} parent=11 // pred_check_branch
        %161 = sbr.rel (%p159) target = $region20
      $region19: #{densenet_forward.17} parent=11 // pred_region
        _
      $region20: #{densenet_forward.17} parent=11 // pred_fallthru
        _
      // Predicated region
      $region21: #{densenet_forward.17} parent=11 // pred_check
        %p162 = pneg %p113
      $region22: #{densenet_forward.17} parent=11 // pred_check_branch
        %164 = sbr.rel (%p162) target = $region24
      $region23: #{densenet_forward.17} parent=11 // pred_region
        _
      $region24: #{densenet_forward.17} parent=11 // pred_fallthru
        _
    $region12: #{densenet_forward.17} parent=5 // pred_fallthru
      _
    %p165 = scmp.lt.s32.totalorder %s10, 2
    // Predicated region
    $region25: #{densenet_forward.17} parent=5 // pred_check
      %p166 = pneg %p165
    $region26: #{densenet_forward.17} parent=5 // pred_check_branch
      %168 = sbr.rel (%p166) target = $region28
    $region27: #{densenet_forward.17} parent=5 // pred_region
      // Predicated region
      $region29: #{densenet_forward.17} parent=27 // pred_check
        %p169 = pneg %p44
      $region30: #{densenet_forward.17} parent=27 // pred_check_branch
        %171 = sbr.rel (%p169) target = $region32
      $region31: #{densenet_forward.17} parent=27 // pred_region
        %p172 = scmp.lt.s32.totalorder %s17, 1
        %s173 = scalar_select %p172, %s17, 1
        %p174 = scmp.lt.s32.totalorder %s18, 0
        %s175 = scalar_select %p174, %s18, 0
        %s176 = smul.addr %s173, 8
        %s177 = sadd.s32 %s175, %s176
        %s178 = smul.addr %s177, 4
        %s179 = scalar_lea.vmem %s0, %s178
      $region32: #{densenet_forward.17} parent=27 // pred_fallthru
        _
    $region28: #{densenet_forward.17} parent=5 // pred_fallthru
      _
    %p180 = scmp.le.s32.totalorder 1, %s10
    %p181 = scmp.lt.s32.totalorder %s10, 3
    %p182 = pnand %p180, %p181
    %p183 = pneg %p182
    // Predicated region
    $region33: #{densenet_forward.17} parent=5 // pred_check
      _
    $region34: #{densenet_forward.17} parent=5 // pred_check_branch
      %185 = sbr.rel (%p182) target = $region36
    $region35: #{densenet_forward.17} parent=5 // pred_region
      %s186 = ssub.s32 %s10, 1
      %p187 = scmp.lt.s32.totalorder %s19, 1
      %s188 = scalar_select %p187, %s19, 1
      %p189 = scmp.lt.s32.totalorder %s20, 0
      %s190 = scalar_select %p189, %s20, 0
      %s191 = smul.addr %s188, 8
      %s192 = sadd.s32 %s190, %s191
      %s193 = smul.addr %s192, 4
      %s194 = scalar_lea.vmem %s0, %s193
      %p195 = pneg %p50
      %p196 = pneg %p47
      %p197 = pneg %p71
      %p198 = pneg %p68
      %p199 = pneg %p92
      %p200 = pneg %p89
      %p201 = pneg %p113
      %p202 = pneg %p110
      %p203 = pneg %p141
      %p204 = pneg %p138
      %p205 = scmp.lt.s32.totalorder %s19, 1
      %s206 = scalar_select %p205, %s19, 1
      %p207 = scmp.lt.s32.totalorder %s20, 0
      %s208 = scalar_select %p207, %s20, 0
      %s209 = smul.addr %s206, 4
      %s210 = sadd.s32 %s208, %s209
      %s211 = smul.addr %s210, 4
      %s212 = scalar_lea.vmem %s4, %s211
      %p213 = scmp.lt.s32.totalorder %s19, 1
      %s214 = scalar_select %p213, %s19, 1
      %p215 = scmp.lt.s32.totalorder %s20, 0
      %s216 = scalar_select %p215, %s20, 0
      %s217 = smul.addr %s214, 8
      %s218 = sadd.s32 %s216, %s217
      %s219 = smul.addr %s218, 4
      %s220 = scalar_lea.vmem %s0, %s219
      %p221 = scmp.lt.s32.totalorder %s19, 1
      %s222 = scalar_select %p221, %s19, 1
      %p223 = scmp.lt.s32.totalorder %s20, 0
      %s224 = scalar_select %p223, %s20, 0
      %s225 = smul.addr %s222, 4
      %s226 = sadd.s32 %s224, %s225
      %s227 = smul.addr %s226, 4
      %s228 = scalar_lea.vmem %s4, %s227
      %v230 = vld [vmem:[%s220] sm:$0xf]
      %v231 = vld [vmem:[%s220 + $0x4] sm:$0xf]
      %v232 = vld [vmem:[%s220 + $0x8] sm:$0xf]
      %v233 = vld [vmem:[%s220 + $0xc] sm:$0xf]
      %v234 = vld [vmem:[%s220 + $0x10] sm:$0xf]
      %v235 = vld [vmem:[%s220 + $0x14] sm:$0xf]
      %v236 = vld [vmem:[%s220 + $0x18] sm:$0xf]
      %v237 = vld [vmem:[%s220 + $0x1c] sm:$0xf]
      %v238 = vunpack.c.l.bf16 %v230
      %v239 = vunpack.c.l.bf16 %v231
      %v240 = vunpack.c.l.bf16 %v232
      %v241 = vunpack.c.l.bf16 %v233
      %v242 = vunpack.c.l.bf16 %v234
      %v243 = vunpack.c.l.bf16 %v235
      %v244 = vunpack.c.l.bf16 %v236
      %v245 = vunpack.c.l.bf16 %v237
      %v246 = vld [vmem:[%s1] sm:$0xff]
      %v247 = vld [vmem:[%s1 + $0x8] sm:$0xff]
      %v248 = vld [vmem:[%s1 + $0x10] sm:$0xff]
      %v249 = vld [vmem:[%s1 + $0x18] sm:$0xff]
      %v250 = vld [vmem:[%s1 + $0x20] sm:$0xff]
      %v251 = vld [vmem:[%s1 + $0x28] sm:$0xff]
      %v252 = vld [vmem:[%s1 + $0x30] sm:$0xff]
      %v253 = vld [vmem:[%s1 + $0x38] sm:$0xff]
      %255 = vset.pattern.permute.xlu0 0
      %256 = vperm.xlu0 %255, %v246
      %v257 = vpop.permute.xlu0 %256
      %260 = vset.pattern.permute.xlu0 0
      %261 = vperm.xlu0 %260, %v247
      %v262 = vpop.permute.xlu0 %261
      %265 = vset.pattern.permute.xlu0 0
      %266 = vperm.xlu0 %265, %v248
      %v267 = vpop.permute.xlu0 %266
      %270 = vset.pattern.permute.xlu0 0
      %271 = vperm.xlu0 %270, %v249
      %v272 = vpop.permute.xlu0 %271
      %275 = vset.pattern.permute.xlu0 0
      %276 = vperm.xlu0 %275, %v250
      %v277 = vpop.permute.xlu0 %276
      %280 = vset.pattern.permute.xlu0 0
      %281 = vperm.xlu0 %280, %v251
      %v282 = vpop.permute.xlu0 %281
      %285 = vset.pattern.permute.xlu0 0
      %286 = vperm.xlu0 %285, %v252
      %v287 = vpop.permute.xlu0 %286
      %290 = vset.pattern.permute.xlu0 0
      %291 = vperm.xlu0 %290, %v253
      %v292 = vpop.permute.xlu0 %291
      %v294 = vmul.f32 %v238, %v257
      %v295 = vmul.f32 %v239, %v262
      %v296 = vmul.f32 %v240, %v267
      %v297 = vmul.f32 %v241, %v272
      %v298 = vmul.f32 %v242, %v277
      %v299 = vmul.f32 %v243, %v282
      %v300 = vmul.f32 %v244, %v287
      %v301 = vmul.f32 %v245, %v292
      %v302 = vld [vmem:[%s2] sm:$0xff]
      %v303 = vld [vmem:[%s2 + $0x8] sm:$0xff]
      %v304 = vld [vmem:[%s2 + $0x10] sm:$0xff]
      %v305 = vld [vmem:[%s2 + $0x18] sm:$0xff]
      %v306 = vld [vmem:[%s2 + $0x20] sm:$0xff]
      %v307 = vld [vmem:[%s2 + $0x28] sm:$0xff]
      %v308 = vld [vmem:[%s2 + $0x30] sm:$0xff]
      %v309 = vld [vmem:[%s2 + $0x38] sm:$0xff]
      %311 = vset.pattern.permute.xlu0 0
      %312 = vperm.xlu0 %311, %v302
      %v313 = vpop.permute.xlu0 %312
      %316 = vset.pattern.permute.xlu0 0
      %317 = vperm.xlu0 %316, %v303
      %v318 = vpop.permute.xlu0 %317
      %321 = vset.pattern.permute.xlu0 0
      %322 = vperm.xlu0 %321, %v304
      %v323 = vpop.permute.xlu0 %322
      %326 = vset.pattern.permute.xlu0 0
      %327 = vperm.xlu0 %326, %v305
      %v328 = vpop.permute.xlu0 %327
      %331 = vset.pattern.permute.xlu0 0
      %332 = vperm.xlu0 %331, %v306
      %v333 = vpop.permute.xlu0 %332
      %336 = vset.pattern.permute.xlu0 0
      %337 = vperm.xlu0 %336, %v307
      %v338 = vpop.permute.xlu0 %337
      %341 = vset.pattern.permute.xlu0 0
      %342 = vperm.xlu0 %341, %v308
      %v343 = vpop.permute.xlu0 %342
      %346 = vset.pattern.permute.xlu0 0
      %347 = vperm.xlu0 %346, %v309
      %v348 = vpop.permute.xlu0 %347
      %v350 = vadd.f32 %v294, %v313
      %v351 = vadd.f32 %v295, %v318
      %v352 = vadd.f32 %v296, %v323
      %v353 = vadd.f32 %v297, %v328
      %v354 = vadd.f32 %v298, %v333
      %v355 = vadd.f32 %v299, %v338
      %v356 = vadd.f32 %v300, %v343
      %v357 = vadd.f32 %v301, %v348
      %v358 = vmax.f32 %v350, 0.0
      %v359 = vmax.f32 %v351, 0.0
      %v360 = vmax.f32 %v352, 0.0
      %v361 = vmax.f32 %v353, 0.0
      %v362 = vmax.f32 %v354, 0.0
      %v363 = vmax.f32 %v355, 0.0
      %v364 = vmax.f32 %v356, 0.0
      %v365 = vmax.f32 %v357, 0.0
      %v366 = vpack.c.bf16 %v359, %v358
      %v367 = vpack.c.bf16 %v361, %v360
      %v368 = vpack.c.bf16 %v363, %v362
      %v369 = vpack.c.bf16 %v365, %v364
      %v370 = vld [vmem:[%s3] sm:$0xf]
      %v371 = vld [vmem:[%s3 + $0x4] sm:$0xf]
      %v372 = vld [vmem:[%s3 + $0x8] sm:$0xf]
      %v373 = vld [vmem:[%s3 + $0xc] sm:$0xf]
      %v378 = vunpack.c.l.b16 %v370
      %v379 = vunpack.c.l.b16 %v371
      %v380 = vunpack.c.l.b16 %v372
      %v381 = vunpack.c.l.b16 %v373
      %v382 = vpack.c.b16 %v379, %v378
      %v383 = vpack.c.b16 %v381, %v380
      %vm384 = vcmask 523264
      %v386 = vsel %vm384, %v382, 0
      %v389 = vsel %vm384, %v383, 0
      %391 = vmatprep.subr.bf16.mxu0 0
      %392 = vmatpush1.bf16.msra.mxu0 %v366
      %393 = vmatprep.subr.bf16.mxu0 0
      %394 = vmatpush1.bf16.msra.mxu0 %v367
      %395 = vmatprep.subr.bf16.mxu0 0
      %396 = vmatpush1.bf16.msra.mxu0 %v368
      %397 = vmatprep.subr.bf16.mxu0 0
      %398 = vmatpush1.bf16.msra.mxu0 %v369
      %399 = vmatprep.subr.bf16.mxu0 0
      %400 = vmatpush1.bf16.msra.mxu0 0
      %401 = vmatprep.subr.bf16.mxu0 0
      %402 = vmatpush1.bf16.msra.mxu0 0
      %403 = vmatprep.subr.bf16.mxu0 0
      %404 = vmatpush1.bf16.msra.mxu0 0
      %405 = vmatprep.subr.bf16.mxu0 0
      %406 = vmatpush1.bf16.msra.mxu0 0
      %407 = vmatprep.subr.bf16.mxu0 0
      %408 = vmatpush1.bf16.msra.mxu0 0
      %409 = vmatprep.subr.bf16.mxu0 0
      %410 = vmatpush1.bf16.msra.mxu0 0
      %411 = vmatprep.subr.bf16.mxu0 0
      %412 = vmatpush1.bf16.msra.mxu0 0
      %413 = vmatprep.subr.bf16.mxu0 0
      %414 = vmatpush1.bf16.msra.mxu0 0
      %415 = vmatprep.subr.bf16.mxu0 0
      %416 = vmatpush1.bf16.msra.mxu0 0
      %417 = vmatprep.subr.bf16.mxu0 0
      %418 = vmatpush1.bf16.msra.mxu0 0
      %419 = vmatprep.subr.bf16.mxu0 0
      %420 = vmatpush1.bf16.msra.mxu0 0
      %421 = vmatprep.subr.bf16.mxu0 0
      %422 = vmatpush1.bf16.msra.mxu0 0
      %423 = vmatprep.mubr.bf16.mxu0 0
      %424 = vmatmul.mubr.bf16.gmra.mrb[0].mxu0 %v386
      %v425 = vpop.f32.mrb[0].mxu0
      %v426 = vadd.f32 0.0, %v425
      %v427 = vpop.f32.mrb[0].mxu0
      %v428 = vpop.f32.mrb[0].mxu0
      %v429 = vadd.f32 0.0, %v428
      %v430 = vpop.f32.mrb[0].mxu0
      %431 = vmatprep.mubr.bf16.mxu0 0
      %432 = vmatmul.mubr.bf16.gmra.mrb[0].mxu0 %v389
      %v433 = vpop.f32.mrb[0].mxu0
      %v434 = vadd.f32 0.0, %v433
      %v435 = vpop.f32.mrb[0].mxu0
      %v436 = vpop.f32.mrb[0].mxu0
      %v437 = vadd.f32 0.0, %v436
      %v438 = vpop.f32.mrb[0].mxu0
      %439 = vdwg.mxu0
      %v440 = vpack.c.bf16 %v429, %v426
      %v441 = vpack.c.bf16 %v437, %v434
      %v444 = vunpack.c.l.b16 %v440
      %v445 = vunpack.c.h.b16 %v440
      %v446 = vunpack.c.l.b16 %v441
      %v447 = vunpack.c.h.b16 %v441
      %v448 = vpack.c.b16 %v444, %v444
      %v449 = vpack.c.b16 %v445, %v445
      %v450 = vpack.c.b16 %v446, %v446
      %v451 = vpack.c.b16 %v447, %v447
      %vm456 = vcmask 519168
      %457 = vst.msk [vmem:[%s228] sm:$0xf] %vm456, %v448
      %458 = vst.msk [vmem:[%s228 + $0x4] sm:$0xf] %vm456, %v449
      %459 = vst.msk [vmem:[%s228 + $0x8] sm:$0xf] %vm456, %v450
      %460 = vst.msk [vmem:[%s228 + $0xc] sm:$0xf] %vm456, %v451
      %p461 = scmp.lt.s32.totalorder %s19, 1
      %s462 = scalar_select %p461, %s19, 1
      %p463 = scmp.lt.s32.totalorder %s20, 0
      %s464 = scalar_select %p463, %s20, 0
      %s465 = smul.addr %s462, 4
      %s466 = sadd.s32 %s464, %s465
      %s467 = smul.addr %s466, 4
      %s468 = scalar_lea.vmem %s4, %s467
      // Predicated region
      $region37: #{densenet_forward.17} parent=35 // pred_check
        %p469 = pneg %p138
      $region38: #{densenet_forward.17} parent=35 // pred_check_branch
        %471 = sbr.rel (%p469) target = $region40
      $region39: #{densenet_forward.17} parent=35 // pred_region
        _
      $region40: #{densenet_forward.17} parent=35 // pred_fallthru
        _
    $region36: #{densenet_forward.17} parent=5 // pred_fallthru
      _
    %p472 = scmp.le.s32.totalorder 2, %s10
    // Predicated region
    $region41: #{densenet_forward.17} parent=5 // pred_check
      %p473 = pneg %p472
    $region42: #{densenet_forward.17} parent=5 // pred_check_branch
      %475 = sbr.rel (%p473) target = $region44
    $region43: #{densenet_forward.17} parent=5 // pred_region
      %s476 = ssub.s32 %s10, 2
      // Predicated region
      $region45: #{densenet_forward.17} parent=43 // pred_check
        %p477 = pneg %p144
      $region46: #{densenet_forward.17} parent=43 // pred_check_branch
        %479 = sbr.rel (%p477) target = $region48
      $region47: #{densenet_forward.17} parent=43 // pred_region
        %p480 = scmp.lt.s32.totalorder %s21, 1
        %s481 = scalar_select %p480, %s21, 1
        %p482 = scmp.lt.s32.totalorder %s22, 0
        %s483 = scalar_select %p482, %s22, 0
        %s484 = smul.addr %s481, 4
        %s485 = sadd.s32 %s483, %s484
        %s486 = smul.addr %s485, 4
        %s487 = scalar_lea.vmem %s4, %s486
      $region48: #{densenet_forward.17} parent=43 // pred_fallthru
        _
    $region44: #{densenet_forward.17} parent=5 // pred_fallthru
      _
  $region6: #{densenet_forward.17} parent=0 // loop_footer
    %s14 = sadd.s32 1, %s10
  $region7: #{densenet_forward.17} parent=0 // loop_footer_branch
    %9 = sbr.rel target = $region3
  $region8: #{densenet_forward.17} parent=0 // loop_exit
    _

// kernel: densenet_forward.18
$region0: #{densenet_forward.18}
  #allocation0 [shape = 'u32[]', space=smem, size = 0x4, offset = 0x4, fixed_abs, tag = 'smem constant byte address 0x4 - core index']
  #allocation1 [shape = 'u32[144,128]{1,0:T(1,128)}', space=vmem, size = 0x12000, scoped, tag = 'internal scratch']
  %s0 = inlined_call_operand.vmem [shape: bf16[2,32,32], index: 0, kind: input, shape index: {}]
  %s1 = inlined_call_operand.vmem [shape: bf16[2,32,32], index: 1, kind: input, shape index: {}]
  %s2 = inlined_call_operand.vmem [shape: bf16[2,64,32], index: 2, kind: output, shape index: {}]
  %s3 = sld [smem:[#allocation0]]
  $region41: #{densenet_forward.18} parent=0
    _
  %s5 = ssub.s32 1, %s3
  %s6 = scalar_select 0, %s5, %s3
  loop: start=0, step=1, limit=4
  $region2: #{densenet_forward.18} parent=0 // loop_pre_header
    _
  $region3: #{densenet_forward.18} parent=0 // loop_header
    %s8 = sphi 0, %s12
    %p9 = scmp.ge.s32.totalorder %s8, 4
    %s15 = sphi 0, %s27
    %s16 = sphi 0, %s23
    %s17 = sphi 0, %s15
    %s18 = sphi 0, %s16
    %s19 = sphi 0, %s17
    %s20 = sphi 0, %s18
    %s32 = sphi 0, %s34
    %s35 = sphi 0, %s32
    %s36 = sphi 0, %s35
    %s52 = sphi 0, %s36
    %s60 = sphi 0, %s62
    %s63 = sphi 0, %s60
    %s64 = sphi 0, %s63
    %s80 = sphi 0, %s64
    %s88 = sphi 0, %s90
    %s91 = sphi 0, %s88
    %s92 = sphi 0, %s91
    %s108 = sphi 0, %s92
  $region4: #{densenet_forward.18} parent=0 // loop_header_branch
    %11 = sbr.rel (%p9) target = $region8
  $region5: #{densenet_forward.18} parent=0 // loop_body
    %s13 = ssub.s32 %s8, 1
    %s14 = ssub.s32 %s8, 2
    %s21 = sadd.s32 1, %s16
    %p22 = scmp.ge.s32.totalorder %s21, 1
    %s23 = scalar_select %p22, 0, %s21
    %s24 = sadd.s32 1, %s15
    %s25 = scalar_select %p22, %s24, %s15
    %p26 = scmp.ge.s32.totalorder %s25, 2
    %s27 = scalar_select %p26, 0, %s25
    %s28 = ssub.s32 %s15, %s27
    %s29 = ssub.s32 %s16, %s23
    %s30 = sor.u32 %s28, %s29
    %p31 = scmp.eq.s32.totalorder %s30, 0
    %s33 = sadd.s32 %s32, 1
    %s34 = scalar_select %p31, %s32, %s33
    %p37 = pneg %p31
    %p38 = scmp.eq.s32.totalorder %s8, 1
    %p39 = por %p37, %p38
    %p40 = scmp.ne.s32.totalorder %s32, %s35
    %p41 = scmp.eq.s32.totalorder %s8, 0
    %p42 = por %p40, %p41
    %p43 = scmp.ne.s32.totalorder %s32, %s35
    %p44 = scmp.eq.s32.totalorder %s13, 1
    %p45 = por %p43, %p44
    %p46 = scmp.ne.s32.totalorder %s35, %s36
    %p47 = scmp.eq.s32.totalorder %s13, 0
    %p48 = por %p46, %p47
    %p49 = scmp.ne.s32.totalorder %s35, %s36
    %p50 = scmp.eq.s32.totalorder %s14, 1
    %p51 = por %p49, %p50
    %p53 = scmp.ne.s32.totalorder %s36, %s52
    %p54 = scmp.eq.s32.totalorder %s14, 0
    %p55 = por %p53, %p54
    %s56 = ssub.s32 %s15, %s27
    %s57 = ssub.s32 %s16, %s23
    %s58 = sor.u32 %s56, %s57
    %p59 = scmp.eq.s32.totalorder %s58, 0
    %s61 = sadd.s32 %s60, 1
    %s62 = scalar_select %p59, %s60, %s61
    %p65 = pneg %p59
    %p66 = scmp.eq.s32.totalorder %s8, 1
    %p67 = por %p65, %p66
    %p68 = scmp.ne.s32.totalorder %s60, %s63
    %p69 = scmp.eq.s32.totalorder %s8, 0
    %p70 = por %p68, %p69
    %p71 = scmp.ne.s32.totalorder %s60, %s63
    %p72 = scmp.eq.s32.totalorder %s13, 1
    %p73 = por %p71, %p72
    %p74 = scmp.ne.s32.totalorder %s63, %s64
    %p75 = scmp.eq.s32.totalorder %s13, 0
    %p76 = por %p74, %p75
    %p77 = scmp.ne.s32.totalorder %s63, %s64
    %p78 = scmp.eq.s32.totalorder %s14, 1
    %p79 = por %p77, %p78
    %p81 = scmp.ne.s32.totalorder %s64, %s80
    %p82 = scmp.eq.s32.totalorder %s14, 0
    %p83 = por %p81, %p82
    %s84 = ssub.s32 %s15, %s27
    %s85 = ssub.s32 %s16, %s23
    %s86 = sor.u32 %s84, %s85
    %p87 = scmp.eq.s32.totalorder %s86, 0
    %s89 = sadd.s32 %s88, 1
    %s90 = scalar_select %p87, %s88, %s89
    %p93 = pneg %p87
    %p94 = scmp.eq.s32.totalorder %s8, 1
    %p95 = por %p93, %p94
    %p96 = scmp.ne.s32.totalorder %s88, %s91
    %p97 = scmp.eq.s32.totalorder %s8, 0
    %p98 = por %p96, %p97
    %p99 = scmp.ne.s32.totalorder %s88, %s91
    %p100 = scmp.eq.s32.totalorder %s13, 1
    %p101 = por %p99, %p100
    %p102 = scmp.ne.s32.totalorder %s91, %s92
    %p103 = scmp.eq.s32.totalorder %s13, 0
    %p104 = por %p102, %p103
    %p105 = scmp.ne.s32.totalorder %s91, %s92
    %p106 = scmp.eq.s32.totalorder %s14, 1
    %p107 = por %p105, %p106
    %p109 = scmp.ne.s32.totalorder %s92, %s108
    %p110 = scmp.eq.s32.totalorder %s14, 0
    %p111 = por %p109, %p110
    %p112 = scmp.le.s32.totalorder 1, %s8
    %p113 = scmp.lt.s32.totalorder %s8, 3
    %p114 = pnand %p112, %p113
    %p115 = pneg %p114
    // Predicated region
    $region9: #{densenet_forward.18} parent=5 // pred_check
      _
    $region10: #{densenet_forward.18} parent=5 // pred_check_branch
      %117 = sbr.rel (%p114) target = $region12
    $region11: #{densenet_forward.18} parent=5 // pred_region
      %s118 = ssub.s32 %s8, 1
    $region12: #{densenet_forward.18} parent=5 // pred_fallthru
      _
    %p119 = scmp.lt.s32.totalorder %s8, 2
    // Predicated region
    $region13: #{densenet_forward.18} parent=5 // pred_check
      %p120 = pneg %p119
    $region14: #{densenet_forward.18} parent=5 // pred_check_branch
      %122 = sbr.rel (%p120) target = $region16
    $region15: #{densenet_forward.18} parent=5 // pred_region
      // Predicated region
      $region17: #{densenet_forward.18} parent=15 // pred_check
        %p123 = pneg %p42
      $region18: #{densenet_forward.18} parent=15 // pred_check_branch
        %125 = sbr.rel (%p123) target = $region20
      $region19: #{densenet_forward.18} parent=15 // pred_region
        %p126 = scmp.lt.s32.totalorder %s15, 1
        %s127 = scalar_select %p126, %s15, 1
        %p128 = scmp.lt.s32.totalorder %s16, 0
        %s129 = scalar_select %p128, %s16, 0
        %s130 = smul.addr %s127, 4
        %s131 = sadd.s32 %s129, %s130
        %s132 = smul.addr %s131, 4
        %s133 = scalar_lea.vmem %s0, %s132
      $region20: #{densenet_forward.18} parent=15 // pred_fallthru
        _
      // Predicated region
      $region21: #{densenet_forward.18} parent=15 // pred_check
        %p134 = pneg %p70
      $region22: #{densenet_forward.18} parent=15 // pred_check_branch
        %136 = sbr.rel (%p134) target = $region24
      $region23: #{densenet_forward.18} parent=15 // pred_region
        %p137 = scmp.lt.s32.totalorder %s15, 1
        %s138 = scalar_select %p137, %s15, 1
        %p139 = scmp.lt.s32.totalorder %s16, 0
        %s140 = scalar_select %p139, %s16, 0
        %s141 = smul.addr %s138, 4
        %s142 = sadd.s32 %s140, %s141
        %s143 = smul.addr %s142, 4
        %s144 = scalar_lea.vmem %s1, %s143
      $region24: #{densenet_forward.18} parent=15 // pred_fallthru
        _
    $region16: #{densenet_forward.18} parent=5 // pred_fallthru
      _
    %p145 = scmp.le.s32.totalorder 1, %s8
    %p146 = scmp.lt.s32.totalorder %s8, 3
    %p147 = pnand %p145, %p146
    %p148 = pneg %p147
    // Predicated region
    $region25: #{densenet_forward.18} parent=5 // pred_check
      _
    $region26: #{densenet_forward.18} parent=5 // pred_check_branch
      %150 = sbr.rel (%p147) target = $region28
    $region27: #{densenet_forward.18} parent=5 // pred_region
      %s151 = ssub.s32 %s8, 1
      %p152 = scmp.lt.s32.totalorder %s17, 1
      %s153 = scalar_select %p152, %s17, 1
      %p154 = scmp.lt.s32.totalorder %s18, 0
      %s155 = scalar_select %p154, %s18, 0
      %s156 = smul.addr %s153, 4
      %s157 = sadd.s32 %s155, %s156
      %s158 = smul.addr %s157, 4
      %s159 = scalar_lea.vmem %s0, %s158
      %p160 = pneg %p48
      %p161 = pneg %p45
      %p162 = scmp.lt.s32.totalorder %s17, 1
      %s163 = scalar_select %p162, %s17, 1
      %p164 = scmp.lt.s32.totalorder %s18, 0
      %s165 = scalar_select %p164, %s18, 0
      %s166 = smul.addr %s163, 4
      %s167 = sadd.s32 %s165, %s166
      %s168 = smul.addr %s167, 4
      %s169 = scalar_lea.vmem %s1, %s168
      %p170 = pneg %p76
      %p171 = pneg %p73
      %p172 = pneg %p104
      %p173 = pneg %p101
      %p174 = scmp.lt.s32.totalorder %s17, 1
      %s175 = scalar_select %p174, %s17, 1
      %p176 = scmp.lt.s32.totalorder %s18, 0
      %s177 = scalar_select %p176, %s18, 0
      %s178 = smul.addr %s175, 8
      %s179 = sadd.s32 %s177, %s178
      %s180 = smul.addr %s179, 4
      %s181 = scalar_lea.vmem %s2, %s180
      %p182 = scmp.lt.s32.totalorder %s17, 1
      %s183 = scalar_select %p182, %s17, 1
      %p184 = scmp.lt.s32.totalorder %s18, 0
      %s185 = scalar_select %p184, %s18, 0
      %s186 = smul.addr %s183, 4
      %s187 = sadd.s32 %s185, %s186
      %s188 = smul.addr %s187, 4
      %s189 = scalar_lea.vmem %s0, %s188
      %p190 = scmp.lt.s32.totalorder %s17, 1
      %s191 = scalar_select %p190, %s17, 1
      %p192 = scmp.lt.s32.totalorder %s18, 0
      %s193 = scalar_select %p192, %s18, 0
      %s194 = smul.addr %s191, 4
      %s195 = sadd.s32 %s193, %s194
      %s196 = smul.addr %s195, 4
      %s197 = scalar_lea.vmem %s1, %s196
      %p198 = scmp.lt.s32.totalorder %s17, 1
      %s199 = scalar_select %p198, %s17, 1
      %p200 = scmp.lt.s32.totalorder %s18, 0
      %s201 = scalar_select %p200, %s18, 0
      %s202 = smul.addr %s199, 8
      %s203 = sadd.s32 %s201, %s202
      %s204 = smul.addr %s203, 4
      %s205 = scalar_lea.vmem %s2, %s204
      %v206 = vld [vmem:[%s189] sm:$0xf]
      %v207 = vld [vmem:[%s189 + $0x4] sm:$0xf]
      %v208 = vld [vmem:[%s189 + $0x8] sm:$0xf]
      %v209 = vld [vmem:[%s189 + $0xc] sm:$0xf]
      %v210 = vunpack.c.l.bf16 %v206
      %v211 = vunpack.c.l.bf16 %v207
      %v212 = vunpack.c.l.bf16 %v208
      %v213 = vunpack.c.l.bf16 %v209
      %v214 = vld [vmem:[%s197] sm:$0xf]
      %v215 = vld [vmem:[%s197 + $0x4] sm:$0xf]
      %v216 = vld [vmem:[%s197 + $0x8] sm:$0xf]
      %v217 = vld [vmem:[%s197 + $0xc] sm:$0xf]
      %v218 = vunpack.c.l.bf16 %v214
      %v219 = vunpack.c.l.bf16 %v215
      %v220 = vunpack.c.l.bf16 %v216
      %v221 = vunpack.c.l.bf16 %v217
      %v222 = vadd.f32 %v210, %v218
      %v223 = vadd.f32 %v211, %v219
      %v224 = vadd.f32 %v212, %v220
      %v225 = vadd.f32 %v213, %v221
      %v226 = vmul.f32 %v222, 0.5
      %v227 = vmul.f32 %v223, 0.5
      %v228 = vmul.f32 %v224, 0.5
      %v229 = vmul.f32 %v225, 0.5
      %v230 = vpack.c.bf16 %v227, %v226
      %v231 = vpack.c.bf16 %v229, %v228
      %v234 = vunpack.c.l.b16 %v230
      %v235 = vunpack.c.h.b16 %v230
      %v236 = vunpack.c.l.b16 %v231
      %v237 = vunpack.c.h.b16 %v231
      %v238 = vpack.c.b16 %v234, %v234
      %v239 = vpack.c.b16 %v235, %v235
      %v240 = vpack.c.b16 %v236, %v236
      %v241 = vpack.c.b16 %v237, %v237
      %vm246 = vcmask 257024
      %247 = vst.msk [vmem:[%s205] sm:$0xf] %vm246, %v238
      %248 = vst.msk [vmem:[%s205 + $0x4] sm:$0xf] %vm246, %v239
      %249 = vst.msk [vmem:[%s205 + $0x8] sm:$0xf] %vm246, %v240
      %250 = vst.msk [vmem:[%s205 + $0xc] sm:$0xf] %vm246, %v241
      %p251 = scmp.lt.s32.totalorder %s17, 1
      %s252 = scalar_select %p251, %s17, 1
      %p253 = scmp.lt.s32.totalorder %s18, 0
      %s254 = scalar_select %p253, %s18, 0
      %s255 = smul.addr %s252, 8
      %s256 = sadd.s32 %s254, %s255
      %s257 = smul.addr %s256, 4
      %s258 = scalar_lea.vmem %s2, %s257
      // Predicated region
      $region29: #{densenet_forward.18} parent=27 // pred_check
        %p259 = pneg %p101
      $region30: #{densenet_forward.18} parent=27 // pred_check_branch
        %261 = sbr.rel (%p259) target = $region32
      $region31: #{densenet_forward.18} parent=27 // pred_region
        _
      $region32: #{densenet_forward.18} parent=27 // pred_fallthru
        _
    $region28: #{densenet_forward.18} parent=5 // pred_fallthru
      _
    %p262 = scmp.le.s32.totalorder 2, %s8
    // Predicated region
    $region33: #{densenet_forward.18} parent=5 // pred_check
      %p263 = pneg %p262
    $region34: #{densenet_forward.18} parent=5 // pred_check_branch
      %265 = sbr.rel (%p263) target = $region36
    $region35: #{densenet_forward.18} parent=5 // pred_region
      %s266 = ssub.s32 %s8, 2
      // Predicated region
      $region37: #{densenet_forward.18} parent=35 // pred_check
        %p267 = pneg %p107
      $region38: #{densenet_forward.18} parent=35 // pred_check_branch
        %269 = sbr.rel (%p267) target = $region40
      $region39: #{densenet_forward.18} parent=35 // pred_region
        %p270 = scmp.lt.s32.totalorder %s19, 1
        %s271 = scalar_select %p270, %s19, 1
        %p272 = scmp.lt.s32.totalorder %s20, 0
        %s273 = scalar_select %p272, %s20, 0
        %s274 = smul.addr %s271, 8
        %s275 = sadd.s32 %s273, %s274
        %s276 = smul.addr %s275, 4
        %s277 = scalar_lea.vmem %s2, %s276
      $region40: #{densenet_forward.18} parent=35 // pred_fallthru
        _
    $region36: #{densenet_forward.18} parent=5 // pred_fallthru
      _
  $region6: #{densenet_forward.18} parent=0 // loop_footer
    %s12 = sadd.s32 1, %s8
  $region7: #{densenet_forward.18} parent=0 // loop_footer_branch
    %7 = sbr.rel target = $region3
  $region8: #{densenet_forward.18} parent=0 // loop_exit
    _

// kernel: densenet_forward.19
$region0: #{densenet_forward.19}
  #allocation0 [shape = 'u32[]', space=smem, size = 0x4, offset = 0x4, fixed_abs, tag = 'smem constant byte address 0x4 - core index']
  #allocation1 [shape = 'u32[144,128]{1,0:T(1,128)}', space=vmem, size = 0x12000, scoped, tag = 'internal scratch']
  %s0 = inlined_call_operand.vmem [shape: bf16[2,64,32], index: 0, kind: input, shape index: {}]
  %s1 = inlined_call_operand.vmem [shape: f32[32,1], index: 1, kind: input, shape index: {}]
  %s2 = inlined_call_operand.vmem [shape: f32[32,1], index: 2, kind: input, shape index: {}]
  %s3 = inlined_call_operand.vmem [shape: bf16[1,32,32], index: 3, kind: input, shape index: {}]
  %s4 = inlined_call_operand.vmem [shape: bf16[2,32,32], index: 4, kind: output, shape index: {}]
  %s5 = sld [smem:[#allocation0]]
  $region49: #{densenet_forward.19} parent=0
    _
  %s7 = ssub.s32 1, %s5
  %s8 = scalar_select 0, %s7, %s5
  loop: start=0, step=1, limit=4
  $region2: #{densenet_forward.19} parent=0 // loop_pre_header
    _
  $region3: #{densenet_forward.19} parent=0 // loop_header
    %s10 = sphi 0, %s14
    %p11 = scmp.ge.s32.totalorder %s10, 4
    %s17 = sphi 0, %s29
    %s18 = sphi 0, %s25
    %s19 = sphi 0, %s17
    %s20 = sphi 0, %s18
    %s21 = sphi 0, %s19
    %s22 = sphi 0, %s20
    %s34 = sphi 0, %s36
    %s37 = sphi 0, %s34
    %s38 = sphi 0, %s37
    %s54 = sphi 0, %s38
    %s58 = sphi 0, %s58
    %s60 = sphi 0, %s58
    %s61 = sphi 0, %s60
    %s75 = sphi 0, %s61
    %s79 = sphi 0, %s79
    %s81 = sphi 0, %s79
    %s82 = sphi 0, %s81
    %s96 = sphi 0, %s82
    %s100 = sphi 0, %s100
    %s102 = sphi 0, %s100
    %s103 = sphi 0, %s102
    %s117 = sphi 0, %s103
    %s125 = sphi 0, %s127
    %s128 = sphi 0, %s125
    %s129 = sphi 0, %s128
    %s145 = sphi 0, %s129
  $region4: #{densenet_forward.19} parent=0 // loop_header_branch
    %13 = sbr.rel (%p11) target = $region8
  $region5: #{densenet_forward.19} parent=0 // loop_body
    %s15 = ssub.s32 %s10, 1
    %s16 = ssub.s32 %s10, 2
    %s23 = sadd.s32 1, %s18
    %p24 = scmp.ge.s32.totalorder %s23, 1
    %s25 = scalar_select %p24, 0, %s23
    %s26 = sadd.s32 1, %s17
    %s27 = scalar_select %p24, %s26, %s17
    %p28 = scmp.ge.s32.totalorder %s27, 2
    %s29 = scalar_select %p28, 0, %s27
    %s30 = ssub.s32 %s17, %s29
    %s31 = ssub.s32 %s18, %s25
    %s32 = sor.u32 %s30, %s31
    %p33 = scmp.eq.s32.totalorder %s32, 0
    %s35 = sadd.s32 %s34, 1
    %s36 = scalar_select %p33, %s34, %s35
    %p39 = pneg %p33
    %p40 = scmp.eq.s32.totalorder %s10, 1
    %p41 = por %p39, %p40
    %p42 = scmp.ne.s32.totalorder %s34, %s37
    %p43 = scmp.eq.s32.totalorder %s10, 0
    %p44 = por %p42, %p43
    %p45 = scmp.ne.s32.totalorder %s34, %s37
    %p46 = scmp.eq.s32.totalorder %s15, 1
    %p47 = por %p45, %p46
    %p48 = scmp.ne.s32.totalorder %s37, %s38
    %p49 = scmp.eq.s32.totalorder %s15, 0
    %p50 = por %p48, %p49
    %p51 = scmp.ne.s32.totalorder %s37, %s38
    %p52 = scmp.eq.s32.totalorder %s16, 1
    %p53 = por %p51, %p52
    %p55 = scmp.ne.s32.totalorder %s38, %s54
    %p56 = scmp.eq.s32.totalorder %s16, 0
    %p57 = por %p55, %p56
    %s59 = sadd.s32 %s58, 1
    %p62 = scmp.eq.s32.totalorder %s10, 1
    %p63 = scmp.ne.s32.totalorder %s58, %s60
    %p64 = scmp.eq.s32.totalorder %s10, 0
    %p65 = por %p63, %p64
    %p66 = scmp.ne.s32.totalorder %s58, %s60
    %p67 = scmp.eq.s32.totalorder %s15, 1
    %p68 = por %p66, %p67
    %p69 = scmp.ne.s32.totalorder %s60, %s61
    %p70 = scmp.eq.s32.totalorder %s15, 0
    %p71 = por %p69, %p70
    %p72 = scmp.ne.s32.totalorder %s60, %s61
    %p73 = scmp.eq.s32.totalorder %s16, 1
    %p74 = por %p72, %p73
    %p76 = scmp.ne.s32.totalorder %s61, %s75
    %p77 = scmp.eq.s32.totalorder %s16, 0
    %p78 = por %p76, %p77
    %s80 = sadd.s32 %s79, 1
    %p83 = scmp.eq.s32.totalorder %s10, 1
    %p84 = scmp.ne.s32.totalorder %s79, %s81
    %p85 = scmp.eq.s32.totalorder %s10, 0
    %p86 = por %p84, %p85
    %p87 = scmp.ne.s32.totalorder %s79, %s81
    %p88 = scmp.eq.s32.totalorder %s15, 1
    %p89 = por %p87, %p88
    %p90 = scmp.ne.s32.totalorder %s81, %s82
    %p91 = scmp.eq.s32.totalorder %s15, 0
    %p92 = por %p90, %p91
    %p93 = scmp.ne.s32.totalorder %s81, %s82
    %p94 = scmp.eq.s32.totalorder %s16, 1
    %p95 = por %p93, %p94
    %p97 = scmp.ne.s32.totalorder %s82, %s96
    %p98 = scmp.eq.s32.totalorder %s16, 0
    %p99 = por %p97, %p98
    %s101 = sadd.s32 %s100, 1
    %p104 = scmp.eq.s32.totalorder %s10, 1
    %p105 = scmp.ne.s32.totalorder %s100, %s102
    %p106 = scmp.eq.s32.totalorder %s10, 0
    %p107 = por %p105, %p106
    %p108 = scmp.ne.s32.totalorder %s100, %s102
    %p109 = scmp.eq.s32.totalorder %s15, 1
    %p110 = por %p108, %p109
    %p111 = scmp.ne.s32.totalorder %s102, %s103
    %p112 = scmp.eq.s32.totalorder %s15, 0
    %p113 = por %p111, %p112
    %p114 = scmp.ne.s32.totalorder %s102, %s103
    %p115 = scmp.eq.s32.totalorder %s16, 1
    %p116 = por %p114, %p115
    %p118 = scmp.ne.s32.totalorder %s103, %s117
    %p119 = scmp.eq.s32.totalorder %s16, 0
    %p120 = por %p118, %p119
    %s121 = ssub.s32 %s17, %s29
    %s122 = ssub.s32 %s18, %s25
    %s123 = sor.u32 %s121, %s122
    %p124 = scmp.eq.s32.totalorder %s123, 0
    %s126 = sadd.s32 %s125, 1
    %s127 = scalar_select %p124, %s125, %s126
    %p130 = pneg %p124
    %p131 = scmp.eq.s32.totalorder %s10, 1
    %p132 = por %p130, %p131
    %p133 = scmp.ne.s32.totalorder %s125, %s128
    %p134 = scmp.eq.s32.totalorder %s10, 0
    %p135 = por %p133, %p134
    %p136 = scmp.ne.s32.totalorder %s125, %s128
    %p137 = scmp.eq.s32.totalorder %s15, 1
    %p138 = por %p136, %p137
    %p139 = scmp.ne.s32.totalorder %s128, %s129
    %p140 = scmp.eq.s32.totalorder %s15, 0
    %p141 = por %p139, %p140
    %p142 = scmp.ne.s32.totalorder %s128, %s129
    %p143 = scmp.eq.s32.totalorder %s16, 1
    %p144 = por %p142, %p143
    %p146 = scmp.ne.s32.totalorder %s129, %s145
    %p147 = scmp.eq.s32.totalorder %s16, 0
    %p148 = por %p146, %p147
    %p149 = scmp.le.s32.totalorder 1, %s10
    %p150 = scmp.lt.s32.totalorder %s10, 3
    %p151 = pnand %p149, %p150
    %p152 = pneg %p151
    // Predicated region
    $region9: #{densenet_forward.19} parent=5 // pred_check
      _
    $region10: #{densenet_forward.19} parent=5 // pred_check_branch
      %154 = sbr.rel (%p151) target = $region12
    $region11: #{densenet_forward.19} parent=5 // pred_region
      %s155 = ssub.s32 %s10, 1
      // Predicated region
      $region13: #{densenet_forward.19} parent=11 // pred_check
        %p156 = pneg %p71
      $region14: #{densenet_forward.19} parent=11 // pred_check_branch
        %158 = sbr.rel (%p156) target = $region16
      $region15: #{densenet_forward.19} parent=11 // pred_region
        _
      $region16: #{densenet_forward.19} parent=11 // pred_fallthru
        _
      // Predicated region
      $region17: #{densenet_forward.19} parent=11 // pred_check
        %p159 = pneg %p92
      $region18: #{densenet_forward.19} parent=11 // pred_check_branch
        %161 = sbr.rel (%p159) target = $region20
      $region19: #{densenet_forward.19} parent=11 // pred_region
        _
      $region20: #{densenet_forward.19} parent=11 // pred_fallthru
        _
      // Predicated region
      $region21: #{densenet_forward.19} parent=11 // pred_check
        %p162 = pneg %p113
      $region22: #{densenet_forward.19} parent=11 // pred_check_branch
        %164 = sbr.rel (%p162) target = $region24
      $region23: #{densenet_forward.19} parent=11 // pred_region
        _
      $region24: #{densenet_forward.19} parent=11 // pred_fallthru
        _
    $region12: #{densenet_forward.19} parent=5 // pred_fallthru
      _
    %p165 = scmp.lt.s32.totalorder %s10, 2
    // Predicated region
    $region25: #{densenet_forward.19} parent=5 // pred_check
      %p166 = pneg %p165
    $region26: #{densenet_forward.19} parent=5 // pred_check_branch
      %168 = sbr.rel (%p166) target = $region28
    $region27: #{densenet_forward.19} parent=5 // pred_region
      // Predicated region
      $region29: #{densenet_forward.19} parent=27 // pred_check
        %p169 = pneg %p44
      $region30: #{densenet_forward.19} parent=27 // pred_check_branch
        %171 = sbr.rel (%p169) target = $region32
      $region31: #{densenet_forward.19} parent=27 // pred_region
        %p172 = scmp.lt.s32.totalorder %s17, 1
        %s173 = scalar_select %p172, %s17, 1
        %p174 = scmp.lt.s32.totalorder %s18, 0
        %s175 = scalar_select %p174, %s18, 0
        %s176 = smul.addr %s173, 8
        %s177 = sadd.s32 %s175, %s176
        %s178 = smul.addr %s177, 4
        %s179 = scalar_lea.vmem %s0, %s178
      $region32: #{densenet_forward.19} parent=27 // pred_fallthru
        _
    $region28: #{densenet_forward.19} parent=5 // pred_fallthru
      _
    %p180 = scmp.le.s32.totalorder 1, %s10
    %p181 = scmp.lt.s32.totalorder %s10, 3
    %p182 = pnand %p180, %p181
    %p183 = pneg %p182
    // Predicated region
    $region33: #{densenet_forward.19} parent=5 // pred_check
      _
    $region34: #{densenet_forward.19} parent=5 // pred_check_branch
      %185 = sbr.rel (%p182) target = $region36
    $region35: #{densenet_forward.19} parent=5 // pred_region
      %s186 = ssub.s32 %s10, 1
      %p187 = scmp.lt.s32.totalorder %s19, 1
      %s188 = scalar_select %p187, %s19, 1
      %p189 = scmp.lt.s32.totalorder %s20, 0
      %s190 = scalar_select %p189, %s20, 0
      %s191 = smul.addr %s188, 8
      %s192 = sadd.s32 %s190, %s191
      %s193 = smul.addr %s192, 4
      %s194 = scalar_lea.vmem %s0, %s193
      %p195 = pneg %p50
      %p196 = pneg %p47
      %p197 = pneg %p71
      %p198 = pneg %p68
      %p199 = pneg %p92
      %p200 = pneg %p89
      %p201 = pneg %p113
      %p202 = pneg %p110
      %p203 = pneg %p141
      %p204 = pneg %p138
      %p205 = scmp.lt.s32.totalorder %s19, 1
      %s206 = scalar_select %p205, %s19, 1
      %p207 = scmp.lt.s32.totalorder %s20, 0
      %s208 = scalar_select %p207, %s20, 0
      %s209 = smul.addr %s206, 4
      %s210 = sadd.s32 %s208, %s209
      %s211 = smul.addr %s210, 4
      %s212 = scalar_lea.vmem %s4, %s211
      %p213 = scmp.lt.s32.totalorder %s19, 1
      %s214 = scalar_select %p213, %s19, 1
      %p215 = scmp.lt.s32.totalorder %s20, 0
      %s216 = scalar_select %p215, %s20, 0
      %s217 = smul.addr %s214, 8
      %s218 = sadd.s32 %s216, %s217
      %s219 = smul.addr %s218, 4
      %s220 = scalar_lea.vmem %s0, %s219
      %p221 = scmp.lt.s32.totalorder %s19, 1
      %s222 = scalar_select %p221, %s19, 1
      %p223 = scmp.lt.s32.totalorder %s20, 0
      %s224 = scalar_select %p223, %s20, 0
      %s225 = smul.addr %s222, 4
      %s226 = sadd.s32 %s224, %s225
      %s227 = smul.addr %s226, 4
      %s228 = scalar_lea.vmem %s4, %s227
      %v230 = vld [vmem:[%s220] sm:$0xf]
      %v231 = vld [vmem:[%s220 + $0x4] sm:$0xf]
      %v232 = vld [vmem:[%s220 + $0x8] sm:$0xf]
      %v233 = vld [vmem:[%s220 + $0xc] sm:$0xf]
      %v234 = vunpack.c.l.bf16 %v230
      %v235 = vunpack.c.l.bf16 %v231
      %v236 = vunpack.c.l.bf16 %v232
      %v237 = vunpack.c.l.bf16 %v233
      %v238 = vld [vmem:[%s1] sm:$0xff]
      %v239 = vld [vmem:[%s1 + $0x8] sm:$0xff]
      %v240 = vld [vmem:[%s1 + $0x10] sm:$0xff]
      %v241 = vld [vmem:[%s1 + $0x18] sm:$0xff]
      %243 = vset.pattern.permute.xlu0 0
      %244 = vperm.xlu0 %243, %v238
      %v245 = vpop.permute.xlu0 %244
      %248 = vset.pattern.permute.xlu0 0
      %249 = vperm.xlu0 %248, %v239
      %v250 = vpop.permute.xlu0 %249
      %253 = vset.pattern.permute.xlu0 0
      %254 = vperm.xlu0 %253, %v240
      %v255 = vpop.permute.xlu0 %254
      %258 = vset.pattern.permute.xlu0 0
      %259 = vperm.xlu0 %258, %v241
      %v260 = vpop.permute.xlu0 %259
      %v262 = vmul.f32 %v234, %v245
      %v263 = vmul.f32 %v235, %v250
      %v264 = vmul.f32 %v236, %v255
      %v265 = vmul.f32 %v237, %v260
      %v266 = vld [vmem:[%s2] sm:$0xff]
      %v267 = vld [vmem:[%s2 + $0x8] sm:$0xff]
      %v268 = vld [vmem:[%s2 + $0x10] sm:$0xff]
      %v269 = vld [vmem:[%s2 + $0x18] sm:$0xff]
      %271 = vset.pattern.permute.xlu0 0
      %272 = vperm.xlu0 %271, %v266
      %v273 = vpop.permute.xlu0 %272
      %276 = vset.pattern.permute.xlu0 0
      %277 = vperm.xlu0 %276, %v267
      %v278 = vpop.permute.xlu0 %277
      %281 = vset.pattern.permute.xlu0 0
      %282 = vperm.xlu0 %281, %v268
      %v283 = vpop.permute.xlu0 %282
      %286 = vset.pattern.permute.xlu0 0
      %287 = vperm.xlu0 %286, %v269
      %v288 = vpop.permute.xlu0 %287
      %v290 = vadd.f32 %v262, %v273
      %v291 = vadd.f32 %v263, %v278
      %v292 = vadd.f32 %v264, %v283
      %v293 = vadd.f32 %v265, %v288
      %v294 = vmax.f32 %v290, 0.0
      %v295 = vmax.f32 %v291, 0.0
      %v296 = vmax.f32 %v292, 0.0
      %v297 = vmax.f32 %v293, 0.0
      %v298 = vpack.c.bf16 %v295, %v294
      %v299 = vpack.c.bf16 %v297, %v296
      %v300 = vld [vmem:[%s3] sm:$0xf]
      %v301 = vld [vmem:[%s3 + $0x4] sm:$0xf]
      %v302 = vld [vmem:[%s3 + $0x8] sm:$0xf]
      %v303 = vld [vmem:[%s3 + $0xc] sm:$0xf]
      %v308 = vunpack.c.l.b16 %v300
      %v309 = vunpack.c.l.b16 %v301
      %v310 = vunpack.c.l.b16 %v302
      %v311 = vunpack.c.l.b16 %v303
      %v312 = vpack.c.b16 %v309, %v308
      %v313 = vpack.c.b16 %v311, %v310
      %vm314 = vcmask 261120
      %v316 = vsel %vm314, %v312, 0
      %v319 = vsel %vm314, %v313, 0
      %321 = vmatprep.subr.bf16.mxu0 0
      %322 = vmatpush1.bf16.msra.mxu0 %v298
      %323 = vmatprep.subr.bf16.mxu0 0
      %324 = vmatpush1.bf16.msra.mxu0 %v299
      %325 = vmatprep.subr.bf16.mxu0 0
      %326 = vmatpush1.bf16.msra.mxu0 0
      %327 = vmatprep.subr.bf16.mxu0 0
      %328 = vmatpush1.bf16.msra.mxu0 0
      %329 = vmatprep.subr.bf16.mxu0 0
      %330 = vmatpush1.bf16.msra.mxu0 0
      %331 = vmatprep.subr.bf16.mxu0 0
      %332 = vmatpush1.bf16.msra.mxu0 0
      %333 = vmatprep.subr.bf16.mxu0 0
      %334 = vmatpush1.bf16.msra.mxu0 0
      %335 = vmatprep.subr.bf16.mxu0 0
      %336 = vmatpush1.bf16.msra.mxu0 0
      %337 = vmatprep.subr.bf16.mxu0 0
      %338 = vmatpush1.bf16.msra.mxu0 0
      %339 = vmatprep.subr.bf16.mxu0 0
      %340 = vmatpush1.bf16.msra.mxu0 0
      %341 = vmatprep.subr.bf16.mxu0 0
      %342 = vmatpush1.bf16.msra.mxu0 0
      %343 = vmatprep.subr.bf16.mxu0 0
      %344 = vmatpush1.bf16.msra.mxu0 0
      %345 = vmatprep.subr.bf16.mxu0 0
      %346 = vmatpush1.bf16.msra.mxu0 0
      %347 = vmatprep.subr.bf16.mxu0 0
      %348 = vmatpush1.bf16.msra.mxu0 0
      %349 = vmatprep.subr.bf16.mxu0 0
      %350 = vmatpush1.bf16.msra.mxu0 0
      %351 = vmatprep.subr.bf16.mxu0 0
      %352 = vmatpush1.bf16.msra.mxu0 0
      %353 = vmatprep.mubr.bf16.mxu0 0
      %354 = vmatmul.mubr.bf16.gmra.mrb[0].mxu0 %v316
      %v355 = vpop.f32.mrb[0].mxu0
      %v356 = vadd.f32 0.0, %v355
      %v357 = vpop.f32.mrb[0].mxu0
      %v358 = vpop.f32.mrb[0].mxu0
      %v359 = vadd.f32 0.0, %v358
      %v360 = vpop.f32.mrb[0].mxu0
      %361 = vmatprep.mubr.bf16.mxu0 0
      %362 = vmatmul.mubr.bf16.gmra.mrb[0].mxu0 %v319
      %v363 = vpop.f32.mrb[0].mxu0
      %v364 = vadd.f32 0.0, %v363
      %v365 = vpop.f32.mrb[0].mxu0
      %v366 = vpop.f32.mrb[0].mxu0
      %v367 = vadd.f32 0.0, %v366
      %v368 = vpop.f32.mrb[0].mxu0
      %369 = vdwg.mxu0
      %v370 = vpack.c.bf16 %v359, %v356
      %v371 = vpack.c.bf16 %v367, %v364
      %v374 = vunpack.c.l.b16 %v370
      %v375 = vunpack.c.h.b16 %v370
      %v376 = vunpack.c.l.b16 %v371
      %v377 = vunpack.c.h.b16 %v371
      %v378 = vpack.c.b16 %v374, %v374
      %v379 = vpack.c.b16 %v375, %v375
      %v380 = vpack.c.b16 %v376, %v376
      %v381 = vpack.c.b16 %v377, %v377
      %vm386 = vcmask 257024
      %387 = vst.msk [vmem:[%s228] sm:$0xf] %vm386, %v378
      %388 = vst.msk [vmem:[%s228 + $0x4] sm:$0xf] %vm386, %v379
      %389 = vst.msk [vmem:[%s228 + $0x8] sm:$0xf] %vm386, %v380
      %390 = vst.msk [vmem:[%s228 + $0xc] sm:$0xf] %vm386, %v381
      %p391 = scmp.lt.s32.totalorder %s19, 1
      %s392 = scalar_select %p391, %s19, 1
      %p393 = scmp.lt.s32.totalorder %s20, 0
      %s394 = scalar_select %p393, %s20, 0
      %s395 = smul.addr %s392, 4
      %s396 = sadd.s32 %s394, %s395
      %s397 = smul.addr %s396, 4
      %s398 = scalar_lea.vmem %s4, %s397
      // Predicated region
      $region37: #{densenet_forward.19} parent=35 // pred_check
        %p399 = pneg %p138
      $region38: #{densenet_forward.19} parent=35 // pred_check_branch
        %401 = sbr.rel (%p399) target = $region40
      $region39: #{densenet_forward.19} parent=35 // pred_region
        _
      $region40: #{densenet_forward.19} parent=35 // pred_fallthru
        _
    $region36: #{densenet_forward.19} parent=5 // pred_fallthru
      _
    %p402 = scmp.le.s32.totalorder 2, %s10
    // Predicated region
    $region41: #{densenet_forward.19} parent=5 // pred_check
      %p403 = pneg %p402
    $region42: #{densenet_forward.19} parent=5 // pred_check_branch
      %405 = sbr.rel (%p403) target = $region44
    $region43: #{densenet_forward.19} parent=5 // pred_region
      %s406 = ssub.s32 %s10, 2
      // Predicated region
      $region45: #{densenet_forward.19} parent=43 // pred_check
        %p407 = pneg %p144
      $region46: #{densenet_forward.19} parent=43 // pred_check_branch
        %409 = sbr.rel (%p407) target = $region48
      $region47: #{densenet_forward.19} parent=43 // pred_region
        %p410 = scmp.lt.s32.totalorder %s21, 1
        %s411 = scalar_select %p410, %s21, 1
        %p412 = scmp.lt.s32.totalorder %s22, 0
        %s413 = scalar_select %p412, %s22, 0
        %s414 = smul.addr %s411, 4
        %s415 = sadd.s32 %s413, %s414
        %s416 = smul.addr %s415, 4
        %s417 = scalar_lea.vmem %s4, %s416
      $region48: #{densenet_forward.19} parent=43 // pred_fallthru
        _
    $region44: #{densenet_forward.19} parent=5 // pred_fallthru
      _
  $region6: #{densenet_forward.19} parent=0 // loop_footer
    %s14 = sadd.s32 1, %s10
  $region7: #{densenet_forward.19} parent=0 // loop_footer_branch
    %9 = sbr.rel target = $region3
  $region8: #{densenet_forward.19} parent=0 // loop_exit
    _

// kernel: densenet_forward.20
$region0: #{densenet_forward.20}
  #allocation0 [shape = 'u32[]', space=smem, size = 0x4, offset = 0x4, fixed_abs, tag = 'smem constant byte address 0x4 - core index']
  #allocation1 [shape = 'u32[144,128]{1,0:T(1,128)}', space=vmem, size = 0x12000, scoped, tag = 'internal scratch']
  %s0 = inlined_call_operand.vmem [shape: bf16[2,32,32], index: 0, kind: input, shape index: {}]
  %s1 = inlined_call_operand.vmem [shape: f32[32,1], index: 1, kind: input, shape index: {}]
  %s2 = inlined_call_operand.vmem [shape: f32[32,1], index: 2, kind: input, shape index: {}]
  %s3 = inlined_call_operand.vmem [shape: bf16[3,16,32], index: 3, kind: input, shape index: {}]
  %s4 = inlined_call_operand.vmem [shape: bf16[2,64,32], index: 4, kind: input, shape index: {}, may-alias: {4,5}]
  %s5 = inlined_call_operand.vmem [shape: bf16[2,64,32], index: 5, kind: output, shape index: {}, may-alias: {4,5}]
  %s6 = sld [smem:[#allocation0]]
  $region53: #{densenet_forward.20} parent=0
    _
  %s8 = ssub.s32 1, %s6
  %s9 = scalar_select 0, %s8, %s6
  loop: start=0, step=1, limit=4
  $region2: #{densenet_forward.20} parent=0 // loop_pre_header
    _
  $region3: #{densenet_forward.20} parent=0 // loop_header
    %s11 = sphi 0, %s15
    %p12 = scmp.ge.s32.totalorder %s11, 4
    %s21 = sphi 0, %s23
    %s24 = sphi 0, %s21
    %s25 = sphi 0, %s24
    %s41 = sphi 0, %s25
    %s45 = sphi 0, %s45
    %s47 = sphi 0, %s45
    %s48 = sphi 0, %s47
    %s62 = sphi 0, %s48
    %s66 = sphi 0, %s66
    %s68 = sphi 0, %s66
    %s69 = sphi 0, %s68
    %s83 = sphi 0, %s69
    %s87 = sphi 0, %s87
    %s89 = sphi 0, %s87
    %s90 = sphi 0, %s89
    %s104 = sphi 0, %s90
    %s110 = sphi 0, %s112
    %s113 = sphi 0, %s110
    %s114 = sphi 0, %s113
    %s130 = sphi 0, %s114
    %s136 = sphi 0, %s138
    %s139 = sphi 0, %s136
    %s140 = sphi 0, %s139
    %s156 = sphi 0, %s140
  $region4: #{densenet_forward.20} parent=0 // loop_header_branch
    %14 = sbr.rel (%p12) target = $region8
  $region5: #{densenet_forward.20} parent=0 // loop_body
    %s16 = ssub.s32 %s11, 1
    %s17 = ssub.s32 %s11, 2
    %s18 = sadd.s32 %s11, 1
    %s19 = ssub.s32 %s11, %s18
    %p20 = scmp.eq.s32.totalorder %s19, 0
    %s22 = sadd.s32 %s21, 1
    %s23 = scalar_select %p20, %s21, %s22
    %p26 = pneg %p20
    %p27 = scmp.eq.s32.totalorder %s11, 1
    %p28 = por %p26, %p27
    %p29 = scmp.ne.s32.totalorder %s21, %s24
    %p30 = scmp.eq.s32.totalorder %s11, 0
    %p31 = por %p29, %p30
    %p32 = scmp.ne.s32.totalorder %s21, %s24
    %p33 = scmp.eq.s32.totalorder %s16, 1
    %p34 = por %p32, %p33
    %p35 = scmp.ne.s32.totalorder %s24, %s25
    %p36 = scmp.eq.s32.totalorder %s16, 0
    %p37 = por %p35, %p36
    %p38 = scmp.ne.s32.totalorder %s24, %s25
    %p39 = scmp.eq.s32.totalorder %s17, 1
    %p40 = por %p38, %p39
    %p42 = scmp.ne.s32.totalorder %s25, %s41
    %p43 = scmp.eq.s32.totalorder %s17, 0
    %p44 = por %p42, %p43
    %s46 = sadd.s32 %s45, 1
    %p49 = scmp.eq.s32.totalorder %s11, 1
    %p50 = scmp.ne.s32.totalorder %s45, %s47
    %p51 = scmp.eq.s32.totalorder %s11, 0
    %p52 = por %p50, %p51
    %p53 = scmp.ne.s32.totalorder %s45, %s47
    %p54 = scmp.eq.s32.totalorder %s16, 1
    %p55 = por %p53, %p54
    %p56 = scmp.ne.s32.totalorder %s47, %s48
    %p57 = scmp.eq.s32.totalorder %s16, 0
    %p58 = por %p56, %p57
    %p59 = scmp.ne.s32.totalorder %s47, %s48
    %p60 = scmp.eq.s32.totalorder %s17, 1
    %p61 = por %p59, %p60
    %p63 = scmp.ne.s32.totalorder %s48, %s62
    %p64 = scmp.eq.s32.totalorder %s17, 0
    %p65 = por %p63, %p64
    %s67 = sadd.s32 %s66, 1
    %p70 = scmp.eq.s32.totalorder %s11, 1
    %p71 = scmp.ne.s32.totalorder %s66, %s68
    %p72 = scmp.eq.s32.totalorder %s11, 0
    %p73 = por %p71, %p72
    %p74 = scmp.ne.s32.totalorder %s66, %s68
    %p75 = scmp.eq.s32.totalorder %s16, 1
    %p76 = por %p74, %p75
    %p77 = scmp.ne.s32.totalorder %s68, %s69
    %p78 = scmp.eq.s32.totalorder %s16, 0
    %p79 = por %p77, %p78
    %p80 = scmp.ne.s32.totalorder %s68, %s69
    %p81 = scmp.eq.s32.totalorder %s17, 1
    %p82 = por %p80, %p81
    %p84 = scmp.ne.s32.totalorder %s69, %s83
    %p85 = scmp.eq.s32.totalorder %s17, 0
    %p86 = por %p84, %p85
    %s88 = sadd.s32 %s87, 1
    %p91 = scmp.eq.s32.totalorder %s11, 1
    %p92 = scmp.ne.s32.totalorder %s87, %s89
    %p93 = scmp.eq.s32.totalorder %s11, 0
    %p94 = por %p92, %p93
    %p95 = scmp.ne.s32.totalorder %s87, %s89
    %p96 = scmp.eq.s32.totalorder %s16, 1
    %p97 = por %p95, %p96
    %p98 = scmp.ne.s32.totalorder %s89, %s90
    %p99 = scmp.eq.s32.totalorder %s16, 0
    %p100 = por %p98, %p99
    %p101 = scmp.ne.s32.totalorder %s89, %s90
    %p102 = scmp.eq.s32.totalorder %s17, 1
    %p103 = por %p101, %p102
    %p105 = scmp.ne.s32.totalorder %s90, %s104
    %p106 = scmp.eq.s32.totalorder %s17, 0
    %p107 = por %p105, %p106
    %s108 = ssub.s32 %s11, %s18
    %p109 = scmp.eq.s32.totalorder %s108, 0
    %s111 = sadd.s32 %s110, 1
    %s112 = scalar_select %p109, %s110, %s111
    %p115 = pneg %p109
    %p116 = scmp.eq.s32.totalorder %s11, 1
    %p117 = por %p115, %p116
    %p118 = scmp.ne.s32.totalorder %s110, %s113
    %p119 = scmp.eq.s32.totalorder %s11, 0
    %p120 = por %p118, %p119
    %p121 = scmp.ne.s32.totalorder %s110, %s113
    %p122 = scmp.eq.s32.totalorder %s16, 1
    %p123 = por %p121, %p122
    %p124 = scmp.ne.s32.totalorder %s113, %s114
    %p125 = scmp.eq.s32.totalorder %s16, 0
    %p126 = por %p124, %p125
    %p127 = scmp.ne.s32.totalorder %s113, %s114
    %p128 = scmp.eq.s32.totalorder %s17, 1
    %p129 = por %p127, %p128
    %p131 = scmp.ne.s32.totalorder %s114, %s130
    %p132 = scmp.eq.s32.totalorder %s17, 0
    %p133 = por %p131, %p132
    %s134 = ssub.s32 %s11, %s18
    %p135 = scmp.eq.s32.totalorder %s134, 0
    %s137 = sadd.s32 %s136, 1
    %s138 = scalar_select %p135, %s136, %s137
    %p141 = pneg %p135
    %p142 = scmp.eq.s32.totalorder %s11, 1
    %p143 = por %p141, %p142
    %p144 = scmp.ne.s32.totalorder %s136, %s139
    %p145 = scmp.eq.s32.totalorder %s11, 0
    %p146 = por %p144, %p145
    %p147 = scmp.ne.s32.totalorder %s136, %s139
    %p148 = scmp.eq.s32.totalorder %s16, 1
    %p149 = por %p147, %p148
    %p150 = scmp.ne.s32.totalorder %s139, %s140
    %p151 = scmp.eq.s32.totalorder %s16, 0
    %p152 = por %p150, %p151
    %p153 = scmp.ne.s32.totalorder %s139, %s140
    %p154 = scmp.eq.s32.totalorder %s17, 1
    %p155 = por %p153, %p154
    %p157 = scmp.ne.s32.totalorder %s140, %s156
    %p158 = scmp.eq.s32.totalorder %s17, 0
    %p159 = por %p157, %p158
    %p160 = scmp.le.s32.totalorder 1, %s11
    %p161 = scmp.lt.s32.totalorder %s11, 3
    %p162 = pnand %p160, %p161
    %p163 = pneg %p162
    // Predicated region
    $region9: #{densenet_forward.20} parent=5 // pred_check
      _
    $region10: #{densenet_forward.20} parent=5 // pred_check_branch
      %165 = sbr.rel (%p162) target = $region12
    $region11: #{densenet_forward.20} parent=5 // pred_region
      %s166 = ssub.s32 %s11, 1
      // Predicated region
      $region13: #{densenet_forward.20} parent=11 // pred_check
        %p167 = pneg %p58
      $region14: #{densenet_forward.20} parent=11 // pred_check_branch
        %169 = sbr.rel (%p167) target = $region16
      $region15: #{densenet_forward.20} parent=11 // pred_region
        _
      $region16: #{densenet_forward.20} parent=11 // pred_fallthru
        _
      // Predicated region
      $region17: #{densenet_forward.20} parent=11 // pred_check
        %p170 = pneg %p79
      $region18: #{densenet_forward.20} parent=11 // pred_check_branch
        %172 = sbr.rel (%p170) target = $region20
      $region19: #{densenet_forward.20} parent=11 // pred_region
        _
      $region20: #{densenet_forward.20} parent=11 // pred_fallthru
        _
      // Predicated region
      $region21: #{densenet_forward.20} parent=11 // pred_check
        %p173 = pneg %p100
      $region22: #{densenet_forward.20} parent=11 // pred_check_branch
        %175 = sbr.rel (%p173) target = $region24
      $region23: #{densenet_forward.20} parent=11 // pred_region
        _
      $region24: #{densenet_forward.20} parent=11 // pred_fallthru
        _
    $region12: #{densenet_forward.20} parent=5 // pred_fallthru
      _
    %p176 = scmp.lt.s32.totalorder %s11, 2
    // Predicated region
    $region25: #{densenet_forward.20} parent=5 // pred_check
      %p177 = pneg %p176
    $region26: #{densenet_forward.20} parent=5 // pred_check_branch
      %179 = sbr.rel (%p177) target = $region28
    $region27: #{densenet_forward.20} parent=5 // pred_region
      // Predicated region
      $region29: #{densenet_forward.20} parent=27 // pred_check
        %p180 = pneg %p31
      $region30: #{densenet_forward.20} parent=27 // pred_check_branch
        %182 = sbr.rel (%p180) target = $region32
      $region31: #{densenet_forward.20} parent=27 // pred_region
        %p183 = scmp.lt.s32.totalorder %s11, 1
        %s184 = scalar_select %p183, %s11, 1
        %s185 = smul.addr %s184, 4
        %s186 = smul.addr %s185, 4
        %s187 = scalar_lea.vmem %s0, %s186
      $region32: #{densenet_forward.20} parent=27 // pred_fallthru
        _
      // Predicated region
      $region33: #{densenet_forward.20} parent=27 // pred_check
        %p188 = pneg %p120
      $region34: #{densenet_forward.20} parent=27 // pred_check_branch
        %190 = sbr.rel (%p188) target = $region36
      $region35: #{densenet_forward.20} parent=27 // pred_region
        %p191 = scmp.lt.s32.totalorder %s11, 1
        %s192 = scalar_select %p191, %s11, 1
        %s193 = smul.addr %s192, 8
        %s194 = sadd.s32 4, %s193
        %s195 = smul.addr %s194, 4
        %s196 = scalar_lea.vmem %s4, %s195
      $region36: #{densenet_forward.20} parent=27 // pred_fallthru
        _
    $region28: #{densenet_forward.20} parent=5 // pred_fallthru
      _
    %p197 = scmp.le.s32.totalorder 1, %s11
    %p198 = scmp.lt.s32.totalorder %s11, 3
    %p199 = pnand %p197, %p198
    %p200 = pneg %p199
    // Predicated region
    $region37: #{densenet_forward.20} parent=5 // pred_check
      _
    $region38: #{densenet_forward.20} parent=5 // pred_check_branch
      %202 = sbr.rel (%p199) target = $region40
    $region39: #{densenet_forward.20} parent=5 // pred_region
      %s203 = ssub.s32 %s11, 1
      %p204 = scmp.lt.s32.totalorder %s16, 1
      %s205 = scalar_select %p204, %s16, 1
      %s206 = smul.addr %s205, 4
      %s207 = smul.addr %s206, 4
      %s208 = scalar_lea.vmem %s0, %s207
      %p209 = pneg %p37
      %p210 = pneg %p34
      %p211 = pneg %p58
      %p212 = pneg %p55
      %p213 = pneg %p79
      %p214 = pneg %p76
      %p215 = pneg %p100
      %p216 = pneg %p97
      %p217 = scmp.lt.s32.totalorder %s16, 1
      %s218 = scalar_select %p217, %s16, 1
      %s219 = smul.addr %s218, 8
      %s220 = sadd.s32 4, %s219
      %s221 = smul.addr %s220, 4
      %s222 = scalar_lea.vmem %s4, %s221
      %p223 = pneg %p126
      %p224 = pneg %p123
      %p225 = pneg %p152
      %p226 = pneg %p149
      %p227 = scmp.lt.s32.totalorder %s16, 1
      %s228 = scalar_select %p227, %s16, 1
      %s229 = smul.addr %s228, 8
      %s230 = sadd.s32 4, %s229
      %s231 = smul.addr %s230, 4
      %s232 = scalar_lea.vmem %s5, %s231
      %p233 = scmp.lt.s32.totalorder %s16, 1
      %s234 = scalar_select %p233, %s16, 1
      %s235 = smul.addr %s234, 4
      %s236 = smul.addr %s235, 4
      %s237 = scalar_lea.vmem %s0, %s236
      %p238 = scmp.lt.s32.totalorder %s16, 1
      %s239 = scalar_select %p238, %s16, 1
      %s240 = smul.addr %s239, 8
      %s241 = sadd.s32 4, %s240
      %s242 = smul.addr %s241, 4
      %s243 = scalar_lea.vmem %s4, %s242
      %p244 = scmp.lt.s32.totalorder %s16, 1
      %s245 = scalar_select %p244, %s16, 1
      %s246 = smul.addr %s245, 8
      %s247 = sadd.s32 4, %s246
      %s248 = smul.addr %s247, 4
      %s249 = scalar_lea.vmem %s5, %s248
      %v251 = vld [vmem:[%s237] sm:$0xf]
      %v252 = vld [vmem:[%s237 + $0x4] sm:$0xf]
      %v253 = vld [vmem:[%s237 + $0x8] sm:$0xf]
      %v254 = vld [vmem:[%s237 + $0xc] sm:$0xf]
      %v255 = vunpack.c.l.bf16 %v251
      %v256 = vunpack.c.l.bf16 %v252
      %v257 = vunpack.c.l.bf16 %v253
      %v258 = vunpack.c.l.bf16 %v254
      %v259 = vld [vmem:[%s1] sm:$0xff]
      %v260 = vld [vmem:[%s1 + $0x8] sm:$0xff]
      %v261 = vld [vmem:[%s1 + $0x10] sm:$0xff]
      %v262 = vld [vmem:[%s1 + $0x18] sm:$0xff]
      %264 = vset.pattern.permute.xlu0 0
      %265 = vperm.xlu0 %264, %v259
      %v266 = vpop.permute.xlu0 %265
      %269 = vset.pattern.permute.xlu0 0
      %270 = vperm.xlu0 %269, %v260
      %v271 = vpop.permute.xlu0 %270
      %274 = vset.pattern.permute.xlu0 0
      %275 = vperm.xlu0 %274, %v261
      %v276 = vpop.permute.xlu0 %275
      %279 = vset.pattern.permute.xlu0 0
      %280 = vperm.xlu0 %279, %v262
      %v281 = vpop.permute.xlu0 %280
      %v283 = vmul.f32 %v255, %v266
      %v284 = vmul.f32 %v256, %v271
      %v285 = vmul.f32 %v257, %v276
      %v286 = vmul.f32 %v258, %v281
      %v287 = vld [vmem:[%s2] sm:$0xff]
      %v288 = vld [vmem:[%s2 + $0x8] sm:$0xff]
      %v289 = vld [vmem:[%s2 + $0x10] sm:$0xff]
      %v290 = vld [vmem:[%s2 + $0x18] sm:$0xff]
      %292 = vset.pattern.permute.xlu0 0
      %293 = vperm.xlu0 %292, %v287
      %v294 = vpop.permute.xlu0 %293
      %297 = vset.pattern.permute.xlu0 0
      %298 = vperm.xlu0 %297, %v288
      %v299 = vpop.permute.xlu0 %298
      %302 = vset.pattern.permute.xlu0 0
      %303 = vperm.xlu0 %302, %v289
      %v304 = vpop.permute.xlu0 %303
      %307 = vset.pattern.permute.xlu0 0
      %308 = vperm.xlu0 %307, %v290
      %v309 = vpop.permute.xlu0 %308
      %v311 = vadd.f32 %v283, %v294
      %v312 = vadd.f32 %v284, %v299
      %v313 = vadd.f32 %v285, %v304
      %v314 = vadd.f32 %v286, %v309
      %v315 = vmax.f32 %v311, 0.0
      %v316 = vmax.f32 %v312, 0.0
      %v317 = vmax.f32 %v313, 0.0
      %v318 = vmax.f32 %v314, 0.0
      %v319 = vpack.c.bf16 %v316, %v315
      %v320 = vpack.c.bf16 %v318, %v317
      %323 = vrot.lane.b32.xlu0 %v319, 1
      %v324 = vpop.permute.xlu0 %323
      %325 = vrot.lane.b32.xlu0 %v320, 1
      %v326 = vpop.permute.xlu0 %325
      %vm327 = vcmask 7168
      %v330 = vsel %vm327, 0, %v324
      %v332 = vsel %vm327, 0, %v326
      %vm333 = vcmask 269312
      %v334 = vsel %vm333, %v330, 0
      %v336 = vsel %vm333, %v332, 0
      %v338 = vld [vmem:[%s3] sm:$0xf]
      %v339 = vld [vmem:[%s3 + $0x4] sm:$0xf]
      %s340 = scalar_lea.vmem %s3, 8
      %v341 = vld [vmem:[%s340] sm:$0xf]
      %v342 = vld [vmem:[%s340 + $0x4] sm:$0xf]
      %v345 = vunpack.c.l.b16 %v341
      %v346 = vunpack.c.l.b16 %v342
      %v347 = vpack.c.b16 %v346, %v345
      %350 = vrot.lane.b32.xlu0 %v334, 127
      %v351 = vpop.permute.xlu0 %350
      %352 = vrot.lane.b32.xlu0 %v336, 127
      %v353 = vpop.permute.xlu0 %352
      %vm356 = vcmask 261120
      %v358 = vsel %vm356, %v347, 0
      %360 = vmatprep.subr.bf16.mxu0 0
      %361 = vmatpush1.bf16.msra.mxu0 %v351
      %362 = vmatprep.subr.bf16.mxu0 0
      %363 = vmatpush1.bf16.msra.mxu0 %v353
      %364 = vmatprep.subr.bf16.mxu0 0
      %365 = vmatpush1.bf16.msra.mxu0 0
      %366 = vmatprep.subr.bf16.mxu0 0
      %367 = vmatpush1.bf16.msra.mxu0 0
      %368 = vmatprep.subr.bf16.mxu0 0
      %369 = vmatpush1.bf16.msra.mxu0 0
      %370 = vmatprep.subr.bf16.mxu0 0
      %371 = vmatpush1.bf16.msra.mxu0 0
      %372 = vmatprep.subr.bf16.mxu0 0
      %373 = vmatpush1.bf16.msra.mxu0 0
      %374 = vmatprep.subr.bf16.mxu0 0
      %375 = vmatpush1.bf16.msra.mxu0 0
      %376 = vmatprep.subr.bf16.mxu0 0
      %377 = vmatpush1.bf16.msra.mxu0 0
      %378 = vmatprep.subr.bf16.mxu0 0
      %379 = vmatpush1.bf16.msra.mxu0 0
      %380 = vmatprep.subr.bf16.mxu0 0
      %381 = vmatpush1.bf16.msra.mxu0 0
      %382 = vmatprep.subr.bf16.mxu0 0
      %383 = vmatpush1.bf16.msra.mxu0 0
      %384 = vmatprep.subr.bf16.mxu0 0
      %385 = vmatpush1.bf16.msra.mxu0 0
      %386 = vmatprep.subr.bf16.mxu0 0
      %387 = vmatpush1.bf16.msra.mxu0 0
      %388 = vmatprep.subr.bf16.mxu0 0
      %389 = vmatpush1.bf16.msra.mxu0 0
      %390 = vmatprep.subr.bf16.mxu0 0
      %391 = vmatpush1.bf16.msra.mxu0 0
      %392 = vmatprep.mubr.bf16.mxu0 0
      %393 = vmatmul.mubr.bf16.gmra.mrb[0].mxu0 %v358
      %v394 = vpop.f32.mrb[0].mxu0
      %v395 = vadd.f32 0.0, %v394
      %v396 = vpop.f32.mrb[0].mxu0
      %v397 = vpop.f32.mrb[0].mxu0
      %v398 = vadd.f32 0.0, %v397
      %v399 = vpop.f32.mrb[0].mxu0
      %400 = vdwg.mxu0
      %v403 = vunpack.c.l.b16 %v338
      %v404 = vunpack.c.l.b16 %v339
      %v405 = vpack.c.b16 %v404, %v403
      %v407 = vsel %vm356, %v405, 0
      %409 = vmatprep.subr.bf16.mxu0 0
      %410 = vmatpush1.bf16.msra.mxu0 %v334
      %411 = vmatprep.subr.bf16.mxu0 0
      %412 = vmatpush1.bf16.msra.mxu0 %v336
      %413 = vmatprep.subr.bf16.mxu0 0
      %414 = vmatpush1.bf16.msra.mxu0 0
      %415 = vmatprep.subr.bf16.mxu0 0
      %416 = vmatpush1.bf16.msra.mxu0 0
      %417 = vmatprep.subr.bf16.mxu0 0
      %418 = vmatpush1.bf16.msra.mxu0 0
      %419 = vmatprep.subr.bf16.mxu0 0
      %420 = vmatpush1.bf16.msra.mxu0 0
      %421 = vmatprep.subr.bf16.mxu0 0
      %422 = vmatpush1.bf16.msra.mxu0 0
      %423 = vmatprep.subr.bf16.mxu0 0
      %424 = vmatpush1.bf16.msra.mxu0 0
      %425 = vmatprep.subr.bf16.mxu0 0
      %426 = vmatpush1.bf16.msra.mxu0 0
      %427 = vmatprep.subr.bf16.mxu0 0
      %428 = vmatpush1.bf16.msra.mxu0 0
      %429 = vmatprep.subr.bf16.mxu0 0
      %430 = vmatpush1.bf16.msra.mxu0 0
      %431 = vmatprep.subr.bf16.mxu0 0
      %432 = vmatpush1.bf16.msra.mxu0 0
      %433 = vmatprep.subr.bf16.mxu0 0
      %434 = vmatpush1.bf16.msra.mxu0 0
      %435 = vmatprep.subr.bf16.mxu0 0
      %436 = vmatpush1.bf16.msra.mxu0 0
      %437 = vmatprep.subr.bf16.mxu0 0
      %438 = vmatpush1.bf16.msra.mxu0 0
      %439 = vmatprep.subr.bf16.mxu0 0
      %440 = vmatpush1.bf16.msra.mxu0 0
      %441 = vmatprep.mubr.bf16.mxu0 0
      %442 = vmatmul.mubr.bf16.gmra.mrb[0].mxu0 %v407
      %v443 = vpop.f32.mrb[0].mxu0
      %v444 = vadd.f32 %v395, %v443
      %v445 = vpop.f32.mrb[0].mxu0
      %v446 = vpop.f32.mrb[0].mxu0
      %v447 = vadd.f32 %v398, %v446
      %v448 = vpop.f32.mrb[0].mxu0
      %449 = vdwg.mxu0
      %s450 = scalar_lea.vmem %s3, 16
      %v451 = vld [vmem:[%s450] sm:$0xf]
      %v452 = vld [vmem:[%s450 + $0x4] sm:$0xf]
      %v455 = vunpack.c.l.b16 %v451
      %v456 = vunpack.c.l.b16 %v452
      %v457 = vpack.c.b16 %v456, %v455
      %458 = vrot.lane.b32.xlu0 %v334, 126
      %v459 = vpop.permute.xlu0 %458
      %460 = vrot.lane.b32.xlu0 %v336, 126
      %v461 = vpop.permute.xlu0 %460
      %v465 = vsel %vm356, %v457, 0
      %467 = vmatprep.subr.bf16.mxu0 0
      %468 = vmatpush1.bf16.msra.mxu0 %v459
      %469 = vmatprep.subr.bf16.mxu0 0
      %470 = vmatpush1.bf16.msra.mxu0 %v461
      %471 = vmatprep.subr.bf16.mxu0 0
      %472 = vmatpush1.bf16.msra.mxu0 0
      %473 = vmatprep.subr.bf16.mxu0 0
      %474 = vmatpush1.bf16.msra.mxu0 0
      %475 = vmatprep.subr.bf16.mxu0 0
      %476 = vmatpush1.bf16.msra.mxu0 0
      %477 = vmatprep.subr.bf16.mxu0 0
      %478 = vmatpush1.bf16.msra.mxu0 0
      %479 = vmatprep.subr.bf16.mxu0 0
      %480 = vmatpush1.bf16.msra.mxu0 0
      %481 = vmatprep.subr.bf16.mxu0 0
      %482 = vmatpush1.bf16.msra.mxu0 0
      %483 = vmatprep.subr.bf16.mxu0 0
      %484 = vmatpush1.bf16.msra.mxu0 0
      %485 = vmatprep.subr.bf16.mxu0 0
      %486 = vmatpush1.bf16.msra.mxu0 0
      %487 = vmatprep.subr.bf16.mxu0 0
      %488 = vmatpush1.bf16.msra.mxu0 0
      %489 = vmatprep.subr.bf16.mxu0 0
      %490 = vmatpush1.bf16.msra.mxu0 0
      %491 = vmatprep.subr.bf16.mxu0 0
      %492 = vmatpush1.bf16.msra.mxu0 0
      %493 = vmatprep.subr.bf16.mxu0 0
      %494 = vmatpush1.bf16.msra.mxu0 0
      %495 = vmatprep.subr.bf16.mxu0 0
      %496 = vmatpush1.bf16.msra.mxu0 0
      %497 = vmatprep.subr.bf16.mxu0 0
      %498 = vmatpush1.bf16.msra.mxu0 0
      %499 = vmatprep.mubr.bf16.mxu0 0
      %500 = vmatmul.mubr.bf16.gmra.mrb[0].mxu0 %v465
      %v501 = vpop.f32.mrb[0].mxu0
      %v502 = vadd.f32 0.0, %v501
      %v503 = vpop.f32.mrb[0].mxu0
      %v504 = vpop.f32.mrb[0].mxu0
      %v505 = vadd.f32 0.0, %v504
      %v506 = vpop.f32.mrb[0].mxu0
      %507 = vdwg.mxu0
      %v508 = vadd.f32 %v444, %v502
      %v509 = vadd.f32 %v447, %v505
      %v510 = vpack.c.bf16 %v509, %v508
      %v512 = vunpack.c.l.b16 %v510
      %v513 = vunpack.c.h.b16 %v510
      %v514 = vpack.c.b16 %v512, %v512
      %v515 = vpack.c.b16 %v513, %v513
      %vm518 = vcmask 257024
      %519 = vst.msk [vmem:[%s249] sm:$0xf] %vm518, %v514
      %520 = vst.msk [vmem:[%s249 + $0x4] sm:$0xf] %vm518, %v515
      %p521 = scmp.lt.s32.totalorder %s16, 1
      %s522 = scalar_select %p521, %s16, 1
      %s523 = smul.addr %s522, 8
      %s524 = sadd.s32 4, %s523
      %s525 = smul.addr %s524, 4
      %s526 = scalar_lea.vmem %s5, %s525
      // Predicated region
      $region41: #{densenet_forward.20} parent=39 // pred_check
        %p527 = pneg %p149
      $region42: #{densenet_forward.20} parent=39 // pred_check_branch
        %529 = sbr.rel (%p527) target = $region44
      $region43: #{densenet_forward.20} parent=39 // pred_region
        _
      $region44: #{densenet_forward.20} parent=39 // pred_fallthru
        _
    $region40: #{densenet_forward.20} parent=5 // pred_fallthru
      _
    %p530 = scmp.le.s32.totalorder 2, %s11
    // Predicated region
    $region45: #{densenet_forward.20} parent=5 // pred_check
      %p531 = pneg %p530
    $region46: #{densenet_forward.20} parent=5 // pred_check_branch
      %533 = sbr.rel (%p531) target = $region48
    $region47: #{densenet_forward.20} parent=5 // pred_region
      %s534 = ssub.s32 %s11, 2
      // Predicated region
      $region49: #{densenet_forward.20} parent=47 // pred_check
        %p535 = pneg %p155
      $region50: #{densenet_forward.20} parent=47 // pred_check_branch
        %537 = sbr.rel (%p535) target = $region52
      $region51: #{densenet_forward.20} parent=47 // pred_region
        %p538 = scmp.lt.s32.totalorder %s17, 1
        %s539 = scalar_select %p538, %s17, 1
        %s540 = smul.addr %s539, 8
        %s541 = sadd.s32 4, %s540
        %s542 = smul.addr %s541, 4
        %s543 = scalar_lea.vmem %s5, %s542
      $region52: #{densenet_forward.20} parent=47 // pred_fallthru
        _
    $region48: #{densenet_forward.20} parent=5 // pred_fallthru
      _
  $region6: #{densenet_forward.20} parent=0 // loop_footer
    %s15 = sadd.s32 1, %s11
  $region7: #{densenet_forward.20} parent=0 // loop_footer_branch
    %10 = sbr.rel target = $region3
  $region8: #{densenet_forward.20} parent=0 // loop_exit
    _

// kernel: densenet_forward.21
$region0: #{densenet_forward.21}
  #allocation0 [shape = 'u32[]', space=smem, size = 0x4, offset = 0x4, fixed_abs, tag = 'smem constant byte address 0x4 - core index']
  #allocation1 [shape = 'u32[144,128]{1,0:T(1,128)}', space=vmem, size = 0x12000, scoped, tag = 'internal scratch']
  %s0 = inlined_call_operand.vmem [shape: bf16[2,64,32], index: 0, kind: input, shape index: {}]
  %s1 = inlined_call_operand.vmem [shape: f32[48,1], index: 1, kind: input, shape index: {}]
  %s2 = inlined_call_operand.vmem [shape: f32[48,1], index: 2, kind: input, shape index: {}]
  %s3 = inlined_call_operand.vmem [shape: bf16[1,32,48], index: 3, kind: input, shape index: {}]
  %s4 = inlined_call_operand.vmem [shape: bf16[2,32,32], index: 4, kind: output, shape index: {}]
  %s5 = sld [smem:[#allocation0]]
  $region49: #{densenet_forward.21} parent=0
    _
  %s7 = ssub.s32 1, %s5
  %s8 = scalar_select 0, %s7, %s5
  loop: start=0, step=1, limit=4
  $region2: #{densenet_forward.21} parent=0 // loop_pre_header
    _
  $region3: #{densenet_forward.21} parent=0 // loop_header
    %s10 = sphi 0, %s14
    %p11 = scmp.ge.s32.totalorder %s10, 4
    %s17 = sphi 0, %s29
    %s18 = sphi 0, %s25
    %s19 = sphi 0, %s17
    %s20 = sphi 0, %s18
    %s21 = sphi 0, %s19
    %s22 = sphi 0, %s20
    %s34 = sphi 0, %s36
    %s37 = sphi 0, %s34
    %s38 = sphi 0, %s37
    %s54 = sphi 0, %s38
    %s58 = sphi 0, %s58
    %s60 = sphi 0, %s58
    %s61 = sphi 0, %s60
    %s75 = sphi 0, %s61
    %s79 = sphi 0, %s79
    %s81 = sphi 0, %s79
    %s82 = sphi 0, %s81
    %s96 = sphi 0, %s82
    %s100 = sphi 0, %s100
    %s102 = sphi 0, %s100
    %s103 = sphi 0, %s102
    %s117 = sphi 0, %s103
    %s125 = sphi 0, %s127
    %s128 = sphi 0, %s125
    %s129 = sphi 0, %s128
    %s145 = sphi 0, %s129
  $region4: #{densenet_forward.21} parent=0 // loop_header_branch
    %13 = sbr.rel (%p11) target = $region8
  $region5: #{densenet_forward.21} parent=0 // loop_body
    %s15 = ssub.s32 %s10, 1
    %s16 = ssub.s32 %s10, 2
    %s23 = sadd.s32 1, %s18
    %p24 = scmp.ge.s32.totalorder %s23, 1
    %s25 = scalar_select %p24, 0, %s23
    %s26 = sadd.s32 1, %s17
    %s27 = scalar_select %p24, %s26, %s17
    %p28 = scmp.ge.s32.totalorder %s27, 2
    %s29 = scalar_select %p28, 0, %s27
    %s30 = ssub.s32 %s17, %s29
    %s31 = ssub.s32 %s18, %s25
    %s32 = sor.u32 %s30, %s31
    %p33 = scmp.eq.s32.totalorder %s32, 0
    %s35 = sadd.s32 %s34, 1
    %s36 = scalar_select %p33, %s34, %s35
    %p39 = pneg %p33
    %p40 = scmp.eq.s32.totalorder %s10, 1
    %p41 = por %p39, %p40
    %p42 = scmp.ne.s32.totalorder %s34, %s37
    %p43 = scmp.eq.s32.totalorder %s10, 0
    %p44 = por %p42, %p43
    %p45 = scmp.ne.s32.totalorder %s34, %s37
    %p46 = scmp.eq.s32.totalorder %s15, 1
    %p47 = por %p45, %p46
    %p48 = scmp.ne.s32.totalorder %s37, %s38
    %p49 = scmp.eq.s32.totalorder %s15, 0
    %p50 = por %p48, %p49
    %p51 = scmp.ne.s32.totalorder %s37, %s38
    %p52 = scmp.eq.s32.totalorder %s16, 1
    %p53 = por %p51, %p52
    %p55 = scmp.ne.s32.totalorder %s38, %s54
    %p56 = scmp.eq.s32.totalorder %s16, 0
    %p57 = por %p55, %p56
    %s59 = sadd.s32 %s58, 1
    %p62 = scmp.eq.s32.totalorder %s10, 1
    %p63 = scmp.ne.s32.totalorder %s58, %s60
    %p64 = scmp.eq.s32.totalorder %s10, 0
    %p65 = por %p63, %p64
    %p66 = scmp.ne.s32.totalorder %s58, %s60
    %p67 = scmp.eq.s32.totalorder %s15, 1
    %p68 = por %p66, %p67
    %p69 = scmp.ne.s32.totalorder %s60, %s61
    %p70 = scmp.eq.s32.totalorder %s15, 0
    %p71 = por %p69, %p70
    %p72 = scmp.ne.s32.totalorder %s60, %s61
    %p73 = scmp.eq.s32.totalorder %s16, 1
    %p74 = por %p72, %p73
    %p76 = scmp.ne.s32.totalorder %s61, %s75
    %p77 = scmp.eq.s32.totalorder %s16, 0
    %p78 = por %p76, %p77
    %s80 = sadd.s32 %s79, 1
    %p83 = scmp.eq.s32.totalorder %s10, 1
    %p84 = scmp.ne.s32.totalorder %s79, %s81
    %p85 = scmp.eq.s32.totalorder %s10, 0
    %p86 = por %p84, %p85
    %p87 = scmp.ne.s32.totalorder %s79, %s81
    %p88 = scmp.eq.s32.totalorder %s15, 1
    %p89 = por %p87, %p88
    %p90 = scmp.ne.s32.totalorder %s81, %s82
    %p91 = scmp.eq.s32.totalorder %s15, 0
    %p92 = por %p90, %p91
    %p93 = scmp.ne.s32.totalorder %s81, %s82
    %p94 = scmp.eq.s32.totalorder %s16, 1
    %p95 = por %p93, %p94
    %p97 = scmp.ne.s32.totalorder %s82, %s96
    %p98 = scmp.eq.s32.totalorder %s16, 0
    %p99 = por %p97, %p98
    %s101 = sadd.s32 %s100, 1
    %p104 = scmp.eq.s32.totalorder %s10, 1
    %p105 = scmp.ne.s32.totalorder %s100, %s102
    %p106 = scmp.eq.s32.totalorder %s10, 0
    %p107 = por %p105, %p106
    %p108 = scmp.ne.s32.totalorder %s100, %s102
    %p109 = scmp.eq.s32.totalorder %s15, 1
    %p110 = por %p108, %p109
    %p111 = scmp.ne.s32.totalorder %s102, %s103
    %p112 = scmp.eq.s32.totalorder %s15, 0
    %p113 = por %p111, %p112
    %p114 = scmp.ne.s32.totalorder %s102, %s103
    %p115 = scmp.eq.s32.totalorder %s16, 1
    %p116 = por %p114, %p115
    %p118 = scmp.ne.s32.totalorder %s103, %s117
    %p119 = scmp.eq.s32.totalorder %s16, 0
    %p120 = por %p118, %p119
    %s121 = ssub.s32 %s17, %s29
    %s122 = ssub.s32 %s18, %s25
    %s123 = sor.u32 %s121, %s122
    %p124 = scmp.eq.s32.totalorder %s123, 0
    %s126 = sadd.s32 %s125, 1
    %s127 = scalar_select %p124, %s125, %s126
    %p130 = pneg %p124
    %p131 = scmp.eq.s32.totalorder %s10, 1
    %p132 = por %p130, %p131
    %p133 = scmp.ne.s32.totalorder %s125, %s128
    %p134 = scmp.eq.s32.totalorder %s10, 0
    %p135 = por %p133, %p134
    %p136 = scmp.ne.s32.totalorder %s125, %s128
    %p137 = scmp.eq.s32.totalorder %s15, 1
    %p138 = por %p136, %p137
    %p139 = scmp.ne.s32.totalorder %s128, %s129
    %p140 = scmp.eq.s32.totalorder %s15, 0
    %p141 = por %p139, %p140
    %p142 = scmp.ne.s32.totalorder %s128, %s129
    %p143 = scmp.eq.s32.totalorder %s16, 1
    %p144 = por %p142, %p143
    %p146 = scmp.ne.s32.totalorder %s129, %s145
    %p147 = scmp.eq.s32.totalorder %s16, 0
    %p148 = por %p146, %p147
    %p149 = scmp.le.s32.totalorder 1, %s10
    %p150 = scmp.lt.s32.totalorder %s10, 3
    %p151 = pnand %p149, %p150
    %p152 = pneg %p151
    // Predicated region
    $region9: #{densenet_forward.21} parent=5 // pred_check
      _
    $region10: #{densenet_forward.21} parent=5 // pred_check_branch
      %154 = sbr.rel (%p151) target = $region12
    $region11: #{densenet_forward.21} parent=5 // pred_region
      %s155 = ssub.s32 %s10, 1
      // Predicated region
      $region13: #{densenet_forward.21} parent=11 // pred_check
        %p156 = pneg %p71
      $region14: #{densenet_forward.21} parent=11 // pred_check_branch
        %158 = sbr.rel (%p156) target = $region16
      $region15: #{densenet_forward.21} parent=11 // pred_region
        _
      $region16: #{densenet_forward.21} parent=11 // pred_fallthru
        _
      // Predicated region
      $region17: #{densenet_forward.21} parent=11 // pred_check
        %p159 = pneg %p92
      $region18: #{densenet_forward.21} parent=11 // pred_check_branch
        %161 = sbr.rel (%p159) target = $region20
      $region19: #{densenet_forward.21} parent=11 // pred_region
        _
      $region20: #{densenet_forward.21} parent=11 // pred_fallthru
        _
      // Predicated region
      $region21: #{densenet_forward.21} parent=11 // pred_check
        %p162 = pneg %p113
      $region22: #{densenet_forward.21} parent=11 // pred_check_branch
        %164 = sbr.rel (%p162) target = $region24
      $region23: #{densenet_forward.21} parent=11 // pred_region
        _
      $region24: #{densenet_forward.21} parent=11 // pred_fallthru
        _
    $region12: #{densenet_forward.21} parent=5 // pred_fallthru
      _
    %p165 = scmp.lt.s32.totalorder %s10, 2
    // Predicated region
    $region25: #{densenet_forward.21} parent=5 // pred_check
      %p166 = pneg %p165
    $region26: #{densenet_forward.21} parent=5 // pred_check_branch
      %168 = sbr.rel (%p166) target = $region28
    $region27: #{densenet_forward.21} parent=5 // pred_region
      // Predicated region
      $region29: #{densenet_forward.21} parent=27 // pred_check
        %p169 = pneg %p44
      $region30: #{densenet_forward.21} parent=27 // pred_check_branch
        %171 = sbr.rel (%p169) target = $region32
      $region31: #{densenet_forward.21} parent=27 // pred_region
        %p172 = scmp.lt.s32.totalorder %s17, 1
        %s173 = scalar_select %p172, %s17, 1
        %p174 = scmp.lt.s32.totalorder %s18, 0
        %s175 = scalar_select %p174, %s18, 0
        %s176 = smul.addr %s173, 8
        %s177 = sadd.s32 %s175, %s176
        %s178 = smul.addr %s177, 4
        %s179 = scalar_lea.vmem %s0, %s178
      $region32: #{densenet_forward.21} parent=27 // pred_fallthru
        _
    $region28: #{densenet_forward.21} parent=5 // pred_fallthru
      _
    %p180 = scmp.le.s32.totalorder 1, %s10
    %p181 = scmp.lt.s32.totalorder %s10, 3
    %p182 = pnand %p180, %p181
    %p183 = pneg %p182
    // Predicated region
    $region33: #{densenet_forward.21} parent=5 // pred_check
      _
    $region34: #{densenet_forward.21} parent=5 // pred_check_branch
      %185 = sbr.rel (%p182) target = $region36
    $region35: #{densenet_forward.21} parent=5 // pred_region
      %s186 = ssub.s32 %s10, 1
      %p187 = scmp.lt.s32.totalorder %s19, 1
      %s188 = scalar_select %p187, %s19, 1
      %p189 = scmp.lt.s32.totalorder %s20, 0
      %s190 = scalar_select %p189, %s20, 0
      %s191 = smul.addr %s188, 8
      %s192 = sadd.s32 %s190, %s191
      %s193 = smul.addr %s192, 4
      %s194 = scalar_lea.vmem %s0, %s193
      %p195 = pneg %p50
      %p196 = pneg %p47
      %p197 = pneg %p71
      %p198 = pneg %p68
      %p199 = pneg %p92
      %p200 = pneg %p89
      %p201 = pneg %p113
      %p202 = pneg %p110
      %p203 = pneg %p141
      %p204 = pneg %p138
      %p205 = scmp.lt.s32.totalorder %s19, 1
      %s206 = scalar_select %p205, %s19, 1
      %p207 = scmp.lt.s32.totalorder %s20, 0
      %s208 = scalar_select %p207, %s20, 0
      %s209 = smul.addr %s206, 4
      %s210 = sadd.s32 %s208, %s209
      %s211 = smul.addr %s210, 4
      %s212 = scalar_lea.vmem %s4, %s211
      %p213 = scmp.lt.s32.totalorder %s19, 1
      %s214 = scalar_select %p213, %s19, 1
      %p215 = scmp.lt.s32.totalorder %s20, 0
      %s216 = scalar_select %p215, %s20, 0
      %s217 = smul.addr %s214, 8
      %s218 = sadd.s32 %s216, %s217
      %s219 = smul.addr %s218, 4
      %s220 = scalar_lea.vmem %s0, %s219
      %p221 = scmp.lt.s32.totalorder %s19, 1
      %s222 = scalar_select %p221, %s19, 1
      %p223 = scmp.lt.s32.totalorder %s20, 0
      %s224 = scalar_select %p223, %s20, 0
      %s225 = smul.addr %s222, 4
      %s226 = sadd.s32 %s224, %s225
      %s227 = smul.addr %s226, 4
      %s228 = scalar_lea.vmem %s4, %s227
      %v230 = vld [vmem:[%s220] sm:$0xf]
      %v231 = vld [vmem:[%s220 + $0x4] sm:$0xf]
      %v232 = vld [vmem:[%s220 + $0x8] sm:$0xf]
      %v233 = vld [vmem:[%s220 + $0xc] sm:$0xf]
      %v234 = vld [vmem:[%s220 + $0x10] sm:$0xf]
      %v235 = vld [vmem:[%s220 + $0x14] sm:$0xf]
      %v236 = vunpack.c.l.bf16 %v230
      %v237 = vunpack.c.l.bf16 %v231
      %v238 = vunpack.c.l.bf16 %v232
      %v239 = vunpack.c.l.bf16 %v233
      %v240 = vunpack.c.l.bf16 %v234
      %v241 = vunpack.c.l.bf16 %v235
      %v242 = vld [vmem:[%s1] sm:$0xff]
      %v243 = vld [vmem:[%s1 + $0x8] sm:$0xff]
      %v244 = vld [vmem:[%s1 + $0x10] sm:$0xff]
      %v245 = vld [vmem:[%s1 + $0x18] sm:$0xff]
      %v246 = vld [vmem:[%s1 + $0x20] sm:$0xff]
      %v247 = vld [vmem:[%s1 + $0x28] sm:$0xff]
      %249 = vset.pattern.permute.xlu0 0
      %250 = vperm.xlu0 %249, %v242
      %v251 = vpop.permute.xlu0 %250
      %254 = vset.pattern.permute.xlu0 0
      %255 = vperm.xlu0 %254, %v243
      %v256 = vpop.permute.xlu0 %255
      %259 = vset.pattern.permute.xlu0 0
      %260 = vperm.xlu0 %259, %v244
      %v261 = vpop.permute.xlu0 %260
      %264 = vset.pattern.permute.xlu0 0
      %265 = vperm.xlu0 %264, %v245
      %v266 = vpop.permute.xlu0 %265
      %269 = vset.pattern.permute.xlu0 0
      %270 = vperm.xlu0 %269, %v246
      %v271 = vpop.permute.xlu0 %270
      %274 = vset.pattern.permute.xlu0 0
      %275 = vperm.xlu0 %274, %v247
      %v276 = vpop.permute.xlu0 %275
      %v278 = vmul.f32 %v236, %v251
      %v279 = vmul.f32 %v237, %v256
      %v280 = vmul.f32 %v238, %v261
      %v281 = vmul.f32 %v239, %v266
      %v282 = vmul.f32 %v240, %v271
      %v283 = vmul.f32 %v241, %v276
      %v284 = vld [vmem:[%s2] sm:$0xff]
      %v285 = vld [vmem:[%s2 + $0x8] sm:$0xff]
      %v286 = vld [vmem:[%s2 + $0x10] sm:$0xff]
      %v287 = vld [vmem:[%s2 + $0x18] sm:$0xff]
      %v288 = vld [vmem:[%s2 + $0x20] sm:$0xff]
      %v289 = vld [vmem:[%s2 + $0x28] sm:$0xff]
      %291 = vset.pattern.permute.xlu0 0
      %292 = vperm.xlu0 %291, %v284
      %v293 = vpop.permute.xlu0 %292
      %296 = vset.pattern.permute.xlu0 0
      %297 = vperm.xlu0 %296, %v285
      %v298 = vpop.permute.xlu0 %297
      %301 = vset.pattern.permute.xlu0 0
      %302 = vperm.xlu0 %301, %v286
      %v303 = vpop.permute.xlu0 %302
      %306 = vset.pattern.permute.xlu0 0
      %307 = vperm.xlu0 %306, %v287
      %v308 = vpop.permute.xlu0 %307
      %311 = vset.pattern.permute.xlu0 0
      %312 = vperm.xlu0 %311, %v288
      %v313 = vpop.permute.xlu0 %312
      %316 = vset.pattern.permute.xlu0 0
      %317 = vperm.xlu0 %316, %v289
      %v318 = vpop.permute.xlu0 %317
      %v320 = vadd.f32 %v278, %v293
      %v321 = vadd.f32 %v279, %v298
      %v322 = vadd.f32 %v280, %v303
      %v323 = vadd.f32 %v281, %v308
      %v324 = vadd.f32 %v282, %v313
      %v325 = vadd.f32 %v283, %v318
      %v326 = vmax.f32 %v320, 0.0
      %v327 = vmax.f32 %v321, 0.0
      %v328 = vmax.f32 %v322, 0.0
      %v329 = vmax.f32 %v323, 0.0
      %v330 = vmax.f32 %v324, 0.0
      %v331 = vmax.f32 %v325, 0.0
      %v332 = vpack.c.bf16 %v327, %v326
      %v333 = vpack.c.bf16 %v329, %v328
      %v334 = vpack.c.bf16 %v331, %v330
      %v335 = vld [vmem:[%s3] sm:$0xf]
      %v336 = vld [vmem:[%s3 + $0x4] sm:$0xf]
      %v337 = vld [vmem:[%s3 + $0x8] sm:$0xf]
      %v338 = vld [vmem:[%s3 + $0xc] sm:$0xf]
      %v343 = vunpack.c.l.b16 %v335
      %v344 = vunpack.c.l.b16 %v336
      %v345 = vunpack.c.l.b16 %v337
      %v346 = vunpack.c.l.b16 %v338
      %v347 = vpack.c.b16 %v344, %v343
      %v348 = vpack.c.b16 %v346, %v345
      %vm349 = vcmask 392192
      %v351 = vsel %vm349, %v347, 0
      %v354 = vsel %vm349, %v348, 0
      %356 = vmatprep.subr.bf16.mxu0 0
      %357 = vmatpush1.bf16.msra.mxu0 %v332
      %358 = vmatprep.subr.bf16.mxu0 0
      %359 = vmatpush1.bf16.msra.mxu0 %v333
      %360 = vmatprep.subr.bf16.mxu0 0
      %361 = vmatpush1.bf16.msra.mxu0 %v334
      %362 = vmatprep.subr.bf16.mxu0 0
      %363 = vmatpush1.bf16.msra.mxu0 0
      %364 = vmatprep.subr.bf16.mxu0 0
      %365 = vmatpush1.bf16.msra.mxu0 0
      %366 = vmatprep.subr.bf16.mxu0 0
      %367 = vmatpush1.bf16.msra.mxu0 0
      %368 = vmatprep.subr.bf16.mxu0 0
      %369 = vmatpush1.bf16.msra.mxu0 0
      %370 = vmatprep.subr.bf16.mxu0 0
      %371 = vmatpush1.bf16.msra.mxu0 0
      %372 = vmatprep.subr.bf16.mxu0 0
      %373 = vmatpush1.bf16.msra.mxu0 0
      %374 = vmatprep.subr.bf16.mxu0 0
      %375 = vmatpush1.bf16.msra.mxu0 0
      %376 = vmatprep.subr.bf16.mxu0 0
      %377 = vmatpush1.bf16.msra.mxu0 0
      %378 = vmatprep.subr.bf16.mxu0 0
      %379 = vmatpush1.bf16.msra.mxu0 0
      %380 = vmatprep.subr.bf16.mxu0 0
      %381 = vmatpush1.bf16.msra.mxu0 0
      %382 = vmatprep.subr.bf16.mxu0 0
      %383 = vmatpush1.bf16.msra.mxu0 0
      %384 = vmatprep.subr.bf16.mxu0 0
      %385 = vmatpush1.bf16.msra.mxu0 0
      %386 = vmatprep.subr.bf16.mxu0 0
      %387 = vmatpush1.bf16.msra.mxu0 0
      %388 = vmatprep.mubr.bf16.mxu0 0
      %389 = vmatmul.mubr.bf16.gmra.mrb[0].mxu0 %v351
      %v390 = vpop.f32.mrb[0].mxu0
      %v391 = vadd.f32 0.0, %v390
      %v392 = vpop.f32.mrb[0].mxu0
      %v393 = vpop.f32.mrb[0].mxu0
      %v394 = vadd.f32 0.0, %v393
      %v395 = vpop.f32.mrb[0].mxu0
      %396 = vmatprep.mubr.bf16.mxu0 0
      %397 = vmatmul.mubr.bf16.gmra.mrb[0].mxu0 %v354
      %v398 = vpop.f32.mrb[0].mxu0
      %v399 = vadd.f32 0.0, %v398
      %v400 = vpop.f32.mrb[0].mxu0
      %v401 = vpop.f32.mrb[0].mxu0
      %v402 = vadd.f32 0.0, %v401
      %v403 = vpop.f32.mrb[0].mxu0
      %404 = vdwg.mxu0
      %v405 = vpack.c.bf16 %v394, %v391
      %v406 = vpack.c.bf16 %v402, %v399
      %v409 = vunpack.c.l.b16 %v405
      %v410 = vunpack.c.h.b16 %v405
      %v411 = vunpack.c.l.b16 %v406
      %v412 = vunpack.c.h.b16 %v406
      %v413 = vpack.c.b16 %v409, %v409
      %v414 = vpack.c.b16 %v410, %v410
      %v415 = vpack.c.b16 %v411, %v411
      %v416 = vpack.c.b16 %v412, %v412
      %vm421 = vcmask 257024
      %422 = vst.msk [vmem:[%s228] sm:$0xf] %vm421, %v413
      %423 = vst.msk [vmem:[%s228 + $0x4] sm:$0xf] %vm421, %v414
      %424 = vst.msk [vmem:[%s228 + $0x8] sm:$0xf] %vm421, %v415
      %425 = vst.msk [vmem:[%s228 + $0xc] sm:$0xf] %vm421, %v416
      %p426 = scmp.lt.s32.totalorder %s19, 1
      %s427 = scalar_select %p426, %s19, 1
      %p428 = scmp.lt.s32.totalorder %s20, 0
      %s429 = scalar_select %p428, %s20, 0
      %s430 = smul.addr %s427, 4
      %s431 = sadd.s32 %s429, %s430
      %s432 = smul.addr %s431, 4
      %s433 = scalar_lea.vmem %s4, %s432
      // Predicated region
      $region37: #{densenet_forward.21} parent=35 // pred_check
        %p434 = pneg %p138
      $region38: #{densenet_forward.21} parent=35 // pred_check_branch
        %436 = sbr.rel (%p434) target = $region40
      $region39: #{densenet_forward.21} parent=35 // pred_region
        _
      $region40: #{densenet_forward.21} parent=35 // pred_fallthru
        _
    $region36: #{densenet_forward.21} parent=5 // pred_fallthru
      _
    %p437 = scmp.le.s32.totalorder 2, %s10
    // Predicated region
    $region41: #{densenet_forward.21} parent=5 // pred_check
      %p438 = pneg %p437
    $region42: #{densenet_forward.21} parent=5 // pred_check_branch
      %440 = sbr.rel (%p438) target = $region44
    $region43: #{densenet_forward.21} parent=5 // pred_region
      %s441 = ssub.s32 %s10, 2
      // Predicated region
      $region45: #{densenet_forward.21} parent=43 // pred_check
        %p442 = pneg %p144
      $region46: #{densenet_forward.21} parent=43 // pred_check_branch
        %444 = sbr.rel (%p442) target = $region48
      $region47: #{densenet_forward.21} parent=43 // pred_region
        %p445 = scmp.lt.s32.totalorder %s21, 1
        %s446 = scalar_select %p445, %s21, 1
        %p447 = scmp.lt.s32.totalorder %s22, 0
        %s448 = scalar_select %p447, %s22, 0
        %s449 = smul.addr %s446, 4
        %s450 = sadd.s32 %s448, %s449
        %s451 = smul.addr %s450, 4
        %s452 = scalar_lea.vmem %s4, %s451
      $region48: #{densenet_forward.21} parent=43 // pred_fallthru
        _
    $region44: #{densenet_forward.21} parent=5 // pred_fallthru
      _
  $region6: #{densenet_forward.21} parent=0 // loop_footer
    %s14 = sadd.s32 1, %s10
  $region7: #{densenet_forward.21} parent=0 // loop_footer_branch
    %9 = sbr.rel target = $region3
  $region8: #{densenet_forward.21} parent=0 // loop_exit
    _

// kernel: densenet_forward.22
$region0: #{densenet_forward.22}
  #allocation0 [shape = 'u32[]', space=smem, size = 0x4, offset = 0x4, fixed_abs, tag = 'smem constant byte address 0x4 - core index']
  #allocation1 [shape = 'u32[144,128]{1,0:T(1,128)}', space=vmem, size = 0x12000, scoped, tag = 'internal scratch']
  %s0 = inlined_call_operand.vmem [shape: bf16[2,32,32], index: 0, kind: input, shape index: {}]
  %s1 = inlined_call_operand.vmem [shape: f32[32,1], index: 1, kind: input, shape index: {}]
  %s2 = inlined_call_operand.vmem [shape: f32[32,1], index: 2, kind: input, shape index: {}]
  %s3 = inlined_call_operand.vmem [shape: bf16[3,16,32], index: 3, kind: input, shape index: {}]
  %s4 = inlined_call_operand.vmem [shape: bf16[2,64,32], index: 4, kind: input, shape index: {}, may-alias: {4,5}]
  %s5 = inlined_call_operand.vmem [shape: bf16[2,64,32], index: 5, kind: output, shape index: {}, may-alias: {4,5}]
  %s6 = sld [smem:[#allocation0]]
  $region53: #{densenet_forward.22} parent=0
    _
  %s8 = ssub.s32 1, %s6
  %s9 = scalar_select 0, %s8, %s6
  loop: start=0, step=1, limit=4
  $region2: #{densenet_forward.22} parent=0 // loop_pre_header
    _
  $region3: #{densenet_forward.22} parent=0 // loop_header
    %s11 = sphi 0, %s15
    %p12 = scmp.ge.s32.totalorder %s11, 4
    %s21 = sphi 0, %s23
    %s24 = sphi 0, %s21
    %s25 = sphi 0, %s24
    %s41 = sphi 0, %s25
    %s45 = sphi 0, %s45
    %s47 = sphi 0, %s45
    %s48 = sphi 0, %s47
    %s62 = sphi 0, %s48
    %s66 = sphi 0, %s66
    %s68 = sphi 0, %s66
    %s69 = sphi 0, %s68
    %s83 = sphi 0, %s69
    %s87 = sphi 0, %s87
    %s89 = sphi 0, %s87
    %s90 = sphi 0, %s89
    %s104 = sphi 0, %s90
    %s110 = sphi 0, %s112
    %s113 = sphi 0, %s110
    %s114 = sphi 0, %s113
    %s130 = sphi 0, %s114
    %s136 = sphi 0, %s138
    %s139 = sphi 0, %s136
    %s140 = sphi 0, %s139
    %s156 = sphi 0, %s140
  $region4: #{densenet_forward.22} parent=0 // loop_header_branch
    %14 = sbr.rel (%p12) target = $region8
  $region5: #{densenet_forward.22} parent=0 // loop_body
    %s16 = ssub.s32 %s11, 1
    %s17 = ssub.s32 %s11, 2
    %s18 = sadd.s32 %s11, 1
    %s19 = ssub.s32 %s11, %s18
    %p20 = scmp.eq.s32.totalorder %s19, 0
    %s22 = sadd.s32 %s21, 1
    %s23 = scalar_select %p20, %s21, %s22
    %p26 = pneg %p20
    %p27 = scmp.eq.s32.totalorder %s11, 1
    %p28 = por %p26, %p27
    %p29 = scmp.ne.s32.totalorder %s21, %s24
    %p30 = scmp.eq.s32.totalorder %s11, 0
    %p31 = por %p29, %p30
    %p32 = scmp.ne.s32.totalorder %s21, %s24
    %p33 = scmp.eq.s32.totalorder %s16, 1
    %p34 = por %p32, %p33
    %p35 = scmp.ne.s32.totalorder %s24, %s25
    %p36 = scmp.eq.s32.totalorder %s16, 0
    %p37 = por %p35, %p36
    %p38 = scmp.ne.s32.totalorder %s24, %s25
    %p39 = scmp.eq.s32.totalorder %s17, 1
    %p40 = por %p38, %p39
    %p42 = scmp.ne.s32.totalorder %s25, %s41
    %p43 = scmp.eq.s32.totalorder %s17, 0
    %p44 = por %p42, %p43
    %s46 = sadd.s32 %s45, 1
    %p49 = scmp.eq.s32.totalorder %s11, 1
    %p50 = scmp.ne.s32.totalorder %s45, %s47
    %p51 = scmp.eq.s32.totalorder %s11, 0
    %p52 = por %p50, %p51
    %p53 = scmp.ne.s32.totalorder %s45, %s47
    %p54 = scmp.eq.s32.totalorder %s16, 1
    %p55 = por %p53, %p54
    %p56 = scmp.ne.s32.totalorder %s47, %s48
    %p57 = scmp.eq.s32.totalorder %s16, 0
    %p58 = por %p56, %p57
    %p59 = scmp.ne.s32.totalorder %s47, %s48
    %p60 = scmp.eq.s32.totalorder %s17, 1
    %p61 = por %p59, %p60
    %p63 = scmp.ne.s32.totalorder %s48, %s62
    %p64 = scmp.eq.s32.totalorder %s17, 0
    %p65 = por %p63, %p64
    %s67 = sadd.s32 %s66, 1
    %p70 = scmp.eq.s32.totalorder %s11, 1
    %p71 = scmp.ne.s32.totalorder %s66, %s68
    %p72 = scmp.eq.s32.totalorder %s11, 0
    %p73 = por %p71, %p72
    %p74 = scmp.ne.s32.totalorder %s66, %s68
    %p75 = scmp.eq.s32.totalorder %s16, 1
    %p76 = por %p74, %p75
    %p77 = scmp.ne.s32.totalorder %s68, %s69
    %p78 = scmp.eq.s32.totalorder %s16, 0
    %p79 = por %p77, %p78
    %p80 = scmp.ne.s32.totalorder %s68, %s69
    %p81 = scmp.eq.s32.totalorder %s17, 1
    %p82 = por %p80, %p81
    %p84 = scmp.ne.s32.totalorder %s69, %s83
    %p85 = scmp.eq.s32.totalorder %s17, 0
    %p86 = por %p84, %p85
    %s88 = sadd.s32 %s87, 1
    %p91 = scmp.eq.s32.totalorder %s11, 1
    %p92 = scmp.ne.s32.totalorder %s87, %s89
    %p93 = scmp.eq.s32.totalorder %s11, 0
    %p94 = por %p92, %p93
    %p95 = scmp.ne.s32.totalorder %s87, %s89
    %p96 = scmp.eq.s32.totalorder %s16, 1
    %p97 = por %p95, %p96
    %p98 = scmp.ne.s32.totalorder %s89, %s90
    %p99 = scmp.eq.s32.totalorder %s16, 0
    %p100 = por %p98, %p99
    %p101 = scmp.ne.s32.totalorder %s89, %s90
    %p102 = scmp.eq.s32.totalorder %s17, 1
    %p103 = por %p101, %p102
    %p105 = scmp.ne.s32.totalorder %s90, %s104
    %p106 = scmp.eq.s32.totalorder %s17, 0
    %p107 = por %p105, %p106
    %s108 = ssub.s32 %s11, %s18
    %p109 = scmp.eq.s32.totalorder %s108, 0
    %s111 = sadd.s32 %s110, 1
    %s112 = scalar_select %p109, %s110, %s111
    %p115 = pneg %p109
    %p116 = scmp.eq.s32.totalorder %s11, 1
    %p117 = por %p115, %p116
    %p118 = scmp.ne.s32.totalorder %s110, %s113
    %p119 = scmp.eq.s32.totalorder %s11, 0
    %p120 = por %p118, %p119
    %p121 = scmp.ne.s32.totalorder %s110, %s113
    %p122 = scmp.eq.s32.totalorder %s16, 1
    %p123 = por %p121, %p122
    %p124 = scmp.ne.s32.totalorder %s113, %s114
    %p125 = scmp.eq.s32.totalorder %s16, 0
    %p126 = por %p124, %p125
    %p127 = scmp.ne.s32.totalorder %s113, %s114
    %p128 = scmp.eq.s32.totalorder %s17, 1
    %p129 = por %p127, %p128
    %p131 = scmp.ne.s32.totalorder %s114, %s130
    %p132 = scmp.eq.s32.totalorder %s17, 0
    %p133 = por %p131, %p132
    %s134 = ssub.s32 %s11, %s18
    %p135 = scmp.eq.s32.totalorder %s134, 0
    %s137 = sadd.s32 %s136, 1
    %s138 = scalar_select %p135, %s136, %s137
    %p141 = pneg %p135
    %p142 = scmp.eq.s32.totalorder %s11, 1
    %p143 = por %p141, %p142
    %p144 = scmp.ne.s32.totalorder %s136, %s139
    %p145 = scmp.eq.s32.totalorder %s11, 0
    %p146 = por %p144, %p145
    %p147 = scmp.ne.s32.totalorder %s136, %s139
    %p148 = scmp.eq.s32.totalorder %s16, 1
    %p149 = por %p147, %p148
    %p150 = scmp.ne.s32.totalorder %s139, %s140
    %p151 = scmp.eq.s32.totalorder %s16, 0
    %p152 = por %p150, %p151
    %p153 = scmp.ne.s32.totalorder %s139, %s140
    %p154 = scmp.eq.s32.totalorder %s17, 1
    %p155 = por %p153, %p154
    %p157 = scmp.ne.s32.totalorder %s140, %s156
    %p158 = scmp.eq.s32.totalorder %s17, 0
    %p159 = por %p157, %p158
    %p160 = scmp.le.s32.totalorder 1, %s11
    %p161 = scmp.lt.s32.totalorder %s11, 3
    %p162 = pnand %p160, %p161
    %p163 = pneg %p162
    // Predicated region
    $region9: #{densenet_forward.22} parent=5 // pred_check
      _
    $region10: #{densenet_forward.22} parent=5 // pred_check_branch
      %165 = sbr.rel (%p162) target = $region12
    $region11: #{densenet_forward.22} parent=5 // pred_region
      %s166 = ssub.s32 %s11, 1
      // Predicated region
      $region13: #{densenet_forward.22} parent=11 // pred_check
        %p167 = pneg %p58
      $region14: #{densenet_forward.22} parent=11 // pred_check_branch
        %169 = sbr.rel (%p167) target = $region16
      $region15: #{densenet_forward.22} parent=11 // pred_region
        _
      $region16: #{densenet_forward.22} parent=11 // pred_fallthru
        _
      // Predicated region
      $region17: #{densenet_forward.22} parent=11 // pred_check
        %p170 = pneg %p79
      $region18: #{densenet_forward.22} parent=11 // pred_check_branch
        %172 = sbr.rel (%p170) target = $region20
      $region19: #{densenet_forward.22} parent=11 // pred_region
        _
      $region20: #{densenet_forward.22} parent=11 // pred_fallthru
        _
      // Predicated region
      $region21: #{densenet_forward.22} parent=11 // pred_check
        %p173 = pneg %p100
      $region22: #{densenet_forward.22} parent=11 // pred_check_branch
        %175 = sbr.rel (%p173) target = $region24
      $region23: #{densenet_forward.22} parent=11 // pred_region
        _
      $region24: #{densenet_forward.22} parent=11 // pred_fallthru
        _
    $region12: #{densenet_forward.22} parent=5 // pred_fallthru
      _
    %p176 = scmp.lt.s32.totalorder %s11, 2
    // Predicated region
    $region25: #{densenet_forward.22} parent=5 // pred_check
      %p177 = pneg %p176
    $region26: #{densenet_forward.22} parent=5 // pred_check_branch
      %179 = sbr.rel (%p177) target = $region28
    $region27: #{densenet_forward.22} parent=5 // pred_region
      // Predicated region
      $region29: #{densenet_forward.22} parent=27 // pred_check
        %p180 = pneg %p31
      $region30: #{densenet_forward.22} parent=27 // pred_check_branch
        %182 = sbr.rel (%p180) target = $region32
      $region31: #{densenet_forward.22} parent=27 // pred_region
        %p183 = scmp.lt.s32.totalorder %s11, 1
        %s184 = scalar_select %p183, %s11, 1
        %s185 = smul.addr %s184, 4
        %s186 = smul.addr %s185, 4
        %s187 = scalar_lea.vmem %s0, %s186
      $region32: #{densenet_forward.22} parent=27 // pred_fallthru
        _
      // Predicated region
      $region33: #{densenet_forward.22} parent=27 // pred_check
        %p188 = pneg %p120
      $region34: #{densenet_forward.22} parent=27 // pred_check_branch
        %190 = sbr.rel (%p188) target = $region36
      $region35: #{densenet_forward.22} parent=27 // pred_region
        %p191 = scmp.lt.s32.totalorder %s11, 1
        %s192 = scalar_select %p191, %s11, 1
        %s193 = smul.addr %s192, 8
        %s194 = sadd.s32 6, %s193
        %s195 = smul.addr %s194, 4
        %s196 = scalar_lea.vmem %s4, %s195
      $region36: #{densenet_forward.22} parent=27 // pred_fallthru
        _
    $region28: #{densenet_forward.22} parent=5 // pred_fallthru
      _
    %p197 = scmp.le.s32.totalorder 1, %s11
    %p198 = scmp.lt.s32.totalorder %s11, 3
    %p199 = pnand %p197, %p198
    %p200 = pneg %p199
    // Predicated region
    $region37: #{densenet_forward.22} parent=5 // pred_check
      _
    $region38: #{densenet_forward.22} parent=5 // pred_check_branch
      %202 = sbr.rel (%p199) target = $region40
    $region39: #{densenet_forward.22} parent=5 // pred_region
      %s203 = ssub.s32 %s11, 1
      %p204 = scmp.lt.s32.totalorder %s16, 1
      %s205 = scalar_select %p204, %s16, 1
      %s206 = smul.addr %s205, 4
      %s207 = smul.addr %s206, 4
      %s208 = scalar_lea.vmem %s0, %s207
      %p209 = pneg %p37
      %p210 = pneg %p34
      %p211 = pneg %p58
      %p212 = pneg %p55
      %p213 = pneg %p79
      %p214 = pneg %p76
      %p215 = pneg %p100
      %p216 = pneg %p97
      %p217 = scmp.lt.s32.totalorder %s16, 1
      %s218 = scalar_select %p217, %s16, 1
      %s219 = smul.addr %s218, 8
      %s220 = sadd.s32 6, %s219
      %s221 = smul.addr %s220, 4
      %s222 = scalar_lea.vmem %s4, %s221
      %p223 = pneg %p126
      %p224 = pneg %p123
      %p225 = pneg %p152
      %p226 = pneg %p149
      %p227 = scmp.lt.s32.totalorder %s16, 1
      %s228 = scalar_select %p227, %s16, 1
      %s229 = smul.addr %s228, 8
      %s230 = sadd.s32 6, %s229
      %s231 = smul.addr %s230, 4
      %s232 = scalar_lea.vmem %s5, %s231
      %p233 = scmp.lt.s32.totalorder %s16, 1
      %s234 = scalar_select %p233, %s16, 1
      %s235 = smul.addr %s234, 4
      %s236 = smul.addr %s235, 4
      %s237 = scalar_lea.vmem %s0, %s236
      %p238 = scmp.lt.s32.totalorder %s16, 1
      %s239 = scalar_select %p238, %s16, 1
      %s240 = smul.addr %s239, 8
      %s241 = sadd.s32 6, %s240
      %s242 = smul.addr %s241, 4
      %s243 = scalar_lea.vmem %s4, %s242
      %p244 = scmp.lt.s32.totalorder %s16, 1
      %s245 = scalar_select %p244, %s16, 1
      %s246 = smul.addr %s245, 8
      %s247 = sadd.s32 6, %s246
      %s248 = smul.addr %s247, 4
      %s249 = scalar_lea.vmem %s5, %s248
      %v251 = vld [vmem:[%s237] sm:$0xf]
      %v252 = vld [vmem:[%s237 + $0x4] sm:$0xf]
      %v253 = vld [vmem:[%s237 + $0x8] sm:$0xf]
      %v254 = vld [vmem:[%s237 + $0xc] sm:$0xf]
      %v255 = vunpack.c.l.bf16 %v251
      %v256 = vunpack.c.l.bf16 %v252
      %v257 = vunpack.c.l.bf16 %v253
      %v258 = vunpack.c.l.bf16 %v254
      %v259 = vld [vmem:[%s1] sm:$0xff]
      %v260 = vld [vmem:[%s1 + $0x8] sm:$0xff]
      %v261 = vld [vmem:[%s1 + $0x10] sm:$0xff]
      %v262 = vld [vmem:[%s1 + $0x18] sm:$0xff]
      %264 = vset.pattern.permute.xlu0 0
      %265 = vperm.xlu0 %264, %v259
      %v266 = vpop.permute.xlu0 %265
      %269 = vset.pattern.permute.xlu0 0
      %270 = vperm.xlu0 %269, %v260
      %v271 = vpop.permute.xlu0 %270
      %274 = vset.pattern.permute.xlu0 0
      %275 = vperm.xlu0 %274, %v261
      %v276 = vpop.permute.xlu0 %275
      %279 = vset.pattern.permute.xlu0 0
      %280 = vperm.xlu0 %279, %v262
      %v281 = vpop.permute.xlu0 %280
      %v283 = vmul.f32 %v255, %v266
      %v284 = vmul.f32 %v256, %v271
      %v285 = vmul.f32 %v257, %v276
      %v286 = vmul.f32 %v258, %v281
      %v287 = vld [vmem:[%s2] sm:$0xff]
      %v288 = vld [vmem:[%s2 + $0x8] sm:$0xff]
      %v289 = vld [vmem:[%s2 + $0x10] sm:$0xff]
      %v290 = vld [vmem:[%s2 + $0x18] sm:$0xff]
      %292 = vset.pattern.permute.xlu0 0
      %293 = vperm.xlu0 %292, %v287
      %v294 = vpop.permute.xlu0 %293
      %297 = vset.pattern.permute.xlu0 0
      %298 = vperm.xlu0 %297, %v288
      %v299 = vpop.permute.xlu0 %298
      %302 = vset.pattern.permute.xlu0 0
      %303 = vperm.xlu0 %302, %v289
      %v304 = vpop.permute.xlu0 %303
      %307 = vset.pattern.permute.xlu0 0
      %308 = vperm.xlu0 %307, %v290
      %v309 = vpop.permute.xlu0 %308
      %v311 = vadd.f32 %v283, %v294
      %v312 = vadd.f32 %v284, %v299
      %v313 = vadd.f32 %v285, %v304
      %v314 = vadd.f32 %v286, %v309
      %v315 = vmax.f32 %v311, 0.0
      %v316 = vmax.f32 %v312, 0.0
      %v317 = vmax.f32 %v313, 0.0
      %v318 = vmax.f32 %v314, 0.0
      %v319 = vpack.c.bf16 %v316, %v315
      %v320 = vpack.c.bf16 %v318, %v317
      %323 = vrot.lane.b32.xlu0 %v319, 1
      %v324 = vpop.permute.xlu0 %323
      %325 = vrot.lane.b32.xlu0 %v320, 1
      %v326 = vpop.permute.xlu0 %325
      %vm327 = vcmask 7168
      %v330 = vsel %vm327, 0, %v324
      %v332 = vsel %vm327, 0, %v326
      %vm333 = vcmask 269312
      %v334 = vsel %vm333, %v330, 0
      %v336 = vsel %vm333, %v332, 0
      %v338 = vld [vmem:[%s3] sm:$0xf]
      %v339 = vld [vmem:[%s3 + $0x4] sm:$0xf]
      %s340 = scalar_lea.vmem %s3, 8
      %v341 = vld [vmem:[%s340] sm:$0xf]
      %v342 = vld [vmem:[%s340 + $0x4] sm:$0xf]
      %v345 = vunpack.c.l.b16 %v341
      %v346 = vunpack.c.l.b16 %v342
      %v347 = vpack.c.b16 %v346, %v345
      %350 = vrot.lane.b32.xlu0 %v334, 127
      %v351 = vpop.permute.xlu0 %350
      %352 = vrot.lane.b32.xlu0 %v336, 127
      %v353 = vpop.permute.xlu0 %352
      %vm356 = vcmask 261120
      %v358 = vsel %vm356, %v347, 0
      %360 = vmatprep.subr.bf16.mxu0 0
      %361 = vmatpush1.bf16.msra.mxu0 %v351
      %362 = vmatprep.subr.bf16.mxu0 0
      %363 = vmatpush1.bf16.msra.mxu0 %v353
      %364 = vmatprep.subr.bf16.mxu0 0
      %365 = vmatpush1.bf16.msra.mxu0 0
      %366 = vmatprep.subr.bf16.mxu0 0
      %367 = vmatpush1.bf16.msra.mxu0 0
      %368 = vmatprep.subr.bf16.mxu0 0
      %369 = vmatpush1.bf16.msra.mxu0 0
      %370 = vmatprep.subr.bf16.mxu0 0
      %371 = vmatpush1.bf16.msra.mxu0 0
      %372 = vmatprep.subr.bf16.mxu0 0
      %373 = vmatpush1.bf16.msra.mxu0 0
      %374 = vmatprep.subr.bf16.mxu0 0
      %375 = vmatpush1.bf16.msra.mxu0 0
      %376 = vmatprep.subr.bf16.mxu0 0
      %377 = vmatpush1.bf16.msra.mxu0 0
      %378 = vmatprep.subr.bf16.mxu0 0
      %379 = vmatpush1.bf16.msra.mxu0 0
      %380 = vmatprep.subr.bf16.mxu0 0
      %381 = vmatpush1.bf16.msra.mxu0 0
      %382 = vmatprep.subr.bf16.mxu0 0
      %383 = vmatpush1.bf16.msra.mxu0 0
      %384 = vmatprep.subr.bf16.mxu0 0
      %385 = vmatpush1.bf16.msra.mxu0 0
      %386 = vmatprep.subr.bf16.mxu0 0
      %387 = vmatpush1.bf16.msra.mxu0 0
      %388 = vmatprep.subr.bf16.mxu0 0
      %389 = vmatpush1.bf16.msra.mxu0 0
      %390 = vmatprep.subr.bf16.mxu0 0
      %391 = vmatpush1.bf16.msra.mxu0 0
      %392 = vmatprep.mubr.bf16.mxu0 0
      %393 = vmatmul.mubr.bf16.gmra.mrb[0].mxu0 %v358
      %v394 = vpop.f32.mrb[0].mxu0
      %v395 = vadd.f32 0.0, %v394
      %v396 = vpop.f32.mrb[0].mxu0
      %v397 = vpop.f32.mrb[0].mxu0
      %v398 = vadd.f32 0.0, %v397
      %v399 = vpop.f32.mrb[0].mxu0
      %400 = vdwg.mxu0
      %v403 = vunpack.c.l.b16 %v338
      %v404 = vunpack.c.l.b16 %v339
      %v405 = vpack.c.b16 %v404, %v403
      %v407 = vsel %vm356, %v405, 0
      %409 = vmatprep.subr.bf16.mxu0 0
      %410 = vmatpush1.bf16.msra.mxu0 %v334
      %411 = vmatprep.subr.bf16.mxu0 0
      %412 = vmatpush1.bf16.msra.mxu0 %v336
      %413 = vmatprep.subr.bf16.mxu0 0
      %414 = vmatpush1.bf16.msra.mxu0 0
      %415 = vmatprep.subr.bf16.mxu0 0
      %416 = vmatpush1.bf16.msra.mxu0 0
      %417 = vmatprep.subr.bf16.mxu0 0
      %418 = vmatpush1.bf16.msra.mxu0 0
      %419 = vmatprep.subr.bf16.mxu0 0
      %420 = vmatpush1.bf16.msra.mxu0 0
      %421 = vmatprep.subr.bf16.mxu0 0
      %422 = vmatpush1.bf16.msra.mxu0 0
      %423 = vmatprep.subr.bf16.mxu0 0
      %424 = vmatpush1.bf16.msra.mxu0 0
      %425 = vmatprep.subr.bf16.mxu0 0
      %426 = vmatpush1.bf16.msra.mxu0 0
      %427 = vmatprep.subr.bf16.mxu0 0
      %428 = vmatpush1.bf16.msra.mxu0 0
      %429 = vmatprep.subr.bf16.mxu0 0
      %430 = vmatpush1.bf16.msra.mxu0 0
      %431 = vmatprep.subr.bf16.mxu0 0
      %432 = vmatpush1.bf16.msra.mxu0 0
      %433 = vmatprep.subr.bf16.mxu0 0
      %434 = vmatpush1.bf16.msra.mxu0 0
      %435 = vmatprep.subr.bf16.mxu0 0
      %436 = vmatpush1.bf16.msra.mxu0 0
      %437 = vmatprep.subr.bf16.mxu0 0
      %438 = vmatpush1.bf16.msra.mxu0 0
      %439 = vmatprep.subr.bf16.mxu0 0
      %440 = vmatpush1.bf16.msra.mxu0 0
      %441 = vmatprep.mubr.bf16.mxu0 0
      %442 = vmatmul.mubr.bf16.gmra.mrb[0].mxu0 %v407
      %v443 = vpop.f32.mrb[0].mxu0
      %v444 = vadd.f32 %v395, %v443
      %v445 = vpop.f32.mrb[0].mxu0
      %v446 = vpop.f32.mrb[0].mxu0
      %v447 = vadd.f32 %v398, %v446
      %v448 = vpop.f32.mrb[0].mxu0
      %449 = vdwg.mxu0
      %s450 = scalar_lea.vmem %s3, 16
      %v451 = vld [vmem:[%s450] sm:$0xf]
      %v452 = vld [vmem:[%s450 + $0x4] sm:$0xf]
      %v455 = vunpack.c.l.b16 %v451
      %v456 = vunpack.c.l.b16 %v452
      %v457 = vpack.c.b16 %v456, %v455
      %458 = vrot.lane.b32.xlu0 %v334, 126
      %v459 = vpop.permute.xlu0 %458
      %460 = vrot.lane.b32.xlu0 %v336, 126
      %v461 = vpop.permute.xlu0 %460
      %v465 = vsel %vm356, %v457, 0
      %467 = vmatprep.subr.bf16.mxu0 0
      %468 = vmatpush1.bf16.msra.mxu0 %v459
      %469 = vmatprep.subr.bf16.mxu0 0
      %470 = vmatpush1.bf16.msra.mxu0 %v461
      %471 = vmatprep.subr.bf16.mxu0 0
      %472 = vmatpush1.bf16.msra.mxu0 0
      %473 = vmatprep.subr.bf16.mxu0 0
      %474 = vmatpush1.bf16.msra.mxu0 0
      %475 = vmatprep.subr.bf16.mxu0 0
      %476 = vmatpush1.bf16.msra.mxu0 0
      %477 = vmatprep.subr.bf16.mxu0 0
      %478 = vmatpush1.bf16.msra.mxu0 0
      %479 = vmatprep.subr.bf16.mxu0 0
      %480 = vmatpush1.bf16.msra.mxu0 0
      %481 = vmatprep.subr.bf16.mxu0 0
      %482 = vmatpush1.bf16.msra.mxu0 0
      %483 = vmatprep.subr.bf16.mxu0 0
      %484 = vmatpush1.bf16.msra.mxu0 0
      %485 = vmatprep.subr.bf16.mxu0 0
      %486 = vmatpush1.bf16.msra.mxu0 0
      %487 = vmatprep.subr.bf16.mxu0 0
      %488 = vmatpush1.bf16.msra.mxu0 0
      %489 = vmatprep.subr.bf16.mxu0 0
      %490 = vmatpush1.bf16.msra.mxu0 0
      %491 = vmatprep.subr.bf16.mxu0 0
      %492 = vmatpush1.bf16.msra.mxu0 0
      %493 = vmatprep.subr.bf16.mxu0 0
      %494 = vmatpush1.bf16.msra.mxu0 0
      %495 = vmatprep.subr.bf16.mxu0 0
      %496 = vmatpush1.bf16.msra.mxu0 0
      %497 = vmatprep.subr.bf16.mxu0 0
      %498 = vmatpush1.bf16.msra.mxu0 0
      %499 = vmatprep.mubr.bf16.mxu0 0
      %500 = vmatmul.mubr.bf16.gmra.mrb[0].mxu0 %v465
      %v501 = vpop.f32.mrb[0].mxu0
      %v502 = vadd.f32 0.0, %v501
      %v503 = vpop.f32.mrb[0].mxu0
      %v504 = vpop.f32.mrb[0].mxu0
      %v505 = vadd.f32 0.0, %v504
      %v506 = vpop.f32.mrb[0].mxu0
      %507 = vdwg.mxu0
      %v508 = vadd.f32 %v444, %v502
      %v509 = vadd.f32 %v447, %v505
      %v510 = vpack.c.bf16 %v509, %v508
      %v512 = vunpack.c.l.b16 %v510
      %v513 = vunpack.c.h.b16 %v510
      %v514 = vpack.c.b16 %v512, %v512
      %v515 = vpack.c.b16 %v513, %v513
      %vm518 = vcmask 257024
      %519 = vst.msk [vmem:[%s249] sm:$0xf] %vm518, %v514
      %520 = vst.msk [vmem:[%s249 + $0x4] sm:$0xf] %vm518, %v515
      %p521 = scmp.lt.s32.totalorder %s16, 1
      %s522 = scalar_select %p521, %s16, 1
      %s523 = smul.addr %s522, 8
      %s524 = sadd.s32 6, %s523
      %s525 = smul.addr %s524, 4
      %s526 = scalar_lea.vmem %s5, %s525
      // Predicated region
      $region41: #{densenet_forward.22} parent=39 // pred_check
        %p527 = pneg %p149
      $region42: #{densenet_forward.22} parent=39 // pred_check_branch
        %529 = sbr.rel (%p527) target = $region44
      $region43: #{densenet_forward.22} parent=39 // pred_region
        _
      $region44: #{densenet_forward.22} parent=39 // pred_fallthru
        _
    $region40: #{densenet_forward.22} parent=5 // pred_fallthru
      _
    %p530 = scmp.le.s32.totalorder 2, %s11
    // Predicated region
    $region45: #{densenet_forward.22} parent=5 // pred_check
      %p531 = pneg %p530
    $region46: #{densenet_forward.22} parent=5 // pred_check_branch
      %533 = sbr.rel (%p531) target = $region48
    $region47: #{densenet_forward.22} parent=5 // pred_region
      %s534 = ssub.s32 %s11, 2
      // Predicated region
      $region49: #{densenet_forward.22} parent=47 // pred_check
        %p535 = pneg %p155
      $region50: #{densenet_forward.22} parent=47 // pred_check_branch
        %537 = sbr.rel (%p535) target = $region52
      $region51: #{densenet_forward.22} parent=47 // pred_region
        %p538 = scmp.lt.s32.totalorder %s17, 1
        %s539 = scalar_select %p538, %s17, 1
        %s540 = smul.addr %s539, 8
        %s541 = sadd.s32 6, %s540
        %s542 = smul.addr %s541, 4
        %s543 = scalar_lea.vmem %s5, %s542
      $region52: #{densenet_forward.22} parent=47 // pred_fallthru
        _
    $region48: #{densenet_forward.22} parent=5 // pred_fallthru
      _
  $region6: #{densenet_forward.22} parent=0 // loop_footer
    %s15 = sadd.s32 1, %s11
  $region7: #{densenet_forward.22} parent=0 // loop_footer_branch
    %10 = sbr.rel target = $region3
  $region8: #{densenet_forward.22} parent=0 // loop_exit
    _

// kernel: densenet_forward.23
$region0: #{densenet_forward.23}
  #allocation0 [shape = 'u32[]', space=smem, size = 0x4, offset = 0x4, fixed_abs, tag = 'smem constant byte address 0x4 - core index']
  #allocation1 [shape = 'u32[144,128]{1,0:T(1,128)}', space=vmem, size = 0x12000, scoped, tag = 'internal scratch']
  %s0 = inlined_call_operand.vmem [shape: bf16[2,64,32], index: 0, kind: input, shape index: {}]
  %s1 = inlined_call_operand.vmem [shape: f32[64,1], index: 1, kind: input, shape index: {}]
  %s2 = inlined_call_operand.vmem [shape: f32[64,1], index: 2, kind: input, shape index: {}]
  %s3 = inlined_call_operand.vmem [shape: f32[2,3,1], index: 3, kind: input, shape index: {}]
  %s4 = inlined_call_operand.vmem [shape: f32[3,3], index: 4, kind: input, shape index: {}]
  %s5 = inlined_call_operand.vmem [shape: f32[3,1], index: 5, kind: input, shape index: {}]
  %s6 = inlined_call_operand.vmem [shape: f32[5,64], index: 6, kind: input, shape index: {}]
  %s7 = inlined_call_operand.vmem [shape: f32[5,3], index: 7, kind: input, shape index: {}]
  %s8 = inlined_call_operand.vmem [shape: f32[5,1], index: 8, kind: input, shape index: {}]
  %s9 = inlined_call_operand.vmem [shape: f32[2,5,1], index: 9, kind: output, shape index: {}]
  %s10 = sld [smem:[#allocation0]]
  $region69: #{densenet_forward.23} parent=0
    _
  %s12 = ssub.s32 1, %s10
  %s13 = scalar_select 0, %s12, %s10
  loop: start=0, step=1, limit=4
  $region2: #{densenet_forward.23} parent=0 // loop_pre_header
    _
  $region3: #{densenet_forward.23} parent=0 // loop_header
    %s15 = sphi 0, %s19
    %p16 = scmp.ge.s32.totalorder %s15, 4
    %s25 = sphi 0, %s27
    %s28 = sphi 0, %s25
    %s29 = sphi 0, %s28
    %s45 = sphi 0, %s29
    %s49 = sphi 0, %s49
    %s51 = sphi 0, %s49
    %s52 = sphi 0, %s51
    %s66 = sphi 0, %s52
    %s70 = sphi 0, %s70
    %s72 = sphi 0, %s70
    %s73 = sphi 0, %s72
    %s87 = sphi 0, %s73
    %s93 = sphi 0, %s95
    %s96 = sphi 0, %s93
    %s97 = sphi 0, %s96
    %s113 = sphi 0, %s97
    %s117 = sphi 0, %s117
    %s119 = sphi 0, %s117
    %s120 = sphi 0, %s119
    %s134 = sphi 0, %s120
    %s138 = sphi 0, %s138
    %s140 = sphi 0, %s138
    %s141 = sphi 0, %s140
    %s155 = sphi 0, %s141
    %s159 = sphi 0, %s159
    %s161 = sphi 0, %s159
    %s162 = sphi 0, %s161
    %s176 = sphi 0, %s162
    %s180 = sphi 0, %s180
    %s182 = sphi 0, %s180
    %s183 = sphi 0, %s182
    %s197 = sphi 0, %s183
    %s201 = sphi 0, %s201
    %s203 = sphi 0, %s201
    %s204 = sphi 0, %s203
    %s218 = sphi 0, %s204
    %s224 = sphi 0, %s226
    %s227 = sphi 0, %s224
    %s228 = sphi 0, %s227
    %s244 = sphi 0, %s228
  $region4: #{densenet_forward.23} parent=0 // loop_header_branch
    %18 = sbr.rel (%p16) target = $region8
  $region5: #{densenet_forward.23} parent=0 // loop_body
    %s20 = ssub.s32 %s15, 1
    %s21 = ssub.s32 %s15, 2
    %s22 = sadd.s32 %s15, 1
    %s23 = ssub.s32 %s15, %s22
    %p24 = scmp.eq.s32.totalorder %s23, 0
    %s26 = sadd.s32 %s25, 1
    %s27 = scalar_select %p24, %s25, %s26
    %p30 = pneg %p24
    %p31 = scmp.eq.s32.totalorder %s15, 1
    %p32 = por %p30, %p31
    %p33 = scmp.ne.s32.totalorder %s25, %s28
    %p34 = scmp.eq.s32.totalorder %s15, 0
    %p35 = por %p33, %p34
    %p36 = scmp.ne.s32.totalorder %s25, %s28
    %p37 = scmp.eq.s32.totalorder %s20, 1
    %p38 = por %p36, %p37
    %p39 = scmp.ne.s32.totalorder %s28, %s29
    %p40 = scmp.eq.s32.totalorder %s20, 0
    %p41 = por %p39, %p40
    %p42 = scmp.ne.s32.totalorder %s28, %s29
    %p43 = scmp.eq.s32.totalorder %s21, 1
    %p44 = por %p42, %p43
    %p46 = scmp.ne.s32.totalorder %s29, %s45
    %p47 = scmp.eq.s32.totalorder %s21, 0
    %p48 = por %p46, %p47
    %s50 = sadd.s32 %s49, 1
    %p53 = scmp.eq.s32.totalorder %s15, 1
    %p54 = scmp.ne.s32.totalorder %s49, %s51
    %p55 = scmp.eq.s32.totalorder %s15, 0
    %p56 = por %p54, %p55
    %p57 = scmp.ne.s32.totalorder %s49, %s51
    %p58 = scmp.eq.s32.totalorder %s20, 1
    %p59 = por %p57, %p58
    %p60 = scmp.ne.s32.totalorder %s51, %s52
    %p61 = scmp.eq.s32.totalorder %s20, 0
    %p62 = por %p60, %p61
    %p63 = scmp.ne.s32.totalorder %s51, %s52
    %p64 = scmp.eq.s32.totalorder %s21, 1
    %p65 = por %p63, %p64
    %p67 = scmp.ne.s32.totalorder %s52, %s66
    %p68 = scmp.eq.s32.totalorder %s21, 0
    %p69 = por %p67, %p68
    %s71 = sadd.s32 %s70, 1
    %p74 = scmp.eq.s32.totalorder %s15, 1
    %p75 = scmp.ne.s32.totalorder %s70, %s72
    %p76 = scmp.eq.s32.totalorder %s15, 0
    %p77 = por %p75, %p76
    %p78 = scmp.ne.s32.totalorder %s70, %s72
    %p79 = scmp.eq.s32.totalorder %s20, 1
    %p80 = por %p78, %p79
    %p81 = scmp.ne.s32.totalorder %s72, %s73
    %p82 = scmp.eq.s32.totalorder %s20, 0
    %p83 = por %p81, %p82
    %p84 = scmp.ne.s32.totalorder %s72, %s73
    %p85 = scmp.eq.s32.totalorder %s21, 1
    %p86 = por %p84, %p85
    %p88 = scmp.ne.s32.totalorder %s73, %s87
    %p89 = scmp.eq.s32.totalorder %s21, 0
    %p90 = por %p88, %p89
    %s91 = ssub.s32 %s15, %s22
    %p92 = scmp.eq.s32.totalorder %s91, 0
    %s94 = sadd.s32 %s93, 1
    %s95 = scalar_select %p92, %s93, %s94
    %p98 = pneg %p92
    %p99 = scmp.eq.s32.totalorder %s15, 1
    %p100 = por %p98, %p99
    %p101 = scmp.ne.s32.totalorder %s93, %s96
    %p102 = scmp.eq.s32.totalorder %s15, 0
    %p103 = por %p101, %p102
    %p104 = scmp.ne.s32.totalorder %s93, %s96
    %p105 = scmp.eq.s32.totalorder %s20, 1
    %p106 = por %p104, %p105
    %p107 = scmp.ne.s32.totalorder %s96, %s97
    %p108 = scmp.eq.s32.totalorder %s20, 0
    %p109 = por %p107, %p108
    %p110 = scmp.ne.s32.totalorder %s96, %s97
    %p111 = scmp.eq.s32.totalorder %s21, 1
    %p112 = por %p110, %p111
    %p114 = scmp.ne.s32.totalorder %s97, %s113
    %p115 = scmp.eq.s32.totalorder %s21, 0
    %p116 = por %p114, %p115
    %s118 = sadd.s32 %s117, 1
    %p121 = scmp.eq.s32.totalorder %s15, 1
    %p122 = scmp.ne.s32.totalorder %s117, %s119
    %p123 = scmp.eq.s32.totalorder %s15, 0
    %p124 = por %p122, %p123
    %p125 = scmp.ne.s32.totalorder %s117, %s119
    %p126 = scmp.eq.s32.totalorder %s20, 1
    %p127 = por %p125, %p126
    %p128 = scmp.ne.s32.totalorder %s119, %s120
    %p129 = scmp.eq.s32.totalorder %s20, 0
    %p130 = por %p128, %p129
    %p131 = scmp.ne.s32.totalorder %s119, %s120
    %p132 = scmp.eq.s32.totalorder %s21, 1
    %p133 = por %p131, %p132
    %p135 = scmp.ne.s32.totalorder %s120, %s134
    %p136 = scmp.eq.s32.totalorder %s21, 0
    %p137 = por %p135, %p136
    %s139 = sadd.s32 %s138, 1
    %p142 = scmp.eq.s32.totalorder %s15, 1
    %p143 = scmp.ne.s32.totalorder %s138, %s140
    %p144 = scmp.eq.s32.totalorder %s15, 0
    %p145 = por %p143, %p144
    %p146 = scmp.ne.s32.totalorder %s138, %s140
    %p147 = scmp.eq.s32.totalorder %s20, 1
    %p148 = por %p146, %p147
    %p149 = scmp.ne.s32.totalorder %s140, %s141
    %p150 = scmp.eq.s32.totalorder %s20, 0
    %p151 = por %p149, %p150
    %p152 = scmp.ne.s32.totalorder %s140, %s141
    %p153 = scmp.eq.s32.totalorder %s21, 1
    %p154 = por %p152, %p153
    %p156 = scmp.ne.s32.totalorder %s141, %s155
    %p157 = scmp.eq.s32.totalorder %s21, 0
    %p158 = por %p156, %p157
    %s160 = sadd.s32 %s159, 1
    %p163 = scmp.eq.s32.totalorder %s15, 1
    %p164 = scmp.ne.s32.totalorder %s159, %s161
    %p165 = scmp.eq.s32.totalorder %s15, 0
    %p166 = por %p164, %p165
    %p167 = scmp.ne.s32.totalorder %s159, %s161
    %p168 = scmp.eq.s32.totalorder %s20, 1
    %p169 = por %p167, %p168
    %p170 = scmp.ne.s32.totalorder %s161, %s162
    %p171 = scmp.eq.s32.totalorder %s20, 0
    %p172 = por %p170, %p171
    %p173 = scmp.ne.s32.totalorder %s161, %s162
    %p174 = scmp.eq.s32.totalorder %s21, 1
    %p175 = por %p173, %p174
    %p177 = scmp.ne.s32.totalorder %s162, %s176
    %p178 = scmp.eq.s32.totalorder %s21, 0
    %p179 = por %p177, %p178
    %s181 = sadd.s32 %s180, 1
    %p184 = scmp.eq.s32.totalorder %s15, 1
    %p185 = scmp.ne.s32.totalorder %s180, %s182
    %p186 = scmp.eq.s32.totalorder %s15, 0
    %p187 = por %p185, %p186
    %p188 = scmp.ne.s32.totalorder %s180, %s182
    %p189 = scmp.eq.s32.totalorder %s20, 1
    %p190 = por %p188, %p189
    %p191 = scmp.ne.s32.totalorder %s182, %s183
    %p192 = scmp.eq.s32.totalorder %s20, 0
    %p193 = por %p191, %p192
    %p194 = scmp.ne.s32.totalorder %s182, %s183
    %p195 = scmp.eq.s32.totalorder %s21, 1
    %p196 = por %p194, %p195
    %p198 = scmp.ne.s32.totalorder %s183, %s197
    %p199 = scmp.eq.s32.totalorder %s21, 0
    %p200 = por %p198, %p199
    %s202 = sadd.s32 %s201, 1
    %p205 = scmp.eq.s32.totalorder %s15, 1
    %p206 = scmp.ne.s32.totalorder %s201, %s203
    %p207 = scmp.eq.s32.totalorder %s15, 0
    %p208 = por %p206, %p207
    %p209 = scmp.ne.s32.totalorder %s201, %s203
    %p210 = scmp.eq.s32.totalorder %s20, 1
    %p211 = por %p209, %p210
    %p212 = scmp.ne.s32.totalorder %s203, %s204
    %p213 = scmp.eq.s32.totalorder %s20, 0
    %p214 = por %p212, %p213
    %p215 = scmp.ne.s32.totalorder %s203, %s204
    %p216 = scmp.eq.s32.totalorder %s21, 1
    %p217 = por %p215, %p216
    %p219 = scmp.ne.s32.totalorder %s204, %s218
    %p220 = scmp.eq.s32.totalorder %s21, 0
    %p221 = por %p219, %p220
    %s222 = ssub.s32 %s15, %s22
    %p223 = scmp.eq.s32.totalorder %s222, 0
    %s225 = sadd.s32 %s224, 1
    %s226 = scalar_select %p223, %s224, %s225
    %p229 = pneg %p223
    %p230 = scmp.eq.s32.totalorder %s15, 1
    %p231 = por %p229, %p230
    %p232 = scmp.ne.s32.totalorder %s224, %s227
    %p233 = scmp.eq.s32.totalorder %s15, 0
    %p234 = por %p232, %p233
    %p235 = scmp.ne.s32.totalorder %s224, %s227
    %p236 = scmp.eq.s32.totalorder %s20, 1
    %p237 = por %p235, %p236
    %p238 = scmp.ne.s32.totalorder %s227, %s228
    %p239 = scmp.eq.s32.totalorder %s20, 0
    %p240 = por %p238, %p239
    %p241 = scmp.ne.s32.totalorder %s227, %s228
    %p242 = scmp.eq.s32.totalorder %s21, 1
    %p243 = por %p241, %p242
    %p245 = scmp.ne.s32.totalorder %s228, %s244
    %p246 = scmp.eq.s32.totalorder %s21, 0
    %p247 = por %p245, %p246
    %p248 = scmp.le.s32.totalorder 1, %s15
    %p249 = scmp.lt.s32.totalorder %s15, 3
    %p250 = pnand %p248, %p249
    %p251 = pneg %p250
    // Predicated region
    $region9: #{densenet_forward.23} parent=5 // pred_check
      _
    $region10: #{densenet_forward.23} parent=5 // pred_check_branch
      %253 = sbr.rel (%p250) target = $region12
    $region11: #{densenet_forward.23} parent=5 // pred_region
      %s254 = ssub.s32 %s15, 1
      // Predicated region
      $region13: #{densenet_forward.23} parent=11 // pred_check
        %p255 = pneg %p62
      $region14: #{densenet_forward.23} parent=11 // pred_check_branch
        %257 = sbr.rel (%p255) target = $region16
      $region15: #{densenet_forward.23} parent=11 // pred_region
        _
      $region16: #{densenet_forward.23} parent=11 // pred_fallthru
        _
      // Predicated region
      $region17: #{densenet_forward.23} parent=11 // pred_check
        %p258 = pneg %p83
      $region18: #{densenet_forward.23} parent=11 // pred_check_branch
        %260 = sbr.rel (%p258) target = $region20
      $region19: #{densenet_forward.23} parent=11 // pred_region
        _
      $region20: #{densenet_forward.23} parent=11 // pred_fallthru
        _
      // Predicated region
      $region21: #{densenet_forward.23} parent=11 // pred_check
        %p261 = pneg %p130
      $region22: #{densenet_forward.23} parent=11 // pred_check_branch
        %263 = sbr.rel (%p261) target = $region24
      $region23: #{densenet_forward.23} parent=11 // pred_region
        _
      $region24: #{densenet_forward.23} parent=11 // pred_fallthru
        _
      // Predicated region
      $region25: #{densenet_forward.23} parent=11 // pred_check
        %p264 = pneg %p151
      $region26: #{densenet_forward.23} parent=11 // pred_check_branch
        %266 = sbr.rel (%p264) target = $region28
      $region27: #{densenet_forward.23} parent=11 // pred_region
        _
      $region28: #{densenet_forward.23} parent=11 // pred_fallthru
        _
      // Predicated region
      $region29: #{densenet_forward.23} parent=11 // pred_check
        %p267 = pneg %p172
      $region30: #{densenet_forward.23} parent=11 // pred_check_branch
        %269 = sbr.rel (%p267) target = $region32
      $region31: #{densenet_forward.23} parent=11 // pred_region
        _
      $region32: #{densenet_forward.23} parent=11 // pred_fallthru
        _
      // Predicated region
      $region33: #{densenet_forward.23} parent=11 // pred_check
        %p270 = pneg %p193
      $region34: #{densenet_forward.23} parent=11 // pred_check_branch
        %272 = sbr.rel (%p270) target = $region36
      $region35: #{densenet_forward.23} parent=11 // pred_region
        _
      $region36: #{densenet_forward.23} parent=11 // pred_fallthru
        _
      // Predicated region
      $region37: #{densenet_forward.23} parent=11 // pred_check
        %p273 = pneg %p214
      $region38: #{densenet_forward.23} parent=11 // pred_check_branch
        %275 = sbr.rel (%p273) target = $region40
      $region39: #{densenet_forward.23} parent=11 // pred_region
        _
      $region40: #{densenet_forward.23} parent=11 // pred_fallthru
        _
    $region12: #{densenet_forward.23} parent=5 // pred_fallthru
      _
    %p276 = scmp.lt.s32.totalorder %s15, 2
    // Predicated region
    $region41: #{densenet_forward.23} parent=5 // pred_check
      %p277 = pneg %p276
    $region42: #{densenet_forward.23} parent=5 // pred_check_branch
      %279 = sbr.rel (%p277) target = $region44
    $region43: #{densenet_forward.23} parent=5 // pred_region
      // Predicated region
      $region45: #{densenet_forward.23} parent=43 // pred_check
        %p280 = pneg %p35
      $region46: #{densenet_forward.23} parent=43 // pred_check_branch
        %282 = sbr.rel (%p280) target = $region48
      $region47: #{densenet_forward.23} parent=43 // pred_region
        %p283 = scmp.lt.s32.totalorder %s15, 1
        %s284 = scalar_select %p283, %s15, 1
        %s285 = smul.addr %s284, 8
        %s286 = smul.addr %s285, 4
        %s287 = scalar_lea.vmem %s0, %s286
      $region48: #{densenet_forward.23} parent=43 // pred_fallthru
        _
      // Predicated region
      $region49: #{densenet_forward.23} parent=43 // pred_check
        %p288 = pneg %p103
      $region50: #{densenet_forward.23} parent=43 // pred_check_branch
        %290 = sbr.rel (%p288) target = $region52
      $region51: #{densenet_forward.23} parent=43 // pred_region
        %p291 = scmp.lt.s32.totalorder %s15, 1
        %s292 = scalar_select %p291, %s15, 1
        %s293 = smul.addr %s292, 4
        %s294 = scalar_lea.vmem %s3, %s293
      $region52: #{densenet_forward.23} parent=43 // pred_fallthru
        _
    $region44: #{densenet_forward.23} parent=5 // pred_fallthru
      _
    %p295 = scmp.le.s32.totalorder 1, %s15
    %p296 = scmp.lt.s32.totalorder %s15, 3
    %p297 = pnand %p295, %p296
    %p298 = pneg %p297
    // Predicated region
    $region53: #{densenet_forward.23} parent=5 // pred_check
      _
    $region54: #{densenet_forward.23} parent=5 // pred_check_branch
      %300 = sbr.rel (%p297) target = $region56
    $region55: #{densenet_forward.23} parent=5 // pred_region
      %s301 = ssub.s32 %s15, 1
      %p302 = scmp.lt.s32.totalorder %s20, 1
      %s303 = scalar_select %p302, %s20, 1
      %s304 = smul.addr %s303, 8
      %s305 = smul.addr %s304, 4
      %s306 = scalar_lea.vmem %s0, %s305
      %p307 = pneg %p41
      %p308 = pneg %p38
      %p309 = pneg %p62
      %p310 = pneg %p59
      %p311 = pneg %p83
      %p312 = pneg %p80
      %p313 = scmp.lt.s32.totalorder %s20, 1
      %s314 = scalar_select %p313, %s20, 1
      %s315 = smul.addr %s314, 4
      %s316 = scalar_lea.vmem %s3, %s315
      %p317 = pneg %p109
      %p318 = pneg %p106
      %p319 = pneg %p130
      %p320 = pneg %p127
      %p321 = pneg %p151
      %p322 = pneg %p148
      %p323 = pneg %p172
      %p324 = pneg %p169
      %p325 = pneg %p193
      %p326 = pneg %p190
      %p327 = pneg %p214
      %p328 = pneg %p211
      %p329 = pneg %p240
      %p330 = pneg %p237
      %p331 = scmp.lt.s32.totalorder %s20, 1
      %s332 = scalar_select %p331, %s20, 1
      %s333 = smul.addr %s332, 8
      %s334 = scalar_lea.vmem %s9, %s333
      %p335 = scmp.lt.s32.totalorder %s20, 1
      %s336 = scalar_select %p335, %s20, 1
      %s337 = smul.addr %s336, 8
      %s338 = smul.addr %s337, 4
      %s339 = scalar_lea.vmem %s0, %s338
      %p340 = scmp.lt.s32.totalorder %s20, 1
      %s341 = scalar_select %p340, %s20, 1
      %s342 = smul.addr %s341, 4
      %s343 = scalar_lea.vmem %s3, %s342
      %p344 = scmp.lt.s32.totalorder %s20, 1
      %s345 = scalar_select %p344, %s20, 1
      %s346 = smul.addr %s345, 8
      %s347 = scalar_lea.vmem %s9, %s346
      %v348 = vld [vmem:[%s339] sm:$0xf]
      %v349 = vld [vmem:[%s339 + $0x4] sm:$0xf]
      %v350 = vld [vmem:[%s339 + $0x8] sm:$0xf]
      %v351 = vld [vmem:[%s339 + $0xc] sm:$0xf]
      %v352 = vld [vmem:[%s339 + $0x10] sm:$0xf]
      %v353 = vld [vmem:[%s339 + $0x14] sm:$0xf]
      %v354 = vld [vmem:[%s339 + $0x18] sm:$0xf]
      %v355 = vld [vmem:[%s339 + $0x1c] sm:$0xf]
      %v356 = vunpack.c.l.bf16 %v348
      %v357 = vunpack.c.l.bf16 %v349
      %v358 = vunpack.c.l.bf16 %v350
      %v359 = vunpack.c.l.bf16 %v351
      %v360 = vunpack.c.l.bf16 %v352
      %v361 = vunpack.c.l.bf16 %v353
      %v362 = vunpack.c.l.bf16 %v354
      %v363 = vunpack.c.l.bf16 %v355
      %v364 = vld [vmem:[%s1] sm:$0xff]
      %v365 = vld [vmem:[%s1 + $0x8] sm:$0xff]
      %v366 = vld [vmem:[%s1 + $0x10] sm:$0xff]
      %v367 = vld [vmem:[%s1 + $0x18] sm:$0xff]
      %v368 = vld [vmem:[%s1 + $0x20] sm:$0xff]
      %v369 = vld [vmem:[%s1 + $0x28] sm:$0xff]
      %v370 = vld [vmem:[%s1 + $0x30] sm:$0xff]
      %v371 = vld [vmem:[%s1 + $0x38] sm:$0xff]
      %373 = vset.pattern.permute.xlu0 0
      %374 = vperm.xlu0 %373, %v364
      %v375 = vpop.permute.xlu0 %374
      %378 = vset.pattern.permute.xlu0 0
      %379 = vperm.xlu0 %378, %v365
      %v380 = vpop.permute.xlu0 %379
      %383 = vset.pattern.permute.xlu0 0
      %384 = vperm.xlu0 %383, %v366
      %v385 = vpop.permute.xlu0 %384
      %388 = vset.pattern.permute.xlu0 0
      %389 = vperm.xlu0 %388, %v367
      %v390 = vpop.permute.xlu0 %389
      %393 = vset.pattern.permute.xlu0 0
      %394 = vperm.xlu0 %393, %v368
      %v395 = vpop.permute.xlu0 %394
      %398 = vset.pattern.permute.xlu0 0
      %399 = vperm.xlu0 %398, %v369
      %v400 = vpop.permute.xlu0 %399
      %403 = vset.pattern.permute.xlu0 0
      %404 = vperm.xlu0 %403, %v370
      %v405 = vpop.permute.xlu0 %404
      %408 = vset.pattern.permute.xlu0 0
      %409 = vperm.xlu0 %408, %v371
      %v410 = vpop.permute.xlu0 %409
      %v412 = vmul.f32 %v356, %v375
      %v413 = vmul.f32 %v357, %v380
      %v414 = vmul.f32 %v358, %v385
      %v415 = vmul.f32 %v359, %v390
      %v416 = vmul.f32 %v360, %v395
      %v417 = vmul.f32 %v361, %v400
      %v418 = vmul.f32 %v362, %v405
      %v419 = vmul.f32 %v363, %v410
      %v420 = vld [vmem:[%s2] sm:$0xff]
      %v421 = vld [vmem:[%s2 + $0x8] sm:$0xff]
      %v422 = vld [vmem:[%s2 + $0x10] sm:$0xff]
      %v423 = vld [vmem:[%s2 + $0x18] sm:$0xff]
      %v424 = vld [vmem:[%s2 + $0x20] sm:$0xff]
      %v425 = vld [vmem:[%s2 + $0x28] sm:$0xff]
      %v426 = vld [vmem:[%s2 + $0x30] sm:$0xff]
      %v427 = vld [vmem:[%s2 + $0x38] sm:$0xff]
      %429 = vset.pattern.permute.xlu0 0
      %430 = vperm.xlu0 %429, %v420
      %v431 = vpop.permute.xlu0 %430
      %434 = vset.pattern.permute.xlu0 0
      %435 = vperm.xlu0 %434, %v421
      %v436 = vpop.permute.xlu0 %435
      %439 = vset.pattern.permute.xlu0 0
      %440 = vperm.xlu0 %439, %v422
      %v441 = vpop.permute.xlu0 %440
      %444 = vset.pattern.permute.xlu0 0
      %445 = vperm.xlu0 %444, %v423
      %v446 = vpop.permute.xlu0 %445
      %449 = vset.pattern.permute.xlu0 0
      %450 = vperm.xlu0 %449, %v424
      %v451 = vpop.permute.xlu0 %450
      %454 = vset.pattern.permute.xlu0 0
      %455 = vperm.xlu0 %454, %v425
      %v456 = vpop.permute.xlu0 %455
      %459 = vset.pattern.permute.xlu0 0
      %460 = vperm.xlu0 %459, %v426
      %v461 = vpop.permute.xlu0 %460
      %464 = vset.pattern.permute.xlu0 0
      %465 = vperm.xlu0 %464, %v427
      %v466 = vpop.permute.xlu0 %465
      %v468 = vadd.f32 %v412, %v431
      %v469 = vadd.f32 %v413, %v436
      %v470 = vadd.f32 %v414, %v441
      %v471 = vadd.f32 %v415, %v446
      %v472 = vadd.f32 %v416, %v451
      %v473 = vadd.f32 %v417, %v456
      %v474 = vadd.f32 %v418, %v461
      %v475 = vadd.f32 %v419, %v466
      %v476 = vmax.f32 %v468, 0.0
      %v477 = vmax.f32 %v469, 0.0
      %v478 = vmax.f32 %v470, 0.0
      %v479 = vmax.f32 %v471, 0.0
      %v480 = vmax.f32 %v472, 0.0
      %v481 = vmax.f32 %v473, 0.0
      %v482 = vmax.f32 %v474, 0.0
      %v483 = vmax.f32 %v475, 0.0
      %vm484 = vcmask 261120
      %v485 = vsel %vm484, %v476, 0.0
      %486 = vadd.xlane.f32.xlu0 %v485
      %v487 = vpop.xlane.xlu0 %486
      %v488 = vsel %vm484, %v477, 0.0
      %489 = vadd.xlane.f32.xlu0 %v488
      %v490 = vpop.xlane.xlu0 %489
      %v491 = vsel %vm484, %v478, 0.0
      %492 = vadd.xlane.f32.xlu0 %v491
      %v493 = vpop.xlane.xlu0 %492
      %v494 = vsel %vm484, %v479, 0.0
      %495 = vadd.xlane.f32.xlu0 %v494
      %v496 = vpop.xlane.xlu0 %495
      %v497 = vsel %vm484, %v480, 0.0
      %498 = vadd.xlane.f32.xlu0 %v497
      %v499 = vpop.xlane.xlu0 %498
      %v500 = vsel %vm484, %v481, 0.0
      %501 = vadd.xlane.f32.xlu0 %v500
      %v502 = vpop.xlane.xlu0 %501
      %v503 = vsel %vm484, %v482, 0.0
      %504 = vadd.xlane.f32.xlu0 %v503
      %v505 = vpop.xlane.xlu0 %504
      %v506 = vsel %vm484, %v483, 0.0
      %507 = vadd.xlane.f32.xlu0 %v506
      %v508 = vpop.xlane.xlu0 %507
      %v509 = vrcp.pop 32.0
      %v510 = vmul.f32 %v487, %v509
      %v511 = vmul.f32 %v490, %v509
      %v512 = vmul.f32 %v493, %v509
      %v513 = vmul.f32 %v496, %v509
      %v514 = vmul.f32 %v499, %v509
      %v515 = vmul.f32 %v502, %v509
      %v516 = vmul.f32 %v505, %v509
      %v517 = vmul.f32 %v508, %v509
      %v518 = vld [vmem:[%s4] sm:$0x7]
      %v519 = vld [vmem:[%s343] sm:$0x7]
      %v520 = vld [vmem:[%s5] sm:$0x7]
      %vm521 = vcmask 23552
      %v523 = vsel %vm521, %v518, 0
      %vm525 = vcmask 1042432
      %v527 = vsel %vm525, %v519, 0
      %529 = vmatprep.subr.mxu0 0.0
      %530 = vmatpush1.msra.mxu0 %v527
      %531 = vmatprep.subr.mxu0 0.0
      %532 = vmatpush1.msra.mxu0 0.0
      %533 = vmatprep.subr.mxu0 0.0
      %534 = vmatpush1.msra.mxu0 0.0
      %535 = vmatprep.subr.mxu0 0.0
      %536 = vmatpush1.msra.mxu0 0.0
      %537 = vmatprep.subr.mxu0 0.0
      %538 = vmatpush1.msra.mxu0 0.0
      %539 = vmatprep.subr.mxu0 0.0
      %540 = vmatpush1.msra.mxu0 0.0
      %541 = vmatprep.subr.mxu0 0.0
      %542 = vmatpush1.msra.mxu0 0.0
      %543 = vmatprep.subr.mxu0 0.0
      %544 = vmatpush1.msra.mxu0 0.0
      %545 = vmatprep.subr.mxu0 0.0
      %546 = vmatpush1.msra.mxu0 0.0
      %547 = vmatprep.subr.mxu0 0.0
      %548 = vmatpush1.msra.mxu0 0.0
      %549 = vmatprep.subr.mxu0 0.0
      %550 = vmatpush1.msra.mxu0 0.0
      %551 = vmatprep.subr.mxu0 0.0
      %552 = vmatpush1.msra.mxu0 0.0
      %553 = vmatprep.subr.mxu0 0.0
      %554 = vmatpush1.msra.mxu0 0.0
      %555 = vmatprep.subr.mxu0 0.0
      %556 = vmatpush1.msra.mxu0 0.0
      %557 = vmatprep.subr.mxu0 0.0
      %558 = vmatpush1.msra.mxu0 0.0
      %559 = vmatprep.subr.mxu0 0.0
      %560 = vmatpush1.msra.mxu0 0.0
      %561 = vmatprep.subr.mxu0 0.0
      %562 = vmatpush1.msra.mxu0 0.0
      %563 = vmatprep.subr.mxu0 0.0
      %564 = vmatpush1.msra.mxu0 0.0
      %565 = vmatprep.subr.mxu0 0.0
      %566 = vmatpush1.msra.mxu0 0.0
      %567 = vmatprep.subr.mxu0 0.0
      %568 = vmatpush1.msra.mxu0 0.0
      %569 = vmatprep.subr.mxu0 0.0
      %570 = vmatpush1.msra.mxu0 0.0
      %571 = vmatprep.subr.mxu0 0.0
      %572 = vmatpush1.msra.mxu0 0.0
      %573 = vmatprep.subr.mxu0 0.0
      %574 = vmatpush1.msra.mxu0 0.0
      %575 = vmatprep.subr.mxu0 0.0
      %576 = vmatpush1.msra.mxu0 0.0
      %577 = vmatprep.subr.mxu0 0.0
      %578 = vmatpush1.msra.mxu0 0.0
      %579 = vmatprep.subr.mxu0 0.0
      %580 = vmatpush1.msra.mxu0 0.0
      %581 = vmatprep.subr.mxu0 0.0
      %582 = vmatpush1.msra.mxu0 0.0
      %583 = vmatprep.subr.mxu0 0.0
      %584 = vmatpush1.msra.mxu0 0.0
      %585 = vmatprep.subr.mxu0 0.0
      %586 = vmatpush1.msra.mxu0 0.0
      %587 = vmatprep.subr.mxu0 0.0
      %588 = vmatpush1.msra.mxu0 0.0
      %589 = vmatprep.subr.mxu0 0.0
      %590 = vmatpush1.msra.mxu0 0.0
      %591 = vmatprep.subr.mxu0 0.0
      %592 = vmatpush1.msra.mxu0 0.0
      %593 = vmatprep.mubr.f32.mxu0 0.0
      %594 = vmatmul.mubr.f32.gmra.mrb[0].mxu0 %v523
      %v595 = vpop.f32.mrb[0].mxu0
      %v596 = vadd.f32 %v520, %v595
      %v597 = vpop.f32.mrb[0].mxu0
      %598 = vdwg.mxu0
      %v599 = vld [vmem:[%s6] sm:$0x1f]
      %v600 = vld [vmem:[%s7] sm:$0x1f]
      %v602 = vsel %vm521, %v600, 0
      %v605 = vsel %vm525, %v596, 0
      %607 = vmatprep.subr.mxu0 0.0
      %608 = vmatpush1.msra.mxu0 %v605
      %609 = vmatprep.subr.mxu0 0.0
      %610 = vmatpush1.msra.mxu0 0.0
      %611 = vmatprep.subr.mxu0 0.0
      %612 = vmatpush1.msra.mxu0 0.0
      %613 = vmatprep.subr.mxu0 0.0
      %614 = vmatpush1.msra.mxu0 0.0
      %615 = vmatprep.subr.mxu0 0.0
      %616 = vmatpush1.msra.mxu0 0.0
      %617 = vmatprep.subr.mxu0 0.0
      %618 = vmatpush1.msra.mxu0 0.0
      %619 = vmatprep.subr.mxu0 0.0
      %620 = vmatpush1.msra.mxu0 0.0
      %621 = vmatprep.subr.mxu0 0.0
      %622 = vmatpush1.msra.mxu0 0.0
      %623 = vmatprep.subr.mxu0 0.0
      %624 = vmatpush1.msra.mxu0 0.0
      %625 = vmatprep.subr.mxu0 0.0
      %626 = vmatpush1.msra.mxu0 0.0
      %627 = vmatprep.subr.mxu0 0.0
      %628 = vmatpush1.msra.mxu0 0.0
      %629 = vmatprep.subr.mxu0 0.0
      %630 = vmatpush1.msra.mxu0 0.0
      %631 = vmatprep.subr.mxu0 0.0
      %632 = vmatpush1.msra.mxu0 0.0
      %633 = vmatprep.subr.mxu0 0.0
      %634 = vmatpush1.msra.mxu0 0.0
      %635 = vmatprep.subr.mxu0 0.0
      %636 = vmatpush1.msra.mxu0 0.0
      %637 = vmatprep.subr.mxu0 0.0
      %638 = vmatpush1.msra.mxu0 0.0
      %639 = vmatprep.subr.mxu0 0.0
      %640 = vmatpush1.msra.mxu0 0.0
      %641 = vmatprep.subr.mxu0 0.0
      %642 = vmatpush1.msra.mxu0 0.0
      %643 = vmatprep.subr.mxu0 0.0
      %644 = vmatpush1.msra.mxu0 0.0
      %645 = vmatprep.subr.mxu0 0.0
      %646 = vmatpush1.msra.mxu0 0.0
      %647 = vmatprep.subr.mxu0 0.0
      %648 = vmatpush1.msra.mxu0 0.0
      %649 = vmatprep.subr.mxu0 0.0
      %650 = vmatpush1.msra.mxu0 0.0
      %651 = vmatprep.subr.mxu0 0.0
      %652 = vmatpush1.msra.mxu0 0.0
      %653 = vmatprep.subr.mxu0 0.0
      %654 = vmatpush1.msra.mxu0 0.0
      %655 = vmatprep.subr.mxu0 0.0
      %656 = vmatpush1.msra.mxu0 0.0
      %657 = vmatprep.subr.mxu0 0.0
      %658 = vmatpush1.msra.mxu0 0.0
      %659 = vmatprep.subr.mxu0 0.0
      %660 = vmatpush1.msra.mxu0 0.0
      %661 = vmatprep.subr.mxu0 0.0
      %662 = vmatpush1.msra.mxu0 0.0
      %663 = vmatprep.subr.mxu0 0.0
      %664 = vmatpush1.msra.mxu0 0.0
      %665 = vmatprep.subr.mxu0 0.0
      %666 = vmatpush1.msra.mxu0 0.0
      %667 = vmatprep.subr.mxu0 0.0
      %668 = vmatpush1.msra.mxu0 0.0
      %669 = vmatprep.subr.mxu0 0.0
      %670 = vmatpush1.msra.mxu0 0.0
      %671 = vmatprep.mubr.f32.mxu0 0.0
      %672 = vmatmul.mubr.f32.gmra.mrb[0].mxu0 %v602
      %v673 = vpop.f32.mrb[0].mxu0
      %v674 = vadd.f32 0.0, %v673
      %v675 = vpop.f32.mrb[0].mxu0
      %676 = vdwg.mxu0
      %vm677 = vcmask 523264
      %v679 = vsel %vm677, %v599, 0
      %681 = vmatprep.subr.mxu0 0.0
      %682 = vmatpush1.msra.mxu0 %v510
      %683 = vmatprep.subr.mxu0 0.0
      %684 = vmatpush1.msra.mxu0 %v511
      %685 = vmatprep.subr.mxu0 0.0
      %686 = vmatpush1.msra.mxu0 %v512
      %687 = vmatprep.subr.mxu0 0.0
      %688 = vmatpush1.msra.mxu0 %v513
      %689 = vmatprep.subr.mxu0 0.0
      %690 = vmatpush1.msra.mxu0 %v514
      %691 = vmatprep.subr.mxu0 0.0
      %692 = vmatpush1.msra.mxu0 %v515
      %693 = vmatprep.subr.mxu0 0.0
      %694 = vmatpush1.msra.mxu0 %v516
      %695 = vmatprep.subr.mxu0 0.0
      %696 = vmatpush1.msra.mxu0 %v517
      %697 = vmatprep.subr.mxu0 0.0
      %698 = vmatpush1.msra.mxu0 0.0
      %699 = vmatprep.subr.mxu0 0.0
      %700 = vmatpush1.msra.mxu0 0.0
      %701 = vmatprep.subr.mxu0 0.0
      %702 = vmatpush1.msra.mxu0 0.0
      %703 = vmatprep.subr.mxu0 0.0
      %704 = vmatpush1.msra.mxu0 0.0
      %705 = vmatprep.subr.mxu0 0.0
      %706 = vmatpush1.msra.mxu0 0.0
      %707 = vmatprep.subr.mxu0 0.0
      %708 = vmatpush1.msra.mxu0 0.0
      %709 = vmatprep.subr.mxu0 0.0
      %710 = vmatpush1.msra.mxu0 0.0
      %711 = vmatprep.subr.mxu0 0.0
      %712 = vmatpush1.msra.mxu0 0.0
      %713 = vmatprep.subr.mxu0 0.0
      %714 = vmatpush1.msra.mxu0 0.0
      %715 = vmatprep.subr.mxu0 0.0
      %716 = vmatpush1.msra.mxu0 0.0
      %717 = vmatprep.subr.mxu0 0.0
      %718 = vmatpush1.msra.mxu0 0.0
      %719 = vmatprep.subr.mxu0 0.0
      %720 = vmatpush1.msra.mxu0 0.0
      %721 = vmatprep.subr.mxu0 0.0
      %722 = vmatpush1.msra.mxu0 0.0
      %723 = vmatprep.subr.mxu0 0.0
      %724 = vmatpush1.msra.mxu0 0.0
      %725 = vmatprep.subr.mxu0 0.0
      %726 = vmatpush1.msra.mxu0 0.0
      %727 = vmatprep.subr.mxu0 0.0
      %728 = vmatpush1.msra.mxu0 0.0
      %729 = vmatprep.subr.mxu0 0.0
      %730 = vmatpush1.msra.mxu0 0.0
      %731 = vmatprep.subr.mxu0 0.0
      %732 = vmatpush1.msra.mxu0 0.0
      %733 = vmatprep.subr.mxu0 0.0
      %734 = vmatpush1.msra.mxu0 0.0
      %735 = vmatprep.subr.mxu0 0.0
      %736 = vmatpush1.msra.mxu0 0.0
      %737 = vmatprep.subr.mxu0 0.0
      %738 = vmatpush1.msra.mxu0 0.0
      %739 = vmatprep.subr.mxu0 0.0
      %740 = vmatpush1.msra.mxu0 0.0
      %741 = vmatprep.subr.mxu0 0.0
      %742 = vmatpush1.msra.mxu0 0.0
      %743 = vmatprep.subr.mxu0 0.0
      %744 = vmatpush1.msra.mxu0 0.0
      %745 = vmatprep.mubr.f32.mxu0 0.0
      %746 = vmatmul.mubr.f32.gmra.mrb[0].mxu0 %v679
      %v747 = vpop.f32.mrb[0].mxu0
      %v748 = vadd.f32 %v674, %v747
      %v749 = vpop.f32.mrb[0].mxu0
      %750 = vdwg.mxu0
      %v751 = vld [vmem:[%s8] sm:$0x1f]
      %v752 = vadd.f32 %v748, %v751
      %vm753 = vcmask 4096
      %754 = vst.msk [vmem:[%s347] sm:$0x1f] %vm753, %v752
      %p755 = scmp.lt.s32.totalorder %s20, 1
      %s756 = scalar_select %p755, %s20, 1
      %s757 = smul.addr %s756, 8
      %s758 = scalar_lea.vmem %s9, %s757
      // Predicated region
      $region57: #{densenet_forward.23} parent=55 // pred_check
        %p759 = pneg %p237
      $region58: #{densenet_forward.23} parent=55 // pred_check_branch
        %761 = sbr.rel (%p759) target = $region60
      $region59: #{densenet_forward.23} parent=55 // pred_region
        _
      $region60: #{densenet_forward.23} parent=55 // pred_fallthru
        _
    $region56: #{densenet_forward.23} parent=5 // pred_fallthru
      _
    %p762 = scmp.le.s32.totalorder 2, %s15
    // Predicated region
    $region61: #{densenet_forward.23} parent=5 // pred_check
      %p763 = pneg %p762
    $region62: #{densenet_forward.23} parent=5 // pred_check_branch
      %765 = sbr.rel (%p763) target = $region64
    $region63: #{densenet_forward.23} parent=5 // pred_region
      %s766 = ssub.s32 %s15, 2
      // Predicated region
      $region65: #{densenet_forward.23} parent=63 // pred_check
        %p767 = pneg %p243
      $region66: #{densenet_forward.23} parent=63 // pred_check_branch
        %769 = sbr.rel (%p767) target = $region68
      $region67: #{densenet_forward.23} parent=63 // pred_region
        %p770 = scmp.lt.s32.totalorder %s21, 1
        %s771 = scalar_select %p770, %s21, 1
        %s772 = smul.addr %s771, 8
        %s773 = scalar_lea.vmem %s9, %s772
      $region68: #{densenet_forward.23} parent=63 // pred_fallthru
        _
    $region64: #{densenet_forward.23} parent=5 // pred_fallthru
      _
  $region6: #{densenet_forward.23} parent=0 // loop_footer
    %s19 = sadd.s32 1, %s15
  $region7: #{densenet_forward.23} parent=0 // loop_footer_branch
    %14 = sbr.rel target = $region3
  $region8: #{densenet_forward.23} parent=0 // loop_exit
    _

</llo_original>
